<compile_context>
chip_gen: v7x
topology: tpu7x:2x2x1
jax: 0.10.0
libtpu: 0.0.40
codegen_flags: <defaults>
</compile_context>

<pallas_src>
import functools

import jax
import jax.numpy as jnp
import numpy as np
from jax.experimental import pallas as pl
from jax.experimental.pallas import tpu as pltpu


def _round_up(x, m):
    return ((x + m - 1) // m) * m


# ----------------------------------------------------------------------------
# Pallas kernel: full R_GAMLP_RLU forward for one tile of nodes.
# ----------------------------------------------------------------------------
def _gamlp_kernel(ba_ref,                        # SMEM [1]  : lr_att bias
                  feats_ref,                     # [K, T, F] bf16
                  lab_ref,                       # [T, C]    bf16
                  wal_ref, war_ref,              # [1, F] f32 each (lr_att weight halves)
                  w13_ref, b13_ref, s13_ref,     # [F+C, 2H] bf16, [1, 2H] f32, [1, 2H] f32
                  w24_ref, b24_ref,              # [2H, Cp]  bf16, [1, Cp] f32
                  out_ref):                      # [T, Cp]   out dtype
    K = feats_ref.shape[0]
    ba = ba_ref[0]
    wal = wal_ref[...]                           # [1, F]
    war = war_ref[...]                           # [1, F]

    def recip(z):
        # EUP approximate reciprocal + one Newton step.  The Newton step costs two
        # VALU ops on a [T,1] slice (negligible) and keeps the kernel bit-close to
        # the exact-softmax reference.
        r = pl.reciprocal(z, approx=True)
        return r * (2.0 - z * r)

    # ---- pass 0: hop-invariant score projections (independent of the recursion)
    #   wl_i = wal . x_i        rb_i = war . x_i + ba          (both [T, 1], f32)
    wl, rb = [], []
    for i in range(K):
        x = feats_ref[i].astype(jnp.float32)                  # [T, F]
        wl.append(jnp.sum(x * wal, axis=-1, keepdims=True))
        rb.append(jnp.sum(x * war, axis=-1, keepdims=True) + ba)

    # ---- pass 1: recursive attention carrying only [T,1] scalars -------------
    #   history_i . wal == (sum_{j<i} e_j * wl_j) / Z_i   (online softmax identity)
    # TODO(synk): for large K (8-12) switch to lax.fori_loop(unroll=True) over
    # stacked [K,T,1] buffers to bound live ranges / compile time.
    e = [None] * K
    s = jax.nn.sigmoid(wl[0] + rb[0])
    e[0] = jnp.exp(s)                                          # sigmoid in (0,1) -> exp safe
    Z = e[0]                                                   # [T, 1] running exp-sum
    swl = e[0] * wl[0]                                         # [T, 1] running wal . S
    for i in range(1, K):
        s = jax.nn.sigmoid(swl * recip(Z) + rb[i])
        e[i] = jnp.exp(s)
        Z = Z + e[i]
        swl = swl + e[i] * wl[i]

    # ---- pass 2: dependency-free softmax-weighted hop aggregation ------------
    rz = recip(Z)                                              # final 1/Z
    right = (e[0] * rz) * feats_ref[0].astype(jnp.float32)     # [T, F]
    for i in range(1, K):
        right = right + (e[i] * rz) * feats_ref[i].astype(jnp.float32)

    # ---- fused first layers: [right, lab] @ blockdiag(w1, w3) -> [T, 2H] -----
    hl_in = jnp.concatenate([right, lab_ref[...].astype(jnp.float32)], axis=1)
    hl = jnp.dot(hl_in.astype(jnp.bfloat16), w13_ref[...],
                 preferred_element_type=jnp.float32) + b13_ref[...]
    hl = jnp.where(hl >= 0, hl, s13_ref[...] * hl)             # per-half PReLU slopes

    # ---- fused second layers: [T, 2H] @ [w2; w4] + (b2 + b4) -----------------
    out = jnp.dot(hl.astype(jnp.bfloat16), w24_ref[...],
                  preferred_element_type=jnp.float32) + b24_ref[...]
    out_ref[...] = out.astype(out_ref.dtype)


# ----------------------------------------------------------------------------
# Wrapper
# ----------------------------------------------------------------------------
@functools.partial(jax.jit, static_argnames=("tile_n", "vmem_limit", "out_dtype"))
def _forward_impl(feats, label_emb, params, *, tile_n, vmem_limit, out_dtype):
    K, N, F = feats.shape
    C = label_emb.shape[1]
    H = params["w1"].shape[1]
    Cp = _round_up(C, 128)                      # lane-dense output stores

    # bf16 HBM storage for the streamed operands (halves feats/label DMA bytes).
    feats_b = feats.astype(jnp.bfloat16)
    lab_b = label_emb.astype(jnp.bfloat16)

    n_tiles = -(-N // tile_n)
    n_pad = n_tiles * tile_n
    if n_pad != N:
        feats_b = jnp.pad(feats_b, ((0, 0), (0, n_pad - N), (0, 0)))
        lab_b = jnp.pad(lab_b, ((0, n_pad - N), (0, 0)))

    # Fused first-layer weights: blockdiag(w1 [F,H], w3 [C,H]) -> [F+C, 2H].
    w13 = jnp.zeros((F + C, 2 * H), jnp.float32)
    w13 = w13.at[:F, :H].set(params["w1"])
    w13 = w13.at[F:, H:].set(params["w3"])
    w13b = w13.astype(jnp.bfloat16)
    b13 = jnp.concatenate([params["b1"], params["b3"]], axis=1)              # [1, 2H]
    s13 = jnp.concatenate([jnp.broadcast_to(params["a1"], (1, H)),
                           jnp.broadcast_to(params["a2"], (1, H))], axis=1)  # PReLU slopes

    # Fused second-layer weights: [w2; w4] -> [2H, Cp],  bias b2 + b4 -> [1, Cp].
    w24 = jnp.concatenate([params["w2"], params["w4"]], axis=0)
    b24 = params["b2"] + params["b4"]
    if Cp != C:
        w24 = jnp.pad(w24, ((0, 0), (0, Cp - C)))
        b24 = jnp.pad(b24, ((0, 0), (0, Cp - C)))
    w24b = w24.astype(jnp.bfloat16)

    ba = params["ba"].reshape(-1).astype(jnp.float32)          # SMEM scalar [1]

    def rep(shape):
        nd = len(shape)
        return pl.BlockSpec(shape, lambda i, _nd=nd: (0,) * _nd)

    in_specs = [
        pl.BlockSpec(memory_space=pltpu.MemorySpace.SMEM),     # ba
        pl.BlockSpec((K, tile_n, F), lambda i: (0, i, 0)),     # feats (bf16 stream)
        pl.BlockSpec((tile_n, C), lambda i: (i, 0)),           # label_emb (bf16 stream)
        rep((1, F)), rep((1, F)),                              # wa_l, wa_r (f32)
        rep((F + C, 2 * H)), rep((1, 2 * H)), rep((1, 2 * H)), # w13 (bf16), b13, slopes
        rep((2 * H, Cp)), rep((1, Cp)),                        # w24 (bf16), b24
    ]
    out_spec = pl.BlockSpec((tile_n, Cp), lambda i: (i, 0))

    out_bytes = jnp.dtype(out_dtype).itemsize
    cost = pl.CostEstimate(
        flops=int(2 * n_pad * ((F + C) * 2 * H + 2 * H * Cp) + n_pad * K * 6 * F),
        transcendentals=int(n_pad * (2 * K + 2)),
        bytes_accessed=int(n_pad * (K * F * 2 + C * 2 + Cp * out_bytes)
                           + w13b.size * 2 + w24b.size * 2),
    )

    out = pl.pallas_call(
        _gamlp_kernel,
        out_shape=jax.ShapeDtypeStruct((n_pad, Cp), out_dtype),
        grid_spec=pltpu.PrefetchScalarGridSpec(
            num_scalar_prefetch=0,
            grid=(n_pad // tile_n,),
            in_specs=in_specs,
            out_specs=out_spec,
        ),
        compiler_params=pltpu.CompilerParams(
            dimension_semantics=("parallel",),
            vmem_limit_bytes=int(vmem_limit)),
        cost_estimate=cost,
    )(ba, feats_b, lab_b,
      params["wa_l"], params["wa_r"],
      w13b, b13, s13, w24b, b24)

    return out[:N, :C]


def r_gamlp_rlu_forward(feats, label_emb, params, *, tile_n=None,
                        out_dtype=jnp.bfloat16):
    K, N, F = feats.shape
    C = label_emb.shape[1]
    H = params["w1"].shape[1]
    Cp = _round_up(C, 128)
    out_bytes = jnp.dtype(out_dtype).itemsize

    # Generation-aware VMEM budget (v5e/v6e: 128 MiB, v7x: 64 MiB per TensorCore).
    try:
        vmem_cap = int(pltpu.get_tpu_info().vmem_capacity_bytes)
    except Exception:
        vmem_cap = 64 * 1024 * 1024            # conservative (v7x-sized) fallback
    vmem_limit = min(100 * 1024 * 1024, int(0.75 * vmem_cap))

    if tile_n is None:
        weight_bytes = 2 * ((F + C) * 2 * H + 2 * H * Cp) + 4 * (4 * H + Cp + 2 * F)
        # Streamed per-node bytes (double-buffered in/out) + rough f32 temporaries.
        per_node = (2 * (K * F * 2 + C * 2 + Cp * out_bytes)
                    + (3 * F * 4 + 4 * H * 4 + (F + C) * 2 + Cp * 4))
        budget = int(0.6 * vmem_limit) - 2 * weight_bytes
        t = max(budget // max(per_node, 1), 256)
        t = min(t, 4096)
        if N > 256:                            # keep >= 2 node tiles (v7x: 2 TCs / megacore)
            t = min(t, _round_up(-(-N // 2), 256))
        tile_n = max(256, (t // 256) * 256)

    return _forward_impl(feats, label_emb, params,
                         tile_n=int(tile_n), vmem_limit=int(vmem_limit),
                         out_dtype=out_dtype)


# ----------------------------------------------------------------------------
# Pure-JAX reference: faithful mirror of the PyTorch forward (explicit history
# rebuild + softmax, f32 attention math, bf16 MXU operands with f32 accumulation,
# dropouts = identity).  The lr_att projection is done with f32 elementwise
# multiply+sum (exactly what Linear(2F,1) computes) to avoid TPU default-precision
# matmul truncation in the reference itself.
# ----------------------------------------------------------------------------
def ref_forward(feats, label_emb, p):
    K = feats.shape[0]
    inp = [feats[i].astype(jnp.float32) for i in range(K)]
    lab = label_emb.astype(jnp.float32)
    wal, war, ba = p["wa_l"], p["wa_r"], p["ba"]

    def lr_att(left, right):   # == Linear(2F, 1)(cat([left, right], dim=1))
        return (jnp.sum(left * wal, axis=-1, keepdims=True)
                + jnp.sum(right * war, axis=-1, keepdims=True) + ba)

    act = jax.nn.sigmoid
    scores = [act(lr_att(inp[0], inp[0]))]
    for i in range(1, K):
        att = jax.nn.softmax(jnp.concatenate(scores[:i], axis=1), axis=1)
        history = inp[0] * att[:, 0:1]
        for j in range(1, i):
            history = history + inp[j] * att[:, j:j + 1]
        scores.append(act(lr_att(history, inp[i])))
    att = jax.nn.softmax(jnp.concatenate(scores, axis=1), axis=1)
    right = inp[0] * att[:, 0:1]
    for i in range(1, K):
        right = right + inp[i] * att[:, i:i + 1]

    bf = jnp.bfloat16
    # lr_output (FeedForwardNetII, n_layers_2=2; Dense 'bn' bias folded into b1/b2)
    h = jnp.dot(right.astype(bf), p["w1"].astype(bf),
                preferred_element_type=jnp.float32) + p["b1"]
    h = jnp.where(h >= 0, h, p["a1"] * h)
    out = jnp.dot(h.astype(bf), p["w2"].astype(bf),
                  preferred_element_type=jnp.float32) + p["b2"]
    # label_fc (FeedForwardNet, n_layers_3=2)
    l = jnp.dot(lab.astype(bf), p["w3"].astype(bf),
                preferred_element_type=jnp.float32) + p["b3"]
    l = jnp.where(l >= 0, l, p["a2"] * l)
    l = jnp.dot(l.astype(bf), p["w4"].astype(bf),
                preferred_element_type=jnp.float32) + p["b4"]
    return out + l


# ----------------------------------------------------------------------------
# Main
# ----------------------------------------------------------------------------
if __name__ == "__main__":
    # Small config: nfeat=64, hidden=128, nclass=32, num_hops=3.
    # N deliberately NOT a multiple of the node tile to exercise the padded tail.
    N, F, H, C, K = 1000, 64, 128, 32, 3

    key = jax.random.PRNGKey(0)
    keys = jax.random.split(key, 12)

    feats = jax.random.normal(keys[0], (K, N, F), dtype=jnp.float32)
    label_emb = jax.random.normal(keys[1], (N, C), dtype=jnp.float32)

    def w(k, shape, scale=0.1):
        return jax.random.normal(k, shape, dtype=jnp.float32) * scale

    params = {
        # lr_att: Linear(2F, 1) (weight split into left/right halves), zero bias
        "wa_l": w(keys[2], (1, F)),
        "wa_r": w(keys[3], (1, F)),
        "ba":   jnp.zeros((1, 1), jnp.float32),
        # lr_output (FeedForwardNetII): Dense(F,H) -> PReLU -> Dense(H,C)
        # (b1/b2 are the slots for folded BatchNorm stats/affine; identity here)
        "w1": w(keys[4], (F, H)), "b1": jnp.zeros((1, H), jnp.float32),
        "a1": jnp.full((1, 1), 0.25, jnp.float32),          # PReLU default init
        "w2": w(keys[5], (H, C)), "b2": jnp.zeros((1, C), jnp.float32),
        # label_fc (FeedForwardNet): Linear(C,H) -> PReLU -> Linear(H,C)
        "w3": w(keys[6], (C, H)), "b3": w(keys[7], (1, H), 0.05),
        "a2": jnp.full((1, 1), 0.25, jnp.float32),
        "w4": w(keys[8], (H, C)), "b4": w(keys[9], (1, C), 0.05),
    }

    # Reference consumes the same bf16-stored streaming inputs as the kernel.
    ref = ref_forward(feats.astype(jnp.bfloat16), label_emb.astype(jnp.bfloat16), params)
    ref = np.asarray(jax.block_until_ready(ref))

    # f32-output variant: tight check.
    out32 = r_gamlp_rlu_forward(feats, label_emb, params, out_dtype=jnp.float32)
    out32 = np.asarray(jax.block_until_ready(out32))
    if not np.allclose(out32, ref, rtol=3e-3, atol=3e-3):
        err = np.max(np.abs(out32 - ref))
        raise AssertionError(f"f32-output kernel does not match reference (max abs err {err})")

    # Default bf16-output variant (halved output HBM traffic): bf16-level check.
    outbf = r_gamlp_rlu_forward(feats, label_emb, params)
    outbf = np.asarray(jax.block_until_ready(outbf)).astype(np.float32)
    if not np.allclose(outbf, ref, rtol=1e-2, atol=1e-2):
        err = np.max(np.abs(outbf - ref))
        raise AssertionError(f"bf16-output kernel does not match reference (max abs err {err})")

    print("KERNEL_OK")
</pallas_src>

<mosaic_0001>
module attributes {stable_mosaic.version = 11 : i64} {
  func.func @_gamlp_kernel(%arg0: i32, %arg1: memref<1xf32, #tpu.memory_space<smem>>, %arg2: memref<3x512x64xbf16, #tpu.memory_space<vmem>>, %arg3: memref<512x32xbf16, #tpu.memory_space<vmem>>, %arg4: memref<1x64xf32, #tpu.memory_space<vmem>>, %arg5: memref<1x64xf32, #tpu.memory_space<vmem>>, %arg6: memref<96x256xbf16, #tpu.memory_space<vmem>>, %arg7: memref<1x256xf32, #tpu.memory_space<vmem>>, %arg8: memref<1x256xf32, #tpu.memory_space<vmem>>, %arg9: memref<256x128xbf16, #tpu.memory_space<vmem>>, %arg10: memref<1x128xf32, #tpu.memory_space<vmem>>, %arg11: memref<512x128xf32, #tpu.memory_space<vmem>>) attributes {dimension_semantics = [#tpu.dimension_semantics<parallel>], iteration_bounds = array<i64: 2>, scalar_prefetch = 0 : i64, scratch_operands = 0 : i64, tpu.core_type = #tpu.core_type<tc>, window_params = [{transform_indices = @transform_0, window_bounds = array<i64: 1>}, {transform_indices = @transform_1, window_bounds = array<i64: 3, 512, 64>}, {transform_indices = @transform_2, window_bounds = array<i64: 512, 32>}, {pipeline_mode = #tpu.pipeline_mode<synchronous>, transform_indices = @transform_3, window_bounds = array<i64: 1, 64>}, {pipeline_mode = #tpu.pipeline_mode<synchronous>, transform_indices = @transform_4, window_bounds = array<i64: 1, 64>}, {pipeline_mode = #tpu.pipeline_mode<synchronous>, transform_indices = @transform_5, window_bounds = array<i64: 96, 256>}, {pipeline_mode = #tpu.pipeline_mode<synchronous>, transform_indices = @transform_6, window_bounds = array<i64: 1, 256>}, {pipeline_mode = #tpu.pipeline_mode<synchronous>, transform_indices = @transform_7, window_bounds = array<i64: 1, 256>}, {pipeline_mode = #tpu.pipeline_mode<synchronous>, transform_indices = @transform_8, window_bounds = array<i64: 256, 128>}, {pipeline_mode = #tpu.pipeline_mode<synchronous>, transform_indices = @transform_9, window_bounds = array<i64: 1, 128>}, {transform_indices = @transform_10, window_bounds = array<i64: 512, 128>}]} {
    %c0 = arith.constant 0 : index
    %0 = memref.load %arg1[%c0] : memref<1xf32, #tpu.memory_space<smem>>
    %c0_0 = arith.constant 0 : index
    %c0_1 = arith.constant 0 : index
    %1 = vector.load %arg4[%c0_0, %c0_1] : memref<1x64xf32, #tpu.memory_space<vmem>>, vector<1x64xf32>
    %c0_2 = arith.constant 0 : index
    %c0_3 = arith.constant 0 : index
    %2 = vector.load %arg5[%c0_2, %c0_3] : memref<1x64xf32, #tpu.memory_space<vmem>>, vector<1x64xf32>
    %c0_4 = arith.constant 0 : index
    %c0_5 = arith.constant 0 : index
    %c0_6 = arith.constant 0 : index
    %3 = vector.load %arg2[%c0_4, %c0_5, %c0_6] : memref<3x512x64xbf16, #tpu.memory_space<vmem>>, vector<1x512x64xbf16>
    %4 = vector.shape_cast %3 : vector<1x512x64xbf16> to vector<512x64xbf16>
    %5 = arith.extf %4 : vector<512x64xbf16> to vector<512x64xf32>
    %6 = vector.broadcast %1 : vector<1x64xf32> to vector<512x64xf32>
    %7 = arith.mulf %5, %6 : vector<512x64xf32>
    %cst = arith.constant dense<0.000000e+00> : vector<512xf32>
    %8 = vector.multi_reduction <add>, %7, %cst [1] : vector<512x64xf32> to vector<512xf32>
    %9 = vector.shape_cast %8 : vector<512xf32> to vector<512x1xf32>
    %10 = vector.broadcast %2 : vector<1x64xf32> to vector<512x64xf32>
    %11 = arith.mulf %5, %10 : vector<512x64xf32>
    %cst_7 = arith.constant dense<0.000000e+00> : vector<512xf32>
    %12 = vector.multi_reduction <add>, %11, %cst_7 [1] : vector<512x64xf32> to vector<512xf32>
    %13 = vector.shape_cast %12 : vector<512xf32> to vector<512x1xf32>
    %14 = vector.broadcast %0 : f32 to vector<512x1xf32>
    %15 = arith.addf %13, %14 : vector<512x1xf32>
    %c1 = arith.constant 1 : index
    %c0_8 = arith.constant 0 : index
    %c0_9 = arith.constant 0 : index
    %16 = vector.load %arg2[%c1, %c0_8, %c0_9] : memref<3x512x64xbf16, #tpu.memory_space<vmem>>, vector<1x512x64xbf16>
    %17 = vector.shape_cast %16 : vector<1x512x64xbf16> to vector<512x64xbf16>
    %18 = arith.extf %17 : vector<512x64xbf16> to vector<512x64xf32>
    %19 = vector.broadcast %1 : vector<1x64xf32> to vector<512x64xf32>
    %20 = arith.mulf %18, %19 : vector<512x64xf32>
    %cst_10 = arith.constant dense<0.000000e+00> : vector<512xf32>
    %21 = vector.multi_reduction <add>, %20, %cst_10 [1] : vector<512x64xf32> to vector<512xf32>
    %22 = vector.shape_cast %21 : vector<512xf32> to vector<512x1xf32>
    %23 = vector.broadcast %2 : vector<1x64xf32> to vector<512x64xf32>
    %24 = arith.mulf %18, %23 : vector<512x64xf32>
    %cst_11 = arith.constant dense<0.000000e+00> : vector<512xf32>
    %25 = vector.multi_reduction <add>, %24, %cst_11 [1] : vector<512x64xf32> to vector<512xf32>
    %26 = vector.shape_cast %25 : vector<512xf32> to vector<512x1xf32>
    %27 = vector.broadcast %0 : f32 to vector<512x1xf32>
    %28 = arith.addf %26, %27 : vector<512x1xf32>
    %c2 = arith.constant 2 : index
    %c0_12 = arith.constant 0 : index
    %c0_13 = arith.constant 0 : index
    %29 = vector.load %arg2[%c2, %c0_12, %c0_13] : memref<3x512x64xbf16, #tpu.memory_space<vmem>>, vector<1x512x64xbf16>
    %30 = vector.shape_cast %29 : vector<1x512x64xbf16> to vector<512x64xbf16>
    %31 = arith.extf %30 : vector<512x64xbf16> to vector<512x64xf32>
    %32 = vector.broadcast %2 : vector<1x64xf32> to vector<512x64xf32>
    %33 = arith.mulf %31, %32 : vector<512x64xf32>
    %cst_14 = arith.constant dense<0.000000e+00> : vector<512xf32>
    %34 = vector.multi_reduction <add>, %33, %cst_14 [1] : vector<512x64xf32> to vector<512xf32>
    %35 = vector.shape_cast %34 : vector<512xf32> to vector<512x1xf32>
    %36 = vector.broadcast %0 : f32 to vector<512x1xf32>
    %37 = arith.addf %35, %36 : vector<512x1xf32>
    %38 = arith.addf %9, %15 : vector<512x1xf32>
    %39 = arith.negf %38 : vector<512x1xf32>
    %40 = math.exp %39 : vector<512x1xf32>
    %cst_15 = arith.constant 1.000000e+00 : f32
    %41 = vector.broadcast %cst_15 : f32 to vector<512x1xf32>
    %42 = arith.addf %41, %40 : vector<512x1xf32>
    %43 = arith.divf %41, %42 : vector<512x1xf32>
    %44 = math.exp %43 : vector<512x1xf32>
    %45 = arith.mulf %44, %9 : vector<512x1xf32>
    %46 = tpu.reciprocal %44 {approx = true} : vector<512x1xf32> -> vector<512x1xf32>
    %47 = arith.mulf %44, %46 : vector<512x1xf32>
    %cst_16 = arith.constant 2.000000e+00 : f32
    %48 = vector.broadcast %cst_16 : f32 to vector<512x1xf32>
    %49 = arith.subf %48, %47 : vector<512x1xf32>
    %50 = arith.mulf %46, %49 : vector<512x1xf32>
    %51 = arith.mulf %45, %50 : vector<512x1xf32>
    %52 = arith.addf %51, %28 : vector<512x1xf32>
    %53 = arith.negf %52 : vector<512x1xf32>
    %54 = math.exp %53 : vector<512x1xf32>
    %cst_17 = arith.constant 1.000000e+00 : f32
    %55 = vector.broadcast %cst_17 : f32 to vector<512x1xf32>
    %56 = arith.addf %55, %54 : vector<512x1xf32>
    %57 = arith.divf %55, %56 : vector<512x1xf32>
    %58 = math.exp %57 : vector<512x1xf32>
    %59 = arith.addf %44, %58 : vector<512x1xf32>
    %60 = arith.mulf %58, %22 : vector<512x1xf32>
    %61 = arith.addf %45, %60 : vector<512x1xf32>
    %62 = tpu.reciprocal %59 {approx = true} : vector<512x1xf32> -> vector<512x1xf32>
    %63 = arith.mulf %59, %62 : vector<512x1xf32>
    %cst_18 = arith.constant 2.000000e+00 : f32
    %64 = vector.broadcast %cst_18 : f32 to vector<512x1xf32>
    %65 = arith.subf %64, %63 : vector<512x1xf32>
    %66 = arith.mulf %62, %65 : vector<512x1xf32>
    %67 = arith.mulf %61, %66 : vector<512x1xf32>
    %68 = arith.addf %67, %37 : vector<512x1xf32>
    %69 = arith.negf %68 : vector<512x1xf32>
    %70 = math.exp %69 : vector<512x1xf32>
    %cst_19 = arith.constant 1.000000e+00 : f32
    %71 = vector.broadcast %cst_19 : f32 to vector<512x1xf32>
    %72 = arith.addf %71, %70 : vector<512x1xf32>
    %73 = arith.divf %71, %72 : vector<512x1xf32>
    %74 = math.exp %73 : vector<512x1xf32>
    %75 = arith.addf %59, %74 : vector<512x1xf32>
    %76 = tpu.reciprocal %75 {approx = true} : vector<512x1xf32> -> vector<512x1xf32>
    %77 = arith.mulf %75, %76 : vector<512x1xf32>
    %cst_20 = arith.constant 2.000000e+00 : f32
    %78 = vector.broadcast %cst_20 : f32 to vector<512x1xf32>
    %79 = arith.subf %78, %77 : vector<512x1xf32>
    %80 = arith.mulf %76, %79 : vector<512x1xf32>
    %81 = arith.mulf %44, %80 : vector<512x1xf32>
    %c0_21 = arith.constant 0 : index
    %c0_22 = arith.constant 0 : index
    %c0_23 = arith.constant 0 : index
    %82 = vector.load %arg2[%c0_21, %c0_22, %c0_23] : memref<3x512x64xbf16, #tpu.memory_space<vmem>>, vector<1x512x64xbf16>
    %83 = vector.shape_cast %82 : vector<1x512x64xbf16> to vector<512x64xbf16>
    %84 = arith.extf %83 : vector<512x64xbf16> to vector<512x64xf32>
    %85 = vector.broadcast %81 : vector<512x1xf32> to vector<512x64xf32>
    %86 = arith.mulf %85, %84 : vector<512x64xf32>
    %87 = arith.mulf %58, %80 : vector<512x1xf32>
    %c1_24 = arith.constant 1 : index
    %c0_25 = arith.constant 0 : index
    %c0_26 = arith.constant 0 : index
    %88 = vector.load %arg2[%c1_24, %c0_25, %c0_26] : memref<3x512x64xbf16, #tpu.memory_space<vmem>>, vector<1x512x64xbf16>
    %89 = vector.shape_cast %88 : vector<1x512x64xbf16> to vector<512x64xbf16>
    %90 = arith.extf %89 : vector<512x64xbf16> to vector<512x64xf32>
    %91 = vector.broadcast %87 : vector<512x1xf32> to vector<512x64xf32>
    %92 = arith.mulf %91, %90 : vector<512x64xf32>
    %93 = arith.addf %86, %92 : vector<512x64xf32>
    %94 = arith.mulf %74, %80 : vector<512x1xf32>
    %c2_27 = arith.constant 2 : index
    %c0_28 = arith.constant 0 : index
    %c0_29 = arith.constant 0 : index
    %95 = vector.load %arg2[%c2_27, %c0_28, %c0_29] : memref<3x512x64xbf16, #tpu.memory_space<vmem>>, vector<1x512x64xbf16>
    %96 = vector.shape_cast %95 : vector<1x512x64xbf16> to vector<512x64xbf16>
    %97 = arith.extf %96 : vector<512x64xbf16> to vector<512x64xf32>
    %98 = vector.broadcast %94 : vector<512x1xf32> to vector<512x64xf32>
    %99 = arith.mulf %98, %97 : vector<512x64xf32>
    %100 = arith.addf %93, %99 : vector<512x64xf32>
    %c0_30 = arith.constant 0 : index
    %c0_31 = arith.constant 0 : index
    %101 = vector.load %arg3[%c0_30, %c0_31] : memref<512x32xbf16, #tpu.memory_space<vmem>>, vector<512x32xbf16>
    %102 = arith.extf %101 : vector<512x32xbf16> to vector<512x32xf32>
    %103 = tpu.concatenate %100, %102 in 1 : vector<512x64xf32>, vector<512x32xf32> -> vector<512x96xf32>
    %104 = arith.truncf %103 : vector<512x96xf32> to vector<512x96xbf16>
    %c0_32 = arith.constant 0 : index
    %c0_33 = arith.constant 0 : index
    %105 = vector.load %arg6[%c0_32, %c0_33] : memref<96x256xbf16, #tpu.memory_space<vmem>>, vector<96x256xbf16>
    %cst_34 = arith.constant dense<0.000000e+00> : vector<512x256xf32>
    %106 = tpu.matmul %104, %105, %cst_34 {dimension_numbers = #tpu.dot_dimension_numbers<[1], [0], [0], [1], [0, 0, 1, 1], [], []>} : vector<512x96xbf16>, vector<96x256xbf16>, vector<512x256xf32> -> vector<512x256xf32>
    %c0_35 = arith.constant 0 : index
    %c0_36 = arith.constant 0 : index
    %107 = vector.load %arg7[%c0_35, %c0_36] : memref<1x256xf32, #tpu.memory_space<vmem>>, vector<1x256xf32>
    %108 = vector.broadcast %107 : vector<1x256xf32> to vector<512x256xf32>
    %109 = arith.addf %106, %108 : vector<512x256xf32>
    %cst_37 = arith.constant 0.000000e+00 : f32
    %110 = vector.broadcast %cst_37 : f32 to vector<512x256xf32>
    %111 = arith.cmpf oge, %109, %110 : vector<512x256xf32>
    %c0_38 = arith.constant 0 : index
    %c0_39 = arith.constant 0 : index
    %112 = vector.load %arg8[%c0_38, %c0_39] : memref<1x256xf32, #tpu.memory_space<vmem>>, vector<1x256xf32>
    %113 = vector.broadcast %112 : vector<1x256xf32> to vector<512x256xf32>
    %114 = arith.mulf %113, %109 : vector<512x256xf32>
    %115 = arith.select %111, %109, %114 : vector<512x256xi1>, vector<512x256xf32>
    %116 = arith.truncf %115 : vector<512x256xf32> to vector<512x256xbf16>
    %c0_40 = arith.constant 0 : index
    %c0_41 = arith.constant 0 : index
    %117 = vector.load %arg9[%c0_40, %c0_41] : memref<256x128xbf16, #tpu.memory_space<vmem>>, vector<256x128xbf16>
    %cst_42 = arith.constant dense<0.000000e+00> : vector<512x128xf32>
    %118 = tpu.matmul %116, %117, %cst_42 {dimension_numbers = #tpu.dot_dimension_numbers<[1], [0], [0], [1], [0, 0, 1, 1], [], []>} : vector<512x256xbf16>, vector<256x128xbf16>, vector<512x128xf32> -> vector<512x128xf32>
    %c0_43 = arith.constant 0 : index
    %c0_44 = arith.constant 0 : index
    %119 = vector.load %arg10[%c0_43, %c0_44] : memref<1x128xf32, #tpu.memory_space<vmem>>, vector<1x128xf32>
    %120 = vector.broadcast %119 : vector<1x128xf32> to vector<512x128xf32>
    %121 = arith.addf %118, %120 : vector<512x128xf32>
    %c0_45 = arith.constant 0 : index
    %c0_46 = arith.constant 0 : index
    %122 = vector.load %arg11[%c0_45, %c0_46] : memref<512x128xf32, #tpu.memory_space<vmem>>, vector<512x128xf32>
    tpu.vector_store %arg11[%c0_45, %c0_46], %121 {strides = array<i32>} : memref<512x128xf32, #tpu.memory_space<vmem>>, vector<512x128xf32>,
    return
  }
  func.func @transform_0(%arg0: i32) -> i32 {
    %c0_i32 = arith.constant 0 : i32
    %c0_i32_0 = arith.constant 0 : i32
    return %c0_i32 : i32
  }
  func.func @transform_1(%arg0: i32) -> (i32, i32, i32) {
    %c0_i32 = arith.constant 0 : i32
    %c0_i32_0 = arith.constant 0 : i32
    %c0_i32_1 = arith.constant 0 : i32
    return %c0_i32, %arg0, %c0_i32_0 : i32, i32, i32
  }
  func.func @transform_2(%arg0: i32) -> (i32, i32) {
    %c0_i32 = arith.constant 0 : i32
    %c0_i32_0 = arith.constant 0 : i32
    return %arg0, %c0_i32 : i32, i32
  }
  func.func @transform_3(%arg0: i32) -> (i32, i32) {
    %c0_i32 = arith.constant 0 : i32
    %c0_i32_0 = arith.constant 0 : i32
    %c0_i32_1 = arith.constant 0 : i32
    return %c0_i32, %c0_i32_0 : i32, i32
  }
  func.func @transform_4(%arg0: i32) -> (i32, i32) {
    %c0_i32 = arith.constant 0 : i32
    %c0_i32_0 = arith.constant 0 : i32
    %c0_i32_1 = arith.constant 0 : i32
    return %c0_i32, %c0_i32_0 : i32, i32
  }
  func.func @transform_5(%arg0: i32) -> (i32, i32) {
    %c0_i32 = arith.constant 0 : i32
    %c0_i32_0 = arith.constant 0 : i32
    %c0_i32_1 = arith.constant 0 : i32
    return %c0_i32, %c0_i32_0 : i32, i32
  }
  func.func @transform_6(%arg0: i32) -> (i32, i32) {
    %c0_i32 = arith.constant 0 : i32
    %c0_i32_0 = arith.constant 0 : i32
    %c0_i32_1 = arith.constant 0 : i32
    return %c0_i32, %c0_i32_0 : i32, i32
  }
  func.func @transform_7(%arg0: i32) -> (i32, i32) {
    %c0_i32 = arith.constant 0 : i32
    %c0_i32_0 = arith.constant 0 : i32
    %c0_i32_1 = arith.constant 0 : i32
    return %c0_i32, %c0_i32_0 : i32, i32
  }
  func.func @transform_8(%arg0: i32) -> (i32, i32) {
    %c0_i32 = arith.constant 0 : i32
    %c0_i32_0 = arith.constant 0 : i32
    %c0_i32_1 = arith.constant 0 : i32
    return %c0_i32, %c0_i32_0 : i32, i32
  }
  func.func @transform_9(%arg0: i32) -> (i32, i32) {
    %c0_i32 = arith.constant 0 : i32
    %c0_i32_0 = arith.constant 0 : i32
    %c0_i32_1 = arith.constant 0 : i32
    return %c0_i32, %c0_i32_0 : i32, i32
  }
  func.func @transform_10(%arg0: i32) -> (i32, i32) {
    %c0_i32 = arith.constant 0 : i32
    %c0_i32_0 = arith.constant 0 : i32
    return %arg0, %c0_i32 : i32, i32
  }
}

</mosaic_0001>

<llo_original>
// kernel: _forward_impl.1
$region0: #{_forward_impl.1}
  #allocation0 [shape = 'u32[]', space=smem, size = 0x4, offset = 0x4, fixed_abs, tag = 'smem constant byte address 0x4 - core index']
  #allocation1 [shape = 'u32[144,128]{1,0:T(1,128)}', space=vmem, size = 0x12000, scoped, tag = 'internal scratch']
  #allocation2 [shape = 'f32[1]{0:T(128)S(6)}', space=smem, size = 0x200, scoped, tag = 'scoped memory for _forward_impl.1']
  %s0 = inlined_call_operand.<no memory space> [shape: f32[1], index: 0, kind: input, shape index: {}]
  %s1 = inlined_call_operand.vmem [shape: bf16[3,1024,64], index: 1, kind: input, shape index: {}]
  %s2 = inlined_call_operand.vmem [shape: bf16[1024,32], index: 2, kind: input, shape index: {}]
  %s3 = inlined_call_operand.vmem [shape: f32[1,64], index: 3, kind: input, shape index: {}]
  %s4 = inlined_call_operand.vmem [shape: f32[1,64], index: 4, kind: input, shape index: {}]
  %s5 = inlined_call_operand.vmem [shape: bf16[96,256], index: 5, kind: input, shape index: {}]
  %s6 = inlined_call_operand.vmem [shape: f32[1,256], index: 6, kind: input, shape index: {}]
  %s7 = inlined_call_operand.vmem [shape: f32[1,256], index: 7, kind: input, shape index: {}]
  %s8 = inlined_call_operand.vmem [shape: bf16[256,128], index: 8, kind: input, shape index: {}]
  %s9 = inlined_call_operand.vmem [shape: f32[1,128], index: 9, kind: input, shape index: {}]
  %s10 = inlined_call_operand.vmem [shape: f32[1024,128], index: 10, kind: output, shape index: {}]
  %s11 = sld [smem:[#allocation0]]
  $region114: #{_forward_impl.1} parent=0
    _
  %s13 = ssub.s32 1, %s11
  %s14 = scalar_select 0, %s13, %s11
  %15 = sst [smem:[#allocation2]] %s0
  $region1: #{_forward_impl.1} parent=0
    #allocation3 [shape = 'u8[786432]{0}', space=vmem, size = 0xc0000, scoped, tag = 'input window, operand 1']
    loop: start=0, step=1, limit=4
    $region2: #{_forward_impl.1} parent=1 // loop_pre_header
      _
    $region3: #{_forward_impl.1} parent=1 // loop_header
      %s17 = sphi 0, %s21
      %p18 = scmp.ge.s32.totalorder %s17, 4
      %s25 = sphi 0, %s25
      %s27 = sphi 0, %s25
      %s28 = sphi 0, %s27
      %s42 = sphi 0, %s28
      %s48 = sphi 0, %s50
      %s51 = sphi 0, %s48
      %s52 = sphi 0, %s51
      %s68 = sphi 0, %s52
      %s74 = sphi 0, %s76
      %s77 = sphi 0, %s74
      %s78 = sphi 0, %s77
      %s94 = sphi 0, %s78
      %s98 = sphi 0, %s98
      %s100 = sphi 0, %s98
      %s101 = sphi 0, %s100
      %s115 = sphi 0, %s101
      %s119 = sphi 0, %s119
      %s121 = sphi 0, %s119
      %s122 = sphi 0, %s121
      %s136 = sphi 0, %s122
      %s140 = sphi 0, %s140
      %s142 = sphi 0, %s140
      %s143 = sphi 0, %s142
      %s157 = sphi 0, %s143
      %s161 = sphi 0, %s161
      %s163 = sphi 0, %s161
      %s164 = sphi 0, %s163
      %s178 = sphi 0, %s164
      %s182 = sphi 0, %s182
      %s184 = sphi 0, %s182
      %s185 = sphi 0, %s184
      %s199 = sphi 0, %s185
      %s203 = sphi 0, %s203
      %s205 = sphi 0, %s203
      %s206 = sphi 0, %s205
      %s220 = sphi 0, %s206
      %s224 = sphi 0, %s224
      %s226 = sphi 0, %s224
      %s227 = sphi 0, %s226
      %s241 = sphi 0, %s227
      %s247 = sphi 0, %s249
      %s250 = sphi 0, %s247
      %s251 = sphi 0, %s250
      %s267 = sphi 0, %s251
    $region4: #{_forward_impl.1} parent=1 // loop_header_branch
      %20 = sbr.rel (%p18) target = $region8
    $region5: #{_forward_impl.1} parent=1 // loop_body
      %s22 = ssub.s32 %s17, 1
      %s23 = ssub.s32 %s17, 2
      %s24 = sadd.s32 %s17, 1
      %s26 = sadd.s32 %s25, 1
      %p29 = scmp.eq.s32.totalorder %s17, 1
      %p30 = scmp.ne.s32.totalorder %s25, %s27
      %p31 = scmp.eq.s32.totalorder %s17, 0
      %p32 = por %p30, %p31
      %p33 = scmp.ne.s32.totalorder %s25, %s27
      %p34 = scmp.eq.s32.totalorder %s22, 1
      %p35 = por %p33, %p34
      %p36 = scmp.ne.s32.totalorder %s27, %s28
      %p37 = scmp.eq.s32.totalorder %s22, 0
      %p38 = por %p36, %p37
      %p39 = scmp.ne.s32.totalorder %s27, %s28
      %p40 = scmp.eq.s32.totalorder %s23, 1
      %p41 = por %p39, %p40
      %p43 = scmp.ne.s32.totalorder %s28, %s42
      %p44 = scmp.eq.s32.totalorder %s23, 0
      %p45 = por %p43, %p44
      %s46 = ssub.s32 %s17, %s24
      %p47 = scmp.eq.s32.totalorder %s46, 0
      %s49 = sadd.s32 %s48, 1
      %s50 = scalar_select %p47, %s48, %s49
      %p53 = pneg %p47
      %p54 = scmp.eq.s32.totalorder %s17, 1
      %p55 = por %p53, %p54
      %p56 = scmp.ne.s32.totalorder %s48, %s51
      %p57 = scmp.eq.s32.totalorder %s17, 0
      %p58 = por %p56, %p57
      %p59 = scmp.ne.s32.totalorder %s48, %s51
      %p60 = scmp.eq.s32.totalorder %s22, 1
      %p61 = por %p59, %p60
      %p62 = scmp.ne.s32.totalorder %s51, %s52
      %p63 = scmp.eq.s32.totalorder %s22, 0
      %p64 = por %p62, %p63
      %p65 = scmp.ne.s32.totalorder %s51, %s52
      %p66 = scmp.eq.s32.totalorder %s23, 1
      %p67 = por %p65, %p66
      %p69 = scmp.ne.s32.totalorder %s52, %s68
      %p70 = scmp.eq.s32.totalorder %s23, 0
      %p71 = por %p69, %p70
      %s72 = ssub.s32 %s17, %s24
      %p73 = scmp.eq.s32.totalorder %s72, 0
      %s75 = sadd.s32 %s74, 1
      %s76 = scalar_select %p73, %s74, %s75
      %p79 = pneg %p73
      %p80 = scmp.eq.s32.totalorder %s17, 1
      %p81 = por %p79, %p80
      %p82 = scmp.ne.s32.totalorder %s74, %s77
      %p83 = scmp.eq.s32.totalorder %s17, 0
      %p84 = por %p82, %p83
      %p85 = scmp.ne.s32.totalorder %s74, %s77
      %p86 = scmp.eq.s32.totalorder %s22, 1
      %p87 = por %p85, %p86
      %p88 = scmp.ne.s32.totalorder %s77, %s78
      %p89 = scmp.eq.s32.totalorder %s22, 0
      %p90 = por %p88, %p89
      %p91 = scmp.ne.s32.totalorder %s77, %s78
      %p92 = scmp.eq.s32.totalorder %s23, 1
      %p93 = por %p91, %p92
      %p95 = scmp.ne.s32.totalorder %s78, %s94
      %p96 = scmp.eq.s32.totalorder %s23, 0
      %p97 = por %p95, %p96
      %s99 = sadd.s32 %s98, 1
      %p102 = scmp.eq.s32.totalorder %s17, 1
      %p103 = scmp.ne.s32.totalorder %s98, %s100
      %p104 = scmp.eq.s32.totalorder %s17, 0
      %p105 = por %p103, %p104
      %p106 = scmp.ne.s32.totalorder %s98, %s100
      %p107 = scmp.eq.s32.totalorder %s22, 1
      %p108 = por %p106, %p107
      %p109 = scmp.ne.s32.totalorder %s100, %s101
      %p110 = scmp.eq.s32.totalorder %s22, 0
      %p111 = por %p109, %p110
      %p112 = scmp.ne.s32.totalorder %s100, %s101
      %p113 = scmp.eq.s32.totalorder %s23, 1
      %p114 = por %p112, %p113
      %p116 = scmp.ne.s32.totalorder %s101, %s115
      %p117 = scmp.eq.s32.totalorder %s23, 0
      %p118 = por %p116, %p117
      %s120 = sadd.s32 %s119, 1
      %p123 = scmp.eq.s32.totalorder %s17, 1
      %p124 = scmp.ne.s32.totalorder %s119, %s121
      %p125 = scmp.eq.s32.totalorder %s17, 0
      %p126 = por %p124, %p125
      %p127 = scmp.ne.s32.totalorder %s119, %s121
      %p128 = scmp.eq.s32.totalorder %s22, 1
      %p129 = por %p127, %p128
      %p130 = scmp.ne.s32.totalorder %s121, %s122
      %p131 = scmp.eq.s32.totalorder %s22, 0
      %p132 = por %p130, %p131
      %p133 = scmp.ne.s32.totalorder %s121, %s122
      %p134 = scmp.eq.s32.totalorder %s23, 1
      %p135 = por %p133, %p134
      %p137 = scmp.ne.s32.totalorder %s122, %s136
      %p138 = scmp.eq.s32.totalorder %s23, 0
      %p139 = por %p137, %p138
      %s141 = sadd.s32 %s140, 1
      %p144 = scmp.eq.s32.totalorder %s17, 1
      %p145 = scmp.ne.s32.totalorder %s140, %s142
      %p146 = scmp.eq.s32.totalorder %s17, 0
      %p147 = por %p145, %p146
      %p148 = scmp.ne.s32.totalorder %s140, %s142
      %p149 = scmp.eq.s32.totalorder %s22, 1
      %p150 = por %p148, %p149
      %p151 = scmp.ne.s32.totalorder %s142, %s143
      %p152 = scmp.eq.s32.totalorder %s22, 0
      %p153 = por %p151, %p152
      %p154 = scmp.ne.s32.totalorder %s142, %s143
      %p155 = scmp.eq.s32.totalorder %s23, 1
      %p156 = por %p154, %p155
      %p158 = scmp.ne.s32.totalorder %s143, %s157
      %p159 = scmp.eq.s32.totalorder %s23, 0
      %p160 = por %p158, %p159
      %s162 = sadd.s32 %s161, 1
      %p165 = scmp.eq.s32.totalorder %s17, 1
      %p166 = scmp.ne.s32.totalorder %s161, %s163
      %p167 = scmp.eq.s32.totalorder %s17, 0
      %p168 = por %p166, %p167
      %p169 = scmp.ne.s32.totalorder %s161, %s163
      %p170 = scmp.eq.s32.totalorder %s22, 1
      %p171 = por %p169, %p170
      %p172 = scmp.ne.s32.totalorder %s163, %s164
      %p173 = scmp.eq.s32.totalorder %s22, 0
      %p174 = por %p172, %p173
      %p175 = scmp.ne.s32.totalorder %s163, %s164
      %p176 = scmp.eq.s32.totalorder %s23, 1
      %p177 = por %p175, %p176
      %p179 = scmp.ne.s32.totalorder %s164, %s178
      %p180 = scmp.eq.s32.totalorder %s23, 0
      %p181 = por %p179, %p180
      %s183 = sadd.s32 %s182, 1
      %p186 = scmp.eq.s32.totalorder %s17, 1
      %p187 = scmp.ne.s32.totalorder %s182, %s184
      %p188 = scmp.eq.s32.totalorder %s17, 0
      %p189 = por %p187, %p188
      %p190 = scmp.ne.s32.totalorder %s182, %s184
      %p191 = scmp.eq.s32.totalorder %s22, 1
      %p192 = por %p190, %p191
      %p193 = scmp.ne.s32.totalorder %s184, %s185
      %p194 = scmp.eq.s32.totalorder %s22, 0
      %p195 = por %p193, %p194
      %p196 = scmp.ne.s32.totalorder %s184, %s185
      %p197 = scmp.eq.s32.totalorder %s23, 1
      %p198 = por %p196, %p197
      %p200 = scmp.ne.s32.totalorder %s185, %s199
      %p201 = scmp.eq.s32.totalorder %s23, 0
      %p202 = por %p200, %p201
      %s204 = sadd.s32 %s203, 1
      %p207 = scmp.eq.s32.totalorder %s17, 1
      %p208 = scmp.ne.s32.totalorder %s203, %s205
      %p209 = scmp.eq.s32.totalorder %s17, 0
      %p210 = por %p208, %p209
      %p211 = scmp.ne.s32.totalorder %s203, %s205
      %p212 = scmp.eq.s32.totalorder %s22, 1
      %p213 = por %p211, %p212
      %p214 = scmp.ne.s32.totalorder %s205, %s206
      %p215 = scmp.eq.s32.totalorder %s22, 0
      %p216 = por %p214, %p215
      %p217 = scmp.ne.s32.totalorder %s205, %s206
      %p218 = scmp.eq.s32.totalorder %s23, 1
      %p219 = por %p217, %p218
      %p221 = scmp.ne.s32.totalorder %s206, %s220
      %p222 = scmp.eq.s32.totalorder %s23, 0
      %p223 = por %p221, %p222
      %s225 = sadd.s32 %s224, 1
      %p228 = scmp.eq.s32.totalorder %s17, 1
      %p229 = scmp.ne.s32.totalorder %s224, %s226
      %p230 = scmp.eq.s32.totalorder %s17, 0
      %p231 = por %p229, %p230
      %p232 = scmp.ne.s32.totalorder %s224, %s226
      %p233 = scmp.eq.s32.totalorder %s22, 1
      %p234 = por %p232, %p233
      %p235 = scmp.ne.s32.totalorder %s226, %s227
      %p236 = scmp.eq.s32.totalorder %s22, 0
      %p237 = por %p235, %p236
      %p238 = scmp.ne.s32.totalorder %s226, %s227
      %p239 = scmp.eq.s32.totalorder %s23, 1
      %p240 = por %p238, %p239
      %p242 = scmp.ne.s32.totalorder %s227, %s241
      %p243 = scmp.eq.s32.totalorder %s23, 0
      %p244 = por %p242, %p243
      %s245 = ssub.s32 %s17, %s24
      %p246 = scmp.eq.s32.totalorder %s245, 0
      %s248 = sadd.s32 %s247, 1
      %s249 = scalar_select %p246, %s247, %s248
      %p252 = pneg %p246
      %p253 = scmp.eq.s32.totalorder %s17, 1
      %p254 = por %p252, %p253
      %p255 = scmp.ne.s32.totalorder %s247, %s250
      %p256 = scmp.eq.s32.totalorder %s17, 0
      %p257 = por %p255, %p256
      %p258 = scmp.ne.s32.totalorder %s247, %s250
      %p259 = scmp.eq.s32.totalorder %s22, 1
      %p260 = por %p258, %p259
      %p261 = scmp.ne.s32.totalorder %s250, %s251
      %p262 = scmp.eq.s32.totalorder %s22, 0
      %p263 = por %p261, %p262
      %p264 = scmp.ne.s32.totalorder %s250, %s251
      %p265 = scmp.eq.s32.totalorder %s23, 1
      %p266 = por %p264, %p265
      %p268 = scmp.ne.s32.totalorder %s251, %s267
      %p269 = scmp.eq.s32.totalorder %s23, 0
      %p270 = por %p268, %p269
      %p271 = scmp.le.s32.totalorder 1, %s17
      %p272 = scmp.lt.s32.totalorder %s17, 3
      %p273 = pnand %p271, %p272
      %p274 = pneg %p273
      // Predicated region
      $region9: #{_forward_impl.1} parent=5 // pred_check
        _
      $region10: #{_forward_impl.1} parent=5 // pred_check_branch
        %276 = sbr.rel (%p273) target = $region12
      $region11: #{_forward_impl.1} parent=5 // pred_region
        %s277 = ssub.s32 %s17, 1
        // Predicated region
        $region13: #{_forward_impl.1} parent=11 // pred_check
          %p278 = pneg %p38
        $region14: #{_forward_impl.1} parent=11 // pred_check_branch
          %280 = sbr.rel (%p278) target = $region16
        $region15: #{_forward_impl.1} parent=11 // pred_region
          _
        $region16: #{_forward_impl.1} parent=11 // pred_fallthru
          _
        // Predicated region
        $region17: #{_forward_impl.1} parent=11 // pred_check
          %p281 = pneg %p111
        $region18: #{_forward_impl.1} parent=11 // pred_check_branch
          %283 = sbr.rel (%p281) target = $region20
        $region19: #{_forward_impl.1} parent=11 // pred_region
          _
        $region20: #{_forward_impl.1} parent=11 // pred_fallthru
          _
        // Predicated region
        $region21: #{_forward_impl.1} parent=11 // pred_check
          %p284 = pneg %p132
        $region22: #{_forward_impl.1} parent=11 // pred_check_branch
          %286 = sbr.rel (%p284) target = $region24
        $region23: #{_forward_impl.1} parent=11 // pred_region
          _
        $region24: #{_forward_impl.1} parent=11 // pred_fallthru
          _
        // Predicated region
        $region25: #{_forward_impl.1} parent=11 // pred_check
          %p287 = pneg %p153
        $region26: #{_forward_impl.1} parent=11 // pred_check_branch
          %289 = sbr.rel (%p287) target = $region28
        $region27: #{_forward_impl.1} parent=11 // pred_region
          _
        $region28: #{_forward_impl.1} parent=11 // pred_fallthru
          _
        // Predicated region
        $region29: #{_forward_impl.1} parent=11 // pred_check
          %p290 = pneg %p174
        $region30: #{_forward_impl.1} parent=11 // pred_check_branch
          %292 = sbr.rel (%p290) target = $region32
        $region31: #{_forward_impl.1} parent=11 // pred_region
          _
        $region32: #{_forward_impl.1} parent=11 // pred_fallthru
          _
        // Predicated region
        $region33: #{_forward_impl.1} parent=11 // pred_check
          %p293 = pneg %p195
        $region34: #{_forward_impl.1} parent=11 // pred_check_branch
          %295 = sbr.rel (%p293) target = $region36
        $region35: #{_forward_impl.1} parent=11 // pred_region
          _
        $region36: #{_forward_impl.1} parent=11 // pred_fallthru
          _
        // Predicated region
        $region37: #{_forward_impl.1} parent=11 // pred_check
          %p296 = pneg %p216
        $region38: #{_forward_impl.1} parent=11 // pred_check_branch
          %298 = sbr.rel (%p296) target = $region40
        $region39: #{_forward_impl.1} parent=11 // pred_region
          _
        $region40: #{_forward_impl.1} parent=11 // pred_fallthru
          _
        // Predicated region
        $region41: #{_forward_impl.1} parent=11 // pred_check
          %p299 = pneg %p237
        $region42: #{_forward_impl.1} parent=11 // pred_check_branch
          %301 = sbr.rel (%p299) target = $region44
        $region43: #{_forward_impl.1} parent=11 // pred_region
          _
        $region44: #{_forward_impl.1} parent=11 // pred_fallthru
          _
      $region12: #{_forward_impl.1} parent=5 // pred_fallthru
        _
      %p302 = scmp.lt.s32.totalorder %s17, 2
      // Predicated region
      $region45: #{_forward_impl.1} parent=5 // pred_check
        %p303 = pneg %p302
      $region46: #{_forward_impl.1} parent=5 // pred_check_branch
        %305 = sbr.rel (%p303) target = $region48
      $region47: #{_forward_impl.1} parent=5 // pred_region
        // Predicated region
        $region49: #{_forward_impl.1} parent=47 // pred_check
          %p306 = pneg %p58
        $region50: #{_forward_impl.1} parent=47 // pred_check_branch
          %308 = sbr.rel (%p306) target = $region52
        $region51: #{_forward_impl.1} parent=47 // pred_region
          %s309 = sand.u32 %s48, 1
          %s310 = sand.u32 %s48, 1
          %s311 = smul.addr %s310, 768
          %s312 = scalar_lea.vmem [#allocation3], %s311
          %s313 = smul.u32 64, %s17
          %s314 = smul.addr %s313, 4
          %s315 = scalar_lea.vmem %s1, %s314
          // Predicated region
          $region53: #{_forward_impl.1} parent=51 // pred_check
            _
          $region54: #{_forward_impl.1} parent=51 // pred_check_branch
            %317 = sbr.rel (0) target = $region56
          $region55: #{_forward_impl.1} parent=51 // pred_region
            // Predicated region
            $region57: #{_forward_impl.1} parent=55 // pred_check
              _
            $region58: #{_forward_impl.1} parent=55 // pred_check_branch
              %319 = sbr.rel target = $region60
            $region59: #{_forward_impl.1} parent=55 // pred_region
              // Predicated region
              $region72: #{_forward_impl.1} parent=59 // pred_check
                _
              $region73: #{_forward_impl.1} parent=59 // pred_check_branch
                %716 = sbr.rel (0) target = $region75
              $region74: #{_forward_impl.1} parent=59 // pred_region
                loop: start=0, step=1, limit=1
                $region76: #{_forward_impl.1} parent=74 // loop_pre_header
                  _
                $region77: #{_forward_impl.1} parent=74 // loop_header
                  %s718 = sphi 0, %s722
                  %p719 = scmp.ge.s32.totalorder %s718, 1
                  %s723 = sphi %s315, %s315
                  %s724 = sphi %s312, %s312
                $region78: #{_forward_impl.1} parent=74 // loop_header_branch
                  %721 = sbr.rel (%p719) target = $region82
                $region79: #{_forward_impl.1} parent=74 // loop_body
                  _
                $region80: #{_forward_impl.1} parent=74 // loop_footer
                  %s722 = sadd.s32 1, %s718
                $region81: #{_forward_impl.1} parent=74 // loop_footer_branch
                  %717 = sbr.rel target = $region77
                $region82: #{_forward_impl.1} parent=74 // loop_exit
                  _
                loop: start=0, step=1, limit=1
                $region83: #{_forward_impl.1} parent=74 // loop_pre_header
                  _
                $region84: #{_forward_impl.1} parent=74 // loop_header
                  %s727 = sphi 0, %s731
                  %p728 = scmp.ge.s32.totalorder %s727, 1
                  %s732 = sphi %s315, %s315
                  %s733 = sphi %s312, %s312
                $region85: #{_forward_impl.1} parent=74 // loop_header_branch
                  %730 = sbr.rel (%p728) target = $region89
                $region86: #{_forward_impl.1} parent=74 // loop_body
                  %v734 = vld [vmem:[%s732] sm:$0xf]
                  %735 = vst [vmem:[%s733] sm:$0xf] %v734
                  %v736 = vld [vmem:[%s732 + $0x4] sm:$0xf]
                  %737 = vst [vmem:[%s733 + $0x4] sm:$0xf] %v736
                  %v738 = vld [vmem:[%s732 + $0x8] sm:$0xf]
                  %739 = vst [vmem:[%s733 + $0x8] sm:$0xf] %v738
                  %v740 = vld [vmem:[%s732 + $0xc] sm:$0xf]
                  %741 = vst [vmem:[%s733 + $0xc] sm:$0xf] %v740
                  %v742 = vld [vmem:[%s732 + $0x10] sm:$0xf]
                  %743 = vst [vmem:[%s733 + $0x10] sm:$0xf] %v742
                  %v744 = vld [vmem:[%s732 + $0x14] sm:$0xf]
                  %745 = vst [vmem:[%s733 + $0x14] sm:$0xf] %v744
                  %v746 = vld [vmem:[%s732 + $0x18] sm:$0xf]
                  %747 = vst [vmem:[%s733 + $0x18] sm:$0xf] %v746
                  %v748 = vld [vmem:[%s732 + $0x1c] sm:$0xf]
                  %749 = vst [vmem:[%s733 + $0x1c] sm:$0xf] %v748
                  %v750 = vld [vmem:[%s732 + $0x20] sm:$0xf]
                  %751 = vst [vmem:[%s733 + $0x20] sm:$0xf] %v750
                  %v752 = vld [vmem:[%s732 + $0x24] sm:$0xf]
                  %753 = vst [vmem:[%s733 + $0x24] sm:$0xf] %v752
                  %v754 = vld [vmem:[%s732 + $0x28] sm:$0xf]
                  %755 = vst [vmem:[%s733 + $0x28] sm:$0xf] %v754
                  %v756 = vld [vmem:[%s732 + $0x2c] sm:$0xf]
                  %757 = vst [vmem:[%s733 + $0x2c] sm:$0xf] %v756
                  %v758 = vld [vmem:[%s732 + $0x30] sm:$0xf]
                  %759 = vst [vmem:[%s733 + $0x30] sm:$0xf] %v758
                  %v760 = vld [vmem:[%s732 + $0x34] sm:$0xf]
                  %761 = vst [vmem:[%s733 + $0x34] sm:$0xf] %v760
                  %v762 = vld [vmem:[%s732 + $0x38] sm:$0xf]
                  %763 = vst [vmem:[%s733 + $0x38] sm:$0xf] %v762
                  %v764 = vld [vmem:[%s732 + $0x3c] sm:$0xf]
                  %765 = vst [vmem:[%s733 + $0x3c] sm:$0xf] %v764
                  %v766 = vld [vmem:[%s732 + $0x40] sm:$0xf]
                  %767 = vst [vmem:[%s733 + $0x40] sm:$0xf] %v766
                  %v768 = vld [vmem:[%s732 + $0x44] sm:$0xf]
                  %769 = vst [vmem:[%s733 + $0x44] sm:$0xf] %v768
                  %v770 = vld [vmem:[%s732 + $0x48] sm:$0xf]
                  %771 = vst [vmem:[%s733 + $0x48] sm:$0xf] %v770
                  %v772 = vld [vmem:[%s732 + $0x4c] sm:$0xf]
                  %773 = vst [vmem:[%s733 + $0x4c] sm:$0xf] %v772
                  %v774 = vld [vmem:[%s732 + $0x50] sm:$0xf]
                  %775 = vst [vmem:[%s733 + $0x50] sm:$0xf] %v774
                  %v776 = vld [vmem:[%s732 + $0x54] sm:$0xf]
                  %777 = vst [vmem:[%s733 + $0x54] sm:$0xf] %v776
                  %v778 = vld [vmem:[%s732 + $0x58] sm:$0xf]
                  %779 = vst [vmem:[%s733 + $0x58] sm:$0xf] %v778
                  %v780 = vld [vmem:[%s732 + $0x5c] sm:$0xf]
                  %781 = vst [vmem:[%s733 + $0x5c] sm:$0xf] %v780
                  %v782 = vld [vmem:[%s732 + $0x60] sm:$0xf]
                  %783 = vst [vmem:[%s733 + $0x60] sm:$0xf] %v782
                  %v784 = vld [vmem:[%s732 + $0x64] sm:$0xf]
                  %785 = vst [vmem:[%s733 + $0x64] sm:$0xf] %v784
                  %v786 = vld [vmem:[%s732 + $0x68] sm:$0xf]
                  %787 = vst [vmem:[%s733 + $0x68] sm:$0xf] %v786
                  %v788 = vld [vmem:[%s732 + $0x6c] sm:$0xf]
                  %789 = vst [vmem:[%s733 + $0x6c] sm:$0xf] %v788
                  %v790 = vld [vmem:[%s732 + $0x70] sm:$0xf]
                  %791 = vst [vmem:[%s733 + $0x70] sm:$0xf] %v790
                  %v792 = vld [vmem:[%s732 + $0x74] sm:$0xf]
                  %793 = vst [vmem:[%s733 + $0x74] sm:$0xf] %v792
                  %v794 = vld [vmem:[%s732 + $0x78] sm:$0xf]
                  %795 = vst [vmem:[%s733 + $0x78] sm:$0xf] %v794
                  %v796 = vld [vmem:[%s732 + $0x7c] sm:$0xf]
                  %797 = vst [vmem:[%s733 + $0x7c] sm:$0xf] %v796
                  %v798 = vld [vmem:[%s732 + $0x80] sm:$0xf]
                  %799 = vst [vmem:[%s733 + $0x80] sm:$0xf] %v798
                  %v800 = vld [vmem:[%s732 + $0x84] sm:$0xf]
                  %801 = vst [vmem:[%s733 + $0x84] sm:$0xf] %v800
                  %v802 = vld [vmem:[%s732 + $0x88] sm:$0xf]
                  %803 = vst [vmem:[%s733 + $0x88] sm:$0xf] %v802
                  %v804 = vld [vmem:[%s732 + $0x8c] sm:$0xf]
                  %805 = vst [vmem:[%s733 + $0x8c] sm:$0xf] %v804
                  %v806 = vld [vmem:[%s732 + $0x90] sm:$0xf]
                  %807 = vst [vmem:[%s733 + $0x90] sm:$0xf] %v806
                  %v808 = vld [vmem:[%s732 + $0x94] sm:$0xf]
                  %809 = vst [vmem:[%s733 + $0x94] sm:$0xf] %v808
                  %v810 = vld [vmem:[%s732 + $0x98] sm:$0xf]
                  %811 = vst [vmem:[%s733 + $0x98] sm:$0xf] %v810
                  %v812 = vld [vmem:[%s732 + $0x9c] sm:$0xf]
                  %813 = vst [vmem:[%s733 + $0x9c] sm:$0xf] %v812
                  %v814 = vld [vmem:[%s732 + $0xa0] sm:$0xf]
                  %815 = vst [vmem:[%s733 + $0xa0] sm:$0xf] %v814
                  %v816 = vld [vmem:[%s732 + $0xa4] sm:$0xf]
                  %817 = vst [vmem:[%s733 + $0xa4] sm:$0xf] %v816
                  %v818 = vld [vmem:[%s732 + $0xa8] sm:$0xf]
                  %819 = vst [vmem:[%s733 + $0xa8] sm:$0xf] %v818
                  %v820 = vld [vmem:[%s732 + $0xac] sm:$0xf]
                  %821 = vst [vmem:[%s733 + $0xac] sm:$0xf] %v820
                  %v822 = vld [vmem:[%s732 + $0xb0] sm:$0xf]
                  %823 = vst [vmem:[%s733 + $0xb0] sm:$0xf] %v822
                  %v824 = vld [vmem:[%s732 + $0xb4] sm:$0xf]
                  %825 = vst [vmem:[%s733 + $0xb4] sm:$0xf] %v824
                  %v826 = vld [vmem:[%s732 + $0xb8] sm:$0xf]
                  %827 = vst [vmem:[%s733 + $0xb8] sm:$0xf] %v826
                  %v828 = vld [vmem:[%s732 + $0xbc] sm:$0xf]
                  %829 = vst [vmem:[%s733 + $0xbc] sm:$0xf] %v828
                  %v830 = vld [vmem:[%s732 + $0xc0] sm:$0xf]
                  %831 = vst [vmem:[%s733 + $0xc0] sm:$0xf] %v830
                  %v832 = vld [vmem:[%s732 + $0xc4] sm:$0xf]
                  %833 = vst [vmem:[%s733 + $0xc4] sm:$0xf] %v832
                  %v834 = vld [vmem:[%s732 + $0xc8] sm:$0xf]
                  %835 = vst [vmem:[%s733 + $0xc8] sm:$0xf] %v834
                  %v836 = vld [vmem:[%s732 + $0xcc] sm:$0xf]
                  %837 = vst [vmem:[%s733 + $0xcc] sm:$0xf] %v836
                  %v838 = vld [vmem:[%s732 + $0xd0] sm:$0xf]
                  %839 = vst [vmem:[%s733 + $0xd0] sm:$0xf] %v838
                  %v840 = vld [vmem:[%s732 + $0xd4] sm:$0xf]
                  %841 = vst [vmem:[%s733 + $0xd4] sm:$0xf] %v840
                  %v842 = vld [vmem:[%s732 + $0xd8] sm:$0xf]
                  %843 = vst [vmem:[%s733 + $0xd8] sm:$0xf] %v842
                  %v844 = vld [vmem:[%s732 + $0xdc] sm:$0xf]
                  %845 = vst [vmem:[%s733 + $0xdc] sm:$0xf] %v844
                  %v846 = vld [vmem:[%s732 + $0xe0] sm:$0xf]
                  %847 = vst [vmem:[%s733 + $0xe0] sm:$0xf] %v846
                  %v848 = vld [vmem:[%s732 + $0xe4] sm:$0xf]
                  %849 = vst [vmem:[%s733 + $0xe4] sm:$0xf] %v848
                  %v850 = vld [vmem:[%s732 + $0xe8] sm:$0xf]
                  %851 = vst [vmem:[%s733 + $0xe8] sm:$0xf] %v850
                  %v852 = vld [vmem:[%s732 + $0xec] sm:$0xf]
                  %853 = vst [vmem:[%s733 + $0xec] sm:$0xf] %v852
                  %v854 = vld [vmem:[%s732 + $0xf0] sm:$0xf]
                  %855 = vst [vmem:[%s733 + $0xf0] sm:$0xf] %v854
                  %v856 = vld [vmem:[%s732 + $0xf4] sm:$0xf]
                  %857 = vst [vmem:[%s733 + $0xf4] sm:$0xf] %v856
                  %v858 = vld [vmem:[%s732 + $0xf8] sm:$0xf]
                  %859 = vst [vmem:[%s733 + $0xf8] sm:$0xf] %v858
                  %v860 = vld [vmem:[%s732 + $0xfc] sm:$0xf]
                  %861 = vst [vmem:[%s733 + $0xfc] sm:$0xf] %v860
                  %v862 = vld [vmem:[%s732 + $0x200] sm:$0xf]
                  %863 = vst [vmem:[%s733 + $0x100] sm:$0xf] %v862
                  %v864 = vld [vmem:[%s732 + $0x204] sm:$0xf]
                  %865 = vst [vmem:[%s733 + $0x104] sm:$0xf] %v864
                  %v866 = vld [vmem:[%s732 + $0x208] sm:$0xf]
                  %867 = vst [vmem:[%s733 + $0x108] sm:$0xf] %v866
                  %v868 = vld [vmem:[%s732 + $0x20c] sm:$0xf]
                  %869 = vst [vmem:[%s733 + $0x10c] sm:$0xf] %v868
                  %v870 = vld [vmem:[%s732 + $0x210] sm:$0xf]
                  %871 = vst [vmem:[%s733 + $0x110] sm:$0xf] %v870
                  %v872 = vld [vmem:[%s732 + $0x214] sm:$0xf]
                  %873 = vst [vmem:[%s733 + $0x114] sm:$0xf] %v872
                  %v874 = vld [vmem:[%s732 + $0x218] sm:$0xf]
                  %875 = vst [vmem:[%s733 + $0x118] sm:$0xf] %v874
                  %v876 = vld [vmem:[%s732 + $0x21c] sm:$0xf]
                  %877 = vst [vmem:[%s733 + $0x11c] sm:$0xf] %v876
                  %v878 = vld [vmem:[%s732 + $0x220] sm:$0xf]
                  %879 = vst [vmem:[%s733 + $0x120] sm:$0xf] %v878
                  %v880 = vld [vmem:[%s732 + $0x224] sm:$0xf]
                  %881 = vst [vmem:[%s733 + $0x124] sm:$0xf] %v880
                  %v882 = vld [vmem:[%s732 + $0x228] sm:$0xf]
                  %883 = vst [vmem:[%s733 + $0x128] sm:$0xf] %v882
                  %v884 = vld [vmem:[%s732 + $0x22c] sm:$0xf]
                  %885 = vst [vmem:[%s733 + $0x12c] sm:$0xf] %v884
                  %v886 = vld [vmem:[%s732 + $0x230] sm:$0xf]
                  %887 = vst [vmem:[%s733 + $0x130] sm:$0xf] %v886
                  %v888 = vld [vmem:[%s732 + $0x234] sm:$0xf]
                  %889 = vst [vmem:[%s733 + $0x134] sm:$0xf] %v888
                  %v890 = vld [vmem:[%s732 + $0x238] sm:$0xf]
                  %891 = vst [vmem:[%s733 + $0x138] sm:$0xf] %v890
                  %v892 = vld [vmem:[%s732 + $0x23c] sm:$0xf]
                  %893 = vst [vmem:[%s733 + $0x13c] sm:$0xf] %v892
                  %v894 = vld [vmem:[%s732 + $0x240] sm:$0xf]
                  %895 = vst [vmem:[%s733 + $0x140] sm:$0xf] %v894
                  %v896 = vld [vmem:[%s732 + $0x244] sm:$0xf]
                  %897 = vst [vmem:[%s733 + $0x144] sm:$0xf] %v896
                  %v898 = vld [vmem:[%s732 + $0x248] sm:$0xf]
                  %899 = vst [vmem:[%s733 + $0x148] sm:$0xf] %v898
                  %v900 = vld [vmem:[%s732 + $0x24c] sm:$0xf]
                  %901 = vst [vmem:[%s733 + $0x14c] sm:$0xf] %v900
                  %v902 = vld [vmem:[%s732 + $0x250] sm:$0xf]
                  %903 = vst [vmem:[%s733 + $0x150] sm:$0xf] %v902
                  %v904 = vld [vmem:[%s732 + $0x254] sm:$0xf]
                  %905 = vst [vmem:[%s733 + $0x154] sm:$0xf] %v904
                  %v906 = vld [vmem:[%s732 + $0x258] sm:$0xf]
                  %907 = vst [vmem:[%s733 + $0x158] sm:$0xf] %v906
                  %v908 = vld [vmem:[%s732 + $0x25c] sm:$0xf]
                  %909 = vst [vmem:[%s733 + $0x15c] sm:$0xf] %v908
                  %v910 = vld [vmem:[%s732 + $0x260] sm:$0xf]
                  %911 = vst [vmem:[%s733 + $0x160] sm:$0xf] %v910
                  %v912 = vld [vmem:[%s732 + $0x264] sm:$0xf]
                  %913 = vst [vmem:[%s733 + $0x164] sm:$0xf] %v912
                  %v914 = vld [vmem:[%s732 + $0x268] sm:$0xf]
                  %915 = vst [vmem:[%s733 + $0x168] sm:$0xf] %v914
                  %v916 = vld [vmem:[%s732 + $0x26c] sm:$0xf]
                  %917 = vst [vmem:[%s733 + $0x16c] sm:$0xf] %v916
                  %v918 = vld [vmem:[%s732 + $0x270] sm:$0xf]
                  %919 = vst [vmem:[%s733 + $0x170] sm:$0xf] %v918
                  %v920 = vld [vmem:[%s732 + $0x274] sm:$0xf]
                  %921 = vst [vmem:[%s733 + $0x174] sm:$0xf] %v920
                  %v922 = vld [vmem:[%s732 + $0x278] sm:$0xf]
                  %923 = vst [vmem:[%s733 + $0x178] sm:$0xf] %v922
                  %v924 = vld [vmem:[%s732 + $0x27c] sm:$0xf]
                  %925 = vst [vmem:[%s733 + $0x17c] sm:$0xf] %v924
                  %v926 = vld [vmem:[%s732 + $0x280] sm:$0xf]
                  %927 = vst [vmem:[%s733 + $0x180] sm:$0xf] %v926
                  %v928 = vld [vmem:[%s732 + $0x284] sm:$0xf]
                  %929 = vst [vmem:[%s733 + $0x184] sm:$0xf] %v928
                  %v930 = vld [vmem:[%s732 + $0x288] sm:$0xf]
                  %931 = vst [vmem:[%s733 + $0x188] sm:$0xf] %v930
                  %v932 = vld [vmem:[%s732 + $0x28c] sm:$0xf]
                  %933 = vst [vmem:[%s733 + $0x18c] sm:$0xf] %v932
                  %v934 = vld [vmem:[%s732 + $0x290] sm:$0xf]
                  %935 = vst [vmem:[%s733 + $0x190] sm:$0xf] %v934
                  %v936 = vld [vmem:[%s732 + $0x294] sm:$0xf]
                  %937 = vst [vmem:[%s733 + $0x194] sm:$0xf] %v936
                  %v938 = vld [vmem:[%s732 + $0x298] sm:$0xf]
                  %939 = vst [vmem:[%s733 + $0x198] sm:$0xf] %v938
                  %v940 = vld [vmem:[%s732 + $0x29c] sm:$0xf]
                  %941 = vst [vmem:[%s733 + $0x19c] sm:$0xf] %v940
                  %v942 = vld [vmem:[%s732 + $0x2a0] sm:$0xf]
                  %943 = vst [vmem:[%s733 + $0x1a0] sm:$0xf] %v942
                  %v944 = vld [vmem:[%s732 + $0x2a4] sm:$0xf]
                  %945 = vst [vmem:[%s733 + $0x1a4] sm:$0xf] %v944
                  %v946 = vld [vmem:[%s732 + $0x2a8] sm:$0xf]
                  %947 = vst [vmem:[%s733 + $0x1a8] sm:$0xf] %v946
                  %v948 = vld [vmem:[%s732 + $0x2ac] sm:$0xf]
                  %949 = vst [vmem:[%s733 + $0x1ac] sm:$0xf] %v948
                  %v950 = vld [vmem:[%s732 + $0x2b0] sm:$0xf]
                  %951 = vst [vmem:[%s733 + $0x1b0] sm:$0xf] %v950
                  %v952 = vld [vmem:[%s732 + $0x2b4] sm:$0xf]
                  %953 = vst [vmem:[%s733 + $0x1b4] sm:$0xf] %v952
                  %v954 = vld [vmem:[%s732 + $0x2b8] sm:$0xf]
                  %955 = vst [vmem:[%s733 + $0x1b8] sm:$0xf] %v954
                  %v956 = vld [vmem:[%s732 + $0x2bc] sm:$0xf]
                  %957 = vst [vmem:[%s733 + $0x1bc] sm:$0xf] %v956
                  %v958 = vld [vmem:[%s732 + $0x2c0] sm:$0xf]
                  %959 = vst [vmem:[%s733 + $0x1c0] sm:$0xf] %v958
                  %v960 = vld [vmem:[%s732 + $0x2c4] sm:$0xf]
                  %961 = vst [vmem:[%s733 + $0x1c4] sm:$0xf] %v960
                  %v962 = vld [vmem:[%s732 + $0x2c8] sm:$0xf]
                  %963 = vst [vmem:[%s733 + $0x1c8] sm:$0xf] %v962
                  %v964 = vld [vmem:[%s732 + $0x2cc] sm:$0xf]
                  %965 = vst [vmem:[%s733 + $0x1cc] sm:$0xf] %v964
                  %v966 = vld [vmem:[%s732 + $0x2d0] sm:$0xf]
                  %967 = vst [vmem:[%s733 + $0x1d0] sm:$0xf] %v966
                  %v968 = vld [vmem:[%s732 + $0x2d4] sm:$0xf]
                  %969 = vst [vmem:[%s733 + $0x1d4] sm:$0xf] %v968
                  %v970 = vld [vmem:[%s732 + $0x2d8] sm:$0xf]
                  %971 = vst [vmem:[%s733 + $0x1d8] sm:$0xf] %v970
                  %v972 = vld [vmem:[%s732 + $0x2dc] sm:$0xf]
                  %973 = vst [vmem:[%s733 + $0x1dc] sm:$0xf] %v972
                  %v974 = vld [vmem:[%s732 + $0x2e0] sm:$0xf]
                  %975 = vst [vmem:[%s733 + $0x1e0] sm:$0xf] %v974
                  %v976 = vld [vmem:[%s732 + $0x2e4] sm:$0xf]
                  %977 = vst [vmem:[%s733 + $0x1e4] sm:$0xf] %v976
                  %v978 = vld [vmem:[%s732 + $0x2e8] sm:$0xf]
                  %979 = vst [vmem:[%s733 + $0x1e8] sm:$0xf] %v978
                  %v980 = vld [vmem:[%s732 + $0x2ec] sm:$0xf]
                  %981 = vst [vmem:[%s733 + $0x1ec] sm:$0xf] %v980
                  %v982 = vld [vmem:[%s732 + $0x2f0] sm:$0xf]
                  %983 = vst [vmem:[%s733 + $0x1f0] sm:$0xf] %v982
                  %v984 = vld [vmem:[%s732 + $0x2f4] sm:$0xf]
                  %985 = vst [vmem:[%s733 + $0x1f4] sm:$0xf] %v984
                  %v986 = vld [vmem:[%s732 + $0x2f8] sm:$0xf]
                  %987 = vst [vmem:[%s733 + $0x1f8] sm:$0xf] %v986
                  %v988 = vld [vmem:[%s732 + $0x2fc] sm:$0xf]
                  %989 = vst [vmem:[%s733 + $0x1fc] sm:$0xf] %v988
                  %v990 = vld [vmem:[%s732 + $0x400] sm:$0xf]
                  %991 = vst [vmem:[%s733 + $0x200] sm:$0xf] %v990
                  %v992 = vld [vmem:[%s732 + $0x404] sm:$0xf]
                  %993 = vst [vmem:[%s733 + $0x204] sm:$0xf] %v992
                  %v994 = vld [vmem:[%s732 + $0x408] sm:$0xf]
                  %995 = vst [vmem:[%s733 + $0x208] sm:$0xf] %v994
                  %v996 = vld [vmem:[%s732 + $0x40c] sm:$0xf]
                  %997 = vst [vmem:[%s733 + $0x20c] sm:$0xf] %v996
                  %v998 = vld [vmem:[%s732 + $0x410] sm:$0xf]
                  %999 = vst [vmem:[%s733 + $0x210] sm:$0xf] %v998
                  %v1000 = vld [vmem:[%s732 + $0x414] sm:$0xf]
                  %1001 = vst [vmem:[%s733 + $0x214] sm:$0xf] %v1000
                  %v1002 = vld [vmem:[%s732 + $0x418] sm:$0xf]
                  %1003 = vst [vmem:[%s733 + $0x218] sm:$0xf] %v1002
                  %v1004 = vld [vmem:[%s732 + $0x41c] sm:$0xf]
                  %1005 = vst [vmem:[%s733 + $0x21c] sm:$0xf] %v1004
                  %v1006 = vld [vmem:[%s732 + $0x420] sm:$0xf]
                  %1007 = vst [vmem:[%s733 + $0x220] sm:$0xf] %v1006
                  %v1008 = vld [vmem:[%s732 + $0x424] sm:$0xf]
                  %1009 = vst [vmem:[%s733 + $0x224] sm:$0xf] %v1008
                  %v1010 = vld [vmem:[%s732 + $0x428] sm:$0xf]
                  %1011 = vst [vmem:[%s733 + $0x228] sm:$0xf] %v1010
                  %v1012 = vld [vmem:[%s732 + $0x42c] sm:$0xf]
                  %1013 = vst [vmem:[%s733 + $0x22c] sm:$0xf] %v1012
                  %v1014 = vld [vmem:[%s732 + $0x430] sm:$0xf]
                  %1015 = vst [vmem:[%s733 + $0x230] sm:$0xf] %v1014
                  %v1016 = vld [vmem:[%s732 + $0x434] sm:$0xf]
                  %1017 = vst [vmem:[%s733 + $0x234] sm:$0xf] %v1016
                  %v1018 = vld [vmem:[%s732 + $0x438] sm:$0xf]
                  %1019 = vst [vmem:[%s733 + $0x238] sm:$0xf] %v1018
                  %v1020 = vld [vmem:[%s732 + $0x43c] sm:$0xf]
                  %1021 = vst [vmem:[%s733 + $0x23c] sm:$0xf] %v1020
                  %v1022 = vld [vmem:[%s732 + $0x440] sm:$0xf]
                  %1023 = vst [vmem:[%s733 + $0x240] sm:$0xf] %v1022
                  %v1024 = vld [vmem:[%s732 + $0x444] sm:$0xf]
                  %1025 = vst [vmem:[%s733 + $0x244] sm:$0xf] %v1024
                  %v1026 = vld [vmem:[%s732 + $0x448] sm:$0xf]
                  %1027 = vst [vmem:[%s733 + $0x248] sm:$0xf] %v1026
                  %v1028 = vld [vmem:[%s732 + $0x44c] sm:$0xf]
                  %1029 = vst [vmem:[%s733 + $0x24c] sm:$0xf] %v1028
                  %v1030 = vld [vmem:[%s732 + $0x450] sm:$0xf]
                  %1031 = vst [vmem:[%s733 + $0x250] sm:$0xf] %v1030
                  %v1032 = vld [vmem:[%s732 + $0x454] sm:$0xf]
                  %1033 = vst [vmem:[%s733 + $0x254] sm:$0xf] %v1032
                  %v1034 = vld [vmem:[%s732 + $0x458] sm:$0xf]
                  %1035 = vst [vmem:[%s733 + $0x258] sm:$0xf] %v1034
                  %v1036 = vld [vmem:[%s732 + $0x45c] sm:$0xf]
                  %1037 = vst [vmem:[%s733 + $0x25c] sm:$0xf] %v1036
                  %v1038 = vld [vmem:[%s732 + $0x460] sm:$0xf]
                  %1039 = vst [vmem:[%s733 + $0x260] sm:$0xf] %v1038
                  %v1040 = vld [vmem:[%s732 + $0x464] sm:$0xf]
                  %1041 = vst [vmem:[%s733 + $0x264] sm:$0xf] %v1040
                  %v1042 = vld [vmem:[%s732 + $0x468] sm:$0xf]
                  %1043 = vst [vmem:[%s733 + $0x268] sm:$0xf] %v1042
                  %v1044 = vld [vmem:[%s732 + $0x46c] sm:$0xf]
                  %1045 = vst [vmem:[%s733 + $0x26c] sm:$0xf] %v1044
                  %v1046 = vld [vmem:[%s732 + $0x470] sm:$0xf]
                  %1047 = vst [vmem:[%s733 + $0x270] sm:$0xf] %v1046
                  %v1048 = vld [vmem:[%s732 + $0x474] sm:$0xf]
                  %1049 = vst [vmem:[%s733 + $0x274] sm:$0xf] %v1048
                  %v1050 = vld [vmem:[%s732 + $0x478] sm:$0xf]
                  %1051 = vst [vmem:[%s733 + $0x278] sm:$0xf] %v1050
                  %v1052 = vld [vmem:[%s732 + $0x47c] sm:$0xf]
                  %1053 = vst [vmem:[%s733 + $0x27c] sm:$0xf] %v1052
                  %v1054 = vld [vmem:[%s732 + $0x480] sm:$0xf]
                  %1055 = vst [vmem:[%s733 + $0x280] sm:$0xf] %v1054
                  %v1056 = vld [vmem:[%s732 + $0x484] sm:$0xf]
                  %1057 = vst [vmem:[%s733 + $0x284] sm:$0xf] %v1056
                  %v1058 = vld [vmem:[%s732 + $0x488] sm:$0xf]
                  %1059 = vst [vmem:[%s733 + $0x288] sm:$0xf] %v1058
                  %v1060 = vld [vmem:[%s732 + $0x48c] sm:$0xf]
                  %1061 = vst [vmem:[%s733 + $0x28c] sm:$0xf] %v1060
                  %v1062 = vld [vmem:[%s732 + $0x490] sm:$0xf]
                  %1063 = vst [vmem:[%s733 + $0x290] sm:$0xf] %v1062
                  %v1064 = vld [vmem:[%s732 + $0x494] sm:$0xf]
                  %1065 = vst [vmem:[%s733 + $0x294] sm:$0xf] %v1064
                  %v1066 = vld [vmem:[%s732 + $0x498] sm:$0xf]
                  %1067 = vst [vmem:[%s733 + $0x298] sm:$0xf] %v1066
                  %v1068 = vld [vmem:[%s732 + $0x49c] sm:$0xf]
                  %1069 = vst [vmem:[%s733 + $0x29c] sm:$0xf] %v1068
                  %v1070 = vld [vmem:[%s732 + $0x4a0] sm:$0xf]
                  %1071 = vst [vmem:[%s733 + $0x2a0] sm:$0xf] %v1070
                  %v1072 = vld [vmem:[%s732 + $0x4a4] sm:$0xf]
                  %1073 = vst [vmem:[%s733 + $0x2a4] sm:$0xf] %v1072
                  %v1074 = vld [vmem:[%s732 + $0x4a8] sm:$0xf]
                  %1075 = vst [vmem:[%s733 + $0x2a8] sm:$0xf] %v1074
                  %v1076 = vld [vmem:[%s732 + $0x4ac] sm:$0xf]
                  %1077 = vst [vmem:[%s733 + $0x2ac] sm:$0xf] %v1076
                  %v1078 = vld [vmem:[%s732 + $0x4b0] sm:$0xf]
                  %1079 = vst [vmem:[%s733 + $0x2b0] sm:$0xf] %v1078
                  %v1080 = vld [vmem:[%s732 + $0x4b4] sm:$0xf]
                  %1081 = vst [vmem:[%s733 + $0x2b4] sm:$0xf] %v1080
                  %v1082 = vld [vmem:[%s732 + $0x4b8] sm:$0xf]
                  %1083 = vst [vmem:[%s733 + $0x2b8] sm:$0xf] %v1082
                  %v1084 = vld [vmem:[%s732 + $0x4bc] sm:$0xf]
                  %1085 = vst [vmem:[%s733 + $0x2bc] sm:$0xf] %v1084
                  %v1086 = vld [vmem:[%s732 + $0x4c0] sm:$0xf]
                  %1087 = vst [vmem:[%s733 + $0x2c0] sm:$0xf] %v1086
                  %v1088 = vld [vmem:[%s732 + $0x4c4] sm:$0xf]
                  %1089 = vst [vmem:[%s733 + $0x2c4] sm:$0xf] %v1088
                  %v1090 = vld [vmem:[%s732 + $0x4c8] sm:$0xf]
                  %1091 = vst [vmem:[%s733 + $0x2c8] sm:$0xf] %v1090
                  %v1092 = vld [vmem:[%s732 + $0x4cc] sm:$0xf]
                  %1093 = vst [vmem:[%s733 + $0x2cc] sm:$0xf] %v1092
                  %v1094 = vld [vmem:[%s732 + $0x4d0] sm:$0xf]
                  %1095 = vst [vmem:[%s733 + $0x2d0] sm:$0xf] %v1094
                  %v1096 = vld [vmem:[%s732 + $0x4d4] sm:$0xf]
                  %1097 = vst [vmem:[%s733 + $0x2d4] sm:$0xf] %v1096
                  %v1098 = vld [vmem:[%s732 + $0x4d8] sm:$0xf]
                  %1099 = vst [vmem:[%s733 + $0x2d8] sm:$0xf] %v1098
                  %v1100 = vld [vmem:[%s732 + $0x4dc] sm:$0xf]
                  %1101 = vst [vmem:[%s733 + $0x2dc] sm:$0xf] %v1100
                  %v1102 = vld [vmem:[%s732 + $0x4e0] sm:$0xf]
                  %1103 = vst [vmem:[%s733 + $0x2e0] sm:$0xf] %v1102
                  %v1104 = vld [vmem:[%s732 + $0x4e4] sm:$0xf]
                  %1105 = vst [vmem:[%s733 + $0x2e4] sm:$0xf] %v1104
                  %v1106 = vld [vmem:[%s732 + $0x4e8] sm:$0xf]
                  %1107 = vst [vmem:[%s733 + $0x2e8] sm:$0xf] %v1106
                  %v1108 = vld [vmem:[%s732 + $0x4ec] sm:$0xf]
                  %1109 = vst [vmem:[%s733 + $0x2ec] sm:$0xf] %v1108
                  %v1110 = vld [vmem:[%s732 + $0x4f0] sm:$0xf]
                  %1111 = vst [vmem:[%s733 + $0x2f0] sm:$0xf] %v1110
                  %v1112 = vld [vmem:[%s732 + $0x4f4] sm:$0xf]
                  %1113 = vst [vmem:[%s733 + $0x2f4] sm:$0xf] %v1112
                  %v1114 = vld [vmem:[%s732 + $0x4f8] sm:$0xf]
                  %1115 = vst [vmem:[%s733 + $0x2f8] sm:$0xf] %v1114
                  %v1116 = vld [vmem:[%s732 + $0x4fc] sm:$0xf]
                  %1117 = vst [vmem:[%s733 + $0x2fc] sm:$0xf] %v1116
                $region87: #{_forward_impl.1} parent=74 // loop_footer
                  %s731 = sadd.s32 1, %s727
                $region88: #{_forward_impl.1} parent=74 // loop_footer_branch
                  %726 = sbr.rel target = $region84
                $region89: #{_forward_impl.1} parent=74 // loop_exit
                  _
              $region75: #{_forward_impl.1} parent=59 // pred_fallthru
                _
            $region60: #{_forward_impl.1} parent=55 // pred_fallthru
              _
            // Predicated region
            $region61: #{_forward_impl.1} parent=55 // pred_check
              _
            $region62: #{_forward_impl.1} parent=55 // pred_check_branch
              %321 = sbr.rel (0) target = $region64
            $region63: #{_forward_impl.1} parent=55 // pred_region
              loop: start=0, step=1, limit=1
              $region65: #{_forward_impl.1} parent=63 // loop_pre_header
                _
              $region66: #{_forward_impl.1} parent=63 // loop_header
                %s324 = sphi 0, %s328
                %p325 = scmp.ge.s32.totalorder %s324, 1
                %s329 = sphi %s315, %s315
                %s330 = sphi %s312, %s312
              $region67: #{_forward_impl.1} parent=63 // loop_header_branch
                %327 = sbr.rel (%p325) target = $region71
              $region68: #{_forward_impl.1} parent=63 // loop_body
                %v331 = vld [vmem:[%s329] sm:$0xf]
                %332 = vst [vmem:[%s330] sm:$0xf] %v331
                %v333 = vld [vmem:[%s329 + $0x4] sm:$0xf]
                %334 = vst [vmem:[%s330 + $0x4] sm:$0xf] %v333
                %v335 = vld [vmem:[%s329 + $0x8] sm:$0xf]
                %336 = vst [vmem:[%s330 + $0x8] sm:$0xf] %v335
                %v337 = vld [vmem:[%s329 + $0xc] sm:$0xf]
                %338 = vst [vmem:[%s330 + $0xc] sm:$0xf] %v337
                %v339 = vld [vmem:[%s329 + $0x10] sm:$0xf]
                %340 = vst [vmem:[%s330 + $0x10] sm:$0xf] %v339
                %v341 = vld [vmem:[%s329 + $0x14] sm:$0xf]
                %342 = vst [vmem:[%s330 + $0x14] sm:$0xf] %v341
                %v343 = vld [vmem:[%s329 + $0x18] sm:$0xf]
                %344 = vst [vmem:[%s330 + $0x18] sm:$0xf] %v343
                %v345 = vld [vmem:[%s329 + $0x1c] sm:$0xf]
                %346 = vst [vmem:[%s330 + $0x1c] sm:$0xf] %v345
                %v347 = vld [vmem:[%s329 + $0x20] sm:$0xf]
                %348 = vst [vmem:[%s330 + $0x20] sm:$0xf] %v347
                %v349 = vld [vmem:[%s329 + $0x24] sm:$0xf]
                %350 = vst [vmem:[%s330 + $0x24] sm:$0xf] %v349
                %v351 = vld [vmem:[%s329 + $0x28] sm:$0xf]
                %352 = vst [vmem:[%s330 + $0x28] sm:$0xf] %v351
                %v353 = vld [vmem:[%s329 + $0x2c] sm:$0xf]
                %354 = vst [vmem:[%s330 + $0x2c] sm:$0xf] %v353
                %v355 = vld [vmem:[%s329 + $0x30] sm:$0xf]
                %356 = vst [vmem:[%s330 + $0x30] sm:$0xf] %v355
                %v357 = vld [vmem:[%s329 + $0x34] sm:$0xf]
                %358 = vst [vmem:[%s330 + $0x34] sm:$0xf] %v357
                %v359 = vld [vmem:[%s329 + $0x38] sm:$0xf]
                %360 = vst [vmem:[%s330 + $0x38] sm:$0xf] %v359
                %v361 = vld [vmem:[%s329 + $0x3c] sm:$0xf]
                %362 = vst [vmem:[%s330 + $0x3c] sm:$0xf] %v361
                %v363 = vld [vmem:[%s329 + $0x40] sm:$0xf]
                %364 = vst [vmem:[%s330 + $0x40] sm:$0xf] %v363
                %v365 = vld [vmem:[%s329 + $0x44] sm:$0xf]
                %366 = vst [vmem:[%s330 + $0x44] sm:$0xf] %v365
                %v367 = vld [vmem:[%s329 + $0x48] sm:$0xf]
                %368 = vst [vmem:[%s330 + $0x48] sm:$0xf] %v367
                %v369 = vld [vmem:[%s329 + $0x4c] sm:$0xf]
                %370 = vst [vmem:[%s330 + $0x4c] sm:$0xf] %v369
                %v371 = vld [vmem:[%s329 + $0x50] sm:$0xf]
                %372 = vst [vmem:[%s330 + $0x50] sm:$0xf] %v371
                %v373 = vld [vmem:[%s329 + $0x54] sm:$0xf]
                %374 = vst [vmem:[%s330 + $0x54] sm:$0xf] %v373
                %v375 = vld [vmem:[%s329 + $0x58] sm:$0xf]
                %376 = vst [vmem:[%s330 + $0x58] sm:$0xf] %v375
                %v377 = vld [vmem:[%s329 + $0x5c] sm:$0xf]
                %378 = vst [vmem:[%s330 + $0x5c] sm:$0xf] %v377
                %v379 = vld [vmem:[%s329 + $0x60] sm:$0xf]
                %380 = vst [vmem:[%s330 + $0x60] sm:$0xf] %v379
                %v381 = vld [vmem:[%s329 + $0x64] sm:$0xf]
                %382 = vst [vmem:[%s330 + $0x64] sm:$0xf] %v381
                %v383 = vld [vmem:[%s329 + $0x68] sm:$0xf]
                %384 = vst [vmem:[%s330 + $0x68] sm:$0xf] %v383
                %v385 = vld [vmem:[%s329 + $0x6c] sm:$0xf]
                %386 = vst [vmem:[%s330 + $0x6c] sm:$0xf] %v385
                %v387 = vld [vmem:[%s329 + $0x70] sm:$0xf]
                %388 = vst [vmem:[%s330 + $0x70] sm:$0xf] %v387
                %v389 = vld [vmem:[%s329 + $0x74] sm:$0xf]
                %390 = vst [vmem:[%s330 + $0x74] sm:$0xf] %v389
                %v391 = vld [vmem:[%s329 + $0x78] sm:$0xf]
                %392 = vst [vmem:[%s330 + $0x78] sm:$0xf] %v391
                %v393 = vld [vmem:[%s329 + $0x7c] sm:$0xf]
                %394 = vst [vmem:[%s330 + $0x7c] sm:$0xf] %v393
                %v395 = vld [vmem:[%s329 + $0x80] sm:$0xf]
                %396 = vst [vmem:[%s330 + $0x80] sm:$0xf] %v395
                %v397 = vld [vmem:[%s329 + $0x84] sm:$0xf]
                %398 = vst [vmem:[%s330 + $0x84] sm:$0xf] %v397
                %v399 = vld [vmem:[%s329 + $0x88] sm:$0xf]
                %400 = vst [vmem:[%s330 + $0x88] sm:$0xf] %v399
                %v401 = vld [vmem:[%s329 + $0x8c] sm:$0xf]
                %402 = vst [vmem:[%s330 + $0x8c] sm:$0xf] %v401
                %v403 = vld [vmem:[%s329 + $0x90] sm:$0xf]
                %404 = vst [vmem:[%s330 + $0x90] sm:$0xf] %v403
                %v405 = vld [vmem:[%s329 + $0x94] sm:$0xf]
                %406 = vst [vmem:[%s330 + $0x94] sm:$0xf] %v405
                %v407 = vld [vmem:[%s329 + $0x98] sm:$0xf]
                %408 = vst [vmem:[%s330 + $0x98] sm:$0xf] %v407
                %v409 = vld [vmem:[%s329 + $0x9c] sm:$0xf]
                %410 = vst [vmem:[%s330 + $0x9c] sm:$0xf] %v409
                %v411 = vld [vmem:[%s329 + $0xa0] sm:$0xf]
                %412 = vst [vmem:[%s330 + $0xa0] sm:$0xf] %v411
                %v413 = vld [vmem:[%s329 + $0xa4] sm:$0xf]
                %414 = vst [vmem:[%s330 + $0xa4] sm:$0xf] %v413
                %v415 = vld [vmem:[%s329 + $0xa8] sm:$0xf]
                %416 = vst [vmem:[%s330 + $0xa8] sm:$0xf] %v415
                %v417 = vld [vmem:[%s329 + $0xac] sm:$0xf]
                %418 = vst [vmem:[%s330 + $0xac] sm:$0xf] %v417
                %v419 = vld [vmem:[%s329 + $0xb0] sm:$0xf]
                %420 = vst [vmem:[%s330 + $0xb0] sm:$0xf] %v419
                %v421 = vld [vmem:[%s329 + $0xb4] sm:$0xf]
                %422 = vst [vmem:[%s330 + $0xb4] sm:$0xf] %v421
                %v423 = vld [vmem:[%s329 + $0xb8] sm:$0xf]
                %424 = vst [vmem:[%s330 + $0xb8] sm:$0xf] %v423
                %v425 = vld [vmem:[%s329 + $0xbc] sm:$0xf]
                %426 = vst [vmem:[%s330 + $0xbc] sm:$0xf] %v425
                %v427 = vld [vmem:[%s329 + $0xc0] sm:$0xf]
                %428 = vst [vmem:[%s330 + $0xc0] sm:$0xf] %v427
                %v429 = vld [vmem:[%s329 + $0xc4] sm:$0xf]
                %430 = vst [vmem:[%s330 + $0xc4] sm:$0xf] %v429
                %v431 = vld [vmem:[%s329 + $0xc8] sm:$0xf]
                %432 = vst [vmem:[%s330 + $0xc8] sm:$0xf] %v431
                %v433 = vld [vmem:[%s329 + $0xcc] sm:$0xf]
                %434 = vst [vmem:[%s330 + $0xcc] sm:$0xf] %v433
                %v435 = vld [vmem:[%s329 + $0xd0] sm:$0xf]
                %436 = vst [vmem:[%s330 + $0xd0] sm:$0xf] %v435
                %v437 = vld [vmem:[%s329 + $0xd4] sm:$0xf]
                %438 = vst [vmem:[%s330 + $0xd4] sm:$0xf] %v437
                %v439 = vld [vmem:[%s329 + $0xd8] sm:$0xf]
                %440 = vst [vmem:[%s330 + $0xd8] sm:$0xf] %v439
                %v441 = vld [vmem:[%s329 + $0xdc] sm:$0xf]
                %442 = vst [vmem:[%s330 + $0xdc] sm:$0xf] %v441
                %v443 = vld [vmem:[%s329 + $0xe0] sm:$0xf]
                %444 = vst [vmem:[%s330 + $0xe0] sm:$0xf] %v443
                %v445 = vld [vmem:[%s329 + $0xe4] sm:$0xf]
                %446 = vst [vmem:[%s330 + $0xe4] sm:$0xf] %v445
                %v447 = vld [vmem:[%s329 + $0xe8] sm:$0xf]
                %448 = vst [vmem:[%s330 + $0xe8] sm:$0xf] %v447
                %v449 = vld [vmem:[%s329 + $0xec] sm:$0xf]
                %450 = vst [vmem:[%s330 + $0xec] sm:$0xf] %v449
                %v451 = vld [vmem:[%s329 + $0xf0] sm:$0xf]
                %452 = vst [vmem:[%s330 + $0xf0] sm:$0xf] %v451
                %v453 = vld [vmem:[%s329 + $0xf4] sm:$0xf]
                %454 = vst [vmem:[%s330 + $0xf4] sm:$0xf] %v453
                %v455 = vld [vmem:[%s329 + $0xf8] sm:$0xf]
                %456 = vst [vmem:[%s330 + $0xf8] sm:$0xf] %v455
                %v457 = vld [vmem:[%s329 + $0xfc] sm:$0xf]
                %458 = vst [vmem:[%s330 + $0xfc] sm:$0xf] %v457
                %v459 = vld [vmem:[%s329 + $0x200] sm:$0xf]
                %460 = vst [vmem:[%s330 + $0x100] sm:$0xf] %v459
                %v461 = vld [vmem:[%s329 + $0x204] sm:$0xf]
                %462 = vst [vmem:[%s330 + $0x104] sm:$0xf] %v461
                %v463 = vld [vmem:[%s329 + $0x208] sm:$0xf]
                %464 = vst [vmem:[%s330 + $0x108] sm:$0xf] %v463
                %v465 = vld [vmem:[%s329 + $0x20c] sm:$0xf]
                %466 = vst [vmem:[%s330 + $0x10c] sm:$0xf] %v465
                %v467 = vld [vmem:[%s329 + $0x210] sm:$0xf]
                %468 = vst [vmem:[%s330 + $0x110] sm:$0xf] %v467
                %v469 = vld [vmem:[%s329 + $0x214] sm:$0xf]
                %470 = vst [vmem:[%s330 + $0x114] sm:$0xf] %v469
                %v471 = vld [vmem:[%s329 + $0x218] sm:$0xf]
                %472 = vst [vmem:[%s330 + $0x118] sm:$0xf] %v471
                %v473 = vld [vmem:[%s329 + $0x21c] sm:$0xf]
                %474 = vst [vmem:[%s330 + $0x11c] sm:$0xf] %v473
                %v475 = vld [vmem:[%s329 + $0x220] sm:$0xf]
                %476 = vst [vmem:[%s330 + $0x120] sm:$0xf] %v475
                %v477 = vld [vmem:[%s329 + $0x224] sm:$0xf]
                %478 = vst [vmem:[%s330 + $0x124] sm:$0xf] %v477
                %v479 = vld [vmem:[%s329 + $0x228] sm:$0xf]
                %480 = vst [vmem:[%s330 + $0x128] sm:$0xf] %v479
                %v481 = vld [vmem:[%s329 + $0x22c] sm:$0xf]
                %482 = vst [vmem:[%s330 + $0x12c] sm:$0xf] %v481
                %v483 = vld [vmem:[%s329 + $0x230] sm:$0xf]
                %484 = vst [vmem:[%s330 + $0x130] sm:$0xf] %v483
                %v485 = vld [vmem:[%s329 + $0x234] sm:$0xf]
                %486 = vst [vmem:[%s330 + $0x134] sm:$0xf] %v485
                %v487 = vld [vmem:[%s329 + $0x238] sm:$0xf]
                %488 = vst [vmem:[%s330 + $0x138] sm:$0xf] %v487
                %v489 = vld [vmem:[%s329 + $0x23c] sm:$0xf]
                %490 = vst [vmem:[%s330 + $0x13c] sm:$0xf] %v489
                %v491 = vld [vmem:[%s329 + $0x240] sm:$0xf]
                %492 = vst [vmem:[%s330 + $0x140] sm:$0xf] %v491
                %v493 = vld [vmem:[%s329 + $0x244] sm:$0xf]
                %494 = vst [vmem:[%s330 + $0x144] sm:$0xf] %v493
                %v495 = vld [vmem:[%s329 + $0x248] sm:$0xf]
                %496 = vst [vmem:[%s330 + $0x148] sm:$0xf] %v495
                %v497 = vld [vmem:[%s329 + $0x24c] sm:$0xf]
                %498 = vst [vmem:[%s330 + $0x14c] sm:$0xf] %v497
                %v499 = vld [vmem:[%s329 + $0x250] sm:$0xf]
                %500 = vst [vmem:[%s330 + $0x150] sm:$0xf] %v499
                %v501 = vld [vmem:[%s329 + $0x254] sm:$0xf]
                %502 = vst [vmem:[%s330 + $0x154] sm:$0xf] %v501
                %v503 = vld [vmem:[%s329 + $0x258] sm:$0xf]
                %504 = vst [vmem:[%s330 + $0x158] sm:$0xf] %v503
                %v505 = vld [vmem:[%s329 + $0x25c] sm:$0xf]
                %506 = vst [vmem:[%s330 + $0x15c] sm:$0xf] %v505
                %v507 = vld [vmem:[%s329 + $0x260] sm:$0xf]
                %508 = vst [vmem:[%s330 + $0x160] sm:$0xf] %v507
                %v509 = vld [vmem:[%s329 + $0x264] sm:$0xf]
                %510 = vst [vmem:[%s330 + $0x164] sm:$0xf] %v509
                %v511 = vld [vmem:[%s329 + $0x268] sm:$0xf]
                %512 = vst [vmem:[%s330 + $0x168] sm:$0xf] %v511
                %v513 = vld [vmem:[%s329 + $0x26c] sm:$0xf]
                %514 = vst [vmem:[%s330 + $0x16c] sm:$0xf] %v513
                %v515 = vld [vmem:[%s329 + $0x270] sm:$0xf]
                %516 = vst [vmem:[%s330 + $0x170] sm:$0xf] %v515
                %v517 = vld [vmem:[%s329 + $0x274] sm:$0xf]
                %518 = vst [vmem:[%s330 + $0x174] sm:$0xf] %v517
                %v519 = vld [vmem:[%s329 + $0x278] sm:$0xf]
                %520 = vst [vmem:[%s330 + $0x178] sm:$0xf] %v519
                %v521 = vld [vmem:[%s329 + $0x27c] sm:$0xf]
                %522 = vst [vmem:[%s330 + $0x17c] sm:$0xf] %v521
                %v523 = vld [vmem:[%s329 + $0x280] sm:$0xf]
                %524 = vst [vmem:[%s330 + $0x180] sm:$0xf] %v523
                %v525 = vld [vmem:[%s329 + $0x284] sm:$0xf]
                %526 = vst [vmem:[%s330 + $0x184] sm:$0xf] %v525
                %v527 = vld [vmem:[%s329 + $0x288] sm:$0xf]
                %528 = vst [vmem:[%s330 + $0x188] sm:$0xf] %v527
                %v529 = vld [vmem:[%s329 + $0x28c] sm:$0xf]
                %530 = vst [vmem:[%s330 + $0x18c] sm:$0xf] %v529
                %v531 = vld [vmem:[%s329 + $0x290] sm:$0xf]
                %532 = vst [vmem:[%s330 + $0x190] sm:$0xf] %v531
                %v533 = vld [vmem:[%s329 + $0x294] sm:$0xf]
                %534 = vst [vmem:[%s330 + $0x194] sm:$0xf] %v533
                %v535 = vld [vmem:[%s329 + $0x298] sm:$0xf]
                %536 = vst [vmem:[%s330 + $0x198] sm:$0xf] %v535
                %v537 = vld [vmem:[%s329 + $0x29c] sm:$0xf]
                %538 = vst [vmem:[%s330 + $0x19c] sm:$0xf] %v537
                %v539 = vld [vmem:[%s329 + $0x2a0] sm:$0xf]
                %540 = vst [vmem:[%s330 + $0x1a0] sm:$0xf] %v539
                %v541 = vld [vmem:[%s329 + $0x2a4] sm:$0xf]
                %542 = vst [vmem:[%s330 + $0x1a4] sm:$0xf] %v541
                %v543 = vld [vmem:[%s329 + $0x2a8] sm:$0xf]
                %544 = vst [vmem:[%s330 + $0x1a8] sm:$0xf] %v543
                %v545 = vld [vmem:[%s329 + $0x2ac] sm:$0xf]
                %546 = vst [vmem:[%s330 + $0x1ac] sm:$0xf] %v545
                %v547 = vld [vmem:[%s329 + $0x2b0] sm:$0xf]
                %548 = vst [vmem:[%s330 + $0x1b0] sm:$0xf] %v547
                %v549 = vld [vmem:[%s329 + $0x2b4] sm:$0xf]
                %550 = vst [vmem:[%s330 + $0x1b4] sm:$0xf] %v549
                %v551 = vld [vmem:[%s329 + $0x2b8] sm:$0xf]
                %552 = vst [vmem:[%s330 + $0x1b8] sm:$0xf] %v551
                %v553 = vld [vmem:[%s329 + $0x2bc] sm:$0xf]
                %554 = vst [vmem:[%s330 + $0x1bc] sm:$0xf] %v553
                %v555 = vld [vmem:[%s329 + $0x2c0] sm:$0xf]
                %556 = vst [vmem:[%s330 + $0x1c0] sm:$0xf] %v555
                %v557 = vld [vmem:[%s329 + $0x2c4] sm:$0xf]
                %558 = vst [vmem:[%s330 + $0x1c4] sm:$0xf] %v557
                %v559 = vld [vmem:[%s329 + $0x2c8] sm:$0xf]
                %560 = vst [vmem:[%s330 + $0x1c8] sm:$0xf] %v559
                %v561 = vld [vmem:[%s329 + $0x2cc] sm:$0xf]
                %562 = vst [vmem:[%s330 + $0x1cc] sm:$0xf] %v561
                %v563 = vld [vmem:[%s329 + $0x2d0] sm:$0xf]
                %564 = vst [vmem:[%s330 + $0x1d0] sm:$0xf] %v563
                %v565 = vld [vmem:[%s329 + $0x2d4] sm:$0xf]
                %566 = vst [vmem:[%s330 + $0x1d4] sm:$0xf] %v565
                %v567 = vld [vmem:[%s329 + $0x2d8] sm:$0xf]
                %568 = vst [vmem:[%s330 + $0x1d8] sm:$0xf] %v567
                %v569 = vld [vmem:[%s329 + $0x2dc] sm:$0xf]
                %570 = vst [vmem:[%s330 + $0x1dc] sm:$0xf] %v569
                %v571 = vld [vmem:[%s329 + $0x2e0] sm:$0xf]
                %572 = vst [vmem:[%s330 + $0x1e0] sm:$0xf] %v571
                %v573 = vld [vmem:[%s329 + $0x2e4] sm:$0xf]
                %574 = vst [vmem:[%s330 + $0x1e4] sm:$0xf] %v573
                %v575 = vld [vmem:[%s329 + $0x2e8] sm:$0xf]
                %576 = vst [vmem:[%s330 + $0x1e8] sm:$0xf] %v575
                %v577 = vld [vmem:[%s329 + $0x2ec] sm:$0xf]
                %578 = vst [vmem:[%s330 + $0x1ec] sm:$0xf] %v577
                %v579 = vld [vmem:[%s329 + $0x2f0] sm:$0xf]
                %580 = vst [vmem:[%s330 + $0x1f0] sm:$0xf] %v579
                %v581 = vld [vmem:[%s329 + $0x2f4] sm:$0xf]
                %582 = vst [vmem:[%s330 + $0x1f4] sm:$0xf] %v581
                %v583 = vld [vmem:[%s329 + $0x2f8] sm:$0xf]
                %584 = vst [vmem:[%s330 + $0x1f8] sm:$0xf] %v583
                %v585 = vld [vmem:[%s329 + $0x2fc] sm:$0xf]
                %586 = vst [vmem:[%s330 + $0x1fc] sm:$0xf] %v585
                %v587 = vld [vmem:[%s329 + $0x400] sm:$0xf]
                %588 = vst [vmem:[%s330 + $0x200] sm:$0xf] %v587
                %v589 = vld [vmem:[%s329 + $0x404] sm:$0xf]
                %590 = vst [vmem:[%s330 + $0x204] sm:$0xf] %v589
                %v591 = vld [vmem:[%s329 + $0x408] sm:$0xf]
                %592 = vst [vmem:[%s330 + $0x208] sm:$0xf] %v591
                %v593 = vld [vmem:[%s329 + $0x40c] sm:$0xf]
                %594 = vst [vmem:[%s330 + $0x20c] sm:$0xf] %v593
                %v595 = vld [vmem:[%s329 + $0x410] sm:$0xf]
                %596 = vst [vmem:[%s330 + $0x210] sm:$0xf] %v595
                %v597 = vld [vmem:[%s329 + $0x414] sm:$0xf]
                %598 = vst [vmem:[%s330 + $0x214] sm:$0xf] %v597
                %v599 = vld [vmem:[%s329 + $0x418] sm:$0xf]
                %600 = vst [vmem:[%s330 + $0x218] sm:$0xf] %v599
                %v601 = vld [vmem:[%s329 + $0x41c] sm:$0xf]
                %602 = vst [vmem:[%s330 + $0x21c] sm:$0xf] %v601
                %v603 = vld [vmem:[%s329 + $0x420] sm:$0xf]
                %604 = vst [vmem:[%s330 + $0x220] sm:$0xf] %v603
                %v605 = vld [vmem:[%s329 + $0x424] sm:$0xf]
                %606 = vst [vmem:[%s330 + $0x224] sm:$0xf] %v605
                %v607 = vld [vmem:[%s329 + $0x428] sm:$0xf]
                %608 = vst [vmem:[%s330 + $0x228] sm:$0xf] %v607
                %v609 = vld [vmem:[%s329 + $0x42c] sm:$0xf]
                %610 = vst [vmem:[%s330 + $0x22c] sm:$0xf] %v609
                %v611 = vld [vmem:[%s329 + $0x430] sm:$0xf]
                %612 = vst [vmem:[%s330 + $0x230] sm:$0xf] %v611
                %v613 = vld [vmem:[%s329 + $0x434] sm:$0xf]
                %614 = vst [vmem:[%s330 + $0x234] sm:$0xf] %v613
                %v615 = vld [vmem:[%s329 + $0x438] sm:$0xf]
                %616 = vst [vmem:[%s330 + $0x238] sm:$0xf] %v615
                %v617 = vld [vmem:[%s329 + $0x43c] sm:$0xf]
                %618 = vst [vmem:[%s330 + $0x23c] sm:$0xf] %v617
                %v619 = vld [vmem:[%s329 + $0x440] sm:$0xf]
                %620 = vst [vmem:[%s330 + $0x240] sm:$0xf] %v619
                %v621 = vld [vmem:[%s329 + $0x444] sm:$0xf]
                %622 = vst [vmem:[%s330 + $0x244] sm:$0xf] %v621
                %v623 = vld [vmem:[%s329 + $0x448] sm:$0xf]
                %624 = vst [vmem:[%s330 + $0x248] sm:$0xf] %v623
                %v625 = vld [vmem:[%s329 + $0x44c] sm:$0xf]
                %626 = vst [vmem:[%s330 + $0x24c] sm:$0xf] %v625
                %v627 = vld [vmem:[%s329 + $0x450] sm:$0xf]
                %628 = vst [vmem:[%s330 + $0x250] sm:$0xf] %v627
                %v629 = vld [vmem:[%s329 + $0x454] sm:$0xf]
                %630 = vst [vmem:[%s330 + $0x254] sm:$0xf] %v629
                %v631 = vld [vmem:[%s329 + $0x458] sm:$0xf]
                %632 = vst [vmem:[%s330 + $0x258] sm:$0xf] %v631
                %v633 = vld [vmem:[%s329 + $0x45c] sm:$0xf]
                %634 = vst [vmem:[%s330 + $0x25c] sm:$0xf] %v633
                %v635 = vld [vmem:[%s329 + $0x460] sm:$0xf]
                %636 = vst [vmem:[%s330 + $0x260] sm:$0xf] %v635
                %v637 = vld [vmem:[%s329 + $0x464] sm:$0xf]
                %638 = vst [vmem:[%s330 + $0x264] sm:$0xf] %v637
                %v639 = vld [vmem:[%s329 + $0x468] sm:$0xf]
                %640 = vst [vmem:[%s330 + $0x268] sm:$0xf] %v639
                %v641 = vld [vmem:[%s329 + $0x46c] sm:$0xf]
                %642 = vst [vmem:[%s330 + $0x26c] sm:$0xf] %v641
                %v643 = vld [vmem:[%s329 + $0x470] sm:$0xf]
                %644 = vst [vmem:[%s330 + $0x270] sm:$0xf] %v643
                %v645 = vld [vmem:[%s329 + $0x474] sm:$0xf]
                %646 = vst [vmem:[%s330 + $0x274] sm:$0xf] %v645
                %v647 = vld [vmem:[%s329 + $0x478] sm:$0xf]
                %648 = vst [vmem:[%s330 + $0x278] sm:$0xf] %v647
                %v649 = vld [vmem:[%s329 + $0x47c] sm:$0xf]
                %650 = vst [vmem:[%s330 + $0x27c] sm:$0xf] %v649
                %v651 = vld [vmem:[%s329 + $0x480] sm:$0xf]
                %652 = vst [vmem:[%s330 + $0x280] sm:$0xf] %v651
                %v653 = vld [vmem:[%s329 + $0x484] sm:$0xf]
                %654 = vst [vmem:[%s330 + $0x284] sm:$0xf] %v653
                %v655 = vld [vmem:[%s329 + $0x488] sm:$0xf]
                %656 = vst [vmem:[%s330 + $0x288] sm:$0xf] %v655
                %v657 = vld [vmem:[%s329 + $0x48c] sm:$0xf]
                %658 = vst [vmem:[%s330 + $0x28c] sm:$0xf] %v657
                %v659 = vld [vmem:[%s329 + $0x490] sm:$0xf]
                %660 = vst [vmem:[%s330 + $0x290] sm:$0xf] %v659
                %v661 = vld [vmem:[%s329 + $0x494] sm:$0xf]
                %662 = vst [vmem:[%s330 + $0x294] sm:$0xf] %v661
                %v663 = vld [vmem:[%s329 + $0x498] sm:$0xf]
                %664 = vst [vmem:[%s330 + $0x298] sm:$0xf] %v663
                %v665 = vld [vmem:[%s329 + $0x49c] sm:$0xf]
                %666 = vst [vmem:[%s330 + $0x29c] sm:$0xf] %v665
                %v667 = vld [vmem:[%s329 + $0x4a0] sm:$0xf]
                %668 = vst [vmem:[%s330 + $0x2a0] sm:$0xf] %v667
                %v669 = vld [vmem:[%s329 + $0x4a4] sm:$0xf]
                %670 = vst [vmem:[%s330 + $0x2a4] sm:$0xf] %v669
                %v671 = vld [vmem:[%s329 + $0x4a8] sm:$0xf]
                %672 = vst [vmem:[%s330 + $0x2a8] sm:$0xf] %v671
                %v673 = vld [vmem:[%s329 + $0x4ac] sm:$0xf]
                %674 = vst [vmem:[%s330 + $0x2ac] sm:$0xf] %v673
                %v675 = vld [vmem:[%s329 + $0x4b0] sm:$0xf]
                %676 = vst [vmem:[%s330 + $0x2b0] sm:$0xf] %v675
                %v677 = vld [vmem:[%s329 + $0x4b4] sm:$0xf]
                %678 = vst [vmem:[%s330 + $0x2b4] sm:$0xf] %v677
                %v679 = vld [vmem:[%s329 + $0x4b8] sm:$0xf]
                %680 = vst [vmem:[%s330 + $0x2b8] sm:$0xf] %v679
                %v681 = vld [vmem:[%s329 + $0x4bc] sm:$0xf]
                %682 = vst [vmem:[%s330 + $0x2bc] sm:$0xf] %v681
                %v683 = vld [vmem:[%s329 + $0x4c0] sm:$0xf]
                %684 = vst [vmem:[%s330 + $0x2c0] sm:$0xf] %v683
                %v685 = vld [vmem:[%s329 + $0x4c4] sm:$0xf]
                %686 = vst [vmem:[%s330 + $0x2c4] sm:$0xf] %v685
                %v687 = vld [vmem:[%s329 + $0x4c8] sm:$0xf]
                %688 = vst [vmem:[%s330 + $0x2c8] sm:$0xf] %v687
                %v689 = vld [vmem:[%s329 + $0x4cc] sm:$0xf]
                %690 = vst [vmem:[%s330 + $0x2cc] sm:$0xf] %v689
                %v691 = vld [vmem:[%s329 + $0x4d0] sm:$0xf]
                %692 = vst [vmem:[%s330 + $0x2d0] sm:$0xf] %v691
                %v693 = vld [vmem:[%s329 + $0x4d4] sm:$0xf]
                %694 = vst [vmem:[%s330 + $0x2d4] sm:$0xf] %v693
                %v695 = vld [vmem:[%s329 + $0x4d8] sm:$0xf]
                %696 = vst [vmem:[%s330 + $0x2d8] sm:$0xf] %v695
                %v697 = vld [vmem:[%s329 + $0x4dc] sm:$0xf]
                %698 = vst [vmem:[%s330 + $0x2dc] sm:$0xf] %v697
                %v699 = vld [vmem:[%s329 + $0x4e0] sm:$0xf]
                %700 = vst [vmem:[%s330 + $0x2e0] sm:$0xf] %v699
                %v701 = vld [vmem:[%s329 + $0x4e4] sm:$0xf]
                %702 = vst [vmem:[%s330 + $0x2e4] sm:$0xf] %v701
                %v703 = vld [vmem:[%s329 + $0x4e8] sm:$0xf]
                %704 = vst [vmem:[%s330 + $0x2e8] sm:$0xf] %v703
                %v705 = vld [vmem:[%s329 + $0x4ec] sm:$0xf]
                %706 = vst [vmem:[%s330 + $0x2ec] sm:$0xf] %v705
                %v707 = vld [vmem:[%s329 + $0x4f0] sm:$0xf]
                %708 = vst [vmem:[%s330 + $0x2f0] sm:$0xf] %v707
                %v709 = vld [vmem:[%s329 + $0x4f4] sm:$0xf]
                %710 = vst [vmem:[%s330 + $0x2f4] sm:$0xf] %v709
                %v711 = vld [vmem:[%s329 + $0x4f8] sm:$0xf]
                %712 = vst [vmem:[%s330 + $0x2f8] sm:$0xf] %v711
                %v713 = vld [vmem:[%s329 + $0x4fc] sm:$0xf]
                %714 = vst [vmem:[%s330 + $0x2fc] sm:$0xf] %v713
              $region69: #{_forward_impl.1} parent=63 // loop_footer
                %s328 = sadd.s32 1, %s324
              $region70: #{_forward_impl.1} parent=63 // loop_footer_branch
                %323 = sbr.rel target = $region66
              $region71: #{_forward_impl.1} parent=63 // loop_exit
                _
            $region64: #{_forward_impl.1} parent=55 // pred_fallthru
              _
          $region56: #{_forward_impl.1} parent=51 // pred_fallthru
            _
          %1118 = vnop
        $region52: #{_forward_impl.1} parent=47 // pred_fallthru
          _
        // Predicated region
        $region90: #{_forward_impl.1} parent=47 // pred_check
          %p1119 = pneg %p84
        $region91: #{_forward_impl.1} parent=47 // pred_check_branch
          %1121 = sbr.rel (%p1119) target = $region93
        $region92: #{_forward_impl.1} parent=47 // pred_region
          %s1122 = smul.u32 64, %s17
          %p1123 = scmp.lt.s32.totalorder %s1122, 127
          %s1124 = scalar_select %p1123, %s1122, 127
          %s1125 = smul.addr %s1124, 4
          %s1126 = scalar_lea.vmem %s2, %s1125
          %s1127 = smul.u32 64, %s17
        $region93: #{_forward_impl.1} parent=47 // pred_fallthru
          _
      $region48: #{_forward_impl.1} parent=5 // pred_fallthru
        _
      %p1128 = scmp.le.s32.totalorder 1, %s17
      %p1129 = scmp.lt.s32.totalorder %s17, 3
      %p1130 = pnand %p1128, %p1129
      %p1131 = pneg %p1130
      // Predicated region
      $region94: #{_forward_impl.1} parent=5 // pred_check
        _
      $region95: #{_forward_impl.1} parent=5 // pred_check_branch
        %1133 = sbr.rel (%p1130) target = $region97
      $region96: #{_forward_impl.1} parent=5 // pred_region
        %s1134 = ssub.s32 %s17, 1
        %s1135 = sand.u32 %s51, 1
        %s1136 = sand.u32 %s51, 1
        %s1137 = smul.addr %s1136, 768
        %s1138 = scalar_lea.vmem [#allocation3], %s1137
        // Predicated region
        $region98: #{_forward_impl.1} parent=96 // pred_check
          %p1139 = pneg %p64
        $region99: #{_forward_impl.1} parent=96 // pred_check_branch
          %1141 = sbr.rel (%p1139) target = $region101
        $region100: #{_forward_impl.1} parent=96 // pred_region
          _
        $region101: #{_forward_impl.1} parent=96 // pred_fallthru
          _
        %p1142 = pneg %p38
        %p1143 = pneg %p35
        %s1144 = sand.u32 %s51, 1
        %s1145 = sand.u32 %s51, 1
        %s1146 = smul.addr %s1145, 768
        %s1147 = scalar_lea.vmem [#allocation3], %s1146
        %p1148 = pneg %p64
        %p1149 = pneg %p61
        %s1150 = smul.u32 64, %s22
        %p1151 = scmp.lt.s32.totalorder %s1150, 127
        %s1152 = scalar_select %p1151, %s1150, 127
        %s1153 = smul.addr %s1152, 4
        %s1154 = scalar_lea.vmem %s2, %s1153
        %p1155 = pneg %p90
        %p1156 = pneg %p87
        %p1157 = pneg %p111
        %p1158 = pneg %p108
        %p1159 = pneg %p132
        %p1160 = pneg %p129
        %p1161 = pneg %p153
        %p1162 = pneg %p150
        %p1163 = pneg %p174
        %p1164 = pneg %p171
        %p1165 = pneg %p195
        %p1166 = pneg %p192
        %p1167 = pneg %p216
        %p1168 = pneg %p213
        %p1169 = pneg %p237
        %p1170 = pneg %p234
        %p1171 = pneg %p263
        %p1172 = pneg %p260
        %s1173 = smul.u32 64, %s22
        %p1174 = scmp.lt.s32.totalorder %s1173, 127
        %s1175 = scalar_select %p1174, %s1173, 127
        %s1176 = smul.addr %s1175, 8
        %s1177 = scalar_lea.vmem %s10, %s1176
        %s1178 = smul.u32 64, %s22
        %s1179 = smul.u32 64, %s22
        %p1180 = scmp.lt.s32.totalorder %s1179, 127
        %s1181 = scalar_select %p1180, %s1179, 127
        %s1182 = smul.addr %s1181, 4
        %s1183 = scalar_lea.vmem %s2, %s1182
        %s1184 = smul.u32 64, %s22
        %s1185 = smul.u32 64, %s22
        %p1186 = scmp.lt.s32.totalorder %s1185, 127
        %s1187 = scalar_select %p1186, %s1185, 127
        %s1188 = smul.addr %s1187, 8
        %s1189 = scalar_lea.vmem %s10, %s1188
        %s1190 = smul.u32 64, %s22
        %s1192 = sld [smem:[#allocation2]]
        %v1193 = vld [vmem:[%s3] sm:$0x1]
        %v1194 = vld [vmem:[%s4] sm:$0x1]
        %v1195 = vld [vmem:[%s1138] sm:$0xf]
        %v1196 = vld [vmem:[%s1138 + $0x4] sm:$0xf]
        %v1197 = vld [vmem:[%s1138 + $0x8] sm:$0xf]
        %v1198 = vld [vmem:[%s1138 + $0xc] sm:$0xf]
        %v1199 = vld [vmem:[%s1138 + $0x10] sm:$0xf]
        %v1200 = vld [vmem:[%s1138 + $0x14] sm:$0xf]
        %v1201 = vld [vmem:[%s1138 + $0x18] sm:$0xf]
        %v1202 = vld [vmem:[%s1138 + $0x1c] sm:$0xf]
        %v1203 = vld [vmem:[%s1138 + $0x20] sm:$0xf]
        %v1204 = vld [vmem:[%s1138 + $0x24] sm:$0xf]
        %v1205 = vld [vmem:[%s1138 + $0x28] sm:$0xf]
        %v1206 = vld [vmem:[%s1138 + $0x2c] sm:$0xf]
        %v1207 = vld [vmem:[%s1138 + $0x30] sm:$0xf]
        %v1208 = vld [vmem:[%s1138 + $0x34] sm:$0xf]
        %v1209 = vld [vmem:[%s1138 + $0x38] sm:$0xf]
        %v1210 = vld [vmem:[%s1138 + $0x3c] sm:$0xf]
        %v1211 = vld [vmem:[%s1138 + $0x40] sm:$0xf]
        %v1212 = vld [vmem:[%s1138 + $0x44] sm:$0xf]
        %v1213 = vld [vmem:[%s1138 + $0x48] sm:$0xf]
        %v1214 = vld [vmem:[%s1138 + $0x4c] sm:$0xf]
        %v1215 = vld [vmem:[%s1138 + $0x50] sm:$0xf]
        %v1216 = vld [vmem:[%s1138 + $0x54] sm:$0xf]
        %v1217 = vld [vmem:[%s1138 + $0x58] sm:$0xf]
        %v1218 = vld [vmem:[%s1138 + $0x5c] sm:$0xf]
        %v1219 = vld [vmem:[%s1138 + $0x60] sm:$0xf]
        %v1220 = vld [vmem:[%s1138 + $0x64] sm:$0xf]
        %v1221 = vld [vmem:[%s1138 + $0x68] sm:$0xf]
        %v1222 = vld [vmem:[%s1138 + $0x6c] sm:$0xf]
        %v1223 = vld [vmem:[%s1138 + $0x70] sm:$0xf]
        %v1224 = vld [vmem:[%s1138 + $0x74] sm:$0xf]
        %v1225 = vld [vmem:[%s1138 + $0x78] sm:$0xf]
        %v1226 = vld [vmem:[%s1138 + $0x7c] sm:$0xf]
        %v1227 = vld [vmem:[%s1138 + $0x80] sm:$0xf]
        %v1228 = vld [vmem:[%s1138 + $0x84] sm:$0xf]
        %v1229 = vld [vmem:[%s1138 + $0x88] sm:$0xf]
        %v1230 = vld [vmem:[%s1138 + $0x8c] sm:$0xf]
        %v1231 = vld [vmem:[%s1138 + $0x90] sm:$0xf]
        %v1232 = vld [vmem:[%s1138 + $0x94] sm:$0xf]
        %v1233 = vld [vmem:[%s1138 + $0x98] sm:$0xf]
        %v1234 = vld [vmem:[%s1138 + $0x9c] sm:$0xf]
        %v1235 = vld [vmem:[%s1138 + $0xa0] sm:$0xf]
        %v1236 = vld [vmem:[%s1138 + $0xa4] sm:$0xf]
        %v1237 = vld [vmem:[%s1138 + $0xa8] sm:$0xf]
        %v1238 = vld [vmem:[%s1138 + $0xac] sm:$0xf]
        %v1239 = vld [vmem:[%s1138 + $0xb0] sm:$0xf]
        %v1240 = vld [vmem:[%s1138 + $0xb4] sm:$0xf]
        %v1241 = vld [vmem:[%s1138 + $0xb8] sm:$0xf]
        %v1242 = vld [vmem:[%s1138 + $0xbc] sm:$0xf]
        %v1243 = vld [vmem:[%s1138 + $0xc0] sm:$0xf]
        %v1244 = vld [vmem:[%s1138 + $0xc4] sm:$0xf]
        %v1245 = vld [vmem:[%s1138 + $0xc8] sm:$0xf]
        %v1246 = vld [vmem:[%s1138 + $0xcc] sm:$0xf]
        %v1247 = vld [vmem:[%s1138 + $0xd0] sm:$0xf]
        %v1248 = vld [vmem:[%s1138 + $0xd4] sm:$0xf]
        %v1249 = vld [vmem:[%s1138 + $0xd8] sm:$0xf]
        %v1250 = vld [vmem:[%s1138 + $0xdc] sm:$0xf]
        %v1251 = vld [vmem:[%s1138 + $0xe0] sm:$0xf]
        %v1252 = vld [vmem:[%s1138 + $0xe4] sm:$0xf]
        %v1253 = vld [vmem:[%s1138 + $0xe8] sm:$0xf]
        %v1254 = vld [vmem:[%s1138 + $0xec] sm:$0xf]
        %v1255 = vld [vmem:[%s1138 + $0xf0] sm:$0xf]
        %v1256 = vld [vmem:[%s1138 + $0xf4] sm:$0xf]
        %v1257 = vld [vmem:[%s1138 + $0xf8] sm:$0xf]
        %v1258 = vld [vmem:[%s1138 + $0xfc] sm:$0xf]
        %v1259 = vunpack.c.l.bf16 %v1195
        %v1260 = vunpack.c.l.bf16 %v1196
        %v1261 = vunpack.c.l.bf16 %v1197
        %v1262 = vunpack.c.l.bf16 %v1198
        %v1263 = vunpack.c.l.bf16 %v1199
        %v1264 = vunpack.c.l.bf16 %v1200
        %v1265 = vunpack.c.l.bf16 %v1201
        %v1266 = vunpack.c.l.bf16 %v1202
        %v1267 = vunpack.c.l.bf16 %v1203
        %v1268 = vunpack.c.l.bf16 %v1204
        %v1269 = vunpack.c.l.bf16 %v1205
        %v1270 = vunpack.c.l.bf16 %v1206
        %v1271 = vunpack.c.l.bf16 %v1207
        %v1272 = vunpack.c.l.bf16 %v1208
        %v1273 = vunpack.c.l.bf16 %v1209
        %v1274 = vunpack.c.l.bf16 %v1210
        %v1275 = vunpack.c.l.bf16 %v1211
        %v1276 = vunpack.c.l.bf16 %v1212
        %v1277 = vunpack.c.l.bf16 %v1213
        %v1278 = vunpack.c.l.bf16 %v1214
        %v1279 = vunpack.c.l.bf16 %v1215
        %v1280 = vunpack.c.l.bf16 %v1216
        %v1281 = vunpack.c.l.bf16 %v1217
        %v1282 = vunpack.c.l.bf16 %v1218
        %v1283 = vunpack.c.l.bf16 %v1219
        %v1284 = vunpack.c.l.bf16 %v1220
        %v1285 = vunpack.c.l.bf16 %v1221
        %v1286 = vunpack.c.l.bf16 %v1222
        %v1287 = vunpack.c.l.bf16 %v1223
        %v1288 = vunpack.c.l.bf16 %v1224
        %v1289 = vunpack.c.l.bf16 %v1225
        %v1290 = vunpack.c.l.bf16 %v1226
        %v1291 = vunpack.c.l.bf16 %v1227
        %v1292 = vunpack.c.l.bf16 %v1228
        %v1293 = vunpack.c.l.bf16 %v1229
        %v1294 = vunpack.c.l.bf16 %v1230
        %v1295 = vunpack.c.l.bf16 %v1231
        %v1296 = vunpack.c.l.bf16 %v1232
        %v1297 = vunpack.c.l.bf16 %v1233
        %v1298 = vunpack.c.l.bf16 %v1234
        %v1299 = vunpack.c.l.bf16 %v1235
        %v1300 = vunpack.c.l.bf16 %v1236
        %v1301 = vunpack.c.l.bf16 %v1237
        %v1302 = vunpack.c.l.bf16 %v1238
        %v1303 = vunpack.c.l.bf16 %v1239
        %v1304 = vunpack.c.l.bf16 %v1240
        %v1305 = vunpack.c.l.bf16 %v1241
        %v1306 = vunpack.c.l.bf16 %v1242
        %v1307 = vunpack.c.l.bf16 %v1243
        %v1308 = vunpack.c.l.bf16 %v1244
        %v1309 = vunpack.c.l.bf16 %v1245
        %v1310 = vunpack.c.l.bf16 %v1246
        %v1311 = vunpack.c.l.bf16 %v1247
        %v1312 = vunpack.c.l.bf16 %v1248
        %v1313 = vunpack.c.l.bf16 %v1249
        %v1314 = vunpack.c.l.bf16 %v1250
        %v1315 = vunpack.c.l.bf16 %v1251
        %v1316 = vunpack.c.l.bf16 %v1252
        %v1317 = vunpack.c.l.bf16 %v1253
        %v1318 = vunpack.c.l.bf16 %v1254
        %v1319 = vunpack.c.l.bf16 %v1255
        %v1320 = vunpack.c.l.bf16 %v1256
        %v1321 = vunpack.c.l.bf16 %v1257
        %v1322 = vunpack.c.l.bf16 %v1258
        %v1324 = vlaneseq
        %v1325 = vshrl.u32 %v1324, 7
        %v1326 = vsub.s32 0, %v1325
        %v1327 = vrot.slane %v1193, %v1326
        %v1329 = vmul.f32 %v1259, %v1327
        %v1330 = vmul.f32 %v1260, %v1327
        %v1331 = vmul.f32 %v1261, %v1327
        %v1332 = vmul.f32 %v1262, %v1327
        %v1333 = vmul.f32 %v1263, %v1327
        %v1334 = vmul.f32 %v1264, %v1327
        %v1335 = vmul.f32 %v1265, %v1327
        %v1336 = vmul.f32 %v1266, %v1327
        %v1337 = vmul.f32 %v1267, %v1327
        %v1338 = vmul.f32 %v1268, %v1327
        %v1339 = vmul.f32 %v1269, %v1327
        %v1340 = vmul.f32 %v1270, %v1327
        %v1341 = vmul.f32 %v1271, %v1327
        %v1342 = vmul.f32 %v1272, %v1327
        %v1343 = vmul.f32 %v1273, %v1327
        %v1344 = vmul.f32 %v1274, %v1327
        %v1345 = vmul.f32 %v1275, %v1327
        %v1346 = vmul.f32 %v1276, %v1327
        %v1347 = vmul.f32 %v1277, %v1327
        %v1348 = vmul.f32 %v1278, %v1327
        %v1349 = vmul.f32 %v1279, %v1327
        %v1350 = vmul.f32 %v1280, %v1327
        %v1351 = vmul.f32 %v1281, %v1327
        %v1352 = vmul.f32 %v1282, %v1327
        %v1353 = vmul.f32 %v1283, %v1327
        %v1354 = vmul.f32 %v1284, %v1327
        %v1355 = vmul.f32 %v1285, %v1327
        %v1356 = vmul.f32 %v1286, %v1327
        %v1357 = vmul.f32 %v1287, %v1327
        %v1358 = vmul.f32 %v1288, %v1327
        %v1359 = vmul.f32 %v1289, %v1327
        %v1360 = vmul.f32 %v1290, %v1327
        %v1361 = vmul.f32 %v1291, %v1327
        %v1362 = vmul.f32 %v1292, %v1327
        %v1363 = vmul.f32 %v1293, %v1327
        %v1364 = vmul.f32 %v1294, %v1327
        %v1365 = vmul.f32 %v1295, %v1327
        %v1366 = vmul.f32 %v1296, %v1327
        %v1367 = vmul.f32 %v1297, %v1327
        %v1368 = vmul.f32 %v1298, %v1327
        %v1369 = vmul.f32 %v1299, %v1327
        %v1370 = vmul.f32 %v1300, %v1327
        %v1371 = vmul.f32 %v1301, %v1327
        %v1372 = vmul.f32 %v1302, %v1327
        %v1373 = vmul.f32 %v1303, %v1327
        %v1374 = vmul.f32 %v1304, %v1327
        %v1375 = vmul.f32 %v1305, %v1327
        %v1376 = vmul.f32 %v1306, %v1327
        %v1377 = vmul.f32 %v1307, %v1327
        %v1378 = vmul.f32 %v1308, %v1327
        %v1379 = vmul.f32 %v1309, %v1327
        %v1380 = vmul.f32 %v1310, %v1327
        %v1381 = vmul.f32 %v1311, %v1327
        %v1382 = vmul.f32 %v1312, %v1327
        %v1383 = vmul.f32 %v1313, %v1327
        %v1384 = vmul.f32 %v1314, %v1327
        %v1385 = vmul.f32 %v1315, %v1327
        %v1386 = vmul.f32 %v1316, %v1327
        %v1387 = vmul.f32 %v1317, %v1327
        %v1388 = vmul.f32 %v1318, %v1327
        %v1389 = vmul.f32 %v1319, %v1327
        %v1390 = vmul.f32 %v1320, %v1327
        %v1391 = vmul.f32 %v1321, %v1327
        %v1392 = vmul.f32 %v1322, %v1327
        %vm1393 = vcmask 523264
        %v1394 = vsel %vm1393, %v1329, 0.0
        %1395 = vadd.xlane.f32.xlu0 %v1394
        %v1396 = vpop.xlane.xlu0 %1395
        %v1397 = vsel %vm1393, %v1330, 0.0
        %1398 = vadd.xlane.f32.xlu0 %v1397
        %v1399 = vpop.xlane.xlu0 %1398
        %v1400 = vsel %vm1393, %v1331, 0.0
        %1401 = vadd.xlane.f32.xlu0 %v1400
        %v1402 = vpop.xlane.xlu0 %1401
        %v1403 = vsel %vm1393, %v1332, 0.0
        %1404 = vadd.xlane.f32.xlu0 %v1403
        %v1405 = vpop.xlane.xlu0 %1404
        %v1406 = vsel %vm1393, %v1333, 0.0
        %1407 = vadd.xlane.f32.xlu0 %v1406
        %v1408 = vpop.xlane.xlu0 %1407
        %v1409 = vsel %vm1393, %v1334, 0.0
        %1410 = vadd.xlane.f32.xlu0 %v1409
        %v1411 = vpop.xlane.xlu0 %1410
        %v1412 = vsel %vm1393, %v1335, 0.0
        %1413 = vadd.xlane.f32.xlu0 %v1412
        %v1414 = vpop.xlane.xlu0 %1413
        %v1415 = vsel %vm1393, %v1336, 0.0
        %1416 = vadd.xlane.f32.xlu0 %v1415
        %v1417 = vpop.xlane.xlu0 %1416
        %v1418 = vsel %vm1393, %v1337, 0.0
        %1419 = vadd.xlane.f32.xlu0 %v1418
        %v1420 = vpop.xlane.xlu0 %1419
        %v1421 = vsel %vm1393, %v1338, 0.0
        %1422 = vadd.xlane.f32.xlu0 %v1421
        %v1423 = vpop.xlane.xlu0 %1422
        %v1424 = vsel %vm1393, %v1339, 0.0
        %1425 = vadd.xlane.f32.xlu0 %v1424
        %v1426 = vpop.xlane.xlu0 %1425
        %v1427 = vsel %vm1393, %v1340, 0.0
        %1428 = vadd.xlane.f32.xlu0 %v1427
        %v1429 = vpop.xlane.xlu0 %1428
        %v1430 = vsel %vm1393, %v1341, 0.0
        %1431 = vadd.xlane.f32.xlu0 %v1430
        %v1432 = vpop.xlane.xlu0 %1431
        %v1433 = vsel %vm1393, %v1342, 0.0
        %1434 = vadd.xlane.f32.xlu0 %v1433
        %v1435 = vpop.xlane.xlu0 %1434
        %v1436 = vsel %vm1393, %v1343, 0.0
        %1437 = vadd.xlane.f32.xlu0 %v1436
        %v1438 = vpop.xlane.xlu0 %1437
        %v1439 = vsel %vm1393, %v1344, 0.0
        %1440 = vadd.xlane.f32.xlu0 %v1439
        %v1441 = vpop.xlane.xlu0 %1440
        %v1442 = vsel %vm1393, %v1345, 0.0
        %1443 = vadd.xlane.f32.xlu0 %v1442
        %v1444 = vpop.xlane.xlu0 %1443
        %v1445 = vsel %vm1393, %v1346, 0.0
        %1446 = vadd.xlane.f32.xlu0 %v1445
        %v1447 = vpop.xlane.xlu0 %1446
        %v1448 = vsel %vm1393, %v1347, 0.0
        %1449 = vadd.xlane.f32.xlu0 %v1448
        %v1450 = vpop.xlane.xlu0 %1449
        %v1451 = vsel %vm1393, %v1348, 0.0
        %1452 = vadd.xlane.f32.xlu0 %v1451
        %v1453 = vpop.xlane.xlu0 %1452
        %v1454 = vsel %vm1393, %v1349, 0.0
        %1455 = vadd.xlane.f32.xlu0 %v1454
        %v1456 = vpop.xlane.xlu0 %1455
        %v1457 = vsel %vm1393, %v1350, 0.0
        %1458 = vadd.xlane.f32.xlu0 %v1457
        %v1459 = vpop.xlane.xlu0 %1458
        %v1460 = vsel %vm1393, %v1351, 0.0
        %1461 = vadd.xlane.f32.xlu0 %v1460
        %v1462 = vpop.xlane.xlu0 %1461
        %v1463 = vsel %vm1393, %v1352, 0.0
        %1464 = vadd.xlane.f32.xlu0 %v1463
        %v1465 = vpop.xlane.xlu0 %1464
        %v1466 = vsel %vm1393, %v1353, 0.0
        %1467 = vadd.xlane.f32.xlu0 %v1466
        %v1468 = vpop.xlane.xlu0 %1467
        %v1469 = vsel %vm1393, %v1354, 0.0
        %1470 = vadd.xlane.f32.xlu0 %v1469
        %v1471 = vpop.xlane.xlu0 %1470
        %v1472 = vsel %vm1393, %v1355, 0.0
        %1473 = vadd.xlane.f32.xlu0 %v1472
        %v1474 = vpop.xlane.xlu0 %1473
        %v1475 = vsel %vm1393, %v1356, 0.0
        %1476 = vadd.xlane.f32.xlu0 %v1475
        %v1477 = vpop.xlane.xlu0 %1476
        %v1478 = vsel %vm1393, %v1357, 0.0
        %1479 = vadd.xlane.f32.xlu0 %v1478
        %v1480 = vpop.xlane.xlu0 %1479
        %v1481 = vsel %vm1393, %v1358, 0.0
        %1482 = vadd.xlane.f32.xlu0 %v1481
        %v1483 = vpop.xlane.xlu0 %1482
        %v1484 = vsel %vm1393, %v1359, 0.0
        %1485 = vadd.xlane.f32.xlu0 %v1484
        %v1486 = vpop.xlane.xlu0 %1485
        %v1487 = vsel %vm1393, %v1360, 0.0
        %1488 = vadd.xlane.f32.xlu0 %v1487
        %v1489 = vpop.xlane.xlu0 %1488
        %v1490 = vsel %vm1393, %v1361, 0.0
        %1491 = vadd.xlane.f32.xlu0 %v1490
        %v1492 = vpop.xlane.xlu0 %1491
        %v1493 = vsel %vm1393, %v1362, 0.0
        %1494 = vadd.xlane.f32.xlu0 %v1493
        %v1495 = vpop.xlane.xlu0 %1494
        %v1496 = vsel %vm1393, %v1363, 0.0
        %1497 = vadd.xlane.f32.xlu0 %v1496
        %v1498 = vpop.xlane.xlu0 %1497
        %v1499 = vsel %vm1393, %v1364, 0.0
        %1500 = vadd.xlane.f32.xlu0 %v1499
        %v1501 = vpop.xlane.xlu0 %1500
        %v1502 = vsel %vm1393, %v1365, 0.0
        %1503 = vadd.xlane.f32.xlu0 %v1502
        %v1504 = vpop.xlane.xlu0 %1503
        %v1505 = vsel %vm1393, %v1366, 0.0
        %1506 = vadd.xlane.f32.xlu0 %v1505
        %v1507 = vpop.xlane.xlu0 %1506
        %v1508 = vsel %vm1393, %v1367, 0.0
        %1509 = vadd.xlane.f32.xlu0 %v1508
        %v1510 = vpop.xlane.xlu0 %1509
        %v1511 = vsel %vm1393, %v1368, 0.0
        %1512 = vadd.xlane.f32.xlu0 %v1511
        %v1513 = vpop.xlane.xlu0 %1512
        %v1514 = vsel %vm1393, %v1369, 0.0
        %1515 = vadd.xlane.f32.xlu0 %v1514
        %v1516 = vpop.xlane.xlu0 %1515
        %v1517 = vsel %vm1393, %v1370, 0.0
        %1518 = vadd.xlane.f32.xlu0 %v1517
        %v1519 = vpop.xlane.xlu0 %1518
        %v1520 = vsel %vm1393, %v1371, 0.0
        %1521 = vadd.xlane.f32.xlu0 %v1520
        %v1522 = vpop.xlane.xlu0 %1521
        %v1523 = vsel %vm1393, %v1372, 0.0
        %1524 = vadd.xlane.f32.xlu0 %v1523
        %v1525 = vpop.xlane.xlu0 %1524
        %v1526 = vsel %vm1393, %v1373, 0.0
        %1527 = vadd.xlane.f32.xlu0 %v1526
        %v1528 = vpop.xlane.xlu0 %1527
        %v1529 = vsel %vm1393, %v1374, 0.0
        %1530 = vadd.xlane.f32.xlu0 %v1529
        %v1531 = vpop.xlane.xlu0 %1530
        %v1532 = vsel %vm1393, %v1375, 0.0
        %1533 = vadd.xlane.f32.xlu0 %v1532
        %v1534 = vpop.xlane.xlu0 %1533
        %v1535 = vsel %vm1393, %v1376, 0.0
        %1536 = vadd.xlane.f32.xlu0 %v1535
        %v1537 = vpop.xlane.xlu0 %1536
        %v1538 = vsel %vm1393, %v1377, 0.0
        %1539 = vadd.xlane.f32.xlu0 %v1538
        %v1540 = vpop.xlane.xlu0 %1539
        %v1541 = vsel %vm1393, %v1378, 0.0
        %1542 = vadd.xlane.f32.xlu0 %v1541
        %v1543 = vpop.xlane.xlu0 %1542
        %v1544 = vsel %vm1393, %v1379, 0.0
        %1545 = vadd.xlane.f32.xlu0 %v1544
        %v1546 = vpop.xlane.xlu0 %1545
        %v1547 = vsel %vm1393, %v1380, 0.0
        %1548 = vadd.xlane.f32.xlu0 %v1547
        %v1549 = vpop.xlane.xlu0 %1548
        %v1550 = vsel %vm1393, %v1381, 0.0
        %1551 = vadd.xlane.f32.xlu0 %v1550
        %v1552 = vpop.xlane.xlu0 %1551
        %v1553 = vsel %vm1393, %v1382, 0.0
        %1554 = vadd.xlane.f32.xlu0 %v1553
        %v1555 = vpop.xlane.xlu0 %1554
        %v1556 = vsel %vm1393, %v1383, 0.0
        %1557 = vadd.xlane.f32.xlu0 %v1556
        %v1558 = vpop.xlane.xlu0 %1557
        %v1559 = vsel %vm1393, %v1384, 0.0
        %1560 = vadd.xlane.f32.xlu0 %v1559
        %v1561 = vpop.xlane.xlu0 %1560
        %v1562 = vsel %vm1393, %v1385, 0.0
        %1563 = vadd.xlane.f32.xlu0 %v1562
        %v1564 = vpop.xlane.xlu0 %1563
        %v1565 = vsel %vm1393, %v1386, 0.0
        %1566 = vadd.xlane.f32.xlu0 %v1565
        %v1567 = vpop.xlane.xlu0 %1566
        %v1568 = vsel %vm1393, %v1387, 0.0
        %1569 = vadd.xlane.f32.xlu0 %v1568
        %v1570 = vpop.xlane.xlu0 %1569
        %v1571 = vsel %vm1393, %v1388, 0.0
        %1572 = vadd.xlane.f32.xlu0 %v1571
        %v1573 = vpop.xlane.xlu0 %1572
        %v1574 = vsel %vm1393, %v1389, 0.0
        %1575 = vadd.xlane.f32.xlu0 %v1574
        %v1576 = vpop.xlane.xlu0 %1575
        %v1577 = vsel %vm1393, %v1390, 0.0
        %1578 = vadd.xlane.f32.xlu0 %v1577
        %v1579 = vpop.xlane.xlu0 %1578
        %v1580 = vsel %vm1393, %v1391, 0.0
        %1581 = vadd.xlane.f32.xlu0 %v1580
        %v1582 = vpop.xlane.xlu0 %1581
        %v1583 = vsel %vm1393, %v1392, 0.0
        %1584 = vadd.xlane.f32.xlu0 %v1583
        %v1585 = vpop.xlane.xlu0 %1584
        %v1587 = vlaneseq
        %v1588 = vshrl.u32 %v1587, 7
        %v1589 = vsub.s32 0, %v1588
        %v1590 = vrot.slane %v1194, %v1589
        %v1592 = vmul.f32 %v1259, %v1590
        %v1593 = vmul.f32 %v1260, %v1590
        %v1594 = vmul.f32 %v1261, %v1590
        %v1595 = vmul.f32 %v1262, %v1590
        %v1596 = vmul.f32 %v1263, %v1590
        %v1597 = vmul.f32 %v1264, %v1590
        %v1598 = vmul.f32 %v1265, %v1590
        %v1599 = vmul.f32 %v1266, %v1590
        %v1600 = vmul.f32 %v1267, %v1590
        %v1601 = vmul.f32 %v1268, %v1590
        %v1602 = vmul.f32 %v1269, %v1590
        %v1603 = vmul.f32 %v1270, %v1590
        %v1604 = vmul.f32 %v1271, %v1590
        %v1605 = vmul.f32 %v1272, %v1590
        %v1606 = vmul.f32 %v1273, %v1590
        %v1607 = vmul.f32 %v1274, %v1590
        %v1608 = vmul.f32 %v1275, %v1590
        %v1609 = vmul.f32 %v1276, %v1590
        %v1610 = vmul.f32 %v1277, %v1590
        %v1611 = vmul.f32 %v1278, %v1590
        %v1612 = vmul.f32 %v1279, %v1590
        %v1613 = vmul.f32 %v1280, %v1590
        %v1614 = vmul.f32 %v1281, %v1590
        %v1615 = vmul.f32 %v1282, %v1590
        %v1616 = vmul.f32 %v1283, %v1590
        %v1617 = vmul.f32 %v1284, %v1590
        %v1618 = vmul.f32 %v1285, %v1590
        %v1619 = vmul.f32 %v1286, %v1590
        %v1620 = vmul.f32 %v1287, %v1590
        %v1621 = vmul.f32 %v1288, %v1590
        %v1622 = vmul.f32 %v1289, %v1590
        %v1623 = vmul.f32 %v1290, %v1590
        %v1624 = vmul.f32 %v1291, %v1590
        %v1625 = vmul.f32 %v1292, %v1590
        %v1626 = vmul.f32 %v1293, %v1590
        %v1627 = vmul.f32 %v1294, %v1590
        %v1628 = vmul.f32 %v1295, %v1590
        %v1629 = vmul.f32 %v1296, %v1590
        %v1630 = vmul.f32 %v1297, %v1590
        %v1631 = vmul.f32 %v1298, %v1590
        %v1632 = vmul.f32 %v1299, %v1590
        %v1633 = vmul.f32 %v1300, %v1590
        %v1634 = vmul.f32 %v1301, %v1590
        %v1635 = vmul.f32 %v1302, %v1590
        %v1636 = vmul.f32 %v1303, %v1590
        %v1637 = vmul.f32 %v1304, %v1590
        %v1638 = vmul.f32 %v1305, %v1590
        %v1639 = vmul.f32 %v1306, %v1590
        %v1640 = vmul.f32 %v1307, %v1590
        %v1641 = vmul.f32 %v1308, %v1590
        %v1642 = vmul.f32 %v1309, %v1590
        %v1643 = vmul.f32 %v1310, %v1590
        %v1644 = vmul.f32 %v1311, %v1590
        %v1645 = vmul.f32 %v1312, %v1590
        %v1646 = vmul.f32 %v1313, %v1590
        %v1647 = vmul.f32 %v1314, %v1590
        %v1648 = vmul.f32 %v1315, %v1590
        %v1649 = vmul.f32 %v1316, %v1590
        %v1650 = vmul.f32 %v1317, %v1590
        %v1651 = vmul.f32 %v1318, %v1590
        %v1652 = vmul.f32 %v1319, %v1590
        %v1653 = vmul.f32 %v1320, %v1590
        %v1654 = vmul.f32 %v1321, %v1590
        %v1655 = vmul.f32 %v1322, %v1590
        %v1656 = vsel %vm1393, %v1592, 0.0
        %1657 = vadd.xlane.f32.xlu0 %v1656
        %v1658 = vpop.xlane.xlu0 %1657
        %v1659 = vsel %vm1393, %v1593, 0.0
        %1660 = vadd.xlane.f32.xlu0 %v1659
        %v1661 = vpop.xlane.xlu0 %1660
        %v1662 = vsel %vm1393, %v1594, 0.0
        %1663 = vadd.xlane.f32.xlu0 %v1662
        %v1664 = vpop.xlane.xlu0 %1663
        %v1665 = vsel %vm1393, %v1595, 0.0
        %1666 = vadd.xlane.f32.xlu0 %v1665
        %v1667 = vpop.xlane.xlu0 %1666
        %v1668 = vsel %vm1393, %v1596, 0.0
        %1669 = vadd.xlane.f32.xlu0 %v1668
        %v1670 = vpop.xlane.xlu0 %1669
        %v1671 = vsel %vm1393, %v1597, 0.0
        %1672 = vadd.xlane.f32.xlu0 %v1671
        %v1673 = vpop.xlane.xlu0 %1672
        %v1674 = vsel %vm1393, %v1598, 0.0
        %1675 = vadd.xlane.f32.xlu0 %v1674
        %v1676 = vpop.xlane.xlu0 %1675
        %v1677 = vsel %vm1393, %v1599, 0.0
        %1678 = vadd.xlane.f32.xlu0 %v1677
        %v1679 = vpop.xlane.xlu0 %1678
        %v1680 = vsel %vm1393, %v1600, 0.0
        %1681 = vadd.xlane.f32.xlu0 %v1680
        %v1682 = vpop.xlane.xlu0 %1681
        %v1683 = vsel %vm1393, %v1601, 0.0
        %1684 = vadd.xlane.f32.xlu0 %v1683
        %v1685 = vpop.xlane.xlu0 %1684
        %v1686 = vsel %vm1393, %v1602, 0.0
        %1687 = vadd.xlane.f32.xlu0 %v1686
        %v1688 = vpop.xlane.xlu0 %1687
        %v1689 = vsel %vm1393, %v1603, 0.0
        %1690 = vadd.xlane.f32.xlu0 %v1689
        %v1691 = vpop.xlane.xlu0 %1690
        %v1692 = vsel %vm1393, %v1604, 0.0
        %1693 = vadd.xlane.f32.xlu0 %v1692
        %v1694 = vpop.xlane.xlu0 %1693
        %v1695 = vsel %vm1393, %v1605, 0.0
        %1696 = vadd.xlane.f32.xlu0 %v1695
        %v1697 = vpop.xlane.xlu0 %1696
        %v1698 = vsel %vm1393, %v1606, 0.0
        %1699 = vadd.xlane.f32.xlu0 %v1698
        %v1700 = vpop.xlane.xlu0 %1699
        %v1701 = vsel %vm1393, %v1607, 0.0
        %1702 = vadd.xlane.f32.xlu0 %v1701
        %v1703 = vpop.xlane.xlu0 %1702
        %v1704 = vsel %vm1393, %v1608, 0.0
        %1705 = vadd.xlane.f32.xlu0 %v1704
        %v1706 = vpop.xlane.xlu0 %1705
        %v1707 = vsel %vm1393, %v1609, 0.0
        %1708 = vadd.xlane.f32.xlu0 %v1707
        %v1709 = vpop.xlane.xlu0 %1708
        %v1710 = vsel %vm1393, %v1610, 0.0
        %1711 = vadd.xlane.f32.xlu0 %v1710
        %v1712 = vpop.xlane.xlu0 %1711
        %v1713 = vsel %vm1393, %v1611, 0.0
        %1714 = vadd.xlane.f32.xlu0 %v1713
        %v1715 = vpop.xlane.xlu0 %1714
        %v1716 = vsel %vm1393, %v1612, 0.0
        %1717 = vadd.xlane.f32.xlu0 %v1716
        %v1718 = vpop.xlane.xlu0 %1717
        %v1719 = vsel %vm1393, %v1613, 0.0
        %1720 = vadd.xlane.f32.xlu0 %v1719
        %v1721 = vpop.xlane.xlu0 %1720
        %v1722 = vsel %vm1393, %v1614, 0.0
        %1723 = vadd.xlane.f32.xlu0 %v1722
        %v1724 = vpop.xlane.xlu0 %1723
        %v1725 = vsel %vm1393, %v1615, 0.0
        %1726 = vadd.xlane.f32.xlu0 %v1725
        %v1727 = vpop.xlane.xlu0 %1726
        %v1728 = vsel %vm1393, %v1616, 0.0
        %1729 = vadd.xlane.f32.xlu0 %v1728
        %v1730 = vpop.xlane.xlu0 %1729
        %v1731 = vsel %vm1393, %v1617, 0.0
        %1732 = vadd.xlane.f32.xlu0 %v1731
        %v1733 = vpop.xlane.xlu0 %1732
        %v1734 = vsel %vm1393, %v1618, 0.0
        %1735 = vadd.xlane.f32.xlu0 %v1734
        %v1736 = vpop.xlane.xlu0 %1735
        %v1737 = vsel %vm1393, %v1619, 0.0
        %1738 = vadd.xlane.f32.xlu0 %v1737
        %v1739 = vpop.xlane.xlu0 %1738
        %v1740 = vsel %vm1393, %v1620, 0.0
        %1741 = vadd.xlane.f32.xlu0 %v1740
        %v1742 = vpop.xlane.xlu0 %1741
        %v1743 = vsel %vm1393, %v1621, 0.0
        %1744 = vadd.xlane.f32.xlu0 %v1743
        %v1745 = vpop.xlane.xlu0 %1744
        %v1746 = vsel %vm1393, %v1622, 0.0
        %1747 = vadd.xlane.f32.xlu0 %v1746
        %v1748 = vpop.xlane.xlu0 %1747
        %v1749 = vsel %vm1393, %v1623, 0.0
        %1750 = vadd.xlane.f32.xlu0 %v1749
        %v1751 = vpop.xlane.xlu0 %1750
        %v1752 = vsel %vm1393, %v1624, 0.0
        %1753 = vadd.xlane.f32.xlu0 %v1752
        %v1754 = vpop.xlane.xlu0 %1753
        %v1755 = vsel %vm1393, %v1625, 0.0
        %1756 = vadd.xlane.f32.xlu0 %v1755
        %v1757 = vpop.xlane.xlu0 %1756
        %v1758 = vsel %vm1393, %v1626, 0.0
        %1759 = vadd.xlane.f32.xlu0 %v1758
        %v1760 = vpop.xlane.xlu0 %1759
        %v1761 = vsel %vm1393, %v1627, 0.0
        %1762 = vadd.xlane.f32.xlu0 %v1761
        %v1763 = vpop.xlane.xlu0 %1762
        %v1764 = vsel %vm1393, %v1628, 0.0
        %1765 = vadd.xlane.f32.xlu0 %v1764
        %v1766 = vpop.xlane.xlu0 %1765
        %v1767 = vsel %vm1393, %v1629, 0.0
        %1768 = vadd.xlane.f32.xlu0 %v1767
        %v1769 = vpop.xlane.xlu0 %1768
        %v1770 = vsel %vm1393, %v1630, 0.0
        %1771 = vadd.xlane.f32.xlu0 %v1770
        %v1772 = vpop.xlane.xlu0 %1771
        %v1773 = vsel %vm1393, %v1631, 0.0
        %1774 = vadd.xlane.f32.xlu0 %v1773
        %v1775 = vpop.xlane.xlu0 %1774
        %v1776 = vsel %vm1393, %v1632, 0.0
        %1777 = vadd.xlane.f32.xlu0 %v1776
        %v1778 = vpop.xlane.xlu0 %1777
        %v1779 = vsel %vm1393, %v1633, 0.0
        %1780 = vadd.xlane.f32.xlu0 %v1779
        %v1781 = vpop.xlane.xlu0 %1780
        %v1782 = vsel %vm1393, %v1634, 0.0
        %1783 = vadd.xlane.f32.xlu0 %v1782
        %v1784 = vpop.xlane.xlu0 %1783
        %v1785 = vsel %vm1393, %v1635, 0.0
        %1786 = vadd.xlane.f32.xlu0 %v1785
        %v1787 = vpop.xlane.xlu0 %1786
        %v1788 = vsel %vm1393, %v1636, 0.0
        %1789 = vadd.xlane.f32.xlu0 %v1788
        %v1790 = vpop.xlane.xlu0 %1789
        %v1791 = vsel %vm1393, %v1637, 0.0
        %1792 = vadd.xlane.f32.xlu0 %v1791
        %v1793 = vpop.xlane.xlu0 %1792
        %v1794 = vsel %vm1393, %v1638, 0.0
        %1795 = vadd.xlane.f32.xlu0 %v1794
        %v1796 = vpop.xlane.xlu0 %1795
        %v1797 = vsel %vm1393, %v1639, 0.0
        %1798 = vadd.xlane.f32.xlu0 %v1797
        %v1799 = vpop.xlane.xlu0 %1798
        %v1800 = vsel %vm1393, %v1640, 0.0
        %1801 = vadd.xlane.f32.xlu0 %v1800
        %v1802 = vpop.xlane.xlu0 %1801
        %v1803 = vsel %vm1393, %v1641, 0.0
        %1804 = vadd.xlane.f32.xlu0 %v1803
        %v1805 = vpop.xlane.xlu0 %1804
        %v1806 = vsel %vm1393, %v1642, 0.0
        %1807 = vadd.xlane.f32.xlu0 %v1806
        %v1808 = vpop.xlane.xlu0 %1807
        %v1809 = vsel %vm1393, %v1643, 0.0
        %1810 = vadd.xlane.f32.xlu0 %v1809
        %v1811 = vpop.xlane.xlu0 %1810
        %v1812 = vsel %vm1393, %v1644, 0.0
        %1813 = vadd.xlane.f32.xlu0 %v1812
        %v1814 = vpop.xlane.xlu0 %1813
        %v1815 = vsel %vm1393, %v1645, 0.0
        %1816 = vadd.xlane.f32.xlu0 %v1815
        %v1817 = vpop.xlane.xlu0 %1816
        %v1818 = vsel %vm1393, %v1646, 0.0
        %1819 = vadd.xlane.f32.xlu0 %v1818
        %v1820 = vpop.xlane.xlu0 %1819
        %v1821 = vsel %vm1393, %v1647, 0.0
        %1822 = vadd.xlane.f32.xlu0 %v1821
        %v1823 = vpop.xlane.xlu0 %1822
        %v1824 = vsel %vm1393, %v1648, 0.0
        %1825 = vadd.xlane.f32.xlu0 %v1824
        %v1826 = vpop.xlane.xlu0 %1825
        %v1827 = vsel %vm1393, %v1649, 0.0
        %1828 = vadd.xlane.f32.xlu0 %v1827
        %v1829 = vpop.xlane.xlu0 %1828
        %v1830 = vsel %vm1393, %v1650, 0.0
        %1831 = vadd.xlane.f32.xlu0 %v1830
        %v1832 = vpop.xlane.xlu0 %1831
        %v1833 = vsel %vm1393, %v1651, 0.0
        %1834 = vadd.xlane.f32.xlu0 %v1833
        %v1835 = vpop.xlane.xlu0 %1834
        %v1836 = vsel %vm1393, %v1652, 0.0
        %1837 = vadd.xlane.f32.xlu0 %v1836
        %v1838 = vpop.xlane.xlu0 %1837
        %v1839 = vsel %vm1393, %v1653, 0.0
        %1840 = vadd.xlane.f32.xlu0 %v1839
        %v1841 = vpop.xlane.xlu0 %1840
        %v1842 = vsel %vm1393, %v1654, 0.0
        %1843 = vadd.xlane.f32.xlu0 %v1842
        %v1844 = vpop.xlane.xlu0 %1843
        %v1845 = vsel %vm1393, %v1655, 0.0
        %1846 = vadd.xlane.f32.xlu0 %v1845
        %v1847 = vpop.xlane.xlu0 %1846
        %v1848 = vstv %s1192
        %v1849 = vadd.f32 %v1658, %v1848
        %v1850 = vadd.f32 %v1661, %v1848
        %v1851 = vadd.f32 %v1664, %v1848
        %v1852 = vadd.f32 %v1667, %v1848
        %v1853 = vadd.f32 %v1670, %v1848
        %v1854 = vadd.f32 %v1673, %v1848
        %v1855 = vadd.f32 %v1676, %v1848
        %v1856 = vadd.f32 %v1679, %v1848
        %v1857 = vadd.f32 %v1682, %v1848
        %v1858 = vadd.f32 %v1685, %v1848
        %v1859 = vadd.f32 %v1688, %v1848
        %v1860 = vadd.f32 %v1691, %v1848
        %v1861 = vadd.f32 %v1694, %v1848
        %v1862 = vadd.f32 %v1697, %v1848
        %v1863 = vadd.f32 %v1700, %v1848
        %v1864 = vadd.f32 %v1703, %v1848
        %v1865 = vadd.f32 %v1706, %v1848
        %v1866 = vadd.f32 %v1709, %v1848
        %v1867 = vadd.f32 %v1712, %v1848
        %v1868 = vadd.f32 %v1715, %v1848
        %v1869 = vadd.f32 %v1718, %v1848
        %v1870 = vadd.f32 %v1721, %v1848
        %v1871 = vadd.f32 %v1724, %v1848
        %v1872 = vadd.f32 %v1727, %v1848
        %v1873 = vadd.f32 %v1730, %v1848
        %v1874 = vadd.f32 %v1733, %v1848
        %v1875 = vadd.f32 %v1736, %v1848
        %v1876 = vadd.f32 %v1739, %v1848
        %v1877 = vadd.f32 %v1742, %v1848
        %v1878 = vadd.f32 %v1745, %v1848
        %v1879 = vadd.f32 %v1748, %v1848
        %v1880 = vadd.f32 %v1751, %v1848
        %v1881 = vadd.f32 %v1754, %v1848
        %v1882 = vadd.f32 %v1757, %v1848
        %v1883 = vadd.f32 %v1760, %v1848
        %v1884 = vadd.f32 %v1763, %v1848
        %v1885 = vadd.f32 %v1766, %v1848
        %v1886 = vadd.f32 %v1769, %v1848
        %v1887 = vadd.f32 %v1772, %v1848
        %v1888 = vadd.f32 %v1775, %v1848
        %v1889 = vadd.f32 %v1778, %v1848
        %v1890 = vadd.f32 %v1781, %v1848
        %v1891 = vadd.f32 %v1784, %v1848
        %v1892 = vadd.f32 %v1787, %v1848
        %v1893 = vadd.f32 %v1790, %v1848
        %v1894 = vadd.f32 %v1793, %v1848
        %v1895 = vadd.f32 %v1796, %v1848
        %v1896 = vadd.f32 %v1799, %v1848
        %v1897 = vadd.f32 %v1802, %v1848
        %v1898 = vadd.f32 %v1805, %v1848
        %v1899 = vadd.f32 %v1808, %v1848
        %v1900 = vadd.f32 %v1811, %v1848
        %v1901 = vadd.f32 %v1814, %v1848
        %v1902 = vadd.f32 %v1817, %v1848
        %v1903 = vadd.f32 %v1820, %v1848
        %v1904 = vadd.f32 %v1823, %v1848
        %v1905 = vadd.f32 %v1826, %v1848
        %v1906 = vadd.f32 %v1829, %v1848
        %v1907 = vadd.f32 %v1832, %v1848
        %v1908 = vadd.f32 %v1835, %v1848
        %v1909 = vadd.f32 %v1838, %v1848
        %v1910 = vadd.f32 %v1841, %v1848
        %v1911 = vadd.f32 %v1844, %v1848
        %v1912 = vadd.f32 %v1847, %v1848
        %s1913 = scalar_lea.vmem %s1138, 256 [#allocation3]
        %v1914 = vld [vmem:[%s1913] sm:$0xf]
        %v1915 = vld [vmem:[%s1913 + $0x4] sm:$0xf]
        %v1916 = vld [vmem:[%s1913 + $0x8] sm:$0xf]
        %v1917 = vld [vmem:[%s1913 + $0xc] sm:$0xf]
        %v1918 = vld [vmem:[%s1913 + $0x10] sm:$0xf]
        %v1919 = vld [vmem:[%s1913 + $0x14] sm:$0xf]
        %v1920 = vld [vmem:[%s1913 + $0x18] sm:$0xf]
        %v1921 = vld [vmem:[%s1913 + $0x1c] sm:$0xf]
        %v1922 = vld [vmem:[%s1913 + $0x20] sm:$0xf]
        %v1923 = vld [vmem:[%s1913 + $0x24] sm:$0xf]
        %v1924 = vld [vmem:[%s1913 + $0x28] sm:$0xf]
        %v1925 = vld [vmem:[%s1913 + $0x2c] sm:$0xf]
        %v1926 = vld [vmem:[%s1913 + $0x30] sm:$0xf]
        %v1927 = vld [vmem:[%s1913 + $0x34] sm:$0xf]
        %v1928 = vld [vmem:[%s1913 + $0x38] sm:$0xf]
        %v1929 = vld [vmem:[%s1913 + $0x3c] sm:$0xf]
        %v1930 = vld [vmem:[%s1913 + $0x40] sm:$0xf]
        %v1931 = vld [vmem:[%s1913 + $0x44] sm:$0xf]
        %v1932 = vld [vmem:[%s1913 + $0x48] sm:$0xf]
        %v1933 = vld [vmem:[%s1913 + $0x4c] sm:$0xf]
        %v1934 = vld [vmem:[%s1913 + $0x50] sm:$0xf]
        %v1935 = vld [vmem:[%s1913 + $0x54] sm:$0xf]
        %v1936 = vld [vmem:[%s1913 + $0x58] sm:$0xf]
        %v1937 = vld [vmem:[%s1913 + $0x5c] sm:$0xf]
        %v1938 = vld [vmem:[%s1913 + $0x60] sm:$0xf]
        %v1939 = vld [vmem:[%s1913 + $0x64] sm:$0xf]
        %v1940 = vld [vmem:[%s1913 + $0x68] sm:$0xf]
        %v1941 = vld [vmem:[%s1913 + $0x6c] sm:$0xf]
        %v1942 = vld [vmem:[%s1913 + $0x70] sm:$0xf]
        %v1943 = vld [vmem:[%s1913 + $0x74] sm:$0xf]
        %v1944 = vld [vmem:[%s1913 + $0x78] sm:$0xf]
        %v1945 = vld [vmem:[%s1913 + $0x7c] sm:$0xf]
        %v1946 = vld [vmem:[%s1913 + $0x80] sm:$0xf]
        %v1947 = vld [vmem:[%s1913 + $0x84] sm:$0xf]
        %v1948 = vld [vmem:[%s1913 + $0x88] sm:$0xf]
        %v1949 = vld [vmem:[%s1913 + $0x8c] sm:$0xf]
        %v1950 = vld [vmem:[%s1913 + $0x90] sm:$0xf]
        %v1951 = vld [vmem:[%s1913 + $0x94] sm:$0xf]
        %v1952 = vld [vmem:[%s1913 + $0x98] sm:$0xf]
        %v1953 = vld [vmem:[%s1913 + $0x9c] sm:$0xf]
        %v1954 = vld [vmem:[%s1913 + $0xa0] sm:$0xf]
        %v1955 = vld [vmem:[%s1913 + $0xa4] sm:$0xf]
        %v1956 = vld [vmem:[%s1913 + $0xa8] sm:$0xf]
        %v1957 = vld [vmem:[%s1913 + $0xac] sm:$0xf]
        %v1958 = vld [vmem:[%s1913 + $0xb0] sm:$0xf]
        %v1959 = vld [vmem:[%s1913 + $0xb4] sm:$0xf]
        %v1960 = vld [vmem:[%s1913 + $0xb8] sm:$0xf]
        %v1961 = vld [vmem:[%s1913 + $0xbc] sm:$0xf]
        %v1962 = vld [vmem:[%s1913 + $0xc0] sm:$0xf]
        %v1963 = vld [vmem:[%s1913 + $0xc4] sm:$0xf]
        %v1964 = vld [vmem:[%s1913 + $0xc8] sm:$0xf]
        %v1965 = vld [vmem:[%s1913 + $0xcc] sm:$0xf]
        %v1966 = vld [vmem:[%s1913 + $0xd0] sm:$0xf]
        %v1967 = vld [vmem:[%s1913 + $0xd4] sm:$0xf]
        %v1968 = vld [vmem:[%s1913 + $0xd8] sm:$0xf]
        %v1969 = vld [vmem:[%s1913 + $0xdc] sm:$0xf]
        %v1970 = vld [vmem:[%s1913 + $0xe0] sm:$0xf]
        %v1971 = vld [vmem:[%s1913 + $0xe4] sm:$0xf]
        %v1972 = vld [vmem:[%s1913 + $0xe8] sm:$0xf]
        %v1973 = vld [vmem:[%s1913 + $0xec] sm:$0xf]
        %v1974 = vld [vmem:[%s1913 + $0xf0] sm:$0xf]
        %v1975 = vld [vmem:[%s1913 + $0xf4] sm:$0xf]
        %v1976 = vld [vmem:[%s1913 + $0xf8] sm:$0xf]
        %v1977 = vld [vmem:[%s1913 + $0xfc] sm:$0xf]
        %v1978 = vunpack.c.l.bf16 %v1914
        %v1979 = vunpack.c.l.bf16 %v1915
        %v1980 = vunpack.c.l.bf16 %v1916
        %v1981 = vunpack.c.l.bf16 %v1917
        %v1982 = vunpack.c.l.bf16 %v1918
        %v1983 = vunpack.c.l.bf16 %v1919
        %v1984 = vunpack.c.l.bf16 %v1920
        %v1985 = vunpack.c.l.bf16 %v1921
        %v1986 = vunpack.c.l.bf16 %v1922
        %v1987 = vunpack.c.l.bf16 %v1923
        %v1988 = vunpack.c.l.bf16 %v1924
        %v1989 = vunpack.c.l.bf16 %v1925
        %v1990 = vunpack.c.l.bf16 %v1926
        %v1991 = vunpack.c.l.bf16 %v1927
        %v1992 = vunpack.c.l.bf16 %v1928
        %v1993 = vunpack.c.l.bf16 %v1929
        %v1994 = vunpack.c.l.bf16 %v1930
        %v1995 = vunpack.c.l.bf16 %v1931
        %v1996 = vunpack.c.l.bf16 %v1932
        %v1997 = vunpack.c.l.bf16 %v1933
        %v1998 = vunpack.c.l.bf16 %v1934
        %v1999 = vunpack.c.l.bf16 %v1935
        %v2000 = vunpack.c.l.bf16 %v1936
        %v2001 = vunpack.c.l.bf16 %v1937
        %v2002 = vunpack.c.l.bf16 %v1938
        %v2003 = vunpack.c.l.bf16 %v1939
        %v2004 = vunpack.c.l.bf16 %v1940
        %v2005 = vunpack.c.l.bf16 %v1941
        %v2006 = vunpack.c.l.bf16 %v1942
        %v2007 = vunpack.c.l.bf16 %v1943
        %v2008 = vunpack.c.l.bf16 %v1944
        %v2009 = vunpack.c.l.bf16 %v1945
        %v2010 = vunpack.c.l.bf16 %v1946
        %v2011 = vunpack.c.l.bf16 %v1947
        %v2012 = vunpack.c.l.bf16 %v1948
        %v2013 = vunpack.c.l.bf16 %v1949
        %v2014 = vunpack.c.l.bf16 %v1950
        %v2015 = vunpack.c.l.bf16 %v1951
        %v2016 = vunpack.c.l.bf16 %v1952
        %v2017 = vunpack.c.l.bf16 %v1953
        %v2018 = vunpack.c.l.bf16 %v1954
        %v2019 = vunpack.c.l.bf16 %v1955
        %v2020 = vunpack.c.l.bf16 %v1956
        %v2021 = vunpack.c.l.bf16 %v1957
        %v2022 = vunpack.c.l.bf16 %v1958
        %v2023 = vunpack.c.l.bf16 %v1959
        %v2024 = vunpack.c.l.bf16 %v1960
        %v2025 = vunpack.c.l.bf16 %v1961
        %v2026 = vunpack.c.l.bf16 %v1962
        %v2027 = vunpack.c.l.bf16 %v1963
        %v2028 = vunpack.c.l.bf16 %v1964
        %v2029 = vunpack.c.l.bf16 %v1965
        %v2030 = vunpack.c.l.bf16 %v1966
        %v2031 = vunpack.c.l.bf16 %v1967
        %v2032 = vunpack.c.l.bf16 %v1968
        %v2033 = vunpack.c.l.bf16 %v1969
        %v2034 = vunpack.c.l.bf16 %v1970
        %v2035 = vunpack.c.l.bf16 %v1971
        %v2036 = vunpack.c.l.bf16 %v1972
        %v2037 = vunpack.c.l.bf16 %v1973
        %v2038 = vunpack.c.l.bf16 %v1974
        %v2039 = vunpack.c.l.bf16 %v1975
        %v2040 = vunpack.c.l.bf16 %v1976
        %v2041 = vunpack.c.l.bf16 %v1977
        %v2042 = vmul.f32 %v1978, %v1327
        %v2043 = vmul.f32 %v1979, %v1327
        %v2044 = vmul.f32 %v1980, %v1327
        %v2045 = vmul.f32 %v1981, %v1327
        %v2046 = vmul.f32 %v1982, %v1327
        %v2047 = vmul.f32 %v1983, %v1327
        %v2048 = vmul.f32 %v1984, %v1327
        %v2049 = vmul.f32 %v1985, %v1327
        %v2050 = vmul.f32 %v1986, %v1327
        %v2051 = vmul.f32 %v1987, %v1327
        %v2052 = vmul.f32 %v1988, %v1327
        %v2053 = vmul.f32 %v1989, %v1327
        %v2054 = vmul.f32 %v1990, %v1327
        %v2055 = vmul.f32 %v1991, %v1327
        %v2056 = vmul.f32 %v1992, %v1327
        %v2057 = vmul.f32 %v1993, %v1327
        %v2058 = vmul.f32 %v1994, %v1327
        %v2059 = vmul.f32 %v1995, %v1327
        %v2060 = vmul.f32 %v1996, %v1327
        %v2061 = vmul.f32 %v1997, %v1327
        %v2062 = vmul.f32 %v1998, %v1327
        %v2063 = vmul.f32 %v1999, %v1327
        %v2064 = vmul.f32 %v2000, %v1327
        %v2065 = vmul.f32 %v2001, %v1327
        %v2066 = vmul.f32 %v2002, %v1327
        %v2067 = vmul.f32 %v2003, %v1327
        %v2068 = vmul.f32 %v2004, %v1327
        %v2069 = vmul.f32 %v2005, %v1327
        %v2070 = vmul.f32 %v2006, %v1327
        %v2071 = vmul.f32 %v2007, %v1327
        %v2072 = vmul.f32 %v2008, %v1327
        %v2073 = vmul.f32 %v2009, %v1327
        %v2074 = vmul.f32 %v2010, %v1327
        %v2075 = vmul.f32 %v2011, %v1327
        %v2076 = vmul.f32 %v2012, %v1327
        %v2077 = vmul.f32 %v2013, %v1327
        %v2078 = vmul.f32 %v2014, %v1327
        %v2079 = vmul.f32 %v2015, %v1327
        %v2080 = vmul.f32 %v2016, %v1327
        %v2081 = vmul.f32 %v2017, %v1327
        %v2082 = vmul.f32 %v2018, %v1327
        %v2083 = vmul.f32 %v2019, %v1327
        %v2084 = vmul.f32 %v2020, %v1327
        %v2085 = vmul.f32 %v2021, %v1327
        %v2086 = vmul.f32 %v2022, %v1327
        %v2087 = vmul.f32 %v2023, %v1327
        %v2088 = vmul.f32 %v2024, %v1327
        %v2089 = vmul.f32 %v2025, %v1327
        %v2090 = vmul.f32 %v2026, %v1327
        %v2091 = vmul.f32 %v2027, %v1327
        %v2092 = vmul.f32 %v2028, %v1327
        %v2093 = vmul.f32 %v2029, %v1327
        %v2094 = vmul.f32 %v2030, %v1327
        %v2095 = vmul.f32 %v2031, %v1327
        %v2096 = vmul.f32 %v2032, %v1327
        %v2097 = vmul.f32 %v2033, %v1327
        %v2098 = vmul.f32 %v2034, %v1327
        %v2099 = vmul.f32 %v2035, %v1327
        %v2100 = vmul.f32 %v2036, %v1327
        %v2101 = vmul.f32 %v2037, %v1327
        %v2102 = vmul.f32 %v2038, %v1327
        %v2103 = vmul.f32 %v2039, %v1327
        %v2104 = vmul.f32 %v2040, %v1327
        %v2105 = vmul.f32 %v2041, %v1327
        %v2106 = vsel %vm1393, %v2042, 0.0
        %2107 = vadd.xlane.f32.xlu0 %v2106
        %v2108 = vpop.xlane.xlu0 %2107
        %v2109 = vsel %vm1393, %v2043, 0.0
        %2110 = vadd.xlane.f32.xlu0 %v2109
        %v2111 = vpop.xlane.xlu0 %2110
        %v2112 = vsel %vm1393, %v2044, 0.0
        %2113 = vadd.xlane.f32.xlu0 %v2112
        %v2114 = vpop.xlane.xlu0 %2113
        %v2115 = vsel %vm1393, %v2045, 0.0
        %2116 = vadd.xlane.f32.xlu0 %v2115
        %v2117 = vpop.xlane.xlu0 %2116
        %v2118 = vsel %vm1393, %v2046, 0.0
        %2119 = vadd.xlane.f32.xlu0 %v2118
        %v2120 = vpop.xlane.xlu0 %2119
        %v2121 = vsel %vm1393, %v2047, 0.0
        %2122 = vadd.xlane.f32.xlu0 %v2121
        %v2123 = vpop.xlane.xlu0 %2122
        %v2124 = vsel %vm1393, %v2048, 0.0
        %2125 = vadd.xlane.f32.xlu0 %v2124
        %v2126 = vpop.xlane.xlu0 %2125
        %v2127 = vsel %vm1393, %v2049, 0.0
        %2128 = vadd.xlane.f32.xlu0 %v2127
        %v2129 = vpop.xlane.xlu0 %2128
        %v2130 = vsel %vm1393, %v2050, 0.0
        %2131 = vadd.xlane.f32.xlu0 %v2130
        %v2132 = vpop.xlane.xlu0 %2131
        %v2133 = vsel %vm1393, %v2051, 0.0
        %2134 = vadd.xlane.f32.xlu0 %v2133
        %v2135 = vpop.xlane.xlu0 %2134
        %v2136 = vsel %vm1393, %v2052, 0.0
        %2137 = vadd.xlane.f32.xlu0 %v2136
        %v2138 = vpop.xlane.xlu0 %2137
        %v2139 = vsel %vm1393, %v2053, 0.0
        %2140 = vadd.xlane.f32.xlu0 %v2139
        %v2141 = vpop.xlane.xlu0 %2140
        %v2142 = vsel %vm1393, %v2054, 0.0
        %2143 = vadd.xlane.f32.xlu0 %v2142
        %v2144 = vpop.xlane.xlu0 %2143
        %v2145 = vsel %vm1393, %v2055, 0.0
        %2146 = vadd.xlane.f32.xlu0 %v2145
        %v2147 = vpop.xlane.xlu0 %2146
        %v2148 = vsel %vm1393, %v2056, 0.0
        %2149 = vadd.xlane.f32.xlu0 %v2148
        %v2150 = vpop.xlane.xlu0 %2149
        %v2151 = vsel %vm1393, %v2057, 0.0
        %2152 = vadd.xlane.f32.xlu0 %v2151
        %v2153 = vpop.xlane.xlu0 %2152
        %v2154 = vsel %vm1393, %v2058, 0.0
        %2155 = vadd.xlane.f32.xlu0 %v2154
        %v2156 = vpop.xlane.xlu0 %2155
        %v2157 = vsel %vm1393, %v2059, 0.0
        %2158 = vadd.xlane.f32.xlu0 %v2157
        %v2159 = vpop.xlane.xlu0 %2158
        %v2160 = vsel %vm1393, %v2060, 0.0
        %2161 = vadd.xlane.f32.xlu0 %v2160
        %v2162 = vpop.xlane.xlu0 %2161
        %v2163 = vsel %vm1393, %v2061, 0.0
        %2164 = vadd.xlane.f32.xlu0 %v2163
        %v2165 = vpop.xlane.xlu0 %2164
        %v2166 = vsel %vm1393, %v2062, 0.0
        %2167 = vadd.xlane.f32.xlu0 %v2166
        %v2168 = vpop.xlane.xlu0 %2167
        %v2169 = vsel %vm1393, %v2063, 0.0
        %2170 = vadd.xlane.f32.xlu0 %v2169
        %v2171 = vpop.xlane.xlu0 %2170
        %v2172 = vsel %vm1393, %v2064, 0.0
        %2173 = vadd.xlane.f32.xlu0 %v2172
        %v2174 = vpop.xlane.xlu0 %2173
        %v2175 = vsel %vm1393, %v2065, 0.0
        %2176 = vadd.xlane.f32.xlu0 %v2175
        %v2177 = vpop.xlane.xlu0 %2176
        %v2178 = vsel %vm1393, %v2066, 0.0
        %2179 = vadd.xlane.f32.xlu0 %v2178
        %v2180 = vpop.xlane.xlu0 %2179
        %v2181 = vsel %vm1393, %v2067, 0.0
        %2182 = vadd.xlane.f32.xlu0 %v2181
        %v2183 = vpop.xlane.xlu0 %2182
        %v2184 = vsel %vm1393, %v2068, 0.0
        %2185 = vadd.xlane.f32.xlu0 %v2184
        %v2186 = vpop.xlane.xlu0 %2185
        %v2187 = vsel %vm1393, %v2069, 0.0
        %2188 = vadd.xlane.f32.xlu0 %v2187
        %v2189 = vpop.xlane.xlu0 %2188
        %v2190 = vsel %vm1393, %v2070, 0.0
        %2191 = vadd.xlane.f32.xlu0 %v2190
        %v2192 = vpop.xlane.xlu0 %2191
        %v2193 = vsel %vm1393, %v2071, 0.0
        %2194 = vadd.xlane.f32.xlu0 %v2193
        %v2195 = vpop.xlane.xlu0 %2194
        %v2196 = vsel %vm1393, %v2072, 0.0
        %2197 = vadd.xlane.f32.xlu0 %v2196
        %v2198 = vpop.xlane.xlu0 %2197
        %v2199 = vsel %vm1393, %v2073, 0.0
        %2200 = vadd.xlane.f32.xlu0 %v2199
        %v2201 = vpop.xlane.xlu0 %2200
        %v2202 = vsel %vm1393, %v2074, 0.0
        %2203 = vadd.xlane.f32.xlu0 %v2202
        %v2204 = vpop.xlane.xlu0 %2203
        %v2205 = vsel %vm1393, %v2075, 0.0
        %2206 = vadd.xlane.f32.xlu0 %v2205
        %v2207 = vpop.xlane.xlu0 %2206
        %v2208 = vsel %vm1393, %v2076, 0.0
        %2209 = vadd.xlane.f32.xlu0 %v2208
        %v2210 = vpop.xlane.xlu0 %2209
        %v2211 = vsel %vm1393, %v2077, 0.0
        %2212 = vadd.xlane.f32.xlu0 %v2211
        %v2213 = vpop.xlane.xlu0 %2212
        %v2214 = vsel %vm1393, %v2078, 0.0
        %2215 = vadd.xlane.f32.xlu0 %v2214
        %v2216 = vpop.xlane.xlu0 %2215
        %v2217 = vsel %vm1393, %v2079, 0.0
        %2218 = vadd.xlane.f32.xlu0 %v2217
        %v2219 = vpop.xlane.xlu0 %2218
        %v2220 = vsel %vm1393, %v2080, 0.0
        %2221 = vadd.xlane.f32.xlu0 %v2220
        %v2222 = vpop.xlane.xlu0 %2221
        %v2223 = vsel %vm1393, %v2081, 0.0
        %2224 = vadd.xlane.f32.xlu0 %v2223
        %v2225 = vpop.xlane.xlu0 %2224
        %v2226 = vsel %vm1393, %v2082, 0.0
        %2227 = vadd.xlane.f32.xlu0 %v2226
        %v2228 = vpop.xlane.xlu0 %2227
        %v2229 = vsel %vm1393, %v2083, 0.0
        %2230 = vadd.xlane.f32.xlu0 %v2229
        %v2231 = vpop.xlane.xlu0 %2230
        %v2232 = vsel %vm1393, %v2084, 0.0
        %2233 = vadd.xlane.f32.xlu0 %v2232
        %v2234 = vpop.xlane.xlu0 %2233
        %v2235 = vsel %vm1393, %v2085, 0.0
        %2236 = vadd.xlane.f32.xlu0 %v2235
        %v2237 = vpop.xlane.xlu0 %2236
        %v2238 = vsel %vm1393, %v2086, 0.0
        %2239 = vadd.xlane.f32.xlu0 %v2238
        %v2240 = vpop.xlane.xlu0 %2239
        %v2241 = vsel %vm1393, %v2087, 0.0
        %2242 = vadd.xlane.f32.xlu0 %v2241
        %v2243 = vpop.xlane.xlu0 %2242
        %v2244 = vsel %vm1393, %v2088, 0.0
        %2245 = vadd.xlane.f32.xlu0 %v2244
        %v2246 = vpop.xlane.xlu0 %2245
        %v2247 = vsel %vm1393, %v2089, 0.0
        %2248 = vadd.xlane.f32.xlu0 %v2247
        %v2249 = vpop.xlane.xlu0 %2248
        %v2250 = vsel %vm1393, %v2090, 0.0
        %2251 = vadd.xlane.f32.xlu0 %v2250
        %v2252 = vpop.xlane.xlu0 %2251
        %v2253 = vsel %vm1393, %v2091, 0.0
        %2254 = vadd.xlane.f32.xlu0 %v2253
        %v2255 = vpop.xlane.xlu0 %2254
        %v2256 = vsel %vm1393, %v2092, 0.0
        %2257 = vadd.xlane.f32.xlu0 %v2256
        %v2258 = vpop.xlane.xlu0 %2257
        %v2259 = vsel %vm1393, %v2093, 0.0
        %2260 = vadd.xlane.f32.xlu0 %v2259
        %v2261 = vpop.xlane.xlu0 %2260
        %v2262 = vsel %vm1393, %v2094, 0.0
        %2263 = vadd.xlane.f32.xlu0 %v2262
        %v2264 = vpop.xlane.xlu0 %2263
        %v2265 = vsel %vm1393, %v2095, 0.0
        %2266 = vadd.xlane.f32.xlu0 %v2265
        %v2267 = vpop.xlane.xlu0 %2266
        %v2268 = vsel %vm1393, %v2096, 0.0
        %2269 = vadd.xlane.f32.xlu0 %v2268
        %v2270 = vpop.xlane.xlu0 %2269
        %v2271 = vsel %vm1393, %v2097, 0.0
        %2272 = vadd.xlane.f32.xlu0 %v2271
        %v2273 = vpop.xlane.xlu0 %2272
        %v2274 = vsel %vm1393, %v2098, 0.0
        %2275 = vadd.xlane.f32.xlu0 %v2274
        %v2276 = vpop.xlane.xlu0 %2275
        %v2277 = vsel %vm1393, %v2099, 0.0
        %2278 = vadd.xlane.f32.xlu0 %v2277
        %v2279 = vpop.xlane.xlu0 %2278
        %v2280 = vsel %vm1393, %v2100, 0.0
        %2281 = vadd.xlane.f32.xlu0 %v2280
        %v2282 = vpop.xlane.xlu0 %2281
        %v2283 = vsel %vm1393, %v2101, 0.0
        %2284 = vadd.xlane.f32.xlu0 %v2283
        %v2285 = vpop.xlane.xlu0 %2284
        %v2286 = vsel %vm1393, %v2102, 0.0
        %2287 = vadd.xlane.f32.xlu0 %v2286
        %v2288 = vpop.xlane.xlu0 %2287
        %v2289 = vsel %vm1393, %v2103, 0.0
        %2290 = vadd.xlane.f32.xlu0 %v2289
        %v2291 = vpop.xlane.xlu0 %2290
        %v2292 = vsel %vm1393, %v2104, 0.0
        %2293 = vadd.xlane.f32.xlu0 %v2292
        %v2294 = vpop.xlane.xlu0 %2293
        %v2295 = vsel %vm1393, %v2105, 0.0
        %2296 = vadd.xlane.f32.xlu0 %v2295
        %v2297 = vpop.xlane.xlu0 %2296
        %v2298 = vmul.f32 %v1978, %v1590
        %v2299 = vmul.f32 %v1979, %v1590
        %v2300 = vmul.f32 %v1980, %v1590
        %v2301 = vmul.f32 %v1981, %v1590
        %v2302 = vmul.f32 %v1982, %v1590
        %v2303 = vmul.f32 %v1983, %v1590
        %v2304 = vmul.f32 %v1984, %v1590
        %v2305 = vmul.f32 %v1985, %v1590
        %v2306 = vmul.f32 %v1986, %v1590
        %v2307 = vmul.f32 %v1987, %v1590
        %v2308 = vmul.f32 %v1988, %v1590
        %v2309 = vmul.f32 %v1989, %v1590
        %v2310 = vmul.f32 %v1990, %v1590
        %v2311 = vmul.f32 %v1991, %v1590
        %v2312 = vmul.f32 %v1992, %v1590
        %v2313 = vmul.f32 %v1993, %v1590
        %v2314 = vmul.f32 %v1994, %v1590
        %v2315 = vmul.f32 %v1995, %v1590
        %v2316 = vmul.f32 %v1996, %v1590
        %v2317 = vmul.f32 %v1997, %v1590
        %v2318 = vmul.f32 %v1998, %v1590
        %v2319 = vmul.f32 %v1999, %v1590
        %v2320 = vmul.f32 %v2000, %v1590
        %v2321 = vmul.f32 %v2001, %v1590
        %v2322 = vmul.f32 %v2002, %v1590
        %v2323 = vmul.f32 %v2003, %v1590
        %v2324 = vmul.f32 %v2004, %v1590
        %v2325 = vmul.f32 %v2005, %v1590
        %v2326 = vmul.f32 %v2006, %v1590
        %v2327 = vmul.f32 %v2007, %v1590
        %v2328 = vmul.f32 %v2008, %v1590
        %v2329 = vmul.f32 %v2009, %v1590
        %v2330 = vmul.f32 %v2010, %v1590
        %v2331 = vmul.f32 %v2011, %v1590
        %v2332 = vmul.f32 %v2012, %v1590
        %v2333 = vmul.f32 %v2013, %v1590
        %v2334 = vmul.f32 %v2014, %v1590
        %v2335 = vmul.f32 %v2015, %v1590
        %v2336 = vmul.f32 %v2016, %v1590
        %v2337 = vmul.f32 %v2017, %v1590
        %v2338 = vmul.f32 %v2018, %v1590
        %v2339 = vmul.f32 %v2019, %v1590
        %v2340 = vmul.f32 %v2020, %v1590
        %v2341 = vmul.f32 %v2021, %v1590
        %v2342 = vmul.f32 %v2022, %v1590
        %v2343 = vmul.f32 %v2023, %v1590
        %v2344 = vmul.f32 %v2024, %v1590
        %v2345 = vmul.f32 %v2025, %v1590
        %v2346 = vmul.f32 %v2026, %v1590
        %v2347 = vmul.f32 %v2027, %v1590
        %v2348 = vmul.f32 %v2028, %v1590
        %v2349 = vmul.f32 %v2029, %v1590
        %v2350 = vmul.f32 %v2030, %v1590
        %v2351 = vmul.f32 %v2031, %v1590
        %v2352 = vmul.f32 %v2032, %v1590
        %v2353 = vmul.f32 %v2033, %v1590
        %v2354 = vmul.f32 %v2034, %v1590
        %v2355 = vmul.f32 %v2035, %v1590
        %v2356 = vmul.f32 %v2036, %v1590
        %v2357 = vmul.f32 %v2037, %v1590
        %v2358 = vmul.f32 %v2038, %v1590
        %v2359 = vmul.f32 %v2039, %v1590
        %v2360 = vmul.f32 %v2040, %v1590
        %v2361 = vmul.f32 %v2041, %v1590
        %v2362 = vsel %vm1393, %v2298, 0.0
        %2363 = vadd.xlane.f32.xlu0 %v2362
        %v2364 = vpop.xlane.xlu0 %2363
        %v2365 = vsel %vm1393, %v2299, 0.0
        %2366 = vadd.xlane.f32.xlu0 %v2365
        %v2367 = vpop.xlane.xlu0 %2366
        %v2368 = vsel %vm1393, %v2300, 0.0
        %2369 = vadd.xlane.f32.xlu0 %v2368
        %v2370 = vpop.xlane.xlu0 %2369
        %v2371 = vsel %vm1393, %v2301, 0.0
        %2372 = vadd.xlane.f32.xlu0 %v2371
        %v2373 = vpop.xlane.xlu0 %2372
        %v2374 = vsel %vm1393, %v2302, 0.0
        %2375 = vadd.xlane.f32.xlu0 %v2374
        %v2376 = vpop.xlane.xlu0 %2375
        %v2377 = vsel %vm1393, %v2303, 0.0
        %2378 = vadd.xlane.f32.xlu0 %v2377
        %v2379 = vpop.xlane.xlu0 %2378
        %v2380 = vsel %vm1393, %v2304, 0.0
        %2381 = vadd.xlane.f32.xlu0 %v2380
        %v2382 = vpop.xlane.xlu0 %2381
        %v2383 = vsel %vm1393, %v2305, 0.0
        %2384 = vadd.xlane.f32.xlu0 %v2383
        %v2385 = vpop.xlane.xlu0 %2384
        %v2386 = vsel %vm1393, %v2306, 0.0
        %2387 = vadd.xlane.f32.xlu0 %v2386
        %v2388 = vpop.xlane.xlu0 %2387
        %v2389 = vsel %vm1393, %v2307, 0.0
        %2390 = vadd.xlane.f32.xlu0 %v2389
        %v2391 = vpop.xlane.xlu0 %2390
        %v2392 = vsel %vm1393, %v2308, 0.0
        %2393 = vadd.xlane.f32.xlu0 %v2392
        %v2394 = vpop.xlane.xlu0 %2393
        %v2395 = vsel %vm1393, %v2309, 0.0
        %2396 = vadd.xlane.f32.xlu0 %v2395
        %v2397 = vpop.xlane.xlu0 %2396
        %v2398 = vsel %vm1393, %v2310, 0.0
        %2399 = vadd.xlane.f32.xlu0 %v2398
        %v2400 = vpop.xlane.xlu0 %2399
        %v2401 = vsel %vm1393, %v2311, 0.0
        %2402 = vadd.xlane.f32.xlu0 %v2401
        %v2403 = vpop.xlane.xlu0 %2402
        %v2404 = vsel %vm1393, %v2312, 0.0
        %2405 = vadd.xlane.f32.xlu0 %v2404
        %v2406 = vpop.xlane.xlu0 %2405
        %v2407 = vsel %vm1393, %v2313, 0.0
        %2408 = vadd.xlane.f32.xlu0 %v2407
        %v2409 = vpop.xlane.xlu0 %2408
        %v2410 = vsel %vm1393, %v2314, 0.0
        %2411 = vadd.xlane.f32.xlu0 %v2410
        %v2412 = vpop.xlane.xlu0 %2411
        %v2413 = vsel %vm1393, %v2315, 0.0
        %2414 = vadd.xlane.f32.xlu0 %v2413
        %v2415 = vpop.xlane.xlu0 %2414
        %v2416 = vsel %vm1393, %v2316, 0.0
        %2417 = vadd.xlane.f32.xlu0 %v2416
        %v2418 = vpop.xlane.xlu0 %2417
        %v2419 = vsel %vm1393, %v2317, 0.0
        %2420 = vadd.xlane.f32.xlu0 %v2419
        %v2421 = vpop.xlane.xlu0 %2420
        %v2422 = vsel %vm1393, %v2318, 0.0
        %2423 = vadd.xlane.f32.xlu0 %v2422
        %v2424 = vpop.xlane.xlu0 %2423
        %v2425 = vsel %vm1393, %v2319, 0.0
        %2426 = vadd.xlane.f32.xlu0 %v2425
        %v2427 = vpop.xlane.xlu0 %2426
        %v2428 = vsel %vm1393, %v2320, 0.0
        %2429 = vadd.xlane.f32.xlu0 %v2428
        %v2430 = vpop.xlane.xlu0 %2429
        %v2431 = vsel %vm1393, %v2321, 0.0
        %2432 = vadd.xlane.f32.xlu0 %v2431
        %v2433 = vpop.xlane.xlu0 %2432
        %v2434 = vsel %vm1393, %v2322, 0.0
        %2435 = vadd.xlane.f32.xlu0 %v2434
        %v2436 = vpop.xlane.xlu0 %2435
        %v2437 = vsel %vm1393, %v2323, 0.0
        %2438 = vadd.xlane.f32.xlu0 %v2437
        %v2439 = vpop.xlane.xlu0 %2438
        %v2440 = vsel %vm1393, %v2324, 0.0
        %2441 = vadd.xlane.f32.xlu0 %v2440
        %v2442 = vpop.xlane.xlu0 %2441
        %v2443 = vsel %vm1393, %v2325, 0.0
        %2444 = vadd.xlane.f32.xlu0 %v2443
        %v2445 = vpop.xlane.xlu0 %2444
        %v2446 = vsel %vm1393, %v2326, 0.0
        %2447 = vadd.xlane.f32.xlu0 %v2446
        %v2448 = vpop.xlane.xlu0 %2447
        %v2449 = vsel %vm1393, %v2327, 0.0
        %2450 = vadd.xlane.f32.xlu0 %v2449
        %v2451 = vpop.xlane.xlu0 %2450
        %v2452 = vsel %vm1393, %v2328, 0.0
        %2453 = vadd.xlane.f32.xlu0 %v2452
        %v2454 = vpop.xlane.xlu0 %2453
        %v2455 = vsel %vm1393, %v2329, 0.0
        %2456 = vadd.xlane.f32.xlu0 %v2455
        %v2457 = vpop.xlane.xlu0 %2456
        %v2458 = vsel %vm1393, %v2330, 0.0
        %2459 = vadd.xlane.f32.xlu0 %v2458
        %v2460 = vpop.xlane.xlu0 %2459
        %v2461 = vsel %vm1393, %v2331, 0.0
        %2462 = vadd.xlane.f32.xlu0 %v2461
        %v2463 = vpop.xlane.xlu0 %2462
        %v2464 = vsel %vm1393, %v2332, 0.0
        %2465 = vadd.xlane.f32.xlu0 %v2464
        %v2466 = vpop.xlane.xlu0 %2465
        %v2467 = vsel %vm1393, %v2333, 0.0
        %2468 = vadd.xlane.f32.xlu0 %v2467
        %v2469 = vpop.xlane.xlu0 %2468
        %v2470 = vsel %vm1393, %v2334, 0.0
        %2471 = vadd.xlane.f32.xlu0 %v2470
        %v2472 = vpop.xlane.xlu0 %2471
        %v2473 = vsel %vm1393, %v2335, 0.0
        %2474 = vadd.xlane.f32.xlu0 %v2473
        %v2475 = vpop.xlane.xlu0 %2474
        %v2476 = vsel %vm1393, %v2336, 0.0
        %2477 = vadd.xlane.f32.xlu0 %v2476
        %v2478 = vpop.xlane.xlu0 %2477
        %v2479 = vsel %vm1393, %v2337, 0.0
        %2480 = vadd.xlane.f32.xlu0 %v2479
        %v2481 = vpop.xlane.xlu0 %2480
        %v2482 = vsel %vm1393, %v2338, 0.0
        %2483 = vadd.xlane.f32.xlu0 %v2482
        %v2484 = vpop.xlane.xlu0 %2483
        %v2485 = vsel %vm1393, %v2339, 0.0
        %2486 = vadd.xlane.f32.xlu0 %v2485
        %v2487 = vpop.xlane.xlu0 %2486
        %v2488 = vsel %vm1393, %v2340, 0.0
        %2489 = vadd.xlane.f32.xlu0 %v2488
        %v2490 = vpop.xlane.xlu0 %2489
        %v2491 = vsel %vm1393, %v2341, 0.0
        %2492 = vadd.xlane.f32.xlu0 %v2491
        %v2493 = vpop.xlane.xlu0 %2492
        %v2494 = vsel %vm1393, %v2342, 0.0
        %2495 = vadd.xlane.f32.xlu0 %v2494
        %v2496 = vpop.xlane.xlu0 %2495
        %v2497 = vsel %vm1393, %v2343, 0.0
        %2498 = vadd.xlane.f32.xlu0 %v2497
        %v2499 = vpop.xlane.xlu0 %2498
        %v2500 = vsel %vm1393, %v2344, 0.0
        %2501 = vadd.xlane.f32.xlu0 %v2500
        %v2502 = vpop.xlane.xlu0 %2501
        %v2503 = vsel %vm1393, %v2345, 0.0
        %2504 = vadd.xlane.f32.xlu0 %v2503
        %v2505 = vpop.xlane.xlu0 %2504
        %v2506 = vsel %vm1393, %v2346, 0.0
        %2507 = vadd.xlane.f32.xlu0 %v2506
        %v2508 = vpop.xlane.xlu0 %2507
        %v2509 = vsel %vm1393, %v2347, 0.0
        %2510 = vadd.xlane.f32.xlu0 %v2509
        %v2511 = vpop.xlane.xlu0 %2510
        %v2512 = vsel %vm1393, %v2348, 0.0
        %2513 = vadd.xlane.f32.xlu0 %v2512
        %v2514 = vpop.xlane.xlu0 %2513
        %v2515 = vsel %vm1393, %v2349, 0.0
        %2516 = vadd.xlane.f32.xlu0 %v2515
        %v2517 = vpop.xlane.xlu0 %2516
        %v2518 = vsel %vm1393, %v2350, 0.0
        %2519 = vadd.xlane.f32.xlu0 %v2518
        %v2520 = vpop.xlane.xlu0 %2519
        %v2521 = vsel %vm1393, %v2351, 0.0
        %2522 = vadd.xlane.f32.xlu0 %v2521
        %v2523 = vpop.xlane.xlu0 %2522
        %v2524 = vsel %vm1393, %v2352, 0.0
        %2525 = vadd.xlane.f32.xlu0 %v2524
        %v2526 = vpop.xlane.xlu0 %2525
        %v2527 = vsel %vm1393, %v2353, 0.0
        %2528 = vadd.xlane.f32.xlu0 %v2527
        %v2529 = vpop.xlane.xlu0 %2528
        %v2530 = vsel %vm1393, %v2354, 0.0
        %2531 = vadd.xlane.f32.xlu0 %v2530
        %v2532 = vpop.xlane.xlu0 %2531
        %v2533 = vsel %vm1393, %v2355, 0.0
        %2534 = vadd.xlane.f32.xlu0 %v2533
        %v2535 = vpop.xlane.xlu0 %2534
        %v2536 = vsel %vm1393, %v2356, 0.0
        %2537 = vadd.xlane.f32.xlu0 %v2536
        %v2538 = vpop.xlane.xlu0 %2537
        %v2539 = vsel %vm1393, %v2357, 0.0
        %2540 = vadd.xlane.f32.xlu0 %v2539
        %v2541 = vpop.xlane.xlu0 %2540
        %v2542 = vsel %vm1393, %v2358, 0.0
        %2543 = vadd.xlane.f32.xlu0 %v2542
        %v2544 = vpop.xlane.xlu0 %2543
        %v2545 = vsel %vm1393, %v2359, 0.0
        %2546 = vadd.xlane.f32.xlu0 %v2545
        %v2547 = vpop.xlane.xlu0 %2546
        %v2548 = vsel %vm1393, %v2360, 0.0
        %2549 = vadd.xlane.f32.xlu0 %v2548
        %v2550 = vpop.xlane.xlu0 %2549
        %v2551 = vsel %vm1393, %v2361, 0.0
        %2552 = vadd.xlane.f32.xlu0 %v2551
        %v2553 = vpop.xlane.xlu0 %2552
        %v2554 = vadd.f32 %v2364, %v1848
        %v2555 = vadd.f32 %v2367, %v1848
        %v2556 = vadd.f32 %v2370, %v1848
        %v2557 = vadd.f32 %v2373, %v1848
        %v2558 = vadd.f32 %v2376, %v1848
        %v2559 = vadd.f32 %v2379, %v1848
        %v2560 = vadd.f32 %v2382, %v1848
        %v2561 = vadd.f32 %v2385, %v1848
        %v2562 = vadd.f32 %v2388, %v1848
        %v2563 = vadd.f32 %v2391, %v1848
        %v2564 = vadd.f32 %v2394, %v1848
        %v2565 = vadd.f32 %v2397, %v1848
        %v2566 = vadd.f32 %v2400, %v1848
        %v2567 = vadd.f32 %v2403, %v1848
        %v2568 = vadd.f32 %v2406, %v1848
        %v2569 = vadd.f32 %v2409, %v1848
        %v2570 = vadd.f32 %v2412, %v1848
        %v2571 = vadd.f32 %v2415, %v1848
        %v2572 = vadd.f32 %v2418, %v1848
        %v2573 = vadd.f32 %v2421, %v1848
        %v2574 = vadd.f32 %v2424, %v1848
        %v2575 = vadd.f32 %v2427, %v1848
        %v2576 = vadd.f32 %v2430, %v1848
        %v2577 = vadd.f32 %v2433, %v1848
        %v2578 = vadd.f32 %v2436, %v1848
        %v2579 = vadd.f32 %v2439, %v1848
        %v2580 = vadd.f32 %v2442, %v1848
        %v2581 = vadd.f32 %v2445, %v1848
        %v2582 = vadd.f32 %v2448, %v1848
        %v2583 = vadd.f32 %v2451, %v1848
        %v2584 = vadd.f32 %v2454, %v1848
        %v2585 = vadd.f32 %v2457, %v1848
        %v2586 = vadd.f32 %v2460, %v1848
        %v2587 = vadd.f32 %v2463, %v1848
        %v2588 = vadd.f32 %v2466, %v1848
        %v2589 = vadd.f32 %v2469, %v1848
        %v2590 = vadd.f32 %v2472, %v1848
        %v2591 = vadd.f32 %v2475, %v1848
        %v2592 = vadd.f32 %v2478, %v1848
        %v2593 = vadd.f32 %v2481, %v1848
        %v2594 = vadd.f32 %v2484, %v1848
        %v2595 = vadd.f32 %v2487, %v1848
        %v2596 = vadd.f32 %v2490, %v1848
        %v2597 = vadd.f32 %v2493, %v1848
        %v2598 = vadd.f32 %v2496, %v1848
        %v2599 = vadd.f32 %v2499, %v1848
        %v2600 = vadd.f32 %v2502, %v1848
        %v2601 = vadd.f32 %v2505, %v1848
        %v2602 = vadd.f32 %v2508, %v1848
        %v2603 = vadd.f32 %v2511, %v1848
        %v2604 = vadd.f32 %v2514, %v1848
        %v2605 = vadd.f32 %v2517, %v1848
        %v2606 = vadd.f32 %v2520, %v1848
        %v2607 = vadd.f32 %v2523, %v1848
        %v2608 = vadd.f32 %v2526, %v1848
        %v2609 = vadd.f32 %v2529, %v1848
        %v2610 = vadd.f32 %v2532, %v1848
        %v2611 = vadd.f32 %v2535, %v1848
        %v2612 = vadd.f32 %v2538, %v1848
        %v2613 = vadd.f32 %v2541, %v1848
        %v2614 = vadd.f32 %v2544, %v1848
        %v2615 = vadd.f32 %v2547, %v1848
        %v2616 = vadd.f32 %v2550, %v1848
        %v2617 = vadd.f32 %v2553, %v1848
        %s2618 = scalar_lea.vmem %s1138, 512 [#allocation3]
        %v2619 = vld [vmem:[%s2618] sm:$0xf]
        %v2620 = vld [vmem:[%s2618 + $0x4] sm:$0xf]
        %v2621 = vld [vmem:[%s2618 + $0x8] sm:$0xf]
        %v2622 = vld [vmem:[%s2618 + $0xc] sm:$0xf]
        %v2623 = vld [vmem:[%s2618 + $0x10] sm:$0xf]
        %v2624 = vld [vmem:[%s2618 + $0x14] sm:$0xf]
        %v2625 = vld [vmem:[%s2618 + $0x18] sm:$0xf]
        %v2626 = vld [vmem:[%s2618 + $0x1c] sm:$0xf]
        %v2627 = vld [vmem:[%s2618 + $0x20] sm:$0xf]
        %v2628 = vld [vmem:[%s2618 + $0x24] sm:$0xf]
        %v2629 = vld [vmem:[%s2618 + $0x28] sm:$0xf]
        %v2630 = vld [vmem:[%s2618 + $0x2c] sm:$0xf]
        %v2631 = vld [vmem:[%s2618 + $0x30] sm:$0xf]
        %v2632 = vld [vmem:[%s2618 + $0x34] sm:$0xf]
        %v2633 = vld [vmem:[%s2618 + $0x38] sm:$0xf]
        %v2634 = vld [vmem:[%s2618 + $0x3c] sm:$0xf]
        %v2635 = vld [vmem:[%s2618 + $0x40] sm:$0xf]
        %v2636 = vld [vmem:[%s2618 + $0x44] sm:$0xf]
        %v2637 = vld [vmem:[%s2618 + $0x48] sm:$0xf]
        %v2638 = vld [vmem:[%s2618 + $0x4c] sm:$0xf]
        %v2639 = vld [vmem:[%s2618 + $0x50] sm:$0xf]
        %v2640 = vld [vmem:[%s2618 + $0x54] sm:$0xf]
        %v2641 = vld [vmem:[%s2618 + $0x58] sm:$0xf]
        %v2642 = vld [vmem:[%s2618 + $0x5c] sm:$0xf]
        %v2643 = vld [vmem:[%s2618 + $0x60] sm:$0xf]
        %v2644 = vld [vmem:[%s2618 + $0x64] sm:$0xf]
        %v2645 = vld [vmem:[%s2618 + $0x68] sm:$0xf]
        %v2646 = vld [vmem:[%s2618 + $0x6c] sm:$0xf]
        %v2647 = vld [vmem:[%s2618 + $0x70] sm:$0xf]
        %v2648 = vld [vmem:[%s2618 + $0x74] sm:$0xf]
        %v2649 = vld [vmem:[%s2618 + $0x78] sm:$0xf]
        %v2650 = vld [vmem:[%s2618 + $0x7c] sm:$0xf]
        %v2651 = vld [vmem:[%s2618 + $0x80] sm:$0xf]
        %v2652 = vld [vmem:[%s2618 + $0x84] sm:$0xf]
        %v2653 = vld [vmem:[%s2618 + $0x88] sm:$0xf]
        %v2654 = vld [vmem:[%s2618 + $0x8c] sm:$0xf]
        %v2655 = vld [vmem:[%s2618 + $0x90] sm:$0xf]
        %v2656 = vld [vmem:[%s2618 + $0x94] sm:$0xf]
        %v2657 = vld [vmem:[%s2618 + $0x98] sm:$0xf]
        %v2658 = vld [vmem:[%s2618 + $0x9c] sm:$0xf]
        %v2659 = vld [vmem:[%s2618 + $0xa0] sm:$0xf]
        %v2660 = vld [vmem:[%s2618 + $0xa4] sm:$0xf]
        %v2661 = vld [vmem:[%s2618 + $0xa8] sm:$0xf]
        %v2662 = vld [vmem:[%s2618 + $0xac] sm:$0xf]
        %v2663 = vld [vmem:[%s2618 + $0xb0] sm:$0xf]
        %v2664 = vld [vmem:[%s2618 + $0xb4] sm:$0xf]
        %v2665 = vld [vmem:[%s2618 + $0xb8] sm:$0xf]
        %v2666 = vld [vmem:[%s2618 + $0xbc] sm:$0xf]
        %v2667 = vld [vmem:[%s2618 + $0xc0] sm:$0xf]
        %v2668 = vld [vmem:[%s2618 + $0xc4] sm:$0xf]
        %v2669 = vld [vmem:[%s2618 + $0xc8] sm:$0xf]
        %v2670 = vld [vmem:[%s2618 + $0xcc] sm:$0xf]
        %v2671 = vld [vmem:[%s2618 + $0xd0] sm:$0xf]
        %v2672 = vld [vmem:[%s2618 + $0xd4] sm:$0xf]
        %v2673 = vld [vmem:[%s2618 + $0xd8] sm:$0xf]
        %v2674 = vld [vmem:[%s2618 + $0xdc] sm:$0xf]
        %v2675 = vld [vmem:[%s2618 + $0xe0] sm:$0xf]
        %v2676 = vld [vmem:[%s2618 + $0xe4] sm:$0xf]
        %v2677 = vld [vmem:[%s2618 + $0xe8] sm:$0xf]
        %v2678 = vld [vmem:[%s2618 + $0xec] sm:$0xf]
        %v2679 = vld [vmem:[%s2618 + $0xf0] sm:$0xf]
        %v2680 = vld [vmem:[%s2618 + $0xf4] sm:$0xf]
        %v2681 = vld [vmem:[%s2618 + $0xf8] sm:$0xf]
        %v2682 = vld [vmem:[%s2618 + $0xfc] sm:$0xf]
        %v2683 = vunpack.c.l.bf16 %v2619
        %v2684 = vunpack.c.l.bf16 %v2620
        %v2685 = vunpack.c.l.bf16 %v2621
        %v2686 = vunpack.c.l.bf16 %v2622
        %v2687 = vunpack.c.l.bf16 %v2623
        %v2688 = vunpack.c.l.bf16 %v2624
        %v2689 = vunpack.c.l.bf16 %v2625
        %v2690 = vunpack.c.l.bf16 %v2626
        %v2691 = vunpack.c.l.bf16 %v2627
        %v2692 = vunpack.c.l.bf16 %v2628
        %v2693 = vunpack.c.l.bf16 %v2629
        %v2694 = vunpack.c.l.bf16 %v2630
        %v2695 = vunpack.c.l.bf16 %v2631
        %v2696 = vunpack.c.l.bf16 %v2632
        %v2697 = vunpack.c.l.bf16 %v2633
        %v2698 = vunpack.c.l.bf16 %v2634
        %v2699 = vunpack.c.l.bf16 %v2635
        %v2700 = vunpack.c.l.bf16 %v2636
        %v2701 = vunpack.c.l.bf16 %v2637
        %v2702 = vunpack.c.l.bf16 %v2638
        %v2703 = vunpack.c.l.bf16 %v2639
        %v2704 = vunpack.c.l.bf16 %v2640
        %v2705 = vunpack.c.l.bf16 %v2641
        %v2706 = vunpack.c.l.bf16 %v2642
        %v2707 = vunpack.c.l.bf16 %v2643
        %v2708 = vunpack.c.l.bf16 %v2644
        %v2709 = vunpack.c.l.bf16 %v2645
        %v2710 = vunpack.c.l.bf16 %v2646
        %v2711 = vunpack.c.l.bf16 %v2647
        %v2712 = vunpack.c.l.bf16 %v2648
        %v2713 = vunpack.c.l.bf16 %v2649
        %v2714 = vunpack.c.l.bf16 %v2650
        %v2715 = vunpack.c.l.bf16 %v2651
        %v2716 = vunpack.c.l.bf16 %v2652
        %v2717 = vunpack.c.l.bf16 %v2653
        %v2718 = vunpack.c.l.bf16 %v2654
        %v2719 = vunpack.c.l.bf16 %v2655
        %v2720 = vunpack.c.l.bf16 %v2656
        %v2721 = vunpack.c.l.bf16 %v2657
        %v2722 = vunpack.c.l.bf16 %v2658
        %v2723 = vunpack.c.l.bf16 %v2659
        %v2724 = vunpack.c.l.bf16 %v2660
        %v2725 = vunpack.c.l.bf16 %v2661
        %v2726 = vunpack.c.l.bf16 %v2662
        %v2727 = vunpack.c.l.bf16 %v2663
        %v2728 = vunpack.c.l.bf16 %v2664
        %v2729 = vunpack.c.l.bf16 %v2665
        %v2730 = vunpack.c.l.bf16 %v2666
        %v2731 = vunpack.c.l.bf16 %v2667
        %v2732 = vunpack.c.l.bf16 %v2668
        %v2733 = vunpack.c.l.bf16 %v2669
        %v2734 = vunpack.c.l.bf16 %v2670
        %v2735 = vunpack.c.l.bf16 %v2671
        %v2736 = vunpack.c.l.bf16 %v2672
        %v2737 = vunpack.c.l.bf16 %v2673
        %v2738 = vunpack.c.l.bf16 %v2674
        %v2739 = vunpack.c.l.bf16 %v2675
        %v2740 = vunpack.c.l.bf16 %v2676
        %v2741 = vunpack.c.l.bf16 %v2677
        %v2742 = vunpack.c.l.bf16 %v2678
        %v2743 = vunpack.c.l.bf16 %v2679
        %v2744 = vunpack.c.l.bf16 %v2680
        %v2745 = vunpack.c.l.bf16 %v2681
        %v2746 = vunpack.c.l.bf16 %v2682
        %v2747 = vmul.f32 %v2683, %v1590
        %v2748 = vmul.f32 %v2684, %v1590
        %v2749 = vmul.f32 %v2685, %v1590
        %v2750 = vmul.f32 %v2686, %v1590
        %v2751 = vmul.f32 %v2687, %v1590
        %v2752 = vmul.f32 %v2688, %v1590
        %v2753 = vmul.f32 %v2689, %v1590
        %v2754 = vmul.f32 %v2690, %v1590
        %v2755 = vmul.f32 %v2691, %v1590
        %v2756 = vmul.f32 %v2692, %v1590
        %v2757 = vmul.f32 %v2693, %v1590
        %v2758 = vmul.f32 %v2694, %v1590
        %v2759 = vmul.f32 %v2695, %v1590
        %v2760 = vmul.f32 %v2696, %v1590
        %v2761 = vmul.f32 %v2697, %v1590
        %v2762 = vmul.f32 %v2698, %v1590
        %v2763 = vmul.f32 %v2699, %v1590
        %v2764 = vmul.f32 %v2700, %v1590
        %v2765 = vmul.f32 %v2701, %v1590
        %v2766 = vmul.f32 %v2702, %v1590
        %v2767 = vmul.f32 %v2703, %v1590
        %v2768 = vmul.f32 %v2704, %v1590
        %v2769 = vmul.f32 %v2705, %v1590
        %v2770 = vmul.f32 %v2706, %v1590
        %v2771 = vmul.f32 %v2707, %v1590
        %v2772 = vmul.f32 %v2708, %v1590
        %v2773 = vmul.f32 %v2709, %v1590
        %v2774 = vmul.f32 %v2710, %v1590
        %v2775 = vmul.f32 %v2711, %v1590
        %v2776 = vmul.f32 %v2712, %v1590
        %v2777 = vmul.f32 %v2713, %v1590
        %v2778 = vmul.f32 %v2714, %v1590
        %v2779 = vmul.f32 %v2715, %v1590
        %v2780 = vmul.f32 %v2716, %v1590
        %v2781 = vmul.f32 %v2717, %v1590
        %v2782 = vmul.f32 %v2718, %v1590
        %v2783 = vmul.f32 %v2719, %v1590
        %v2784 = vmul.f32 %v2720, %v1590
        %v2785 = vmul.f32 %v2721, %v1590
        %v2786 = vmul.f32 %v2722, %v1590
        %v2787 = vmul.f32 %v2723, %v1590
        %v2788 = vmul.f32 %v2724, %v1590
        %v2789 = vmul.f32 %v2725, %v1590
        %v2790 = vmul.f32 %v2726, %v1590
        %v2791 = vmul.f32 %v2727, %v1590
        %v2792 = vmul.f32 %v2728, %v1590
        %v2793 = vmul.f32 %v2729, %v1590
        %v2794 = vmul.f32 %v2730, %v1590
        %v2795 = vmul.f32 %v2731, %v1590
        %v2796 = vmul.f32 %v2732, %v1590
        %v2797 = vmul.f32 %v2733, %v1590
        %v2798 = vmul.f32 %v2734, %v1590
        %v2799 = vmul.f32 %v2735, %v1590
        %v2800 = vmul.f32 %v2736, %v1590
        %v2801 = vmul.f32 %v2737, %v1590
        %v2802 = vmul.f32 %v2738, %v1590
        %v2803 = vmul.f32 %v2739, %v1590
        %v2804 = vmul.f32 %v2740, %v1590
        %v2805 = vmul.f32 %v2741, %v1590
        %v2806 = vmul.f32 %v2742, %v1590
        %v2807 = vmul.f32 %v2743, %v1590
        %v2808 = vmul.f32 %v2744, %v1590
        %v2809 = vmul.f32 %v2745, %v1590
        %v2810 = vmul.f32 %v2746, %v1590
        %v2811 = vsel %vm1393, %v2747, 0.0
        %2812 = vadd.xlane.f32.xlu0 %v2811
        %v2813 = vpop.xlane.xlu0 %2812
        %v2814 = vsel %vm1393, %v2748, 0.0
        %2815 = vadd.xlane.f32.xlu0 %v2814
        %v2816 = vpop.xlane.xlu0 %2815
        %v2817 = vsel %vm1393, %v2749, 0.0
        %2818 = vadd.xlane.f32.xlu0 %v2817
        %v2819 = vpop.xlane.xlu0 %2818
        %v2820 = vsel %vm1393, %v2750, 0.0
        %2821 = vadd.xlane.f32.xlu0 %v2820
        %v2822 = vpop.xlane.xlu0 %2821
        %v2823 = vsel %vm1393, %v2751, 0.0
        %2824 = vadd.xlane.f32.xlu0 %v2823
        %v2825 = vpop.xlane.xlu0 %2824
        %v2826 = vsel %vm1393, %v2752, 0.0
        %2827 = vadd.xlane.f32.xlu0 %v2826
        %v2828 = vpop.xlane.xlu0 %2827
        %v2829 = vsel %vm1393, %v2753, 0.0
        %2830 = vadd.xlane.f32.xlu0 %v2829
        %v2831 = vpop.xlane.xlu0 %2830
        %v2832 = vsel %vm1393, %v2754, 0.0
        %2833 = vadd.xlane.f32.xlu0 %v2832
        %v2834 = vpop.xlane.xlu0 %2833
        %v2835 = vsel %vm1393, %v2755, 0.0
        %2836 = vadd.xlane.f32.xlu0 %v2835
        %v2837 = vpop.xlane.xlu0 %2836
        %v2838 = vsel %vm1393, %v2756, 0.0
        %2839 = vadd.xlane.f32.xlu0 %v2838
        %v2840 = vpop.xlane.xlu0 %2839
        %v2841 = vsel %vm1393, %v2757, 0.0
        %2842 = vadd.xlane.f32.xlu0 %v2841
        %v2843 = vpop.xlane.xlu0 %2842
        %v2844 = vsel %vm1393, %v2758, 0.0
        %2845 = vadd.xlane.f32.xlu0 %v2844
        %v2846 = vpop.xlane.xlu0 %2845
        %v2847 = vsel %vm1393, %v2759, 0.0
        %2848 = vadd.xlane.f32.xlu0 %v2847
        %v2849 = vpop.xlane.xlu0 %2848
        %v2850 = vsel %vm1393, %v2760, 0.0
        %2851 = vadd.xlane.f32.xlu0 %v2850
        %v2852 = vpop.xlane.xlu0 %2851
        %v2853 = vsel %vm1393, %v2761, 0.0
        %2854 = vadd.xlane.f32.xlu0 %v2853
        %v2855 = vpop.xlane.xlu0 %2854
        %v2856 = vsel %vm1393, %v2762, 0.0
        %2857 = vadd.xlane.f32.xlu0 %v2856
        %v2858 = vpop.xlane.xlu0 %2857
        %v2859 = vsel %vm1393, %v2763, 0.0
        %2860 = vadd.xlane.f32.xlu0 %v2859
        %v2861 = vpop.xlane.xlu0 %2860
        %v2862 = vsel %vm1393, %v2764, 0.0
        %2863 = vadd.xlane.f32.xlu0 %v2862
        %v2864 = vpop.xlane.xlu0 %2863
        %v2865 = vsel %vm1393, %v2765, 0.0
        %2866 = vadd.xlane.f32.xlu0 %v2865
        %v2867 = vpop.xlane.xlu0 %2866
        %v2868 = vsel %vm1393, %v2766, 0.0
        %2869 = vadd.xlane.f32.xlu0 %v2868
        %v2870 = vpop.xlane.xlu0 %2869
        %v2871 = vsel %vm1393, %v2767, 0.0
        %2872 = vadd.xlane.f32.xlu0 %v2871
        %v2873 = vpop.xlane.xlu0 %2872
        %v2874 = vsel %vm1393, %v2768, 0.0
        %2875 = vadd.xlane.f32.xlu0 %v2874
        %v2876 = vpop.xlane.xlu0 %2875
        %v2877 = vsel %vm1393, %v2769, 0.0
        %2878 = vadd.xlane.f32.xlu0 %v2877
        %v2879 = vpop.xlane.xlu0 %2878
        %v2880 = vsel %vm1393, %v2770, 0.0
        %2881 = vadd.xlane.f32.xlu0 %v2880
        %v2882 = vpop.xlane.xlu0 %2881
        %v2883 = vsel %vm1393, %v2771, 0.0
        %2884 = vadd.xlane.f32.xlu0 %v2883
        %v2885 = vpop.xlane.xlu0 %2884
        %v2886 = vsel %vm1393, %v2772, 0.0
        %2887 = vadd.xlane.f32.xlu0 %v2886
        %v2888 = vpop.xlane.xlu0 %2887
        %v2889 = vsel %vm1393, %v2773, 0.0
        %2890 = vadd.xlane.f32.xlu0 %v2889
        %v2891 = vpop.xlane.xlu0 %2890
        %v2892 = vsel %vm1393, %v2774, 0.0
        %2893 = vadd.xlane.f32.xlu0 %v2892
        %v2894 = vpop.xlane.xlu0 %2893
        %v2895 = vsel %vm1393, %v2775, 0.0
        %2896 = vadd.xlane.f32.xlu0 %v2895
        %v2897 = vpop.xlane.xlu0 %2896
        %v2898 = vsel %vm1393, %v2776, 0.0
        %2899 = vadd.xlane.f32.xlu0 %v2898
        %v2900 = vpop.xlane.xlu0 %2899
        %v2901 = vsel %vm1393, %v2777, 0.0
        %2902 = vadd.xlane.f32.xlu0 %v2901
        %v2903 = vpop.xlane.xlu0 %2902
        %v2904 = vsel %vm1393, %v2778, 0.0
        %2905 = vadd.xlane.f32.xlu0 %v2904
        %v2906 = vpop.xlane.xlu0 %2905
        %v2907 = vsel %vm1393, %v2779, 0.0
        %2908 = vadd.xlane.f32.xlu0 %v2907
        %v2909 = vpop.xlane.xlu0 %2908
        %v2910 = vsel %vm1393, %v2780, 0.0
        %2911 = vadd.xlane.f32.xlu0 %v2910
        %v2912 = vpop.xlane.xlu0 %2911
        %v2913 = vsel %vm1393, %v2781, 0.0
        %2914 = vadd.xlane.f32.xlu0 %v2913
        %v2915 = vpop.xlane.xlu0 %2914
        %v2916 = vsel %vm1393, %v2782, 0.0
        %2917 = vadd.xlane.f32.xlu0 %v2916
        %v2918 = vpop.xlane.xlu0 %2917
        %v2919 = vsel %vm1393, %v2783, 0.0
        %2920 = vadd.xlane.f32.xlu0 %v2919
        %v2921 = vpop.xlane.xlu0 %2920
        %v2922 = vsel %vm1393, %v2784, 0.0
        %2923 = vadd.xlane.f32.xlu0 %v2922
        %v2924 = vpop.xlane.xlu0 %2923
        %v2925 = vsel %vm1393, %v2785, 0.0
        %2926 = vadd.xlane.f32.xlu0 %v2925
        %v2927 = vpop.xlane.xlu0 %2926
        %v2928 = vsel %vm1393, %v2786, 0.0
        %2929 = vadd.xlane.f32.xlu0 %v2928
        %v2930 = vpop.xlane.xlu0 %2929
        %v2931 = vsel %vm1393, %v2787, 0.0
        %2932 = vadd.xlane.f32.xlu0 %v2931
        %v2933 = vpop.xlane.xlu0 %2932
        %v2934 = vsel %vm1393, %v2788, 0.0
        %2935 = vadd.xlane.f32.xlu0 %v2934
        %v2936 = vpop.xlane.xlu0 %2935
        %v2937 = vsel %vm1393, %v2789, 0.0
        %2938 = vadd.xlane.f32.xlu0 %v2937
        %v2939 = vpop.xlane.xlu0 %2938
        %v2940 = vsel %vm1393, %v2790, 0.0
        %2941 = vadd.xlane.f32.xlu0 %v2940
        %v2942 = vpop.xlane.xlu0 %2941
        %v2943 = vsel %vm1393, %v2791, 0.0
        %2944 = vadd.xlane.f32.xlu0 %v2943
        %v2945 = vpop.xlane.xlu0 %2944
        %v2946 = vsel %vm1393, %v2792, 0.0
        %2947 = vadd.xlane.f32.xlu0 %v2946
        %v2948 = vpop.xlane.xlu0 %2947
        %v2949 = vsel %vm1393, %v2793, 0.0
        %2950 = vadd.xlane.f32.xlu0 %v2949
        %v2951 = vpop.xlane.xlu0 %2950
        %v2952 = vsel %vm1393, %v2794, 0.0
        %2953 = vadd.xlane.f32.xlu0 %v2952
        %v2954 = vpop.xlane.xlu0 %2953
        %v2955 = vsel %vm1393, %v2795, 0.0
        %2956 = vadd.xlane.f32.xlu0 %v2955
        %v2957 = vpop.xlane.xlu0 %2956
        %v2958 = vsel %vm1393, %v2796, 0.0
        %2959 = vadd.xlane.f32.xlu0 %v2958
        %v2960 = vpop.xlane.xlu0 %2959
        %v2961 = vsel %vm1393, %v2797, 0.0
        %2962 = vadd.xlane.f32.xlu0 %v2961
        %v2963 = vpop.xlane.xlu0 %2962
        %v2964 = vsel %vm1393, %v2798, 0.0
        %2965 = vadd.xlane.f32.xlu0 %v2964
        %v2966 = vpop.xlane.xlu0 %2965
        %v2967 = vsel %vm1393, %v2799, 0.0
        %2968 = vadd.xlane.f32.xlu0 %v2967
        %v2969 = vpop.xlane.xlu0 %2968
        %v2970 = vsel %vm1393, %v2800, 0.0
        %2971 = vadd.xlane.f32.xlu0 %v2970
        %v2972 = vpop.xlane.xlu0 %2971
        %v2973 = vsel %vm1393, %v2801, 0.0
        %2974 = vadd.xlane.f32.xlu0 %v2973
        %v2975 = vpop.xlane.xlu0 %2974
        %v2976 = vsel %vm1393, %v2802, 0.0
        %2977 = vadd.xlane.f32.xlu0 %v2976
        %v2978 = vpop.xlane.xlu0 %2977
        %v2979 = vsel %vm1393, %v2803, 0.0
        %2980 = vadd.xlane.f32.xlu0 %v2979
        %v2981 = vpop.xlane.xlu0 %2980
        %v2982 = vsel %vm1393, %v2804, 0.0
        %2983 = vadd.xlane.f32.xlu0 %v2982
        %v2984 = vpop.xlane.xlu0 %2983
        %v2985 = vsel %vm1393, %v2805, 0.0
        %2986 = vadd.xlane.f32.xlu0 %v2985
        %v2987 = vpop.xlane.xlu0 %2986
        %v2988 = vsel %vm1393, %v2806, 0.0
        %2989 = vadd.xlane.f32.xlu0 %v2988
        %v2990 = vpop.xlane.xlu0 %2989
        %v2991 = vsel %vm1393, %v2807, 0.0
        %2992 = vadd.xlane.f32.xlu0 %v2991
        %v2993 = vpop.xlane.xlu0 %2992
        %v2994 = vsel %vm1393, %v2808, 0.0
        %2995 = vadd.xlane.f32.xlu0 %v2994
        %v2996 = vpop.xlane.xlu0 %2995
        %v2997 = vsel %vm1393, %v2809, 0.0
        %2998 = vadd.xlane.f32.xlu0 %v2997
        %v2999 = vpop.xlane.xlu0 %2998
        %v3000 = vsel %vm1393, %v2810, 0.0
        %3001 = vadd.xlane.f32.xlu0 %v3000
        %v3002 = vpop.xlane.xlu0 %3001
        %v3003 = vadd.f32 %v2813, %v1848
        %v3004 = vadd.f32 %v2816, %v1848
        %v3005 = vadd.f32 %v2819, %v1848
        %v3006 = vadd.f32 %v2822, %v1848
        %v3007 = vadd.f32 %v2825, %v1848
        %v3008 = vadd.f32 %v2828, %v1848
        %v3009 = vadd.f32 %v2831, %v1848
        %v3010 = vadd.f32 %v2834, %v1848
        %v3011 = vadd.f32 %v2837, %v1848
        %v3012 = vadd.f32 %v2840, %v1848
        %v3013 = vadd.f32 %v2843, %v1848
        %v3014 = vadd.f32 %v2846, %v1848
        %v3015 = vadd.f32 %v2849, %v1848
        %v3016 = vadd.f32 %v2852, %v1848
        %v3017 = vadd.f32 %v2855, %v1848
        %v3018 = vadd.f32 %v2858, %v1848
        %v3019 = vadd.f32 %v2861, %v1848
        %v3020 = vadd.f32 %v2864, %v1848
        %v3021 = vadd.f32 %v2867, %v1848
        %v3022 = vadd.f32 %v2870, %v1848
        %v3023 = vadd.f32 %v2873, %v1848
        %v3024 = vadd.f32 %v2876, %v1848
        %v3025 = vadd.f32 %v2879, %v1848
        %v3026 = vadd.f32 %v2882, %v1848
        %v3027 = vadd.f32 %v2885, %v1848
        %v3028 = vadd.f32 %v2888, %v1848
        %v3029 = vadd.f32 %v2891, %v1848
        %v3030 = vadd.f32 %v2894, %v1848
        %v3031 = vadd.f32 %v2897, %v1848
        %v3032 = vadd.f32 %v2900, %v1848
        %v3033 = vadd.f32 %v2903, %v1848
        %v3034 = vadd.f32 %v2906, %v1848
        %v3035 = vadd.f32 %v2909, %v1848
        %v3036 = vadd.f32 %v2912, %v1848
        %v3037 = vadd.f32 %v2915, %v1848
        %v3038 = vadd.f32 %v2918, %v1848
        %v3039 = vadd.f32 %v2921, %v1848
        %v3040 = vadd.f32 %v2924, %v1848
        %v3041 = vadd.f32 %v2927, %v1848
        %v3042 = vadd.f32 %v2930, %v1848
        %v3043 = vadd.f32 %v2933, %v1848
        %v3044 = vadd.f32 %v2936, %v1848
        %v3045 = vadd.f32 %v2939, %v1848
        %v3046 = vadd.f32 %v2942, %v1848
        %v3047 = vadd.f32 %v2945, %v1848
        %v3048 = vadd.f32 %v2948, %v1848
        %v3049 = vadd.f32 %v2951, %v1848
        %v3050 = vadd.f32 %v2954, %v1848
        %v3051 = vadd.f32 %v2957, %v1848
        %v3052 = vadd.f32 %v2960, %v1848
        %v3053 = vadd.f32 %v2963, %v1848
        %v3054 = vadd.f32 %v2966, %v1848
        %v3055 = vadd.f32 %v2969, %v1848
        %v3056 = vadd.f32 %v2972, %v1848
        %v3057 = vadd.f32 %v2975, %v1848
        %v3058 = vadd.f32 %v2978, %v1848
        %v3059 = vadd.f32 %v2981, %v1848
        %v3060 = vadd.f32 %v2984, %v1848
        %v3061 = vadd.f32 %v2987, %v1848
        %v3062 = vadd.f32 %v2990, %v1848
        %v3063 = vadd.f32 %v2993, %v1848
        %v3064 = vadd.f32 %v2996, %v1848
        %v3065 = vadd.f32 %v2999, %v1848
        %v3066 = vadd.f32 %v3002, %v1848
        %v3067 = vadd.f32 %v1396, %v1849
        %v3068 = vadd.f32 %v1399, %v1850
        %v3069 = vadd.f32 %v1402, %v1851
        %v3070 = vadd.f32 %v1405, %v1852
        %v3071 = vadd.f32 %v1408, %v1853
        %v3072 = vadd.f32 %v1411, %v1854
        %v3073 = vadd.f32 %v1414, %v1855
        %v3074 = vadd.f32 %v1417, %v1856
        %v3075 = vadd.f32 %v1420, %v1857
        %v3076 = vadd.f32 %v1423, %v1858
        %v3077 = vadd.f32 %v1426, %v1859
        %v3078 = vadd.f32 %v1429, %v1860
        %v3079 = vadd.f32 %v1432, %v1861
        %v3080 = vadd.f32 %v1435, %v1862
        %v3081 = vadd.f32 %v1438, %v1863
        %v3082 = vadd.f32 %v1441, %v1864
        %v3083 = vadd.f32 %v1444, %v1865
        %v3084 = vadd.f32 %v1447, %v1866
        %v3085 = vadd.f32 %v1450, %v1867
        %v3086 = vadd.f32 %v1453, %v1868
        %v3087 = vadd.f32 %v1456, %v1869
        %v3088 = vadd.f32 %v1459, %v1870
        %v3089 = vadd.f32 %v1462, %v1871
        %v3090 = vadd.f32 %v1465, %v1872
        %v3091 = vadd.f32 %v1468, %v1873
        %v3092 = vadd.f32 %v1471, %v1874
        %v3093 = vadd.f32 %v1474, %v1875
        %v3094 = vadd.f32 %v1477, %v1876
        %v3095 = vadd.f32 %v1480, %v1877
        %v3096 = vadd.f32 %v1483, %v1878
        %v3097 = vadd.f32 %v1486, %v1879
        %v3098 = vadd.f32 %v1489, %v1880
        %v3099 = vadd.f32 %v1492, %v1881
        %v3100 = vadd.f32 %v1495, %v1882
        %v3101 = vadd.f32 %v1498, %v1883
        %v3102 = vadd.f32 %v1501, %v1884
        %v3103 = vadd.f32 %v1504, %v1885
        %v3104 = vadd.f32 %v1507, %v1886
        %v3105 = vadd.f32 %v1510, %v1887
        %v3106 = vadd.f32 %v1513, %v1888
        %v3107 = vadd.f32 %v1516, %v1889
        %v3108 = vadd.f32 %v1519, %v1890
        %v3109 = vadd.f32 %v1522, %v1891
        %v3110 = vadd.f32 %v1525, %v1892
        %v3111 = vadd.f32 %v1528, %v1893
        %v3112 = vadd.f32 %v1531, %v1894
        %v3113 = vadd.f32 %v1534, %v1895
        %v3114 = vadd.f32 %v1537, %v1896
        %v3115 = vadd.f32 %v1540, %v1897
        %v3116 = vadd.f32 %v1543, %v1898
        %v3117 = vadd.f32 %v1546, %v1899
        %v3118 = vadd.f32 %v1549, %v1900
        %v3119 = vadd.f32 %v1552, %v1901
        %v3120 = vadd.f32 %v1555, %v1902
        %v3121 = vadd.f32 %v1558, %v1903
        %v3122 = vadd.f32 %v1561, %v1904
        %v3123 = vadd.f32 %v1564, %v1905
        %v3124 = vadd.f32 %v1567, %v1906
        %v3125 = vadd.f32 %v1570, %v1907
        %v3126 = vadd.f32 %v1573, %v1908
        %v3127 = vadd.f32 %v1576, %v1909
        %v3128 = vadd.f32 %v1579, %v1910
        %v3129 = vadd.f32 %v1582, %v1911
        %v3130 = vadd.f32 %v1585, %v1912
        %v3131 = vxor.u32 %v3067, 2147483648
        %v3132 = vxor.u32 %v3068, 2147483648
        %v3133 = vxor.u32 %v3069, 2147483648
        %v3134 = vxor.u32 %v3070, 2147483648
        %v3135 = vxor.u32 %v3071, 2147483648
        %v3136 = vxor.u32 %v3072, 2147483648
        %v3137 = vxor.u32 %v3073, 2147483648
        %v3138 = vxor.u32 %v3074, 2147483648
        %v3139 = vxor.u32 %v3075, 2147483648
        %v3140 = vxor.u32 %v3076, 2147483648
        %v3141 = vxor.u32 %v3077, 2147483648
        %v3142 = vxor.u32 %v3078, 2147483648
        %v3143 = vxor.u32 %v3079, 2147483648
        %v3144 = vxor.u32 %v3080, 2147483648
        %v3145 = vxor.u32 %v3081, 2147483648
        %v3146 = vxor.u32 %v3082, 2147483648
        %v3147 = vxor.u32 %v3083, 2147483648
        %v3148 = vxor.u32 %v3084, 2147483648
        %v3149 = vxor.u32 %v3085, 2147483648
        %v3150 = vxor.u32 %v3086, 2147483648
        %v3151 = vxor.u32 %v3087, 2147483648
        %v3152 = vxor.u32 %v3088, 2147483648
        %v3153 = vxor.u32 %v3089, 2147483648
        %v3154 = vxor.u32 %v3090, 2147483648
        %v3155 = vxor.u32 %v3091, 2147483648
        %v3156 = vxor.u32 %v3092, 2147483648
        %v3157 = vxor.u32 %v3093, 2147483648
        %v3158 = vxor.u32 %v3094, 2147483648
        %v3159 = vxor.u32 %v3095, 2147483648
        %v3160 = vxor.u32 %v3096, 2147483648
        %v3161 = vxor.u32 %v3097, 2147483648
        %v3162 = vxor.u32 %v3098, 2147483648
        %v3163 = vxor.u32 %v3099, 2147483648
        %v3164 = vxor.u32 %v3100, 2147483648
        %v3165 = vxor.u32 %v3101, 2147483648
        %v3166 = vxor.u32 %v3102, 2147483648
        %v3167 = vxor.u32 %v3103, 2147483648
        %v3168 = vxor.u32 %v3104, 2147483648
        %v3169 = vxor.u32 %v3105, 2147483648
        %v3170 = vxor.u32 %v3106, 2147483648
        %v3171 = vxor.u32 %v3107, 2147483648
        %v3172 = vxor.u32 %v3108, 2147483648
        %v3173 = vxor.u32 %v3109, 2147483648
        %v3174 = vxor.u32 %v3110, 2147483648
        %v3175 = vxor.u32 %v3111, 2147483648
        %v3176 = vxor.u32 %v3112, 2147483648
        %v3177 = vxor.u32 %v3113, 2147483648
        %v3178 = vxor.u32 %v3114, 2147483648
        %v3179 = vxor.u32 %v3115, 2147483648
        %v3180 = vxor.u32 %v3116, 2147483648
        %v3181 = vxor.u32 %v3117, 2147483648
        %v3182 = vxor.u32 %v3118, 2147483648
        %v3183 = vxor.u32 %v3119, 2147483648
        %v3184 = vxor.u32 %v3120, 2147483648
        %v3185 = vxor.u32 %v3121, 2147483648
        %v3186 = vxor.u32 %v3122, 2147483648
        %v3187 = vxor.u32 %v3123, 2147483648
        %v3188 = vxor.u32 %v3124, 2147483648
        %v3189 = vxor.u32 %v3125, 2147483648
        %v3190 = vxor.u32 %v3126, 2147483648
        %v3191 = vxor.u32 %v3127, 2147483648
        %v3192 = vxor.u32 %v3128, 2147483648
        %v3193 = vxor.u32 %v3129, 2147483648
        %v3194 = vxor.u32 %v3130, 2147483648
        %v3195 = vmul.f32 %v3131, 1.442695
        %v3196 = vpow.pop %v3195
        %v3197 = vmul.f32 %v3132, 1.442695
        %v3198 = vpow.pop %v3197
        %v3199 = vmul.f32 %v3133, 1.442695
        %v3200 = vpow.pop %v3199
        %v3201 = vmul.f32 %v3134, 1.442695
        %v3202 = vpow.pop %v3201
        %v3203 = vmul.f32 %v3135, 1.442695
        %v3204 = vpow.pop %v3203
        %v3205 = vmul.f32 %v3136, 1.442695
        %v3206 = vpow.pop %v3205
        %v3207 = vmul.f32 %v3137, 1.442695
        %v3208 = vpow.pop %v3207
        %v3209 = vmul.f32 %v3138, 1.442695
        %v3210 = vpow.pop %v3209
        %v3211 = vmul.f32 %v3139, 1.442695
        %v3212 = vpow.pop %v3211
        %v3213 = vmul.f32 %v3140, 1.442695
        %v3214 = vpow.pop %v3213
        %v3215 = vmul.f32 %v3141, 1.442695
        %v3216 = vpow.pop %v3215
        %v3217 = vmul.f32 %v3142, 1.442695
        %v3218 = vpow.pop %v3217
        %v3219 = vmul.f32 %v3143, 1.442695
        %v3220 = vpow.pop %v3219
        %v3221 = vmul.f32 %v3144, 1.442695
        %v3222 = vpow.pop %v3221
        %v3223 = vmul.f32 %v3145, 1.442695
        %v3224 = vpow.pop %v3223
        %v3225 = vmul.f32 %v3146, 1.442695
        %v3226 = vpow.pop %v3225
        %v3227 = vmul.f32 %v3147, 1.442695
        %v3228 = vpow.pop %v3227
        %v3229 = vmul.f32 %v3148, 1.442695
        %v3230 = vpow.pop %v3229
        %v3231 = vmul.f32 %v3149, 1.442695
        %v3232 = vpow.pop %v3231
        %v3233 = vmul.f32 %v3150, 1.442695
        %v3234 = vpow.pop %v3233
        %v3235 = vmul.f32 %v3151, 1.442695
        %v3236 = vpow.pop %v3235
        %v3237 = vmul.f32 %v3152, 1.442695
        %v3238 = vpow.pop %v3237
        %v3239 = vmul.f32 %v3153, 1.442695
        %v3240 = vpow.pop %v3239
        %v3241 = vmul.f32 %v3154, 1.442695
        %v3242 = vpow.pop %v3241
        %v3243 = vmul.f32 %v3155, 1.442695
        %v3244 = vpow.pop %v3243
        %v3245 = vmul.f32 %v3156, 1.442695
        %v3246 = vpow.pop %v3245
        %v3247 = vmul.f32 %v3157, 1.442695
        %v3248 = vpow.pop %v3247
        %v3249 = vmul.f32 %v3158, 1.442695
        %v3250 = vpow.pop %v3249
        %v3251 = vmul.f32 %v3159, 1.442695
        %v3252 = vpow.pop %v3251
        %v3253 = vmul.f32 %v3160, 1.442695
        %v3254 = vpow.pop %v3253
        %v3255 = vmul.f32 %v3161, 1.442695
        %v3256 = vpow.pop %v3255
        %v3257 = vmul.f32 %v3162, 1.442695
        %v3258 = vpow.pop %v3257
        %v3259 = vmul.f32 %v3163, 1.442695
        %v3260 = vpow.pop %v3259
        %v3261 = vmul.f32 %v3164, 1.442695
        %v3262 = vpow.pop %v3261
        %v3263 = vmul.f32 %v3165, 1.442695
        %v3264 = vpow.pop %v3263
        %v3265 = vmul.f32 %v3166, 1.442695
        %v3266 = vpow.pop %v3265
        %v3267 = vmul.f32 %v3167, 1.442695
        %v3268 = vpow.pop %v3267
        %v3269 = vmul.f32 %v3168, 1.442695
        %v3270 = vpow.pop %v3269
        %v3271 = vmul.f32 %v3169, 1.442695
        %v3272 = vpow.pop %v3271
        %v3273 = vmul.f32 %v3170, 1.442695
        %v3274 = vpow.pop %v3273
        %v3275 = vmul.f32 %v3171, 1.442695
        %v3276 = vpow.pop %v3275
        %v3277 = vmul.f32 %v3172, 1.442695
        %v3278 = vpow.pop %v3277
        %v3279 = vmul.f32 %v3173, 1.442695
        %v3280 = vpow.pop %v3279
        %v3281 = vmul.f32 %v3174, 1.442695
        %v3282 = vpow.pop %v3281
        %v3283 = vmul.f32 %v3175, 1.442695
        %v3284 = vpow.pop %v3283
        %v3285 = vmul.f32 %v3176, 1.442695
        %v3286 = vpow.pop %v3285
        %v3287 = vmul.f32 %v3177, 1.442695
        %v3288 = vpow.pop %v3287
        %v3289 = vmul.f32 %v3178, 1.442695
        %v3290 = vpow.pop %v3289
        %v3291 = vmul.f32 %v3179, 1.442695
        %v3292 = vpow.pop %v3291
        %v3293 = vmul.f32 %v3180, 1.442695
        %v3294 = vpow.pop %v3293
        %v3295 = vmul.f32 %v3181, 1.442695
        %v3296 = vpow.pop %v3295
        %v3297 = vmul.f32 %v3182, 1.442695
        %v3298 = vpow.pop %v3297
        %v3299 = vmul.f32 %v3183, 1.442695
        %v3300 = vpow.pop %v3299
        %v3301 = vmul.f32 %v3184, 1.442695
        %v3302 = vpow.pop %v3301
        %v3303 = vmul.f32 %v3185, 1.442695
        %v3304 = vpow.pop %v3303
        %v3305 = vmul.f32 %v3186, 1.442695
        %v3306 = vpow.pop %v3305
        %v3307 = vmul.f32 %v3187, 1.442695
        %v3308 = vpow.pop %v3307
        %v3309 = vmul.f32 %v3188, 1.442695
        %v3310 = vpow.pop %v3309
        %v3311 = vmul.f32 %v3189, 1.442695
        %v3312 = vpow.pop %v3311
        %v3313 = vmul.f32 %v3190, 1.442695
        %v3314 = vpow.pop %v3313
        %v3315 = vmul.f32 %v3191, 1.442695
        %v3316 = vpow.pop %v3315
        %v3317 = vmul.f32 %v3192, 1.442695
        %v3318 = vpow.pop %v3317
        %v3319 = vmul.f32 %v3193, 1.442695
        %v3320 = vpow.pop %v3319
        %v3321 = vmul.f32 %v3194, 1.442695
        %v3322 = vpow.pop %v3321
        %v3323 = vadd.f32 %v3196, 1.0
        %v3324 = vadd.f32 %v3198, 1.0
        %v3325 = vadd.f32 %v3200, 1.0
        %v3326 = vadd.f32 %v3202, 1.0
        %v3327 = vadd.f32 %v3204, 1.0
        %v3328 = vadd.f32 %v3206, 1.0
        %v3329 = vadd.f32 %v3208, 1.0
        %v3330 = vadd.f32 %v3210, 1.0
        %v3331 = vadd.f32 %v3212, 1.0
        %v3332 = vadd.f32 %v3214, 1.0
        %v3333 = vadd.f32 %v3216, 1.0
        %v3334 = vadd.f32 %v3218, 1.0
        %v3335 = vadd.f32 %v3220, 1.0
        %v3336 = vadd.f32 %v3222, 1.0
        %v3337 = vadd.f32 %v3224, 1.0
        %v3338 = vadd.f32 %v3226, 1.0
        %v3339 = vadd.f32 %v3228, 1.0
        %v3340 = vadd.f32 %v3230, 1.0
        %v3341 = vadd.f32 %v3232, 1.0
        %v3342 = vadd.f32 %v3234, 1.0
        %v3343 = vadd.f32 %v3236, 1.0
        %v3344 = vadd.f32 %v3238, 1.0
        %v3345 = vadd.f32 %v3240, 1.0
        %v3346 = vadd.f32 %v3242, 1.0
        %v3347 = vadd.f32 %v3244, 1.0
        %v3348 = vadd.f32 %v3246, 1.0
        %v3349 = vadd.f32 %v3248, 1.0
        %v3350 = vadd.f32 %v3250, 1.0
        %v3351 = vadd.f32 %v3252, 1.0
        %v3352 = vadd.f32 %v3254, 1.0
        %v3353 = vadd.f32 %v3256, 1.0
        %v3354 = vadd.f32 %v3258, 1.0
        %v3355 = vadd.f32 %v3260, 1.0
        %v3356 = vadd.f32 %v3262, 1.0
        %v3357 = vadd.f32 %v3264, 1.0
        %v3358 = vadd.f32 %v3266, 1.0
        %v3359 = vadd.f32 %v3268, 1.0
        %v3360 = vadd.f32 %v3270, 1.0
        %v3361 = vadd.f32 %v3272, 1.0
        %v3362 = vadd.f32 %v3274, 1.0
        %v3363 = vadd.f32 %v3276, 1.0
        %v3364 = vadd.f32 %v3278, 1.0
        %v3365 = vadd.f32 %v3280, 1.0
        %v3366 = vadd.f32 %v3282, 1.0
        %v3367 = vadd.f32 %v3284, 1.0
        %v3368 = vadd.f32 %v3286, 1.0
        %v3369 = vadd.f32 %v3288, 1.0
        %v3370 = vadd.f32 %v3290, 1.0
        %v3371 = vadd.f32 %v3292, 1.0
        %v3372 = vadd.f32 %v3294, 1.0
        %v3373 = vadd.f32 %v3296, 1.0
        %v3374 = vadd.f32 %v3298, 1.0
        %v3375 = vadd.f32 %v3300, 1.0
        %v3376 = vadd.f32 %v3302, 1.0
        %v3377 = vadd.f32 %v3304, 1.0
        %v3378 = vadd.f32 %v3306, 1.0
        %v3379 = vadd.f32 %v3308, 1.0
        %v3380 = vadd.f32 %v3310, 1.0
        %v3381 = vadd.f32 %v3312, 1.0
        %v3382 = vadd.f32 %v3314, 1.0
        %v3383 = vadd.f32 %v3316, 1.0
        %v3384 = vadd.f32 %v3318, 1.0
        %v3385 = vadd.f32 %v3320, 1.0
        %v3386 = vadd.f32 %v3322, 1.0
        %v3387 = vrcp.pop %v3323
        %v3388 = vmul.f32 1.0, %v3387
        %v3389 = vrcp.pop %v3324
        %v3390 = vmul.f32 1.0, %v3389
        %v3391 = vrcp.pop %v3325
        %v3392 = vmul.f32 1.0, %v3391
        %v3393 = vrcp.pop %v3326
        %v3394 = vmul.f32 1.0, %v3393
        %v3395 = vrcp.pop %v3327
        %v3396 = vmul.f32 1.0, %v3395
        %v3397 = vrcp.pop %v3328
        %v3398 = vmul.f32 1.0, %v3397
        %v3399 = vrcp.pop %v3329
        %v3400 = vmul.f32 1.0, %v3399
        %v3401 = vrcp.pop %v3330
        %v3402 = vmul.f32 1.0, %v3401
        %v3403 = vrcp.pop %v3331
        %v3404 = vmul.f32 1.0, %v3403
        %v3405 = vrcp.pop %v3332
        %v3406 = vmul.f32 1.0, %v3405
        %v3407 = vrcp.pop %v3333
        %v3408 = vmul.f32 1.0, %v3407
        %v3409 = vrcp.pop %v3334
        %v3410 = vmul.f32 1.0, %v3409
        %v3411 = vrcp.pop %v3335
        %v3412 = vmul.f32 1.0, %v3411
        %v3413 = vrcp.pop %v3336
        %v3414 = vmul.f32 1.0, %v3413
        %v3415 = vrcp.pop %v3337
        %v3416 = vmul.f32 1.0, %v3415
        %v3417 = vrcp.pop %v3338
        %v3418 = vmul.f32 1.0, %v3417
        %v3419 = vrcp.pop %v3339
        %v3420 = vmul.f32 1.0, %v3419
        %v3421 = vrcp.pop %v3340
        %v3422 = vmul.f32 1.0, %v3421
        %v3423 = vrcp.pop %v3341
        %v3424 = vmul.f32 1.0, %v3423
        %v3425 = vrcp.pop %v3342
        %v3426 = vmul.f32 1.0, %v3425
        %v3427 = vrcp.pop %v3343
        %v3428 = vmul.f32 1.0, %v3427
        %v3429 = vrcp.pop %v3344
        %v3430 = vmul.f32 1.0, %v3429
        %v3431 = vrcp.pop %v3345
        %v3432 = vmul.f32 1.0, %v3431
        %v3433 = vrcp.pop %v3346
        %v3434 = vmul.f32 1.0, %v3433
        %v3435 = vrcp.pop %v3347
        %v3436 = vmul.f32 1.0, %v3435
        %v3437 = vrcp.pop %v3348
        %v3438 = vmul.f32 1.0, %v3437
        %v3439 = vrcp.pop %v3349
        %v3440 = vmul.f32 1.0, %v3439
        %v3441 = vrcp.pop %v3350
        %v3442 = vmul.f32 1.0, %v3441
        %v3443 = vrcp.pop %v3351
        %v3444 = vmul.f32 1.0, %v3443
        %v3445 = vrcp.pop %v3352
        %v3446 = vmul.f32 1.0, %v3445
        %v3447 = vrcp.pop %v3353
        %v3448 = vmul.f32 1.0, %v3447
        %v3449 = vrcp.pop %v3354
        %v3450 = vmul.f32 1.0, %v3449
        %v3451 = vrcp.pop %v3355
        %v3452 = vmul.f32 1.0, %v3451
        %v3453 = vrcp.pop %v3356
        %v3454 = vmul.f32 1.0, %v3453
        %v3455 = vrcp.pop %v3357
        %v3456 = vmul.f32 1.0, %v3455
        %v3457 = vrcp.pop %v3358
        %v3458 = vmul.f32 1.0, %v3457
        %v3459 = vrcp.pop %v3359
        %v3460 = vmul.f32 1.0, %v3459
        %v3461 = vrcp.pop %v3360
        %v3462 = vmul.f32 1.0, %v3461
        %v3463 = vrcp.pop %v3361
        %v3464 = vmul.f32 1.0, %v3463
        %v3465 = vrcp.pop %v3362
        %v3466 = vmul.f32 1.0, %v3465
        %v3467 = vrcp.pop %v3363
        %v3468 = vmul.f32 1.0, %v3467
        %v3469 = vrcp.pop %v3364
        %v3470 = vmul.f32 1.0, %v3469
        %v3471 = vrcp.pop %v3365
        %v3472 = vmul.f32 1.0, %v3471
        %v3473 = vrcp.pop %v3366
        %v3474 = vmul.f32 1.0, %v3473
        %v3475 = vrcp.pop %v3367
        %v3476 = vmul.f32 1.0, %v3475
        %v3477 = vrcp.pop %v3368
        %v3478 = vmul.f32 1.0, %v3477
        %v3479 = vrcp.pop %v3369
        %v3480 = vmul.f32 1.0, %v3479
        %v3481 = vrcp.pop %v3370
        %v3482 = vmul.f32 1.0, %v3481
        %v3483 = vrcp.pop %v3371
        %v3484 = vmul.f32 1.0, %v3483
        %v3485 = vrcp.pop %v3372
        %v3486 = vmul.f32 1.0, %v3485
        %v3487 = vrcp.pop %v3373
        %v3488 = vmul.f32 1.0, %v3487
        %v3489 = vrcp.pop %v3374
        %v3490 = vmul.f32 1.0, %v3489
        %v3491 = vrcp.pop %v3375
        %v3492 = vmul.f32 1.0, %v3491
        %v3493 = vrcp.pop %v3376
        %v3494 = vmul.f32 1.0, %v3493
        %v3495 = vrcp.pop %v3377
        %v3496 = vmul.f32 1.0, %v3495
        %v3497 = vrcp.pop %v3378
        %v3498 = vmul.f32 1.0, %v3497
        %v3499 = vrcp.pop %v3379
        %v3500 = vmul.f32 1.0, %v3499
        %v3501 = vrcp.pop %v3380
        %v3502 = vmul.f32 1.0, %v3501
        %v3503 = vrcp.pop %v3381
        %v3504 = vmul.f32 1.0, %v3503
        %v3505 = vrcp.pop %v3382
        %v3506 = vmul.f32 1.0, %v3505
        %v3507 = vrcp.pop %v3383
        %v3508 = vmul.f32 1.0, %v3507
        %v3509 = vrcp.pop %v3384
        %v3510 = vmul.f32 1.0, %v3509
        %v3511 = vrcp.pop %v3385
        %v3512 = vmul.f32 1.0, %v3511
        %v3513 = vrcp.pop %v3386
        %v3514 = vmul.f32 1.0, %v3513
        %v3515 = vmul.f32 %v3388, 1.442695
        %v3516 = vpow.pop %v3515
        %v3517 = vmul.f32 %v3390, 1.442695
        %v3518 = vpow.pop %v3517
        %v3519 = vmul.f32 %v3392, 1.442695
        %v3520 = vpow.pop %v3519
        %v3521 = vmul.f32 %v3394, 1.442695
        %v3522 = vpow.pop %v3521
        %v3523 = vmul.f32 %v3396, 1.442695
        %v3524 = vpow.pop %v3523
        %v3525 = vmul.f32 %v3398, 1.442695
        %v3526 = vpow.pop %v3525
        %v3527 = vmul.f32 %v3400, 1.442695
        %v3528 = vpow.pop %v3527
        %v3529 = vmul.f32 %v3402, 1.442695
        %v3530 = vpow.pop %v3529
        %v3531 = vmul.f32 %v3404, 1.442695
        %v3532 = vpow.pop %v3531
        %v3533 = vmul.f32 %v3406, 1.442695
        %v3534 = vpow.pop %v3533
        %v3535 = vmul.f32 %v3408, 1.442695
        %v3536 = vpow.pop %v3535
        %v3537 = vmul.f32 %v3410, 1.442695
        %v3538 = vpow.pop %v3537
        %v3539 = vmul.f32 %v3412, 1.442695
        %v3540 = vpow.pop %v3539
        %v3541 = vmul.f32 %v3414, 1.442695
        %v3542 = vpow.pop %v3541
        %v3543 = vmul.f32 %v3416, 1.442695
        %v3544 = vpow.pop %v3543
        %v3545 = vmul.f32 %v3418, 1.442695
        %v3546 = vpow.pop %v3545
        %v3547 = vmul.f32 %v3420, 1.442695
        %v3548 = vpow.pop %v3547
        %v3549 = vmul.f32 %v3422, 1.442695
        %v3550 = vpow.pop %v3549
        %v3551 = vmul.f32 %v3424, 1.442695
        %v3552 = vpow.pop %v3551
        %v3553 = vmul.f32 %v3426, 1.442695
        %v3554 = vpow.pop %v3553
        %v3555 = vmul.f32 %v3428, 1.442695
        %v3556 = vpow.pop %v3555
        %v3557 = vmul.f32 %v3430, 1.442695
        %v3558 = vpow.pop %v3557
        %v3559 = vmul.f32 %v3432, 1.442695
        %v3560 = vpow.pop %v3559
        %v3561 = vmul.f32 %v3434, 1.442695
        %v3562 = vpow.pop %v3561
        %v3563 = vmul.f32 %v3436, 1.442695
        %v3564 = vpow.pop %v3563
        %v3565 = vmul.f32 %v3438, 1.442695
        %v3566 = vpow.pop %v3565
        %v3567 = vmul.f32 %v3440, 1.442695
        %v3568 = vpow.pop %v3567
        %v3569 = vmul.f32 %v3442, 1.442695
        %v3570 = vpow.pop %v3569
        %v3571 = vmul.f32 %v3444, 1.442695
        %v3572 = vpow.pop %v3571
        %v3573 = vmul.f32 %v3446, 1.442695
        %v3574 = vpow.pop %v3573
        %v3575 = vmul.f32 %v3448, 1.442695
        %v3576 = vpow.pop %v3575
        %v3577 = vmul.f32 %v3450, 1.442695
        %v3578 = vpow.pop %v3577
        %v3579 = vmul.f32 %v3452, 1.442695
        %v3580 = vpow.pop %v3579
        %v3581 = vmul.f32 %v3454, 1.442695
        %v3582 = vpow.pop %v3581
        %v3583 = vmul.f32 %v3456, 1.442695
        %v3584 = vpow.pop %v3583
        %v3585 = vmul.f32 %v3458, 1.442695
        %v3586 = vpow.pop %v3585
        %v3587 = vmul.f32 %v3460, 1.442695
        %v3588 = vpow.pop %v3587
        %v3589 = vmul.f32 %v3462, 1.442695
        %v3590 = vpow.pop %v3589
        %v3591 = vmul.f32 %v3464, 1.442695
        %v3592 = vpow.pop %v3591
        %v3593 = vmul.f32 %v3466, 1.442695
        %v3594 = vpow.pop %v3593
        %v3595 = vmul.f32 %v3468, 1.442695
        %v3596 = vpow.pop %v3595
        %v3597 = vmul.f32 %v3470, 1.442695
        %v3598 = vpow.pop %v3597
        %v3599 = vmul.f32 %v3472, 1.442695
        %v3600 = vpow.pop %v3599
        %v3601 = vmul.f32 %v3474, 1.442695
        %v3602 = vpow.pop %v3601
        %v3603 = vmul.f32 %v3476, 1.442695
        %v3604 = vpow.pop %v3603
        %v3605 = vmul.f32 %v3478, 1.442695
        %v3606 = vpow.pop %v3605
        %v3607 = vmul.f32 %v3480, 1.442695
        %v3608 = vpow.pop %v3607
        %v3609 = vmul.f32 %v3482, 1.442695
        %v3610 = vpow.pop %v3609
        %v3611 = vmul.f32 %v3484, 1.442695
        %v3612 = vpow.pop %v3611
        %v3613 = vmul.f32 %v3486, 1.442695
        %v3614 = vpow.pop %v3613
        %v3615 = vmul.f32 %v3488, 1.442695
        %v3616 = vpow.pop %v3615
        %v3617 = vmul.f32 %v3490, 1.442695
        %v3618 = vpow.pop %v3617
        %v3619 = vmul.f32 %v3492, 1.442695
        %v3620 = vpow.pop %v3619
        %v3621 = vmul.f32 %v3494, 1.442695
        %v3622 = vpow.pop %v3621
        %v3623 = vmul.f32 %v3496, 1.442695
        %v3624 = vpow.pop %v3623
        %v3625 = vmul.f32 %v3498, 1.442695
        %v3626 = vpow.pop %v3625
        %v3627 = vmul.f32 %v3500, 1.442695
        %v3628 = vpow.pop %v3627
        %v3629 = vmul.f32 %v3502, 1.442695
        %v3630 = vpow.pop %v3629
        %v3631 = vmul.f32 %v3504, 1.442695
        %v3632 = vpow.pop %v3631
        %v3633 = vmul.f32 %v3506, 1.442695
        %v3634 = vpow.pop %v3633
        %v3635 = vmul.f32 %v3508, 1.442695
        %v3636 = vpow.pop %v3635
        %v3637 = vmul.f32 %v3510, 1.442695
        %v3638 = vpow.pop %v3637
        %v3639 = vmul.f32 %v3512, 1.442695
        %v3640 = vpow.pop %v3639
        %v3641 = vmul.f32 %v3514, 1.442695
        %v3642 = vpow.pop %v3641
        %v3643 = vmul.f32 %v3516, %v1396
        %v3644 = vmul.f32 %v3518, %v1399
        %v3645 = vmul.f32 %v3520, %v1402
        %v3646 = vmul.f32 %v3522, %v1405
        %v3647 = vmul.f32 %v3524, %v1408
        %v3648 = vmul.f32 %v3526, %v1411
        %v3649 = vmul.f32 %v3528, %v1414
        %v3650 = vmul.f32 %v3530, %v1417
        %v3651 = vmul.f32 %v3532, %v1420
        %v3652 = vmul.f32 %v3534, %v1423
        %v3653 = vmul.f32 %v3536, %v1426
        %v3654 = vmul.f32 %v3538, %v1429
        %v3655 = vmul.f32 %v3540, %v1432
        %v3656 = vmul.f32 %v3542, %v1435
        %v3657 = vmul.f32 %v3544, %v1438
        %v3658 = vmul.f32 %v3546, %v1441
        %v3659 = vmul.f32 %v3548, %v1444
        %v3660 = vmul.f32 %v3550, %v1447
        %v3661 = vmul.f32 %v3552, %v1450
        %v3662 = vmul.f32 %v3554, %v1453
        %v3663 = vmul.f32 %v3556, %v1456
        %v3664 = vmul.f32 %v3558, %v1459
        %v3665 = vmul.f32 %v3560, %v1462
        %v3666 = vmul.f32 %v3562, %v1465
        %v3667 = vmul.f32 %v3564, %v1468
        %v3668 = vmul.f32 %v3566, %v1471
        %v3669 = vmul.f32 %v3568, %v1474
        %v3670 = vmul.f32 %v3570, %v1477
        %v3671 = vmul.f32 %v3572, %v1480
        %v3672 = vmul.f32 %v3574, %v1483
        %v3673 = vmul.f32 %v3576, %v1486
        %v3674 = vmul.f32 %v3578, %v1489
        %v3675 = vmul.f32 %v3580, %v1492
        %v3676 = vmul.f32 %v3582, %v1495
        %v3677 = vmul.f32 %v3584, %v1498
        %v3678 = vmul.f32 %v3586, %v1501
        %v3679 = vmul.f32 %v3588, %v1504
        %v3680 = vmul.f32 %v3590, %v1507
        %v3681 = vmul.f32 %v3592, %v1510
        %v3682 = vmul.f32 %v3594, %v1513
        %v3683 = vmul.f32 %v3596, %v1516
        %v3684 = vmul.f32 %v3598, %v1519
        %v3685 = vmul.f32 %v3600, %v1522
        %v3686 = vmul.f32 %v3602, %v1525
        %v3687 = vmul.f32 %v3604, %v1528
        %v3688 = vmul.f32 %v3606, %v1531
        %v3689 = vmul.f32 %v3608, %v1534
        %v3690 = vmul.f32 %v3610, %v1537
        %v3691 = vmul.f32 %v3612, %v1540
        %v3692 = vmul.f32 %v3614, %v1543
        %v3693 = vmul.f32 %v3616, %v1546
        %v3694 = vmul.f32 %v3618, %v1549
        %v3695 = vmul.f32 %v3620, %v1552
        %v3696 = vmul.f32 %v3622, %v1555
        %v3697 = vmul.f32 %v3624, %v1558
        %v3698 = vmul.f32 %v3626, %v1561
        %v3699 = vmul.f32 %v3628, %v1564
        %v3700 = vmul.f32 %v3630, %v1567
        %v3701 = vmul.f32 %v3632, %v1570
        %v3702 = vmul.f32 %v3634, %v1573
        %v3703 = vmul.f32 %v3636, %v1576
        %v3704 = vmul.f32 %v3638, %v1579
        %v3705 = vmul.f32 %v3640, %v1582
        %v3706 = vmul.f32 %v3642, %v1585
        %v3707 = vrcp.pop %v3516
        %v3708 = vrcp.pop %v3518
        %v3709 = vrcp.pop %v3520
        %v3710 = vrcp.pop %v3522
        %v3711 = vrcp.pop %v3524
        %v3712 = vrcp.pop %v3526
        %v3713 = vrcp.pop %v3528
        %v3714 = vrcp.pop %v3530
        %v3715 = vrcp.pop %v3532
        %v3716 = vrcp.pop %v3534
        %v3717 = vrcp.pop %v3536
        %v3718 = vrcp.pop %v3538
        %v3719 = vrcp.pop %v3540
        %v3720 = vrcp.pop %v3542
        %v3721 = vrcp.pop %v3544
        %v3722 = vrcp.pop %v3546
        %v3723 = vrcp.pop %v3548
        %v3724 = vrcp.pop %v3550
        %v3725 = vrcp.pop %v3552
        %v3726 = vrcp.pop %v3554
        %v3727 = vrcp.pop %v3556
        %v3728 = vrcp.pop %v3558
        %v3729 = vrcp.pop %v3560
        %v3730 = vrcp.pop %v3562
        %v3731 = vrcp.pop %v3564
        %v3732 = vrcp.pop %v3566
        %v3733 = vrcp.pop %v3568
        %v3734 = vrcp.pop %v3570
        %v3735 = vrcp.pop %v3572
        %v3736 = vrcp.pop %v3574
        %v3737 = vrcp.pop %v3576
        %v3738 = vrcp.pop %v3578
        %v3739 = vrcp.pop %v3580
        %v3740 = vrcp.pop %v3582
        %v3741 = vrcp.pop %v3584
        %v3742 = vrcp.pop %v3586
        %v3743 = vrcp.pop %v3588
        %v3744 = vrcp.pop %v3590
        %v3745 = vrcp.pop %v3592
        %v3746 = vrcp.pop %v3594
        %v3747 = vrcp.pop %v3596
        %v3748 = vrcp.pop %v3598
        %v3749 = vrcp.pop %v3600
        %v3750 = vrcp.pop %v3602
        %v3751 = vrcp.pop %v3604
        %v3752 = vrcp.pop %v3606
        %v3753 = vrcp.pop %v3608
        %v3754 = vrcp.pop %v3610
        %v3755 = vrcp.pop %v3612
        %v3756 = vrcp.pop %v3614
        %v3757 = vrcp.pop %v3616
        %v3758 = vrcp.pop %v3618
        %v3759 = vrcp.pop %v3620
        %v3760 = vrcp.pop %v3622
        %v3761 = vrcp.pop %v3624
        %v3762 = vrcp.pop %v3626
        %v3763 = vrcp.pop %v3628
        %v3764 = vrcp.pop %v3630
        %v3765 = vrcp.pop %v3632
        %v3766 = vrcp.pop %v3634
        %v3767 = vrcp.pop %v3636
        %v3768 = vrcp.pop %v3638
        %v3769 = vrcp.pop %v3640
        %v3770 = vrcp.pop %v3642
        %v3771 = vmul.f32 %v3516, %v3707
        %v3772 = vmul.f32 %v3518, %v3708
        %v3773 = vmul.f32 %v3520, %v3709
        %v3774 = vmul.f32 %v3522, %v3710
        %v3775 = vmul.f32 %v3524, %v3711
        %v3776 = vmul.f32 %v3526, %v3712
        %v3777 = vmul.f32 %v3528, %v3713
        %v3778 = vmul.f32 %v3530, %v3714
        %v3779 = vmul.f32 %v3532, %v3715
        %v3780 = vmul.f32 %v3534, %v3716
        %v3781 = vmul.f32 %v3536, %v3717
        %v3782 = vmul.f32 %v3538, %v3718
        %v3783 = vmul.f32 %v3540, %v3719
        %v3784 = vmul.f32 %v3542, %v3720
        %v3785 = vmul.f32 %v3544, %v3721
        %v3786 = vmul.f32 %v3546, %v3722
        %v3787 = vmul.f32 %v3548, %v3723
        %v3788 = vmul.f32 %v3550, %v3724
        %v3789 = vmul.f32 %v3552, %v3725
        %v3790 = vmul.f32 %v3554, %v3726
        %v3791 = vmul.f32 %v3556, %v3727
        %v3792 = vmul.f32 %v3558, %v3728
        %v3793 = vmul.f32 %v3560, %v3729
        %v3794 = vmul.f32 %v3562, %v3730
        %v3795 = vmul.f32 %v3564, %v3731
        %v3796 = vmul.f32 %v3566, %v3732
        %v3797 = vmul.f32 %v3568, %v3733
        %v3798 = vmul.f32 %v3570, %v3734
        %v3799 = vmul.f32 %v3572, %v3735
        %v3800 = vmul.f32 %v3574, %v3736
        %v3801 = vmul.f32 %v3576, %v3737
        %v3802 = vmul.f32 %v3578, %v3738
        %v3803 = vmul.f32 %v3580, %v3739
        %v3804 = vmul.f32 %v3582, %v3740
        %v3805 = vmul.f32 %v3584, %v3741
        %v3806 = vmul.f32 %v3586, %v3742
        %v3807 = vmul.f32 %v3588, %v3743
        %v3808 = vmul.f32 %v3590, %v3744
        %v3809 = vmul.f32 %v3592, %v3745
        %v3810 = vmul.f32 %v3594, %v3746
        %v3811 = vmul.f32 %v3596, %v3747
        %v3812 = vmul.f32 %v3598, %v3748
        %v3813 = vmul.f32 %v3600, %v3749
        %v3814 = vmul.f32 %v3602, %v3750
        %v3815 = vmul.f32 %v3604, %v3751
        %v3816 = vmul.f32 %v3606, %v3752
        %v3817 = vmul.f32 %v3608, %v3753
        %v3818 = vmul.f32 %v3610, %v3754
        %v3819 = vmul.f32 %v3612, %v3755
        %v3820 = vmul.f32 %v3614, %v3756
        %v3821 = vmul.f32 %v3616, %v3757
        %v3822 = vmul.f32 %v3618, %v3758
        %v3823 = vmul.f32 %v3620, %v3759
        %v3824 = vmul.f32 %v3622, %v3760
        %v3825 = vmul.f32 %v3624, %v3761
        %v3826 = vmul.f32 %v3626, %v3762
        %v3827 = vmul.f32 %v3628, %v3763
        %v3828 = vmul.f32 %v3630, %v3764
        %v3829 = vmul.f32 %v3632, %v3765
        %v3830 = vmul.f32 %v3634, %v3766
        %v3831 = vmul.f32 %v3636, %v3767
        %v3832 = vmul.f32 %v3638, %v3768
        %v3833 = vmul.f32 %v3640, %v3769
        %v3834 = vmul.f32 %v3642, %v3770
        %v3835 = vsub.f32 2.0, %v3771
        %v3836 = vsub.f32 2.0, %v3772
        %v3837 = vsub.f32 2.0, %v3773
        %v3838 = vsub.f32 2.0, %v3774
        %v3839 = vsub.f32 2.0, %v3775
        %v3840 = vsub.f32 2.0, %v3776
        %v3841 = vsub.f32 2.0, %v3777
        %v3842 = vsub.f32 2.0, %v3778
        %v3843 = vsub.f32 2.0, %v3779
        %v3844 = vsub.f32 2.0, %v3780
        %v3845 = vsub.f32 2.0, %v3781
        %v3846 = vsub.f32 2.0, %v3782
        %v3847 = vsub.f32 2.0, %v3783
        %v3848 = vsub.f32 2.0, %v3784
        %v3849 = vsub.f32 2.0, %v3785
        %v3850 = vsub.f32 2.0, %v3786
        %v3851 = vsub.f32 2.0, %v3787
        %v3852 = vsub.f32 2.0, %v3788
        %v3853 = vsub.f32 2.0, %v3789
        %v3854 = vsub.f32 2.0, %v3790
        %v3855 = vsub.f32 2.0, %v3791
        %v3856 = vsub.f32 2.0, %v3792
        %v3857 = vsub.f32 2.0, %v3793
        %v3858 = vsub.f32 2.0, %v3794
        %v3859 = vsub.f32 2.0, %v3795
        %v3860 = vsub.f32 2.0, %v3796
        %v3861 = vsub.f32 2.0, %v3797
        %v3862 = vsub.f32 2.0, %v3798
        %v3863 = vsub.f32 2.0, %v3799
        %v3864 = vsub.f32 2.0, %v3800
        %v3865 = vsub.f32 2.0, %v3801
        %v3866 = vsub.f32 2.0, %v3802
        %v3867 = vsub.f32 2.0, %v3803
        %v3868 = vsub.f32 2.0, %v3804
        %v3869 = vsub.f32 2.0, %v3805
        %v3870 = vsub.f32 2.0, %v3806
        %v3871 = vsub.f32 2.0, %v3807
        %v3872 = vsub.f32 2.0, %v3808
        %v3873 = vsub.f32 2.0, %v3809
        %v3874 = vsub.f32 2.0, %v3810
        %v3875 = vsub.f32 2.0, %v3811
        %v3876 = vsub.f32 2.0, %v3812
        %v3877 = vsub.f32 2.0, %v3813
        %v3878 = vsub.f32 2.0, %v3814
        %v3879 = vsub.f32 2.0, %v3815
        %v3880 = vsub.f32 2.0, %v3816
        %v3881 = vsub.f32 2.0, %v3817
        %v3882 = vsub.f32 2.0, %v3818
        %v3883 = vsub.f32 2.0, %v3819
        %v3884 = vsub.f32 2.0, %v3820
        %v3885 = vsub.f32 2.0, %v3821
        %v3886 = vsub.f32 2.0, %v3822
        %v3887 = vsub.f32 2.0, %v3823
        %v3888 = vsub.f32 2.0, %v3824
        %v3889 = vsub.f32 2.0, %v3825
        %v3890 = vsub.f32 2.0, %v3826
        %v3891 = vsub.f32 2.0, %v3827
        %v3892 = vsub.f32 2.0, %v3828
        %v3893 = vsub.f32 2.0, %v3829
        %v3894 = vsub.f32 2.0, %v3830
        %v3895 = vsub.f32 2.0, %v3831
        %v3896 = vsub.f32 2.0, %v3832
        %v3897 = vsub.f32 2.0, %v3833
        %v3898 = vsub.f32 2.0, %v3834
        %v3899 = vmul.f32 %v3707, %v3835
        %v3900 = vmul.f32 %v3708, %v3836
        %v3901 = vmul.f32 %v3709, %v3837
        %v3902 = vmul.f32 %v3710, %v3838
        %v3903 = vmul.f32 %v3711, %v3839
        %v3904 = vmul.f32 %v3712, %v3840
        %v3905 = vmul.f32 %v3713, %v3841
        %v3906 = vmul.f32 %v3714, %v3842
        %v3907 = vmul.f32 %v3715, %v3843
        %v3908 = vmul.f32 %v3716, %v3844
        %v3909 = vmul.f32 %v3717, %v3845
        %v3910 = vmul.f32 %v3718, %v3846
        %v3911 = vmul.f32 %v3719, %v3847
        %v3912 = vmul.f32 %v3720, %v3848
        %v3913 = vmul.f32 %v3721, %v3849
        %v3914 = vmul.f32 %v3722, %v3850
        %v3915 = vmul.f32 %v3723, %v3851
        %v3916 = vmul.f32 %v3724, %v3852
        %v3917 = vmul.f32 %v3725, %v3853
        %v3918 = vmul.f32 %v3726, %v3854
        %v3919 = vmul.f32 %v3727, %v3855
        %v3920 = vmul.f32 %v3728, %v3856
        %v3921 = vmul.f32 %v3729, %v3857
        %v3922 = vmul.f32 %v3730, %v3858
        %v3923 = vmul.f32 %v3731, %v3859
        %v3924 = vmul.f32 %v3732, %v3860
        %v3925 = vmul.f32 %v3733, %v3861
        %v3926 = vmul.f32 %v3734, %v3862
        %v3927 = vmul.f32 %v3735, %v3863
        %v3928 = vmul.f32 %v3736, %v3864
        %v3929 = vmul.f32 %v3737, %v3865
        %v3930 = vmul.f32 %v3738, %v3866
        %v3931 = vmul.f32 %v3739, %v3867
        %v3932 = vmul.f32 %v3740, %v3868
        %v3933 = vmul.f32 %v3741, %v3869
        %v3934 = vmul.f32 %v3742, %v3870
        %v3935 = vmul.f32 %v3743, %v3871
        %v3936 = vmul.f32 %v3744, %v3872
        %v3937 = vmul.f32 %v3745, %v3873
        %v3938 = vmul.f32 %v3746, %v3874
        %v3939 = vmul.f32 %v3747, %v3875
        %v3940 = vmul.f32 %v3748, %v3876
        %v3941 = vmul.f32 %v3749, %v3877
        %v3942 = vmul.f32 %v3750, %v3878
        %v3943 = vmul.f32 %v3751, %v3879
        %v3944 = vmul.f32 %v3752, %v3880
        %v3945 = vmul.f32 %v3753, %v3881
        %v3946 = vmul.f32 %v3754, %v3882
        %v3947 = vmul.f32 %v3755, %v3883
        %v3948 = vmul.f32 %v3756, %v3884
        %v3949 = vmul.f32 %v3757, %v3885
        %v3950 = vmul.f32 %v3758, %v3886
        %v3951 = vmul.f32 %v3759, %v3887
        %v3952 = vmul.f32 %v3760, %v3888
        %v3953 = vmul.f32 %v3761, %v3889
        %v3954 = vmul.f32 %v3762, %v3890
        %v3955 = vmul.f32 %v3763, %v3891
        %v3956 = vmul.f32 %v3764, %v3892
        %v3957 = vmul.f32 %v3765, %v3893
        %v3958 = vmul.f32 %v3766, %v3894
        %v3959 = vmul.f32 %v3767, %v3895
        %v3960 = vmul.f32 %v3768, %v3896
        %v3961 = vmul.f32 %v3769, %v3897
        %v3962 = vmul.f32 %v3770, %v3898
        %v3963 = vmul.f32 %v3643, %v3899
        %v3964 = vmul.f32 %v3644, %v3900
        %v3965 = vmul.f32 %v3645, %v3901
        %v3966 = vmul.f32 %v3646, %v3902
        %v3967 = vmul.f32 %v3647, %v3903
        %v3968 = vmul.f32 %v3648, %v3904
        %v3969 = vmul.f32 %v3649, %v3905
        %v3970 = vmul.f32 %v3650, %v3906
        %v3971 = vmul.f32 %v3651, %v3907
        %v3972 = vmul.f32 %v3652, %v3908
        %v3973 = vmul.f32 %v3653, %v3909
        %v3974 = vmul.f32 %v3654, %v3910
        %v3975 = vmul.f32 %v3655, %v3911
        %v3976 = vmul.f32 %v3656, %v3912
        %v3977 = vmul.f32 %v3657, %v3913
        %v3978 = vmul.f32 %v3658, %v3914
        %v3979 = vmul.f32 %v3659, %v3915
        %v3980 = vmul.f32 %v3660, %v3916
        %v3981 = vmul.f32 %v3661, %v3917
        %v3982 = vmul.f32 %v3662, %v3918
        %v3983 = vmul.f32 %v3663, %v3919
        %v3984 = vmul.f32 %v3664, %v3920
        %v3985 = vmul.f32 %v3665, %v3921
        %v3986 = vmul.f32 %v3666, %v3922
        %v3987 = vmul.f32 %v3667, %v3923
        %v3988 = vmul.f32 %v3668, %v3924
        %v3989 = vmul.f32 %v3669, %v3925
        %v3990 = vmul.f32 %v3670, %v3926
        %v3991 = vmul.f32 %v3671, %v3927
        %v3992 = vmul.f32 %v3672, %v3928
        %v3993 = vmul.f32 %v3673, %v3929
        %v3994 = vmul.f32 %v3674, %v3930
        %v3995 = vmul.f32 %v3675, %v3931
        %v3996 = vmul.f32 %v3676, %v3932
        %v3997 = vmul.f32 %v3677, %v3933
        %v3998 = vmul.f32 %v3678, %v3934
        %v3999 = vmul.f32 %v3679, %v3935
        %v4000 = vmul.f32 %v3680, %v3936
        %v4001 = vmul.f32 %v3681, %v3937
        %v4002 = vmul.f32 %v3682, %v3938
        %v4003 = vmul.f32 %v3683, %v3939
        %v4004 = vmul.f32 %v3684, %v3940
        %v4005 = vmul.f32 %v3685, %v3941
        %v4006 = vmul.f32 %v3686, %v3942
        %v4007 = vmul.f32 %v3687, %v3943
        %v4008 = vmul.f32 %v3688, %v3944
        %v4009 = vmul.f32 %v3689, %v3945
        %v4010 = vmul.f32 %v3690, %v3946
        %v4011 = vmul.f32 %v3691, %v3947
        %v4012 = vmul.f32 %v3692, %v3948
        %v4013 = vmul.f32 %v3693, %v3949
        %v4014 = vmul.f32 %v3694, %v3950
        %v4015 = vmul.f32 %v3695, %v3951
        %v4016 = vmul.f32 %v3696, %v3952
        %v4017 = vmul.f32 %v3697, %v3953
        %v4018 = vmul.f32 %v3698, %v3954
        %v4019 = vmul.f32 %v3699, %v3955
        %v4020 = vmul.f32 %v3700, %v3956
        %v4021 = vmul.f32 %v3701, %v3957
        %v4022 = vmul.f32 %v3702, %v3958
        %v4023 = vmul.f32 %v3703, %v3959
        %v4024 = vmul.f32 %v3704, %v3960
        %v4025 = vmul.f32 %v3705, %v3961
        %v4026 = vmul.f32 %v3706, %v3962
        %v4027 = vadd.f32 %v3963, %v2554
        %v4028 = vadd.f32 %v3964, %v2555
        %v4029 = vadd.f32 %v3965, %v2556
        %v4030 = vadd.f32 %v3966, %v2557
        %v4031 = vadd.f32 %v3967, %v2558
        %v4032 = vadd.f32 %v3968, %v2559
        %v4033 = vadd.f32 %v3969, %v2560
        %v4034 = vadd.f32 %v3970, %v2561
        %v4035 = vadd.f32 %v3971, %v2562
        %v4036 = vadd.f32 %v3972, %v2563
        %v4037 = vadd.f32 %v3973, %v2564
        %v4038 = vadd.f32 %v3974, %v2565
        %v4039 = vadd.f32 %v3975, %v2566
        %v4040 = vadd.f32 %v3976, %v2567
        %v4041 = vadd.f32 %v3977, %v2568
        %v4042 = vadd.f32 %v3978, %v2569
        %v4043 = vadd.f32 %v3979, %v2570
        %v4044 = vadd.f32 %v3980, %v2571
        %v4045 = vadd.f32 %v3981, %v2572
        %v4046 = vadd.f32 %v3982, %v2573
        %v4047 = vadd.f32 %v3983, %v2574
        %v4048 = vadd.f32 %v3984, %v2575
        %v4049 = vadd.f32 %v3985, %v2576
        %v4050 = vadd.f32 %v3986, %v2577
        %v4051 = vadd.f32 %v3987, %v2578
        %v4052 = vadd.f32 %v3988, %v2579
        %v4053 = vadd.f32 %v3989, %v2580
        %v4054 = vadd.f32 %v3990, %v2581
        %v4055 = vadd.f32 %v3991, %v2582
        %v4056 = vadd.f32 %v3992, %v2583
        %v4057 = vadd.f32 %v3993, %v2584
        %v4058 = vadd.f32 %v3994, %v2585
        %v4059 = vadd.f32 %v3995, %v2586
        %v4060 = vadd.f32 %v3996, %v2587
        %v4061 = vadd.f32 %v3997, %v2588
        %v4062 = vadd.f32 %v3998, %v2589
        %v4063 = vadd.f32 %v3999, %v2590
        %v4064 = vadd.f32 %v4000, %v2591
        %v4065 = vadd.f32 %v4001, %v2592
        %v4066 = vadd.f32 %v4002, %v2593
        %v4067 = vadd.f32 %v4003, %v2594
        %v4068 = vadd.f32 %v4004, %v2595
        %v4069 = vadd.f32 %v4005, %v2596
        %v4070 = vadd.f32 %v4006, %v2597
        %v4071 = vadd.f32 %v4007, %v2598
        %v4072 = vadd.f32 %v4008, %v2599
        %v4073 = vadd.f32 %v4009, %v2600
        %v4074 = vadd.f32 %v4010, %v2601
        %v4075 = vadd.f32 %v4011, %v2602
        %v4076 = vadd.f32 %v4012, %v2603
        %v4077 = vadd.f32 %v4013, %v2604
        %v4078 = vadd.f32 %v4014, %v2605
        %v4079 = vadd.f32 %v4015, %v2606
        %v4080 = vadd.f32 %v4016, %v2607
        %v4081 = vadd.f32 %v4017, %v2608
        %v4082 = vadd.f32 %v4018, %v2609
        %v4083 = vadd.f32 %v4019, %v2610
        %v4084 = vadd.f32 %v4020, %v2611
        %v4085 = vadd.f32 %v4021, %v2612
        %v4086 = vadd.f32 %v4022, %v2613
        %v4087 = vadd.f32 %v4023, %v2614
        %v4088 = vadd.f32 %v4024, %v2615
        %v4089 = vadd.f32 %v4025, %v2616
        %v4090 = vadd.f32 %v4026, %v2617
        %v4091 = vxor.u32 %v4027, 2147483648
        %v4092 = vxor.u32 %v4028, 2147483648
        %v4093 = vxor.u32 %v4029, 2147483648
        %v4094 = vxor.u32 %v4030, 2147483648
        %v4095 = vxor.u32 %v4031, 2147483648
        %v4096 = vxor.u32 %v4032, 2147483648
        %v4097 = vxor.u32 %v4033, 2147483648
        %v4098 = vxor.u32 %v4034, 2147483648
        %v4099 = vxor.u32 %v4035, 2147483648
        %v4100 = vxor.u32 %v4036, 2147483648
        %v4101 = vxor.u32 %v4037, 2147483648
        %v4102 = vxor.u32 %v4038, 2147483648
        %v4103 = vxor.u32 %v4039, 2147483648
        %v4104 = vxor.u32 %v4040, 2147483648
        %v4105 = vxor.u32 %v4041, 2147483648
        %v4106 = vxor.u32 %v4042, 2147483648
        %v4107 = vxor.u32 %v4043, 2147483648
        %v4108 = vxor.u32 %v4044, 2147483648
        %v4109 = vxor.u32 %v4045, 2147483648
        %v4110 = vxor.u32 %v4046, 2147483648
        %v4111 = vxor.u32 %v4047, 2147483648
        %v4112 = vxor.u32 %v4048, 2147483648
        %v4113 = vxor.u32 %v4049, 2147483648
        %v4114 = vxor.u32 %v4050, 2147483648
        %v4115 = vxor.u32 %v4051, 2147483648
        %v4116 = vxor.u32 %v4052, 2147483648
        %v4117 = vxor.u32 %v4053, 2147483648
        %v4118 = vxor.u32 %v4054, 2147483648
        %v4119 = vxor.u32 %v4055, 2147483648
        %v4120 = vxor.u32 %v4056, 2147483648
        %v4121 = vxor.u32 %v4057, 2147483648
        %v4122 = vxor.u32 %v4058, 2147483648
        %v4123 = vxor.u32 %v4059, 2147483648
        %v4124 = vxor.u32 %v4060, 2147483648
        %v4125 = vxor.u32 %v4061, 2147483648
        %v4126 = vxor.u32 %v4062, 2147483648
        %v4127 = vxor.u32 %v4063, 2147483648
        %v4128 = vxor.u32 %v4064, 2147483648
        %v4129 = vxor.u32 %v4065, 2147483648
        %v4130 = vxor.u32 %v4066, 2147483648
        %v4131 = vxor.u32 %v4067, 2147483648
        %v4132 = vxor.u32 %v4068, 2147483648
        %v4133 = vxor.u32 %v4069, 2147483648
        %v4134 = vxor.u32 %v4070, 2147483648
        %v4135 = vxor.u32 %v4071, 2147483648
        %v4136 = vxor.u32 %v4072, 2147483648
        %v4137 = vxor.u32 %v4073, 2147483648
        %v4138 = vxor.u32 %v4074, 2147483648
        %v4139 = vxor.u32 %v4075, 2147483648
        %v4140 = vxor.u32 %v4076, 2147483648
        %v4141 = vxor.u32 %v4077, 2147483648
        %v4142 = vxor.u32 %v4078, 2147483648
        %v4143 = vxor.u32 %v4079, 2147483648
        %v4144 = vxor.u32 %v4080, 2147483648
        %v4145 = vxor.u32 %v4081, 2147483648
        %v4146 = vxor.u32 %v4082, 2147483648
        %v4147 = vxor.u32 %v4083, 2147483648
        %v4148 = vxor.u32 %v4084, 2147483648
        %v4149 = vxor.u32 %v4085, 2147483648
        %v4150 = vxor.u32 %v4086, 2147483648
        %v4151 = vxor.u32 %v4087, 2147483648
        %v4152 = vxor.u32 %v4088, 2147483648
        %v4153 = vxor.u32 %v4089, 2147483648
        %v4154 = vxor.u32 %v4090, 2147483648
        %v4155 = vmul.f32 %v4091, 1.442695
        %v4156 = vpow.pop %v4155
        %v4157 = vmul.f32 %v4092, 1.442695
        %v4158 = vpow.pop %v4157
        %v4159 = vmul.f32 %v4093, 1.442695
        %v4160 = vpow.pop %v4159
        %v4161 = vmul.f32 %v4094, 1.442695
        %v4162 = vpow.pop %v4161
        %v4163 = vmul.f32 %v4095, 1.442695
        %v4164 = vpow.pop %v4163
        %v4165 = vmul.f32 %v4096, 1.442695
        %v4166 = vpow.pop %v4165
        %v4167 = vmul.f32 %v4097, 1.442695
        %v4168 = vpow.pop %v4167
        %v4169 = vmul.f32 %v4098, 1.442695
        %v4170 = vpow.pop %v4169
        %v4171 = vmul.f32 %v4099, 1.442695
        %v4172 = vpow.pop %v4171
        %v4173 = vmul.f32 %v4100, 1.442695
        %v4174 = vpow.pop %v4173
        %v4175 = vmul.f32 %v4101, 1.442695
        %v4176 = vpow.pop %v4175
        %v4177 = vmul.f32 %v4102, 1.442695
        %v4178 = vpow.pop %v4177
        %v4179 = vmul.f32 %v4103, 1.442695
        %v4180 = vpow.pop %v4179
        %v4181 = vmul.f32 %v4104, 1.442695
        %v4182 = vpow.pop %v4181
        %v4183 = vmul.f32 %v4105, 1.442695
        %v4184 = vpow.pop %v4183
        %v4185 = vmul.f32 %v4106, 1.442695
        %v4186 = vpow.pop %v4185
        %v4187 = vmul.f32 %v4107, 1.442695
        %v4188 = vpow.pop %v4187
        %v4189 = vmul.f32 %v4108, 1.442695
        %v4190 = vpow.pop %v4189
        %v4191 = vmul.f32 %v4109, 1.442695
        %v4192 = vpow.pop %v4191
        %v4193 = vmul.f32 %v4110, 1.442695
        %v4194 = vpow.pop %v4193
        %v4195 = vmul.f32 %v4111, 1.442695
        %v4196 = vpow.pop %v4195
        %v4197 = vmul.f32 %v4112, 1.442695
        %v4198 = vpow.pop %v4197
        %v4199 = vmul.f32 %v4113, 1.442695
        %v4200 = vpow.pop %v4199
        %v4201 = vmul.f32 %v4114, 1.442695
        %v4202 = vpow.pop %v4201
        %v4203 = vmul.f32 %v4115, 1.442695
        %v4204 = vpow.pop %v4203
        %v4205 = vmul.f32 %v4116, 1.442695
        %v4206 = vpow.pop %v4205
        %v4207 = vmul.f32 %v4117, 1.442695
        %v4208 = vpow.pop %v4207
        %v4209 = vmul.f32 %v4118, 1.442695
        %v4210 = vpow.pop %v4209
        %v4211 = vmul.f32 %v4119, 1.442695
        %v4212 = vpow.pop %v4211
        %v4213 = vmul.f32 %v4120, 1.442695
        %v4214 = vpow.pop %v4213
        %v4215 = vmul.f32 %v4121, 1.442695
        %v4216 = vpow.pop %v4215
        %v4217 = vmul.f32 %v4122, 1.442695
        %v4218 = vpow.pop %v4217
        %v4219 = vmul.f32 %v4123, 1.442695
        %v4220 = vpow.pop %v4219
        %v4221 = vmul.f32 %v4124, 1.442695
        %v4222 = vpow.pop %v4221
        %v4223 = vmul.f32 %v4125, 1.442695
        %v4224 = vpow.pop %v4223
        %v4225 = vmul.f32 %v4126, 1.442695
        %v4226 = vpow.pop %v4225
        %v4227 = vmul.f32 %v4127, 1.442695
        %v4228 = vpow.pop %v4227
        %v4229 = vmul.f32 %v4128, 1.442695
        %v4230 = vpow.pop %v4229
        %v4231 = vmul.f32 %v4129, 1.442695
        %v4232 = vpow.pop %v4231
        %v4233 = vmul.f32 %v4130, 1.442695
        %v4234 = vpow.pop %v4233
        %v4235 = vmul.f32 %v4131, 1.442695
        %v4236 = vpow.pop %v4235
        %v4237 = vmul.f32 %v4132, 1.442695
        %v4238 = vpow.pop %v4237
        %v4239 = vmul.f32 %v4133, 1.442695
        %v4240 = vpow.pop %v4239
        %v4241 = vmul.f32 %v4134, 1.442695
        %v4242 = vpow.pop %v4241
        %v4243 = vmul.f32 %v4135, 1.442695
        %v4244 = vpow.pop %v4243
        %v4245 = vmul.f32 %v4136, 1.442695
        %v4246 = vpow.pop %v4245
        %v4247 = vmul.f32 %v4137, 1.442695
        %v4248 = vpow.pop %v4247
        %v4249 = vmul.f32 %v4138, 1.442695
        %v4250 = vpow.pop %v4249
        %v4251 = vmul.f32 %v4139, 1.442695
        %v4252 = vpow.pop %v4251
        %v4253 = vmul.f32 %v4140, 1.442695
        %v4254 = vpow.pop %v4253
        %v4255 = vmul.f32 %v4141, 1.442695
        %v4256 = vpow.pop %v4255
        %v4257 = vmul.f32 %v4142, 1.442695
        %v4258 = vpow.pop %v4257
        %v4259 = vmul.f32 %v4143, 1.442695
        %v4260 = vpow.pop %v4259
        %v4261 = vmul.f32 %v4144, 1.442695
        %v4262 = vpow.pop %v4261
        %v4263 = vmul.f32 %v4145, 1.442695
        %v4264 = vpow.pop %v4263
        %v4265 = vmul.f32 %v4146, 1.442695
        %v4266 = vpow.pop %v4265
        %v4267 = vmul.f32 %v4147, 1.442695
        %v4268 = vpow.pop %v4267
        %v4269 = vmul.f32 %v4148, 1.442695
        %v4270 = vpow.pop %v4269
        %v4271 = vmul.f32 %v4149, 1.442695
        %v4272 = vpow.pop %v4271
        %v4273 = vmul.f32 %v4150, 1.442695
        %v4274 = vpow.pop %v4273
        %v4275 = vmul.f32 %v4151, 1.442695
        %v4276 = vpow.pop %v4275
        %v4277 = vmul.f32 %v4152, 1.442695
        %v4278 = vpow.pop %v4277
        %v4279 = vmul.f32 %v4153, 1.442695
        %v4280 = vpow.pop %v4279
        %v4281 = vmul.f32 %v4154, 1.442695
        %v4282 = vpow.pop %v4281
        %v4283 = vadd.f32 %v4156, 1.0
        %v4284 = vadd.f32 %v4158, 1.0
        %v4285 = vadd.f32 %v4160, 1.0
        %v4286 = vadd.f32 %v4162, 1.0
        %v4287 = vadd.f32 %v4164, 1.0
        %v4288 = vadd.f32 %v4166, 1.0
        %v4289 = vadd.f32 %v4168, 1.0
        %v4290 = vadd.f32 %v4170, 1.0
        %v4291 = vadd.f32 %v4172, 1.0
        %v4292 = vadd.f32 %v4174, 1.0
        %v4293 = vadd.f32 %v4176, 1.0
        %v4294 = vadd.f32 %v4178, 1.0
        %v4295 = vadd.f32 %v4180, 1.0
        %v4296 = vadd.f32 %v4182, 1.0
        %v4297 = vadd.f32 %v4184, 1.0
        %v4298 = vadd.f32 %v4186, 1.0
        %v4299 = vadd.f32 %v4188, 1.0
        %v4300 = vadd.f32 %v4190, 1.0
        %v4301 = vadd.f32 %v4192, 1.0
        %v4302 = vadd.f32 %v4194, 1.0
        %v4303 = vadd.f32 %v4196, 1.0
        %v4304 = vadd.f32 %v4198, 1.0
        %v4305 = vadd.f32 %v4200, 1.0
        %v4306 = vadd.f32 %v4202, 1.0
        %v4307 = vadd.f32 %v4204, 1.0
        %v4308 = vadd.f32 %v4206, 1.0
        %v4309 = vadd.f32 %v4208, 1.0
        %v4310 = vadd.f32 %v4210, 1.0
        %v4311 = vadd.f32 %v4212, 1.0
        %v4312 = vadd.f32 %v4214, 1.0
        %v4313 = vadd.f32 %v4216, 1.0
        %v4314 = vadd.f32 %v4218, 1.0
        %v4315 = vadd.f32 %v4220, 1.0
        %v4316 = vadd.f32 %v4222, 1.0
        %v4317 = vadd.f32 %v4224, 1.0
        %v4318 = vadd.f32 %v4226, 1.0
        %v4319 = vadd.f32 %v4228, 1.0
        %v4320 = vadd.f32 %v4230, 1.0
        %v4321 = vadd.f32 %v4232, 1.0
        %v4322 = vadd.f32 %v4234, 1.0
        %v4323 = vadd.f32 %v4236, 1.0
        %v4324 = vadd.f32 %v4238, 1.0
        %v4325 = vadd.f32 %v4240, 1.0
        %v4326 = vadd.f32 %v4242, 1.0
        %v4327 = vadd.f32 %v4244, 1.0
        %v4328 = vadd.f32 %v4246, 1.0
        %v4329 = vadd.f32 %v4248, 1.0
        %v4330 = vadd.f32 %v4250, 1.0
        %v4331 = vadd.f32 %v4252, 1.0
        %v4332 = vadd.f32 %v4254, 1.0
        %v4333 = vadd.f32 %v4256, 1.0
        %v4334 = vadd.f32 %v4258, 1.0
        %v4335 = vadd.f32 %v4260, 1.0
        %v4336 = vadd.f32 %v4262, 1.0
        %v4337 = vadd.f32 %v4264, 1.0
        %v4338 = vadd.f32 %v4266, 1.0
        %v4339 = vadd.f32 %v4268, 1.0
        %v4340 = vadd.f32 %v4270, 1.0
        %v4341 = vadd.f32 %v4272, 1.0
        %v4342 = vadd.f32 %v4274, 1.0
        %v4343 = vadd.f32 %v4276, 1.0
        %v4344 = vadd.f32 %v4278, 1.0
        %v4345 = vadd.f32 %v4280, 1.0
        %v4346 = vadd.f32 %v4282, 1.0
        %v4347 = vrcp.pop %v4283
        %v4348 = vmul.f32 1.0, %v4347
        %v4349 = vrcp.pop %v4284
        %v4350 = vmul.f32 1.0, %v4349
        %v4351 = vrcp.pop %v4285
        %v4352 = vmul.f32 1.0, %v4351
        %v4353 = vrcp.pop %v4286
        %v4354 = vmul.f32 1.0, %v4353
        %v4355 = vrcp.pop %v4287
        %v4356 = vmul.f32 1.0, %v4355
        %v4357 = vrcp.pop %v4288
        %v4358 = vmul.f32 1.0, %v4357
        %v4359 = vrcp.pop %v4289
        %v4360 = vmul.f32 1.0, %v4359
        %v4361 = vrcp.pop %v4290
        %v4362 = vmul.f32 1.0, %v4361
        %v4363 = vrcp.pop %v4291
        %v4364 = vmul.f32 1.0, %v4363
        %v4365 = vrcp.pop %v4292
        %v4366 = vmul.f32 1.0, %v4365
        %v4367 = vrcp.pop %v4293
        %v4368 = vmul.f32 1.0, %v4367
        %v4369 = vrcp.pop %v4294
        %v4370 = vmul.f32 1.0, %v4369
        %v4371 = vrcp.pop %v4295
        %v4372 = vmul.f32 1.0, %v4371
        %v4373 = vrcp.pop %v4296
        %v4374 = vmul.f32 1.0, %v4373
        %v4375 = vrcp.pop %v4297
        %v4376 = vmul.f32 1.0, %v4375
        %v4377 = vrcp.pop %v4298
        %v4378 = vmul.f32 1.0, %v4377
        %v4379 = vrcp.pop %v4299
        %v4380 = vmul.f32 1.0, %v4379
        %v4381 = vrcp.pop %v4300
        %v4382 = vmul.f32 1.0, %v4381
        %v4383 = vrcp.pop %v4301
        %v4384 = vmul.f32 1.0, %v4383
        %v4385 = vrcp.pop %v4302
        %v4386 = vmul.f32 1.0, %v4385
        %v4387 = vrcp.pop %v4303
        %v4388 = vmul.f32 1.0, %v4387
        %v4389 = vrcp.pop %v4304
        %v4390 = vmul.f32 1.0, %v4389
        %v4391 = vrcp.pop %v4305
        %v4392 = vmul.f32 1.0, %v4391
        %v4393 = vrcp.pop %v4306
        %v4394 = vmul.f32 1.0, %v4393
        %v4395 = vrcp.pop %v4307
        %v4396 = vmul.f32 1.0, %v4395
        %v4397 = vrcp.pop %v4308
        %v4398 = vmul.f32 1.0, %v4397
        %v4399 = vrcp.pop %v4309
        %v4400 = vmul.f32 1.0, %v4399
        %v4401 = vrcp.pop %v4310
        %v4402 = vmul.f32 1.0, %v4401
        %v4403 = vrcp.pop %v4311
        %v4404 = vmul.f32 1.0, %v4403
        %v4405 = vrcp.pop %v4312
        %v4406 = vmul.f32 1.0, %v4405
        %v4407 = vrcp.pop %v4313
        %v4408 = vmul.f32 1.0, %v4407
        %v4409 = vrcp.pop %v4314
        %v4410 = vmul.f32 1.0, %v4409
        %v4411 = vrcp.pop %v4315
        %v4412 = vmul.f32 1.0, %v4411
        %v4413 = vrcp.pop %v4316
        %v4414 = vmul.f32 1.0, %v4413
        %v4415 = vrcp.pop %v4317
        %v4416 = vmul.f32 1.0, %v4415
        %v4417 = vrcp.pop %v4318
        %v4418 = vmul.f32 1.0, %v4417
        %v4419 = vrcp.pop %v4319
        %v4420 = vmul.f32 1.0, %v4419
        %v4421 = vrcp.pop %v4320
        %v4422 = vmul.f32 1.0, %v4421
        %v4423 = vrcp.pop %v4321
        %v4424 = vmul.f32 1.0, %v4423
        %v4425 = vrcp.pop %v4322
        %v4426 = vmul.f32 1.0, %v4425
        %v4427 = vrcp.pop %v4323
        %v4428 = vmul.f32 1.0, %v4427
        %v4429 = vrcp.pop %v4324
        %v4430 = vmul.f32 1.0, %v4429
        %v4431 = vrcp.pop %v4325
        %v4432 = vmul.f32 1.0, %v4431
        %v4433 = vrcp.pop %v4326
        %v4434 = vmul.f32 1.0, %v4433
        %v4435 = vrcp.pop %v4327
        %v4436 = vmul.f32 1.0, %v4435
        %v4437 = vrcp.pop %v4328
        %v4438 = vmul.f32 1.0, %v4437
        %v4439 = vrcp.pop %v4329
        %v4440 = vmul.f32 1.0, %v4439
        %v4441 = vrcp.pop %v4330
        %v4442 = vmul.f32 1.0, %v4441
        %v4443 = vrcp.pop %v4331
        %v4444 = vmul.f32 1.0, %v4443
        %v4445 = vrcp.pop %v4332
        %v4446 = vmul.f32 1.0, %v4445
        %v4447 = vrcp.pop %v4333
        %v4448 = vmul.f32 1.0, %v4447
        %v4449 = vrcp.pop %v4334
        %v4450 = vmul.f32 1.0, %v4449
        %v4451 = vrcp.pop %v4335
        %v4452 = vmul.f32 1.0, %v4451
        %v4453 = vrcp.pop %v4336
        %v4454 = vmul.f32 1.0, %v4453
        %v4455 = vrcp.pop %v4337
        %v4456 = vmul.f32 1.0, %v4455
        %v4457 = vrcp.pop %v4338
        %v4458 = vmul.f32 1.0, %v4457
        %v4459 = vrcp.pop %v4339
        %v4460 = vmul.f32 1.0, %v4459
        %v4461 = vrcp.pop %v4340
        %v4462 = vmul.f32 1.0, %v4461
        %v4463 = vrcp.pop %v4341
        %v4464 = vmul.f32 1.0, %v4463
        %v4465 = vrcp.pop %v4342
        %v4466 = vmul.f32 1.0, %v4465
        %v4467 = vrcp.pop %v4343
        %v4468 = vmul.f32 1.0, %v4467
        %v4469 = vrcp.pop %v4344
        %v4470 = vmul.f32 1.0, %v4469
        %v4471 = vrcp.pop %v4345
        %v4472 = vmul.f32 1.0, %v4471
        %v4473 = vrcp.pop %v4346
        %v4474 = vmul.f32 1.0, %v4473
        %v4475 = vmul.f32 %v4348, 1.442695
        %v4476 = vpow.pop %v4475
        %v4477 = vmul.f32 %v4350, 1.442695
        %v4478 = vpow.pop %v4477
        %v4479 = vmul.f32 %v4352, 1.442695
        %v4480 = vpow.pop %v4479
        %v4481 = vmul.f32 %v4354, 1.442695
        %v4482 = vpow.pop %v4481
        %v4483 = vmul.f32 %v4356, 1.442695
        %v4484 = vpow.pop %v4483
        %v4485 = vmul.f32 %v4358, 1.442695
        %v4486 = vpow.pop %v4485
        %v4487 = vmul.f32 %v4360, 1.442695
        %v4488 = vpow.pop %v4487
        %v4489 = vmul.f32 %v4362, 1.442695
        %v4490 = vpow.pop %v4489
        %v4491 = vmul.f32 %v4364, 1.442695
        %v4492 = vpow.pop %v4491
        %v4493 = vmul.f32 %v4366, 1.442695
        %v4494 = vpow.pop %v4493
        %v4495 = vmul.f32 %v4368, 1.442695
        %v4496 = vpow.pop %v4495
        %v4497 = vmul.f32 %v4370, 1.442695
        %v4498 = vpow.pop %v4497
        %v4499 = vmul.f32 %v4372, 1.442695
        %v4500 = vpow.pop %v4499
        %v4501 = vmul.f32 %v4374, 1.442695
        %v4502 = vpow.pop %v4501
        %v4503 = vmul.f32 %v4376, 1.442695
        %v4504 = vpow.pop %v4503
        %v4505 = vmul.f32 %v4378, 1.442695
        %v4506 = vpow.pop %v4505
        %v4507 = vmul.f32 %v4380, 1.442695
        %v4508 = vpow.pop %v4507
        %v4509 = vmul.f32 %v4382, 1.442695
        %v4510 = vpow.pop %v4509
        %v4511 = vmul.f32 %v4384, 1.442695
        %v4512 = vpow.pop %v4511
        %v4513 = vmul.f32 %v4386, 1.442695
        %v4514 = vpow.pop %v4513
        %v4515 = vmul.f32 %v4388, 1.442695
        %v4516 = vpow.pop %v4515
        %v4517 = vmul.f32 %v4390, 1.442695
        %v4518 = vpow.pop %v4517
        %v4519 = vmul.f32 %v4392, 1.442695
        %v4520 = vpow.pop %v4519
        %v4521 = vmul.f32 %v4394, 1.442695
        %v4522 = vpow.pop %v4521
        %v4523 = vmul.f32 %v4396, 1.442695
        %v4524 = vpow.pop %v4523
        %v4525 = vmul.f32 %v4398, 1.442695
        %v4526 = vpow.pop %v4525
        %v4527 = vmul.f32 %v4400, 1.442695
        %v4528 = vpow.pop %v4527
        %v4529 = vmul.f32 %v4402, 1.442695
        %v4530 = vpow.pop %v4529
        %v4531 = vmul.f32 %v4404, 1.442695
        %v4532 = vpow.pop %v4531
        %v4533 = vmul.f32 %v4406, 1.442695
        %v4534 = vpow.pop %v4533
        %v4535 = vmul.f32 %v4408, 1.442695
        %v4536 = vpow.pop %v4535
        %v4537 = vmul.f32 %v4410, 1.442695
        %v4538 = vpow.pop %v4537
        %v4539 = vmul.f32 %v4412, 1.442695
        %v4540 = vpow.pop %v4539
        %v4541 = vmul.f32 %v4414, 1.442695
        %v4542 = vpow.pop %v4541
        %v4543 = vmul.f32 %v4416, 1.442695
        %v4544 = vpow.pop %v4543
        %v4545 = vmul.f32 %v4418, 1.442695
        %v4546 = vpow.pop %v4545
        %v4547 = vmul.f32 %v4420, 1.442695
        %v4548 = vpow.pop %v4547
        %v4549 = vmul.f32 %v4422, 1.442695
        %v4550 = vpow.pop %v4549
        %v4551 = vmul.f32 %v4424, 1.442695
        %v4552 = vpow.pop %v4551
        %v4553 = vmul.f32 %v4426, 1.442695
        %v4554 = vpow.pop %v4553
        %v4555 = vmul.f32 %v4428, 1.442695
        %v4556 = vpow.pop %v4555
        %v4557 = vmul.f32 %v4430, 1.442695
        %v4558 = vpow.pop %v4557
        %v4559 = vmul.f32 %v4432, 1.442695
        %v4560 = vpow.pop %v4559
        %v4561 = vmul.f32 %v4434, 1.442695
        %v4562 = vpow.pop %v4561
        %v4563 = vmul.f32 %v4436, 1.442695
        %v4564 = vpow.pop %v4563
        %v4565 = vmul.f32 %v4438, 1.442695
        %v4566 = vpow.pop %v4565
        %v4567 = vmul.f32 %v4440, 1.442695
        %v4568 = vpow.pop %v4567
        %v4569 = vmul.f32 %v4442, 1.442695
        %v4570 = vpow.pop %v4569
        %v4571 = vmul.f32 %v4444, 1.442695
        %v4572 = vpow.pop %v4571
        %v4573 = vmul.f32 %v4446, 1.442695
        %v4574 = vpow.pop %v4573
        %v4575 = vmul.f32 %v4448, 1.442695
        %v4576 = vpow.pop %v4575
        %v4577 = vmul.f32 %v4450, 1.442695
        %v4578 = vpow.pop %v4577
        %v4579 = vmul.f32 %v4452, 1.442695
        %v4580 = vpow.pop %v4579
        %v4581 = vmul.f32 %v4454, 1.442695
        %v4582 = vpow.pop %v4581
        %v4583 = vmul.f32 %v4456, 1.442695
        %v4584 = vpow.pop %v4583
        %v4585 = vmul.f32 %v4458, 1.442695
        %v4586 = vpow.pop %v4585
        %v4587 = vmul.f32 %v4460, 1.442695
        %v4588 = vpow.pop %v4587
        %v4589 = vmul.f32 %v4462, 1.442695
        %v4590 = vpow.pop %v4589
        %v4591 = vmul.f32 %v4464, 1.442695
        %v4592 = vpow.pop %v4591
        %v4593 = vmul.f32 %v4466, 1.442695
        %v4594 = vpow.pop %v4593
        %v4595 = vmul.f32 %v4468, 1.442695
        %v4596 = vpow.pop %v4595
        %v4597 = vmul.f32 %v4470, 1.442695
        %v4598 = vpow.pop %v4597
        %v4599 = vmul.f32 %v4472, 1.442695
        %v4600 = vpow.pop %v4599
        %v4601 = vmul.f32 %v4474, 1.442695
        %v4602 = vpow.pop %v4601
        %v4603 = vadd.f32 %v3516, %v4476
        %v4604 = vadd.f32 %v3518, %v4478
        %v4605 = vadd.f32 %v3520, %v4480
        %v4606 = vadd.f32 %v3522, %v4482
        %v4607 = vadd.f32 %v3524, %v4484
        %v4608 = vadd.f32 %v3526, %v4486
        %v4609 = vadd.f32 %v3528, %v4488
        %v4610 = vadd.f32 %v3530, %v4490
        %v4611 = vadd.f32 %v3532, %v4492
        %v4612 = vadd.f32 %v3534, %v4494
        %v4613 = vadd.f32 %v3536, %v4496
        %v4614 = vadd.f32 %v3538, %v4498
        %v4615 = vadd.f32 %v3540, %v4500
        %v4616 = vadd.f32 %v3542, %v4502
        %v4617 = vadd.f32 %v3544, %v4504
        %v4618 = vadd.f32 %v3546, %v4506
        %v4619 = vadd.f32 %v3548, %v4508
        %v4620 = vadd.f32 %v3550, %v4510
        %v4621 = vadd.f32 %v3552, %v4512
        %v4622 = vadd.f32 %v3554, %v4514
        %v4623 = vadd.f32 %v3556, %v4516
        %v4624 = vadd.f32 %v3558, %v4518
        %v4625 = vadd.f32 %v3560, %v4520
        %v4626 = vadd.f32 %v3562, %v4522
        %v4627 = vadd.f32 %v3564, %v4524
        %v4628 = vadd.f32 %v3566, %v4526
        %v4629 = vadd.f32 %v3568, %v4528
        %v4630 = vadd.f32 %v3570, %v4530
        %v4631 = vadd.f32 %v3572, %v4532
        %v4632 = vadd.f32 %v3574, %v4534
        %v4633 = vadd.f32 %v3576, %v4536
        %v4634 = vadd.f32 %v3578, %v4538
        %v4635 = vadd.f32 %v3580, %v4540
        %v4636 = vadd.f32 %v3582, %v4542
        %v4637 = vadd.f32 %v3584, %v4544
        %v4638 = vadd.f32 %v3586, %v4546
        %v4639 = vadd.f32 %v3588, %v4548
        %v4640 = vadd.f32 %v3590, %v4550
        %v4641 = vadd.f32 %v3592, %v4552
        %v4642 = vadd.f32 %v3594, %v4554
        %v4643 = vadd.f32 %v3596, %v4556
        %v4644 = vadd.f32 %v3598, %v4558
        %v4645 = vadd.f32 %v3600, %v4560
        %v4646 = vadd.f32 %v3602, %v4562
        %v4647 = vadd.f32 %v3604, %v4564
        %v4648 = vadd.f32 %v3606, %v4566
        %v4649 = vadd.f32 %v3608, %v4568
        %v4650 = vadd.f32 %v3610, %v4570
        %v4651 = vadd.f32 %v3612, %v4572
        %v4652 = vadd.f32 %v3614, %v4574
        %v4653 = vadd.f32 %v3616, %v4576
        %v4654 = vadd.f32 %v3618, %v4578
        %v4655 = vadd.f32 %v3620, %v4580
        %v4656 = vadd.f32 %v3622, %v4582
        %v4657 = vadd.f32 %v3624, %v4584
        %v4658 = vadd.f32 %v3626, %v4586
        %v4659 = vadd.f32 %v3628, %v4588
        %v4660 = vadd.f32 %v3630, %v4590
        %v4661 = vadd.f32 %v3632, %v4592
        %v4662 = vadd.f32 %v3634, %v4594
        %v4663 = vadd.f32 %v3636, %v4596
        %v4664 = vadd.f32 %v3638, %v4598
        %v4665 = vadd.f32 %v3640, %v4600
        %v4666 = vadd.f32 %v3642, %v4602
        %v4667 = vmul.f32 %v4476, %v2108
        %v4668 = vmul.f32 %v4478, %v2111
        %v4669 = vmul.f32 %v4480, %v2114
        %v4670 = vmul.f32 %v4482, %v2117
        %v4671 = vmul.f32 %v4484, %v2120
        %v4672 = vmul.f32 %v4486, %v2123
        %v4673 = vmul.f32 %v4488, %v2126
        %v4674 = vmul.f32 %v4490, %v2129
        %v4675 = vmul.f32 %v4492, %v2132
        %v4676 = vmul.f32 %v4494, %v2135
        %v4677 = vmul.f32 %v4496, %v2138
        %v4678 = vmul.f32 %v4498, %v2141
        %v4679 = vmul.f32 %v4500, %v2144
        %v4680 = vmul.f32 %v4502, %v2147
        %v4681 = vmul.f32 %v4504, %v2150
        %v4682 = vmul.f32 %v4506, %v2153
        %v4683 = vmul.f32 %v4508, %v2156
        %v4684 = vmul.f32 %v4510, %v2159
        %v4685 = vmul.f32 %v4512, %v2162
        %v4686 = vmul.f32 %v4514, %v2165
        %v4687 = vmul.f32 %v4516, %v2168
        %v4688 = vmul.f32 %v4518, %v2171
        %v4689 = vmul.f32 %v4520, %v2174
        %v4690 = vmul.f32 %v4522, %v2177
        %v4691 = vmul.f32 %v4524, %v2180
        %v4692 = vmul.f32 %v4526, %v2183
        %v4693 = vmul.f32 %v4528, %v2186
        %v4694 = vmul.f32 %v4530, %v2189
        %v4695 = vmul.f32 %v4532, %v2192
        %v4696 = vmul.f32 %v4534, %v2195
        %v4697 = vmul.f32 %v4536, %v2198
        %v4698 = vmul.f32 %v4538, %v2201
        %v4699 = vmul.f32 %v4540, %v2204
        %v4700 = vmul.f32 %v4542, %v2207
        %v4701 = vmul.f32 %v4544, %v2210
        %v4702 = vmul.f32 %v4546, %v2213
        %v4703 = vmul.f32 %v4548, %v2216
        %v4704 = vmul.f32 %v4550, %v2219
        %v4705 = vmul.f32 %v4552, %v2222
        %v4706 = vmul.f32 %v4554, %v2225
        %v4707 = vmul.f32 %v4556, %v2228
        %v4708 = vmul.f32 %v4558, %v2231
        %v4709 = vmul.f32 %v4560, %v2234
        %v4710 = vmul.f32 %v4562, %v2237
        %v4711 = vmul.f32 %v4564, %v2240
        %v4712 = vmul.f32 %v4566, %v2243
        %v4713 = vmul.f32 %v4568, %v2246
        %v4714 = vmul.f32 %v4570, %v2249
        %v4715 = vmul.f32 %v4572, %v2252
        %v4716 = vmul.f32 %v4574, %v2255
        %v4717 = vmul.f32 %v4576, %v2258
        %v4718 = vmul.f32 %v4578, %v2261
        %v4719 = vmul.f32 %v4580, %v2264
        %v4720 = vmul.f32 %v4582, %v2267
        %v4721 = vmul.f32 %v4584, %v2270
        %v4722 = vmul.f32 %v4586, %v2273
        %v4723 = vmul.f32 %v4588, %v2276
        %v4724 = vmul.f32 %v4590, %v2279
        %v4725 = vmul.f32 %v4592, %v2282
        %v4726 = vmul.f32 %v4594, %v2285
        %v4727 = vmul.f32 %v4596, %v2288
        %v4728 = vmul.f32 %v4598, %v2291
        %v4729 = vmul.f32 %v4600, %v2294
        %v4730 = vmul.f32 %v4602, %v2297
        %v4731 = vadd.f32 %v3643, %v4667
        %v4732 = vadd.f32 %v3644, %v4668
        %v4733 = vadd.f32 %v3645, %v4669
        %v4734 = vadd.f32 %v3646, %v4670
        %v4735 = vadd.f32 %v3647, %v4671
        %v4736 = vadd.f32 %v3648, %v4672
        %v4737 = vadd.f32 %v3649, %v4673
        %v4738 = vadd.f32 %v3650, %v4674
        %v4739 = vadd.f32 %v3651, %v4675
        %v4740 = vadd.f32 %v3652, %v4676
        %v4741 = vadd.f32 %v3653, %v4677
        %v4742 = vadd.f32 %v3654, %v4678
        %v4743 = vadd.f32 %v3655, %v4679
        %v4744 = vadd.f32 %v3656, %v4680
        %v4745 = vadd.f32 %v3657, %v4681
        %v4746 = vadd.f32 %v3658, %v4682
        %v4747 = vadd.f32 %v3659, %v4683
        %v4748 = vadd.f32 %v3660, %v4684
        %v4749 = vadd.f32 %v3661, %v4685
        %v4750 = vadd.f32 %v3662, %v4686
        %v4751 = vadd.f32 %v3663, %v4687
        %v4752 = vadd.f32 %v3664, %v4688
        %v4753 = vadd.f32 %v3665, %v4689
        %v4754 = vadd.f32 %v3666, %v4690
        %v4755 = vadd.f32 %v3667, %v4691
        %v4756 = vadd.f32 %v3668, %v4692
        %v4757 = vadd.f32 %v3669, %v4693
        %v4758 = vadd.f32 %v3670, %v4694
        %v4759 = vadd.f32 %v3671, %v4695
        %v4760 = vadd.f32 %v3672, %v4696
        %v4761 = vadd.f32 %v3673, %v4697
        %v4762 = vadd.f32 %v3674, %v4698
        %v4763 = vadd.f32 %v3675, %v4699
        %v4764 = vadd.f32 %v3676, %v4700
        %v4765 = vadd.f32 %v3677, %v4701
        %v4766 = vadd.f32 %v3678, %v4702
        %v4767 = vadd.f32 %v3679, %v4703
        %v4768 = vadd.f32 %v3680, %v4704
        %v4769 = vadd.f32 %v3681, %v4705
        %v4770 = vadd.f32 %v3682, %v4706
        %v4771 = vadd.f32 %v3683, %v4707
        %v4772 = vadd.f32 %v3684, %v4708
        %v4773 = vadd.f32 %v3685, %v4709
        %v4774 = vadd.f32 %v3686, %v4710
        %v4775 = vadd.f32 %v3687, %v4711
        %v4776 = vadd.f32 %v3688, %v4712
        %v4777 = vadd.f32 %v3689, %v4713
        %v4778 = vadd.f32 %v3690, %v4714
        %v4779 = vadd.f32 %v3691, %v4715
        %v4780 = vadd.f32 %v3692, %v4716
        %v4781 = vadd.f32 %v3693, %v4717
        %v4782 = vadd.f32 %v3694, %v4718
        %v4783 = vadd.f32 %v3695, %v4719
        %v4784 = vadd.f32 %v3696, %v4720
        %v4785 = vadd.f32 %v3697, %v4721
        %v4786 = vadd.f32 %v3698, %v4722
        %v4787 = vadd.f32 %v3699, %v4723
        %v4788 = vadd.f32 %v3700, %v4724
        %v4789 = vadd.f32 %v3701, %v4725
        %v4790 = vadd.f32 %v3702, %v4726
        %v4791 = vadd.f32 %v3703, %v4727
        %v4792 = vadd.f32 %v3704, %v4728
        %v4793 = vadd.f32 %v3705, %v4729
        %v4794 = vadd.f32 %v3706, %v4730
        %v4795 = vrcp.pop %v4603
        %v4796 = vrcp.pop %v4604
        %v4797 = vrcp.pop %v4605
        %v4798 = vrcp.pop %v4606
        %v4799 = vrcp.pop %v4607
        %v4800 = vrcp.pop %v4608
        %v4801 = vrcp.pop %v4609
        %v4802 = vrcp.pop %v4610
        %v4803 = vrcp.pop %v4611
        %v4804 = vrcp.pop %v4612
        %v4805 = vrcp.pop %v4613
        %v4806 = vrcp.pop %v4614
        %v4807 = vrcp.pop %v4615
        %v4808 = vrcp.pop %v4616
        %v4809 = vrcp.pop %v4617
        %v4810 = vrcp.pop %v4618
        %v4811 = vrcp.pop %v4619
        %v4812 = vrcp.pop %v4620
        %v4813 = vrcp.pop %v4621
        %v4814 = vrcp.pop %v4622
        %v4815 = vrcp.pop %v4623
        %v4816 = vrcp.pop %v4624
        %v4817 = vrcp.pop %v4625
        %v4818 = vrcp.pop %v4626
        %v4819 = vrcp.pop %v4627
        %v4820 = vrcp.pop %v4628
        %v4821 = vrcp.pop %v4629
        %v4822 = vrcp.pop %v4630
        %v4823 = vrcp.pop %v4631
        %v4824 = vrcp.pop %v4632
        %v4825 = vrcp.pop %v4633
        %v4826 = vrcp.pop %v4634
        %v4827 = vrcp.pop %v4635
        %v4828 = vrcp.pop %v4636
        %v4829 = vrcp.pop %v4637
        %v4830 = vrcp.pop %v4638
        %v4831 = vrcp.pop %v4639
        %v4832 = vrcp.pop %v4640
        %v4833 = vrcp.pop %v4641
        %v4834 = vrcp.pop %v4642
        %v4835 = vrcp.pop %v4643
        %v4836 = vrcp.pop %v4644
        %v4837 = vrcp.pop %v4645
        %v4838 = vrcp.pop %v4646
        %v4839 = vrcp.pop %v4647
        %v4840 = vrcp.pop %v4648
        %v4841 = vrcp.pop %v4649
        %v4842 = vrcp.pop %v4650
        %v4843 = vrcp.pop %v4651
        %v4844 = vrcp.pop %v4652
        %v4845 = vrcp.pop %v4653
        %v4846 = vrcp.pop %v4654
        %v4847 = vrcp.pop %v4655
        %v4848 = vrcp.pop %v4656
        %v4849 = vrcp.pop %v4657
        %v4850 = vrcp.pop %v4658
        %v4851 = vrcp.pop %v4659
        %v4852 = vrcp.pop %v4660
        %v4853 = vrcp.pop %v4661
        %v4854 = vrcp.pop %v4662
        %v4855 = vrcp.pop %v4663
        %v4856 = vrcp.pop %v4664
        %v4857 = vrcp.pop %v4665
        %v4858 = vrcp.pop %v4666
        %v4859 = vmul.f32 %v4603, %v4795
        %v4860 = vmul.f32 %v4604, %v4796
        %v4861 = vmul.f32 %v4605, %v4797
        %v4862 = vmul.f32 %v4606, %v4798
        %v4863 = vmul.f32 %v4607, %v4799
        %v4864 = vmul.f32 %v4608, %v4800
        %v4865 = vmul.f32 %v4609, %v4801
        %v4866 = vmul.f32 %v4610, %v4802
        %v4867 = vmul.f32 %v4611, %v4803
        %v4868 = vmul.f32 %v4612, %v4804
        %v4869 = vmul.f32 %v4613, %v4805
        %v4870 = vmul.f32 %v4614, %v4806
        %v4871 = vmul.f32 %v4615, %v4807
        %v4872 = vmul.f32 %v4616, %v4808
        %v4873 = vmul.f32 %v4617, %v4809
        %v4874 = vmul.f32 %v4618, %v4810
        %v4875 = vmul.f32 %v4619, %v4811
        %v4876 = vmul.f32 %v4620, %v4812
        %v4877 = vmul.f32 %v4621, %v4813
        %v4878 = vmul.f32 %v4622, %v4814
        %v4879 = vmul.f32 %v4623, %v4815
        %v4880 = vmul.f32 %v4624, %v4816
        %v4881 = vmul.f32 %v4625, %v4817
        %v4882 = vmul.f32 %v4626, %v4818
        %v4883 = vmul.f32 %v4627, %v4819
        %v4884 = vmul.f32 %v4628, %v4820
        %v4885 = vmul.f32 %v4629, %v4821
        %v4886 = vmul.f32 %v4630, %v4822
        %v4887 = vmul.f32 %v4631, %v4823
        %v4888 = vmul.f32 %v4632, %v4824
        %v4889 = vmul.f32 %v4633, %v4825
        %v4890 = vmul.f32 %v4634, %v4826
        %v4891 = vmul.f32 %v4635, %v4827
        %v4892 = vmul.f32 %v4636, %v4828
        %v4893 = vmul.f32 %v4637, %v4829
        %v4894 = vmul.f32 %v4638, %v4830
        %v4895 = vmul.f32 %v4639, %v4831
        %v4896 = vmul.f32 %v4640, %v4832
        %v4897 = vmul.f32 %v4641, %v4833
        %v4898 = vmul.f32 %v4642, %v4834
        %v4899 = vmul.f32 %v4643, %v4835
        %v4900 = vmul.f32 %v4644, %v4836
        %v4901 = vmul.f32 %v4645, %v4837
        %v4902 = vmul.f32 %v4646, %v4838
        %v4903 = vmul.f32 %v4647, %v4839
        %v4904 = vmul.f32 %v4648, %v4840
        %v4905 = vmul.f32 %v4649, %v4841
        %v4906 = vmul.f32 %v4650, %v4842
        %v4907 = vmul.f32 %v4651, %v4843
        %v4908 = vmul.f32 %v4652, %v4844
        %v4909 = vmul.f32 %v4653, %v4845
        %v4910 = vmul.f32 %v4654, %v4846
        %v4911 = vmul.f32 %v4655, %v4847
        %v4912 = vmul.f32 %v4656, %v4848
        %v4913 = vmul.f32 %v4657, %v4849
        %v4914 = vmul.f32 %v4658, %v4850
        %v4915 = vmul.f32 %v4659, %v4851
        %v4916 = vmul.f32 %v4660, %v4852
        %v4917 = vmul.f32 %v4661, %v4853
        %v4918 = vmul.f32 %v4662, %v4854
        %v4919 = vmul.f32 %v4663, %v4855
        %v4920 = vmul.f32 %v4664, %v4856
        %v4921 = vmul.f32 %v4665, %v4857
        %v4922 = vmul.f32 %v4666, %v4858
        %v4923 = vsub.f32 2.0, %v4859
        %v4924 = vsub.f32 2.0, %v4860
        %v4925 = vsub.f32 2.0, %v4861
        %v4926 = vsub.f32 2.0, %v4862
        %v4927 = vsub.f32 2.0, %v4863
        %v4928 = vsub.f32 2.0, %v4864
        %v4929 = vsub.f32 2.0, %v4865
        %v4930 = vsub.f32 2.0, %v4866
        %v4931 = vsub.f32 2.0, %v4867
        %v4932 = vsub.f32 2.0, %v4868
        %v4933 = vsub.f32 2.0, %v4869
        %v4934 = vsub.f32 2.0, %v4870
        %v4935 = vsub.f32 2.0, %v4871
        %v4936 = vsub.f32 2.0, %v4872
        %v4937 = vsub.f32 2.0, %v4873
        %v4938 = vsub.f32 2.0, %v4874
        %v4939 = vsub.f32 2.0, %v4875
        %v4940 = vsub.f32 2.0, %v4876
        %v4941 = vsub.f32 2.0, %v4877
        %v4942 = vsub.f32 2.0, %v4878
        %v4943 = vsub.f32 2.0, %v4879
        %v4944 = vsub.f32 2.0, %v4880
        %v4945 = vsub.f32 2.0, %v4881
        %v4946 = vsub.f32 2.0, %v4882
        %v4947 = vsub.f32 2.0, %v4883
        %v4948 = vsub.f32 2.0, %v4884
        %v4949 = vsub.f32 2.0, %v4885
        %v4950 = vsub.f32 2.0, %v4886
        %v4951 = vsub.f32 2.0, %v4887
        %v4952 = vsub.f32 2.0, %v4888
        %v4953 = vsub.f32 2.0, %v4889
        %v4954 = vsub.f32 2.0, %v4890
        %v4955 = vsub.f32 2.0, %v4891
        %v4956 = vsub.f32 2.0, %v4892
        %v4957 = vsub.f32 2.0, %v4893
        %v4958 = vsub.f32 2.0, %v4894
        %v4959 = vsub.f32 2.0, %v4895
        %v4960 = vsub.f32 2.0, %v4896
        %v4961 = vsub.f32 2.0, %v4897
        %v4962 = vsub.f32 2.0, %v4898
        %v4963 = vsub.f32 2.0, %v4899
        %v4964 = vsub.f32 2.0, %v4900
        %v4965 = vsub.f32 2.0, %v4901
        %v4966 = vsub.f32 2.0, %v4902
        %v4967 = vsub.f32 2.0, %v4903
        %v4968 = vsub.f32 2.0, %v4904
        %v4969 = vsub.f32 2.0, %v4905
        %v4970 = vsub.f32 2.0, %v4906
        %v4971 = vsub.f32 2.0, %v4907
        %v4972 = vsub.f32 2.0, %v4908
        %v4973 = vsub.f32 2.0, %v4909
        %v4974 = vsub.f32 2.0, %v4910
        %v4975 = vsub.f32 2.0, %v4911
        %v4976 = vsub.f32 2.0, %v4912
        %v4977 = vsub.f32 2.0, %v4913
        %v4978 = vsub.f32 2.0, %v4914
        %v4979 = vsub.f32 2.0, %v4915
        %v4980 = vsub.f32 2.0, %v4916
        %v4981 = vsub.f32 2.0, %v4917
        %v4982 = vsub.f32 2.0, %v4918
        %v4983 = vsub.f32 2.0, %v4919
        %v4984 = vsub.f32 2.0, %v4920
        %v4985 = vsub.f32 2.0, %v4921
        %v4986 = vsub.f32 2.0, %v4922
        %v4987 = vmul.f32 %v4795, %v4923
        %v4988 = vmul.f32 %v4796, %v4924
        %v4989 = vmul.f32 %v4797, %v4925
        %v4990 = vmul.f32 %v4798, %v4926
        %v4991 = vmul.f32 %v4799, %v4927
        %v4992 = vmul.f32 %v4800, %v4928
        %v4993 = vmul.f32 %v4801, %v4929
        %v4994 = vmul.f32 %v4802, %v4930
        %v4995 = vmul.f32 %v4803, %v4931
        %v4996 = vmul.f32 %v4804, %v4932
        %v4997 = vmul.f32 %v4805, %v4933
        %v4998 = vmul.f32 %v4806, %v4934
        %v4999 = vmul.f32 %v4807, %v4935
        %v5000 = vmul.f32 %v4808, %v4936
        %v5001 = vmul.f32 %v4809, %v4937
        %v5002 = vmul.f32 %v4810, %v4938
        %v5003 = vmul.f32 %v4811, %v4939
        %v5004 = vmul.f32 %v4812, %v4940
        %v5005 = vmul.f32 %v4813, %v4941
        %v5006 = vmul.f32 %v4814, %v4942
        %v5007 = vmul.f32 %v4815, %v4943
        %v5008 = vmul.f32 %v4816, %v4944
        %v5009 = vmul.f32 %v4817, %v4945
        %v5010 = vmul.f32 %v4818, %v4946
        %v5011 = vmul.f32 %v4819, %v4947
        %v5012 = vmul.f32 %v4820, %v4948
        %v5013 = vmul.f32 %v4821, %v4949
        %v5014 = vmul.f32 %v4822, %v4950
        %v5015 = vmul.f32 %v4823, %v4951
        %v5016 = vmul.f32 %v4824, %v4952
        %v5017 = vmul.f32 %v4825, %v4953
        %v5018 = vmul.f32 %v4826, %v4954
        %v5019 = vmul.f32 %v4827, %v4955
        %v5020 = vmul.f32 %v4828, %v4956
        %v5021 = vmul.f32 %v4829, %v4957
        %v5022 = vmul.f32 %v4830, %v4958
        %v5023 = vmul.f32 %v4831, %v4959
        %v5024 = vmul.f32 %v4832, %v4960
        %v5025 = vmul.f32 %v4833, %v4961
        %v5026 = vmul.f32 %v4834, %v4962
        %v5027 = vmul.f32 %v4835, %v4963
        %v5028 = vmul.f32 %v4836, %v4964
        %v5029 = vmul.f32 %v4837, %v4965
        %v5030 = vmul.f32 %v4838, %v4966
        %v5031 = vmul.f32 %v4839, %v4967
        %v5032 = vmul.f32 %v4840, %v4968
        %v5033 = vmul.f32 %v4841, %v4969
        %v5034 = vmul.f32 %v4842, %v4970
        %v5035 = vmul.f32 %v4843, %v4971
        %v5036 = vmul.f32 %v4844, %v4972
        %v5037 = vmul.f32 %v4845, %v4973
        %v5038 = vmul.f32 %v4846, %v4974
        %v5039 = vmul.f32 %v4847, %v4975
        %v5040 = vmul.f32 %v4848, %v4976
        %v5041 = vmul.f32 %v4849, %v4977
        %v5042 = vmul.f32 %v4850, %v4978
        %v5043 = vmul.f32 %v4851, %v4979
        %v5044 = vmul.f32 %v4852, %v4980
        %v5045 = vmul.f32 %v4853, %v4981
        %v5046 = vmul.f32 %v4854, %v4982
        %v5047 = vmul.f32 %v4855, %v4983
        %v5048 = vmul.f32 %v4856, %v4984
        %v5049 = vmul.f32 %v4857, %v4985
        %v5050 = vmul.f32 %v4858, %v4986
        %v5051 = vmul.f32 %v4731, %v4987
        %v5052 = vmul.f32 %v4732, %v4988
        %v5053 = vmul.f32 %v4733, %v4989
        %v5054 = vmul.f32 %v4734, %v4990
        %v5055 = vmul.f32 %v4735, %v4991
        %v5056 = vmul.f32 %v4736, %v4992
        %v5057 = vmul.f32 %v4737, %v4993
        %v5058 = vmul.f32 %v4738, %v4994
        %v5059 = vmul.f32 %v4739, %v4995
        %v5060 = vmul.f32 %v4740, %v4996
        %v5061 = vmul.f32 %v4741, %v4997
        %v5062 = vmul.f32 %v4742, %v4998
        %v5063 = vmul.f32 %v4743, %v4999
        %v5064 = vmul.f32 %v4744, %v5000
        %v5065 = vmul.f32 %v4745, %v5001
        %v5066 = vmul.f32 %v4746, %v5002
        %v5067 = vmul.f32 %v4747, %v5003
        %v5068 = vmul.f32 %v4748, %v5004
        %v5069 = vmul.f32 %v4749, %v5005
        %v5070 = vmul.f32 %v4750, %v5006
        %v5071 = vmul.f32 %v4751, %v5007
        %v5072 = vmul.f32 %v4752, %v5008
        %v5073 = vmul.f32 %v4753, %v5009
        %v5074 = vmul.f32 %v4754, %v5010
        %v5075 = vmul.f32 %v4755, %v5011
        %v5076 = vmul.f32 %v4756, %v5012
        %v5077 = vmul.f32 %v4757, %v5013
        %v5078 = vmul.f32 %v4758, %v5014
        %v5079 = vmul.f32 %v4759, %v5015
        %v5080 = vmul.f32 %v4760, %v5016
        %v5081 = vmul.f32 %v4761, %v5017
        %v5082 = vmul.f32 %v4762, %v5018
        %v5083 = vmul.f32 %v4763, %v5019
        %v5084 = vmul.f32 %v4764, %v5020
        %v5085 = vmul.f32 %v4765, %v5021
        %v5086 = vmul.f32 %v4766, %v5022
        %v5087 = vmul.f32 %v4767, %v5023
        %v5088 = vmul.f32 %v4768, %v5024
        %v5089 = vmul.f32 %v4769, %v5025
        %v5090 = vmul.f32 %v4770, %v5026
        %v5091 = vmul.f32 %v4771, %v5027
        %v5092 = vmul.f32 %v4772, %v5028
        %v5093 = vmul.f32 %v4773, %v5029
        %v5094 = vmul.f32 %v4774, %v5030
        %v5095 = vmul.f32 %v4775, %v5031
        %v5096 = vmul.f32 %v4776, %v5032
        %v5097 = vmul.f32 %v4777, %v5033
        %v5098 = vmul.f32 %v4778, %v5034
        %v5099 = vmul.f32 %v4779, %v5035
        %v5100 = vmul.f32 %v4780, %v5036
        %v5101 = vmul.f32 %v4781, %v5037
        %v5102 = vmul.f32 %v4782, %v5038
        %v5103 = vmul.f32 %v4783, %v5039
        %v5104 = vmul.f32 %v4784, %v5040
        %v5105 = vmul.f32 %v4785, %v5041
        %v5106 = vmul.f32 %v4786, %v5042
        %v5107 = vmul.f32 %v4787, %v5043
        %v5108 = vmul.f32 %v4788, %v5044
        %v5109 = vmul.f32 %v4789, %v5045
        %v5110 = vmul.f32 %v4790, %v5046
        %v5111 = vmul.f32 %v4791, %v5047
        %v5112 = vmul.f32 %v4792, %v5048
        %v5113 = vmul.f32 %v4793, %v5049
        %v5114 = vmul.f32 %v4794, %v5050
        %v5115 = vadd.f32 %v5051, %v3003
        %v5116 = vadd.f32 %v5052, %v3004
        %v5117 = vadd.f32 %v5053, %v3005
        %v5118 = vadd.f32 %v5054, %v3006
        %v5119 = vadd.f32 %v5055, %v3007
        %v5120 = vadd.f32 %v5056, %v3008
        %v5121 = vadd.f32 %v5057, %v3009
        %v5122 = vadd.f32 %v5058, %v3010
        %v5123 = vadd.f32 %v5059, %v3011
        %v5124 = vadd.f32 %v5060, %v3012
        %v5125 = vadd.f32 %v5061, %v3013
        %v5126 = vadd.f32 %v5062, %v3014
        %v5127 = vadd.f32 %v5063, %v3015
        %v5128 = vadd.f32 %v5064, %v3016
        %v5129 = vadd.f32 %v5065, %v3017
        %v5130 = vadd.f32 %v5066, %v3018
        %v5131 = vadd.f32 %v5067, %v3019
        %v5132 = vadd.f32 %v5068, %v3020
        %v5133 = vadd.f32 %v5069, %v3021
        %v5134 = vadd.f32 %v5070, %v3022
        %v5135 = vadd.f32 %v5071, %v3023
        %v5136 = vadd.f32 %v5072, %v3024
        %v5137 = vadd.f32 %v5073, %v3025
        %v5138 = vadd.f32 %v5074, %v3026
        %v5139 = vadd.f32 %v5075, %v3027
        %v5140 = vadd.f32 %v5076, %v3028
        %v5141 = vadd.f32 %v5077, %v3029
        %v5142 = vadd.f32 %v5078, %v3030
        %v5143 = vadd.f32 %v5079, %v3031
        %v5144 = vadd.f32 %v5080, %v3032
        %v5145 = vadd.f32 %v5081, %v3033
        %v5146 = vadd.f32 %v5082, %v3034
        %v5147 = vadd.f32 %v5083, %v3035
        %v5148 = vadd.f32 %v5084, %v3036
        %v5149 = vadd.f32 %v5085, %v3037
        %v5150 = vadd.f32 %v5086, %v3038
        %v5151 = vadd.f32 %v5087, %v3039
        %v5152 = vadd.f32 %v5088, %v3040
        %v5153 = vadd.f32 %v5089, %v3041
        %v5154 = vadd.f32 %v5090, %v3042
        %v5155 = vadd.f32 %v5091, %v3043
        %v5156 = vadd.f32 %v5092, %v3044
        %v5157 = vadd.f32 %v5093, %v3045
        %v5158 = vadd.f32 %v5094, %v3046
        %v5159 = vadd.f32 %v5095, %v3047
        %v5160 = vadd.f32 %v5096, %v3048
        %v5161 = vadd.f32 %v5097, %v3049
        %v5162 = vadd.f32 %v5098, %v3050
        %v5163 = vadd.f32 %v5099, %v3051
        %v5164 = vadd.f32 %v5100, %v3052
        %v5165 = vadd.f32 %v5101, %v3053
        %v5166 = vadd.f32 %v5102, %v3054
        %v5167 = vadd.f32 %v5103, %v3055
        %v5168 = vadd.f32 %v5104, %v3056
        %v5169 = vadd.f32 %v5105, %v3057
        %v5170 = vadd.f32 %v5106, %v3058
        %v5171 = vadd.f32 %v5107, %v3059
        %v5172 = vadd.f32 %v5108, %v3060
        %v5173 = vadd.f32 %v5109, %v3061
        %v5174 = vadd.f32 %v5110, %v3062
        %v5175 = vadd.f32 %v5111, %v3063
        %v5176 = vadd.f32 %v5112, %v3064
        %v5177 = vadd.f32 %v5113, %v3065
        %v5178 = vadd.f32 %v5114, %v3066
        %v5179 = vxor.u32 %v5115, 2147483648
        %v5180 = vxor.u32 %v5116, 2147483648
        %v5181 = vxor.u32 %v5117, 2147483648
        %v5182 = vxor.u32 %v5118, 2147483648
        %v5183 = vxor.u32 %v5119, 2147483648
        %v5184 = vxor.u32 %v5120, 2147483648
        %v5185 = vxor.u32 %v5121, 2147483648
        %v5186 = vxor.u32 %v5122, 2147483648
        %v5187 = vxor.u32 %v5123, 2147483648
        %v5188 = vxor.u32 %v5124, 2147483648
        %v5189 = vxor.u32 %v5125, 2147483648
        %v5190 = vxor.u32 %v5126, 2147483648
        %v5191 = vxor.u32 %v5127, 2147483648
        %v5192 = vxor.u32 %v5128, 2147483648
        %v5193 = vxor.u32 %v5129, 2147483648
        %v5194 = vxor.u32 %v5130, 2147483648
        %v5195 = vxor.u32 %v5131, 2147483648
        %v5196 = vxor.u32 %v5132, 2147483648
        %v5197 = vxor.u32 %v5133, 2147483648
        %v5198 = vxor.u32 %v5134, 2147483648
        %v5199 = vxor.u32 %v5135, 2147483648
        %v5200 = vxor.u32 %v5136, 2147483648
        %v5201 = vxor.u32 %v5137, 2147483648
        %v5202 = vxor.u32 %v5138, 2147483648
        %v5203 = vxor.u32 %v5139, 2147483648
        %v5204 = vxor.u32 %v5140, 2147483648
        %v5205 = vxor.u32 %v5141, 2147483648
        %v5206 = vxor.u32 %v5142, 2147483648
        %v5207 = vxor.u32 %v5143, 2147483648
        %v5208 = vxor.u32 %v5144, 2147483648
        %v5209 = vxor.u32 %v5145, 2147483648
        %v5210 = vxor.u32 %v5146, 2147483648
        %v5211 = vxor.u32 %v5147, 2147483648
        %v5212 = vxor.u32 %v5148, 2147483648
        %v5213 = vxor.u32 %v5149, 2147483648
        %v5214 = vxor.u32 %v5150, 2147483648
        %v5215 = vxor.u32 %v5151, 2147483648
        %v5216 = vxor.u32 %v5152, 2147483648
        %v5217 = vxor.u32 %v5153, 2147483648
        %v5218 = vxor.u32 %v5154, 2147483648
        %v5219 = vxor.u32 %v5155, 2147483648
        %v5220 = vxor.u32 %v5156, 2147483648
        %v5221 = vxor.u32 %v5157, 2147483648
        %v5222 = vxor.u32 %v5158, 2147483648
        %v5223 = vxor.u32 %v5159, 2147483648
        %v5224 = vxor.u32 %v5160, 2147483648
        %v5225 = vxor.u32 %v5161, 2147483648
        %v5226 = vxor.u32 %v5162, 2147483648
        %v5227 = vxor.u32 %v5163, 2147483648
        %v5228 = vxor.u32 %v5164, 2147483648
        %v5229 = vxor.u32 %v5165, 2147483648
        %v5230 = vxor.u32 %v5166, 2147483648
        %v5231 = vxor.u32 %v5167, 2147483648
        %v5232 = vxor.u32 %v5168, 2147483648
        %v5233 = vxor.u32 %v5169, 2147483648
        %v5234 = vxor.u32 %v5170, 2147483648
        %v5235 = vxor.u32 %v5171, 2147483648
        %v5236 = vxor.u32 %v5172, 2147483648
        %v5237 = vxor.u32 %v5173, 2147483648
        %v5238 = vxor.u32 %v5174, 2147483648
        %v5239 = vxor.u32 %v5175, 2147483648
        %v5240 = vxor.u32 %v5176, 2147483648
        %v5241 = vxor.u32 %v5177, 2147483648
        %v5242 = vxor.u32 %v5178, 2147483648
        %v5243 = vmul.f32 %v5179, 1.442695
        %v5244 = vpow.pop %v5243
        %v5245 = vmul.f32 %v5180, 1.442695
        %v5246 = vpow.pop %v5245
        %v5247 = vmul.f32 %v5181, 1.442695
        %v5248 = vpow.pop %v5247
        %v5249 = vmul.f32 %v5182, 1.442695
        %v5250 = vpow.pop %v5249
        %v5251 = vmul.f32 %v5183, 1.442695
        %v5252 = vpow.pop %v5251
        %v5253 = vmul.f32 %v5184, 1.442695
        %v5254 = vpow.pop %v5253
        %v5255 = vmul.f32 %v5185, 1.442695
        %v5256 = vpow.pop %v5255
        %v5257 = vmul.f32 %v5186, 1.442695
        %v5258 = vpow.pop %v5257
        %v5259 = vmul.f32 %v5187, 1.442695
        %v5260 = vpow.pop %v5259
        %v5261 = vmul.f32 %v5188, 1.442695
        %v5262 = vpow.pop %v5261
        %v5263 = vmul.f32 %v5189, 1.442695
        %v5264 = vpow.pop %v5263
        %v5265 = vmul.f32 %v5190, 1.442695
        %v5266 = vpow.pop %v5265
        %v5267 = vmul.f32 %v5191, 1.442695
        %v5268 = vpow.pop %v5267
        %v5269 = vmul.f32 %v5192, 1.442695
        %v5270 = vpow.pop %v5269
        %v5271 = vmul.f32 %v5193, 1.442695
        %v5272 = vpow.pop %v5271
        %v5273 = vmul.f32 %v5194, 1.442695
        %v5274 = vpow.pop %v5273
        %v5275 = vmul.f32 %v5195, 1.442695
        %v5276 = vpow.pop %v5275
        %v5277 = vmul.f32 %v5196, 1.442695
        %v5278 = vpow.pop %v5277
        %v5279 = vmul.f32 %v5197, 1.442695
        %v5280 = vpow.pop %v5279
        %v5281 = vmul.f32 %v5198, 1.442695
        %v5282 = vpow.pop %v5281
        %v5283 = vmul.f32 %v5199, 1.442695
        %v5284 = vpow.pop %v5283
        %v5285 = vmul.f32 %v5200, 1.442695
        %v5286 = vpow.pop %v5285
        %v5287 = vmul.f32 %v5201, 1.442695
        %v5288 = vpow.pop %v5287
        %v5289 = vmul.f32 %v5202, 1.442695
        %v5290 = vpow.pop %v5289
        %v5291 = vmul.f32 %v5203, 1.442695
        %v5292 = vpow.pop %v5291
        %v5293 = vmul.f32 %v5204, 1.442695
        %v5294 = vpow.pop %v5293
        %v5295 = vmul.f32 %v5205, 1.442695
        %v5296 = vpow.pop %v5295
        %v5297 = vmul.f32 %v5206, 1.442695
        %v5298 = vpow.pop %v5297
        %v5299 = vmul.f32 %v5207, 1.442695
        %v5300 = vpow.pop %v5299
        %v5301 = vmul.f32 %v5208, 1.442695
        %v5302 = vpow.pop %v5301
        %v5303 = vmul.f32 %v5209, 1.442695
        %v5304 = vpow.pop %v5303
        %v5305 = vmul.f32 %v5210, 1.442695
        %v5306 = vpow.pop %v5305
        %v5307 = vmul.f32 %v5211, 1.442695
        %v5308 = vpow.pop %v5307
        %v5309 = vmul.f32 %v5212, 1.442695
        %v5310 = vpow.pop %v5309
        %v5311 = vmul.f32 %v5213, 1.442695
        %v5312 = vpow.pop %v5311
        %v5313 = vmul.f32 %v5214, 1.442695
        %v5314 = vpow.pop %v5313
        %v5315 = vmul.f32 %v5215, 1.442695
        %v5316 = vpow.pop %v5315
        %v5317 = vmul.f32 %v5216, 1.442695
        %v5318 = vpow.pop %v5317
        %v5319 = vmul.f32 %v5217, 1.442695
        %v5320 = vpow.pop %v5319
        %v5321 = vmul.f32 %v5218, 1.442695
        %v5322 = vpow.pop %v5321
        %v5323 = vmul.f32 %v5219, 1.442695
        %v5324 = vpow.pop %v5323
        %v5325 = vmul.f32 %v5220, 1.442695
        %v5326 = vpow.pop %v5325
        %v5327 = vmul.f32 %v5221, 1.442695
        %v5328 = vpow.pop %v5327
        %v5329 = vmul.f32 %v5222, 1.442695
        %v5330 = vpow.pop %v5329
        %v5331 = vmul.f32 %v5223, 1.442695
        %v5332 = vpow.pop %v5331
        %v5333 = vmul.f32 %v5224, 1.442695
        %v5334 = vpow.pop %v5333
        %v5335 = vmul.f32 %v5225, 1.442695
        %v5336 = vpow.pop %v5335
        %v5337 = vmul.f32 %v5226, 1.442695
        %v5338 = vpow.pop %v5337
        %v5339 = vmul.f32 %v5227, 1.442695
        %v5340 = vpow.pop %v5339
        %v5341 = vmul.f32 %v5228, 1.442695
        %v5342 = vpow.pop %v5341
        %v5343 = vmul.f32 %v5229, 1.442695
        %v5344 = vpow.pop %v5343
        %v5345 = vmul.f32 %v5230, 1.442695
        %v5346 = vpow.pop %v5345
        %v5347 = vmul.f32 %v5231, 1.442695
        %v5348 = vpow.pop %v5347
        %v5349 = vmul.f32 %v5232, 1.442695
        %v5350 = vpow.pop %v5349
        %v5351 = vmul.f32 %v5233, 1.442695
        %v5352 = vpow.pop %v5351
        %v5353 = vmul.f32 %v5234, 1.442695
        %v5354 = vpow.pop %v5353
        %v5355 = vmul.f32 %v5235, 1.442695
        %v5356 = vpow.pop %v5355
        %v5357 = vmul.f32 %v5236, 1.442695
        %v5358 = vpow.pop %v5357
        %v5359 = vmul.f32 %v5237, 1.442695
        %v5360 = vpow.pop %v5359
        %v5361 = vmul.f32 %v5238, 1.442695
        %v5362 = vpow.pop %v5361
        %v5363 = vmul.f32 %v5239, 1.442695
        %v5364 = vpow.pop %v5363
        %v5365 = vmul.f32 %v5240, 1.442695
        %v5366 = vpow.pop %v5365
        %v5367 = vmul.f32 %v5241, 1.442695
        %v5368 = vpow.pop %v5367
        %v5369 = vmul.f32 %v5242, 1.442695
        %v5370 = vpow.pop %v5369
        %v5371 = vadd.f32 %v5244, 1.0
        %v5372 = vadd.f32 %v5246, 1.0
        %v5373 = vadd.f32 %v5248, 1.0
        %v5374 = vadd.f32 %v5250, 1.0
        %v5375 = vadd.f32 %v5252, 1.0
        %v5376 = vadd.f32 %v5254, 1.0
        %v5377 = vadd.f32 %v5256, 1.0
        %v5378 = vadd.f32 %v5258, 1.0
        %v5379 = vadd.f32 %v5260, 1.0
        %v5380 = vadd.f32 %v5262, 1.0
        %v5381 = vadd.f32 %v5264, 1.0
        %v5382 = vadd.f32 %v5266, 1.0
        %v5383 = vadd.f32 %v5268, 1.0
        %v5384 = vadd.f32 %v5270, 1.0
        %v5385 = vadd.f32 %v5272, 1.0
        %v5386 = vadd.f32 %v5274, 1.0
        %v5387 = vadd.f32 %v5276, 1.0
        %v5388 = vadd.f32 %v5278, 1.0
        %v5389 = vadd.f32 %v5280, 1.0
        %v5390 = vadd.f32 %v5282, 1.0
        %v5391 = vadd.f32 %v5284, 1.0
        %v5392 = vadd.f32 %v5286, 1.0
        %v5393 = vadd.f32 %v5288, 1.0
        %v5394 = vadd.f32 %v5290, 1.0
        %v5395 = vadd.f32 %v5292, 1.0
        %v5396 = vadd.f32 %v5294, 1.0
        %v5397 = vadd.f32 %v5296, 1.0
        %v5398 = vadd.f32 %v5298, 1.0
        %v5399 = vadd.f32 %v5300, 1.0
        %v5400 = vadd.f32 %v5302, 1.0
        %v5401 = vadd.f32 %v5304, 1.0
        %v5402 = vadd.f32 %v5306, 1.0
        %v5403 = vadd.f32 %v5308, 1.0
        %v5404 = vadd.f32 %v5310, 1.0
        %v5405 = vadd.f32 %v5312, 1.0
        %v5406 = vadd.f32 %v5314, 1.0
        %v5407 = vadd.f32 %v5316, 1.0
        %v5408 = vadd.f32 %v5318, 1.0
        %v5409 = vadd.f32 %v5320, 1.0
        %v5410 = vadd.f32 %v5322, 1.0
        %v5411 = vadd.f32 %v5324, 1.0
        %v5412 = vadd.f32 %v5326, 1.0
        %v5413 = vadd.f32 %v5328, 1.0
        %v5414 = vadd.f32 %v5330, 1.0
        %v5415 = vadd.f32 %v5332, 1.0
        %v5416 = vadd.f32 %v5334, 1.0
        %v5417 = vadd.f32 %v5336, 1.0
        %v5418 = vadd.f32 %v5338, 1.0
        %v5419 = vadd.f32 %v5340, 1.0
        %v5420 = vadd.f32 %v5342, 1.0
        %v5421 = vadd.f32 %v5344, 1.0
        %v5422 = vadd.f32 %v5346, 1.0
        %v5423 = vadd.f32 %v5348, 1.0
        %v5424 = vadd.f32 %v5350, 1.0
        %v5425 = vadd.f32 %v5352, 1.0
        %v5426 = vadd.f32 %v5354, 1.0
        %v5427 = vadd.f32 %v5356, 1.0
        %v5428 = vadd.f32 %v5358, 1.0
        %v5429 = vadd.f32 %v5360, 1.0
        %v5430 = vadd.f32 %v5362, 1.0
        %v5431 = vadd.f32 %v5364, 1.0
        %v5432 = vadd.f32 %v5366, 1.0
        %v5433 = vadd.f32 %v5368, 1.0
        %v5434 = vadd.f32 %v5370, 1.0
        %v5435 = vrcp.pop %v5371
        %v5436 = vmul.f32 1.0, %v5435
        %v5437 = vrcp.pop %v5372
        %v5438 = vmul.f32 1.0, %v5437
        %v5439 = vrcp.pop %v5373
        %v5440 = vmul.f32 1.0, %v5439
        %v5441 = vrcp.pop %v5374
        %v5442 = vmul.f32 1.0, %v5441
        %v5443 = vrcp.pop %v5375
        %v5444 = vmul.f32 1.0, %v5443
        %v5445 = vrcp.pop %v5376
        %v5446 = vmul.f32 1.0, %v5445
        %v5447 = vrcp.pop %v5377
        %v5448 = vmul.f32 1.0, %v5447
        %v5449 = vrcp.pop %v5378
        %v5450 = vmul.f32 1.0, %v5449
        %v5451 = vrcp.pop %v5379
        %v5452 = vmul.f32 1.0, %v5451
        %v5453 = vrcp.pop %v5380
        %v5454 = vmul.f32 1.0, %v5453
        %v5455 = vrcp.pop %v5381
        %v5456 = vmul.f32 1.0, %v5455
        %v5457 = vrcp.pop %v5382
        %v5458 = vmul.f32 1.0, %v5457
        %v5459 = vrcp.pop %v5383
        %v5460 = vmul.f32 1.0, %v5459
        %v5461 = vrcp.pop %v5384
        %v5462 = vmul.f32 1.0, %v5461
        %v5463 = vrcp.pop %v5385
        %v5464 = vmul.f32 1.0, %v5463
        %v5465 = vrcp.pop %v5386
        %v5466 = vmul.f32 1.0, %v5465
        %v5467 = vrcp.pop %v5387
        %v5468 = vmul.f32 1.0, %v5467
        %v5469 = vrcp.pop %v5388
        %v5470 = vmul.f32 1.0, %v5469
        %v5471 = vrcp.pop %v5389
        %v5472 = vmul.f32 1.0, %v5471
        %v5473 = vrcp.pop %v5390
        %v5474 = vmul.f32 1.0, %v5473
        %v5475 = vrcp.pop %v5391
        %v5476 = vmul.f32 1.0, %v5475
        %v5477 = vrcp.pop %v5392
        %v5478 = vmul.f32 1.0, %v5477
        %v5479 = vrcp.pop %v5393
        %v5480 = vmul.f32 1.0, %v5479
        %v5481 = vrcp.pop %v5394
        %v5482 = vmul.f32 1.0, %v5481
        %v5483 = vrcp.pop %v5395
        %v5484 = vmul.f32 1.0, %v5483
        %v5485 = vrcp.pop %v5396
        %v5486 = vmul.f32 1.0, %v5485
        %v5487 = vrcp.pop %v5397
        %v5488 = vmul.f32 1.0, %v5487
        %v5489 = vrcp.pop %v5398
        %v5490 = vmul.f32 1.0, %v5489
        %v5491 = vrcp.pop %v5399
        %v5492 = vmul.f32 1.0, %v5491
        %v5493 = vrcp.pop %v5400
        %v5494 = vmul.f32 1.0, %v5493
        %v5495 = vrcp.pop %v5401
        %v5496 = vmul.f32 1.0, %v5495
        %v5497 = vrcp.pop %v5402
        %v5498 = vmul.f32 1.0, %v5497
        %v5499 = vrcp.pop %v5403
        %v5500 = vmul.f32 1.0, %v5499
        %v5501 = vrcp.pop %v5404
        %v5502 = vmul.f32 1.0, %v5501
        %v5503 = vrcp.pop %v5405
        %v5504 = vmul.f32 1.0, %v5503
        %v5505 = vrcp.pop %v5406
        %v5506 = vmul.f32 1.0, %v5505
        %v5507 = vrcp.pop %v5407
        %v5508 = vmul.f32 1.0, %v5507
        %v5509 = vrcp.pop %v5408
        %v5510 = vmul.f32 1.0, %v5509
        %v5511 = vrcp.pop %v5409
        %v5512 = vmul.f32 1.0, %v5511
        %v5513 = vrcp.pop %v5410
        %v5514 = vmul.f32 1.0, %v5513
        %v5515 = vrcp.pop %v5411
        %v5516 = vmul.f32 1.0, %v5515
        %v5517 = vrcp.pop %v5412
        %v5518 = vmul.f32 1.0, %v5517
        %v5519 = vrcp.pop %v5413
        %v5520 = vmul.f32 1.0, %v5519
        %v5521 = vrcp.pop %v5414
        %v5522 = vmul.f32 1.0, %v5521
        %v5523 = vrcp.pop %v5415
        %v5524 = vmul.f32 1.0, %v5523
        %v5525 = vrcp.pop %v5416
        %v5526 = vmul.f32 1.0, %v5525
        %v5527 = vrcp.pop %v5417
        %v5528 = vmul.f32 1.0, %v5527
        %v5529 = vrcp.pop %v5418
        %v5530 = vmul.f32 1.0, %v5529
        %v5531 = vrcp.pop %v5419
        %v5532 = vmul.f32 1.0, %v5531
        %v5533 = vrcp.pop %v5420
        %v5534 = vmul.f32 1.0, %v5533
        %v5535 = vrcp.pop %v5421
        %v5536 = vmul.f32 1.0, %v5535
        %v5537 = vrcp.pop %v5422
        %v5538 = vmul.f32 1.0, %v5537
        %v5539 = vrcp.pop %v5423
        %v5540 = vmul.f32 1.0, %v5539
        %v5541 = vrcp.pop %v5424
        %v5542 = vmul.f32 1.0, %v5541
        %v5543 = vrcp.pop %v5425
        %v5544 = vmul.f32 1.0, %v5543
        %v5545 = vrcp.pop %v5426
        %v5546 = vmul.f32 1.0, %v5545
        %v5547 = vrcp.pop %v5427
        %v5548 = vmul.f32 1.0, %v5547
        %v5549 = vrcp.pop %v5428
        %v5550 = vmul.f32 1.0, %v5549
        %v5551 = vrcp.pop %v5429
        %v5552 = vmul.f32 1.0, %v5551
        %v5553 = vrcp.pop %v5430
        %v5554 = vmul.f32 1.0, %v5553
        %v5555 = vrcp.pop %v5431
        %v5556 = vmul.f32 1.0, %v5555
        %v5557 = vrcp.pop %v5432
        %v5558 = vmul.f32 1.0, %v5557
        %v5559 = vrcp.pop %v5433
        %v5560 = vmul.f32 1.0, %v5559
        %v5561 = vrcp.pop %v5434
        %v5562 = vmul.f32 1.0, %v5561
        %v5563 = vmul.f32 %v5436, 1.442695
        %v5564 = vpow.pop %v5563
        %v5565 = vmul.f32 %v5438, 1.442695
        %v5566 = vpow.pop %v5565
        %v5567 = vmul.f32 %v5440, 1.442695
        %v5568 = vpow.pop %v5567
        %v5569 = vmul.f32 %v5442, 1.442695
        %v5570 = vpow.pop %v5569
        %v5571 = vmul.f32 %v5444, 1.442695
        %v5572 = vpow.pop %v5571
        %v5573 = vmul.f32 %v5446, 1.442695
        %v5574 = vpow.pop %v5573
        %v5575 = vmul.f32 %v5448, 1.442695
        %v5576 = vpow.pop %v5575
        %v5577 = vmul.f32 %v5450, 1.442695
        %v5578 = vpow.pop %v5577
        %v5579 = vmul.f32 %v5452, 1.442695
        %v5580 = vpow.pop %v5579
        %v5581 = vmul.f32 %v5454, 1.442695
        %v5582 = vpow.pop %v5581
        %v5583 = vmul.f32 %v5456, 1.442695
        %v5584 = vpow.pop %v5583
        %v5585 = vmul.f32 %v5458, 1.442695
        %v5586 = vpow.pop %v5585
        %v5587 = vmul.f32 %v5460, 1.442695
        %v5588 = vpow.pop %v5587
        %v5589 = vmul.f32 %v5462, 1.442695
        %v5590 = vpow.pop %v5589
        %v5591 = vmul.f32 %v5464, 1.442695
        %v5592 = vpow.pop %v5591
        %v5593 = vmul.f32 %v5466, 1.442695
        %v5594 = vpow.pop %v5593
        %v5595 = vmul.f32 %v5468, 1.442695
        %v5596 = vpow.pop %v5595
        %v5597 = vmul.f32 %v5470, 1.442695
        %v5598 = vpow.pop %v5597
        %v5599 = vmul.f32 %v5472, 1.442695
        %v5600 = vpow.pop %v5599
        %v5601 = vmul.f32 %v5474, 1.442695
        %v5602 = vpow.pop %v5601
        %v5603 = vmul.f32 %v5476, 1.442695
        %v5604 = vpow.pop %v5603
        %v5605 = vmul.f32 %v5478, 1.442695
        %v5606 = vpow.pop %v5605
        %v5607 = vmul.f32 %v5480, 1.442695
        %v5608 = vpow.pop %v5607
        %v5609 = vmul.f32 %v5482, 1.442695
        %v5610 = vpow.pop %v5609
        %v5611 = vmul.f32 %v5484, 1.442695
        %v5612 = vpow.pop %v5611
        %v5613 = vmul.f32 %v5486, 1.442695
        %v5614 = vpow.pop %v5613
        %v5615 = vmul.f32 %v5488, 1.442695
        %v5616 = vpow.pop %v5615
        %v5617 = vmul.f32 %v5490, 1.442695
        %v5618 = vpow.pop %v5617
        %v5619 = vmul.f32 %v5492, 1.442695
        %v5620 = vpow.pop %v5619
        %v5621 = vmul.f32 %v5494, 1.442695
        %v5622 = vpow.pop %v5621
        %v5623 = vmul.f32 %v5496, 1.442695
        %v5624 = vpow.pop %v5623
        %v5625 = vmul.f32 %v5498, 1.442695
        %v5626 = vpow.pop %v5625
        %v5627 = vmul.f32 %v5500, 1.442695
        %v5628 = vpow.pop %v5627
        %v5629 = vmul.f32 %v5502, 1.442695
        %v5630 = vpow.pop %v5629
        %v5631 = vmul.f32 %v5504, 1.442695
        %v5632 = vpow.pop %v5631
        %v5633 = vmul.f32 %v5506, 1.442695
        %v5634 = vpow.pop %v5633
        %v5635 = vmul.f32 %v5508, 1.442695
        %v5636 = vpow.pop %v5635
        %v5637 = vmul.f32 %v5510, 1.442695
        %v5638 = vpow.pop %v5637
        %v5639 = vmul.f32 %v5512, 1.442695
        %v5640 = vpow.pop %v5639
        %v5641 = vmul.f32 %v5514, 1.442695
        %v5642 = vpow.pop %v5641
        %v5643 = vmul.f32 %v5516, 1.442695
        %v5644 = vpow.pop %v5643
        %v5645 = vmul.f32 %v5518, 1.442695
        %v5646 = vpow.pop %v5645
        %v5647 = vmul.f32 %v5520, 1.442695
        %v5648 = vpow.pop %v5647
        %v5649 = vmul.f32 %v5522, 1.442695
        %v5650 = vpow.pop %v5649
        %v5651 = vmul.f32 %v5524, 1.442695
        %v5652 = vpow.pop %v5651
        %v5653 = vmul.f32 %v5526, 1.442695
        %v5654 = vpow.pop %v5653
        %v5655 = vmul.f32 %v5528, 1.442695
        %v5656 = vpow.pop %v5655
        %v5657 = vmul.f32 %v5530, 1.442695
        %v5658 = vpow.pop %v5657
        %v5659 = vmul.f32 %v5532, 1.442695
        %v5660 = vpow.pop %v5659
        %v5661 = vmul.f32 %v5534, 1.442695
        %v5662 = vpow.pop %v5661
        %v5663 = vmul.f32 %v5536, 1.442695
        %v5664 = vpow.pop %v5663
        %v5665 = vmul.f32 %v5538, 1.442695
        %v5666 = vpow.pop %v5665
        %v5667 = vmul.f32 %v5540, 1.442695
        %v5668 = vpow.pop %v5667
        %v5669 = vmul.f32 %v5542, 1.442695
        %v5670 = vpow.pop %v5669
        %v5671 = vmul.f32 %v5544, 1.442695
        %v5672 = vpow.pop %v5671
        %v5673 = vmul.f32 %v5546, 1.442695
        %v5674 = vpow.pop %v5673
        %v5675 = vmul.f32 %v5548, 1.442695
        %v5676 = vpow.pop %v5675
        %v5677 = vmul.f32 %v5550, 1.442695
        %v5678 = vpow.pop %v5677
        %v5679 = vmul.f32 %v5552, 1.442695
        %v5680 = vpow.pop %v5679
        %v5681 = vmul.f32 %v5554, 1.442695
        %v5682 = vpow.pop %v5681
        %v5683 = vmul.f32 %v5556, 1.442695
        %v5684 = vpow.pop %v5683
        %v5685 = vmul.f32 %v5558, 1.442695
        %v5686 = vpow.pop %v5685
        %v5687 = vmul.f32 %v5560, 1.442695
        %v5688 = vpow.pop %v5687
        %v5689 = vmul.f32 %v5562, 1.442695
        %v5690 = vpow.pop %v5689
        %v5691 = vadd.f32 %v4603, %v5564
        %v5692 = vadd.f32 %v4604, %v5566
        %v5693 = vadd.f32 %v4605, %v5568
        %v5694 = vadd.f32 %v4606, %v5570
        %v5695 = vadd.f32 %v4607, %v5572
        %v5696 = vadd.f32 %v4608, %v5574
        %v5697 = vadd.f32 %v4609, %v5576
        %v5698 = vadd.f32 %v4610, %v5578
        %v5699 = vadd.f32 %v4611, %v5580
        %v5700 = vadd.f32 %v4612, %v5582
        %v5701 = vadd.f32 %v4613, %v5584
        %v5702 = vadd.f32 %v4614, %v5586
        %v5703 = vadd.f32 %v4615, %v5588
        %v5704 = vadd.f32 %v4616, %v5590
        %v5705 = vadd.f32 %v4617, %v5592
        %v5706 = vadd.f32 %v4618, %v5594
        %v5707 = vadd.f32 %v4619, %v5596
        %v5708 = vadd.f32 %v4620, %v5598
        %v5709 = vadd.f32 %v4621, %v5600
        %v5710 = vadd.f32 %v4622, %v5602
        %v5711 = vadd.f32 %v4623, %v5604
        %v5712 = vadd.f32 %v4624, %v5606
        %v5713 = vadd.f32 %v4625, %v5608
        %v5714 = vadd.f32 %v4626, %v5610
        %v5715 = vadd.f32 %v4627, %v5612
        %v5716 = vadd.f32 %v4628, %v5614
        %v5717 = vadd.f32 %v4629, %v5616
        %v5718 = vadd.f32 %v4630, %v5618
        %v5719 = vadd.f32 %v4631, %v5620
        %v5720 = vadd.f32 %v4632, %v5622
        %v5721 = vadd.f32 %v4633, %v5624
        %v5722 = vadd.f32 %v4634, %v5626
        %v5723 = vadd.f32 %v4635, %v5628
        %v5724 = vadd.f32 %v4636, %v5630
        %v5725 = vadd.f32 %v4637, %v5632
        %v5726 = vadd.f32 %v4638, %v5634
        %v5727 = vadd.f32 %v4639, %v5636
        %v5728 = vadd.f32 %v4640, %v5638
        %v5729 = vadd.f32 %v4641, %v5640
        %v5730 = vadd.f32 %v4642, %v5642
        %v5731 = vadd.f32 %v4643, %v5644
        %v5732 = vadd.f32 %v4644, %v5646
        %v5733 = vadd.f32 %v4645, %v5648
        %v5734 = vadd.f32 %v4646, %v5650
        %v5735 = vadd.f32 %v4647, %v5652
        %v5736 = vadd.f32 %v4648, %v5654
        %v5737 = vadd.f32 %v4649, %v5656
        %v5738 = vadd.f32 %v4650, %v5658
        %v5739 = vadd.f32 %v4651, %v5660
        %v5740 = vadd.f32 %v4652, %v5662
        %v5741 = vadd.f32 %v4653, %v5664
        %v5742 = vadd.f32 %v4654, %v5666
        %v5743 = vadd.f32 %v4655, %v5668
        %v5744 = vadd.f32 %v4656, %v5670
        %v5745 = vadd.f32 %v4657, %v5672
        %v5746 = vadd.f32 %v4658, %v5674
        %v5747 = vadd.f32 %v4659, %v5676
        %v5748 = vadd.f32 %v4660, %v5678
        %v5749 = vadd.f32 %v4661, %v5680
        %v5750 = vadd.f32 %v4662, %v5682
        %v5751 = vadd.f32 %v4663, %v5684
        %v5752 = vadd.f32 %v4664, %v5686
        %v5753 = vadd.f32 %v4665, %v5688
        %v5754 = vadd.f32 %v4666, %v5690
        %v5755 = vrcp.pop %v5691
        %v5756 = vrcp.pop %v5692
        %v5757 = vrcp.pop %v5693
        %v5758 = vrcp.pop %v5694
        %v5759 = vrcp.pop %v5695
        %v5760 = vrcp.pop %v5696
        %v5761 = vrcp.pop %v5697
        %v5762 = vrcp.pop %v5698
        %v5763 = vrcp.pop %v5699
        %v5764 = vrcp.pop %v5700
        %v5765 = vrcp.pop %v5701
        %v5766 = vrcp.pop %v5702
        %v5767 = vrcp.pop %v5703
        %v5768 = vrcp.pop %v5704
        %v5769 = vrcp.pop %v5705
        %v5770 = vrcp.pop %v5706
        %v5771 = vrcp.pop %v5707
        %v5772 = vrcp.pop %v5708
        %v5773 = vrcp.pop %v5709
        %v5774 = vrcp.pop %v5710
        %v5775 = vrcp.pop %v5711
        %v5776 = vrcp.pop %v5712
        %v5777 = vrcp.pop %v5713
        %v5778 = vrcp.pop %v5714
        %v5779 = vrcp.pop %v5715
        %v5780 = vrcp.pop %v5716
        %v5781 = vrcp.pop %v5717
        %v5782 = vrcp.pop %v5718
        %v5783 = vrcp.pop %v5719
        %v5784 = vrcp.pop %v5720
        %v5785 = vrcp.pop %v5721
        %v5786 = vrcp.pop %v5722
        %v5787 = vrcp.pop %v5723
        %v5788 = vrcp.pop %v5724
        %v5789 = vrcp.pop %v5725
        %v5790 = vrcp.pop %v5726
        %v5791 = vrcp.pop %v5727
        %v5792 = vrcp.pop %v5728
        %v5793 = vrcp.pop %v5729
        %v5794 = vrcp.pop %v5730
        %v5795 = vrcp.pop %v5731
        %v5796 = vrcp.pop %v5732
        %v5797 = vrcp.pop %v5733
        %v5798 = vrcp.pop %v5734
        %v5799 = vrcp.pop %v5735
        %v5800 = vrcp.pop %v5736
        %v5801 = vrcp.pop %v5737
        %v5802 = vrcp.pop %v5738
        %v5803 = vrcp.pop %v5739
        %v5804 = vrcp.pop %v5740
        %v5805 = vrcp.pop %v5741
        %v5806 = vrcp.pop %v5742
        %v5807 = vrcp.pop %v5743
        %v5808 = vrcp.pop %v5744
        %v5809 = vrcp.pop %v5745
        %v5810 = vrcp.pop %v5746
        %v5811 = vrcp.pop %v5747
        %v5812 = vrcp.pop %v5748
        %v5813 = vrcp.pop %v5749
        %v5814 = vrcp.pop %v5750
        %v5815 = vrcp.pop %v5751
        %v5816 = vrcp.pop %v5752
        %v5817 = vrcp.pop %v5753
        %v5818 = vrcp.pop %v5754
        %v5819 = vmul.f32 %v5691, %v5755
        %v5820 = vmul.f32 %v5692, %v5756
        %v5821 = vmul.f32 %v5693, %v5757
        %v5822 = vmul.f32 %v5694, %v5758
        %v5823 = vmul.f32 %v5695, %v5759
        %v5824 = vmul.f32 %v5696, %v5760
        %v5825 = vmul.f32 %v5697, %v5761
        %v5826 = vmul.f32 %v5698, %v5762
        %v5827 = vmul.f32 %v5699, %v5763
        %v5828 = vmul.f32 %v5700, %v5764
        %v5829 = vmul.f32 %v5701, %v5765
        %v5830 = vmul.f32 %v5702, %v5766
        %v5831 = vmul.f32 %v5703, %v5767
        %v5832 = vmul.f32 %v5704, %v5768
        %v5833 = vmul.f32 %v5705, %v5769
        %v5834 = vmul.f32 %v5706, %v5770
        %v5835 = vmul.f32 %v5707, %v5771
        %v5836 = vmul.f32 %v5708, %v5772
        %v5837 = vmul.f32 %v5709, %v5773
        %v5838 = vmul.f32 %v5710, %v5774
        %v5839 = vmul.f32 %v5711, %v5775
        %v5840 = vmul.f32 %v5712, %v5776
        %v5841 = vmul.f32 %v5713, %v5777
        %v5842 = vmul.f32 %v5714, %v5778
        %v5843 = vmul.f32 %v5715, %v5779
        %v5844 = vmul.f32 %v5716, %v5780
        %v5845 = vmul.f32 %v5717, %v5781
        %v5846 = vmul.f32 %v5718, %v5782
        %v5847 = vmul.f32 %v5719, %v5783
        %v5848 = vmul.f32 %v5720, %v5784
        %v5849 = vmul.f32 %v5721, %v5785
        %v5850 = vmul.f32 %v5722, %v5786
        %v5851 = vmul.f32 %v5723, %v5787
        %v5852 = vmul.f32 %v5724, %v5788
        %v5853 = vmul.f32 %v5725, %v5789
        %v5854 = vmul.f32 %v5726, %v5790
        %v5855 = vmul.f32 %v5727, %v5791
        %v5856 = vmul.f32 %v5728, %v5792
        %v5857 = vmul.f32 %v5729, %v5793
        %v5858 = vmul.f32 %v5730, %v5794
        %v5859 = vmul.f32 %v5731, %v5795
        %v5860 = vmul.f32 %v5732, %v5796
        %v5861 = vmul.f32 %v5733, %v5797
        %v5862 = vmul.f32 %v5734, %v5798
        %v5863 = vmul.f32 %v5735, %v5799
        %v5864 = vmul.f32 %v5736, %v5800
        %v5865 = vmul.f32 %v5737, %v5801
        %v5866 = vmul.f32 %v5738, %v5802
        %v5867 = vmul.f32 %v5739, %v5803
        %v5868 = vmul.f32 %v5740, %v5804
        %v5869 = vmul.f32 %v5741, %v5805
        %v5870 = vmul.f32 %v5742, %v5806
        %v5871 = vmul.f32 %v5743, %v5807
        %v5872 = vmul.f32 %v5744, %v5808
        %v5873 = vmul.f32 %v5745, %v5809
        %v5874 = vmul.f32 %v5746, %v5810
        %v5875 = vmul.f32 %v5747, %v5811
        %v5876 = vmul.f32 %v5748, %v5812
        %v5877 = vmul.f32 %v5749, %v5813
        %v5878 = vmul.f32 %v5750, %v5814
        %v5879 = vmul.f32 %v5751, %v5815
        %v5880 = vmul.f32 %v5752, %v5816
        %v5881 = vmul.f32 %v5753, %v5817
        %v5882 = vmul.f32 %v5754, %v5818
        %v5883 = vsub.f32 2.0, %v5819
        %v5884 = vsub.f32 2.0, %v5820
        %v5885 = vsub.f32 2.0, %v5821
        %v5886 = vsub.f32 2.0, %v5822
        %v5887 = vsub.f32 2.0, %v5823
        %v5888 = vsub.f32 2.0, %v5824
        %v5889 = vsub.f32 2.0, %v5825
        %v5890 = vsub.f32 2.0, %v5826
        %v5891 = vsub.f32 2.0, %v5827
        %v5892 = vsub.f32 2.0, %v5828
        %v5893 = vsub.f32 2.0, %v5829
        %v5894 = vsub.f32 2.0, %v5830
        %v5895 = vsub.f32 2.0, %v5831
        %v5896 = vsub.f32 2.0, %v5832
        %v5897 = vsub.f32 2.0, %v5833
        %v5898 = vsub.f32 2.0, %v5834
        %v5899 = vsub.f32 2.0, %v5835
        %v5900 = vsub.f32 2.0, %v5836
        %v5901 = vsub.f32 2.0, %v5837
        %v5902 = vsub.f32 2.0, %v5838
        %v5903 = vsub.f32 2.0, %v5839
        %v5904 = vsub.f32 2.0, %v5840
        %v5905 = vsub.f32 2.0, %v5841
        %v5906 = vsub.f32 2.0, %v5842
        %v5907 = vsub.f32 2.0, %v5843
        %v5908 = vsub.f32 2.0, %v5844
        %v5909 = vsub.f32 2.0, %v5845
        %v5910 = vsub.f32 2.0, %v5846
        %v5911 = vsub.f32 2.0, %v5847
        %v5912 = vsub.f32 2.0, %v5848
        %v5913 = vsub.f32 2.0, %v5849
        %v5914 = vsub.f32 2.0, %v5850
        %v5915 = vsub.f32 2.0, %v5851
        %v5916 = vsub.f32 2.0, %v5852
        %v5917 = vsub.f32 2.0, %v5853
        %v5918 = vsub.f32 2.0, %v5854
        %v5919 = vsub.f32 2.0, %v5855
        %v5920 = vsub.f32 2.0, %v5856
        %v5921 = vsub.f32 2.0, %v5857
        %v5922 = vsub.f32 2.0, %v5858
        %v5923 = vsub.f32 2.0, %v5859
        %v5924 = vsub.f32 2.0, %v5860
        %v5925 = vsub.f32 2.0, %v5861
        %v5926 = vsub.f32 2.0, %v5862
        %v5927 = vsub.f32 2.0, %v5863
        %v5928 = vsub.f32 2.0, %v5864
        %v5929 = vsub.f32 2.0, %v5865
        %v5930 = vsub.f32 2.0, %v5866
        %v5931 = vsub.f32 2.0, %v5867
        %v5932 = vsub.f32 2.0, %v5868
        %v5933 = vsub.f32 2.0, %v5869
        %v5934 = vsub.f32 2.0, %v5870
        %v5935 = vsub.f32 2.0, %v5871
        %v5936 = vsub.f32 2.0, %v5872
        %v5937 = vsub.f32 2.0, %v5873
        %v5938 = vsub.f32 2.0, %v5874
        %v5939 = vsub.f32 2.0, %v5875
        %v5940 = vsub.f32 2.0, %v5876
        %v5941 = vsub.f32 2.0, %v5877
        %v5942 = vsub.f32 2.0, %v5878
        %v5943 = vsub.f32 2.0, %v5879
        %v5944 = vsub.f32 2.0, %v5880
        %v5945 = vsub.f32 2.0, %v5881
        %v5946 = vsub.f32 2.0, %v5882
        %v5947 = vmul.f32 %v5755, %v5883
        %v5948 = vmul.f32 %v5756, %v5884
        %v5949 = vmul.f32 %v5757, %v5885
        %v5950 = vmul.f32 %v5758, %v5886
        %v5951 = vmul.f32 %v5759, %v5887
        %v5952 = vmul.f32 %v5760, %v5888
        %v5953 = vmul.f32 %v5761, %v5889
        %v5954 = vmul.f32 %v5762, %v5890
        %v5955 = vmul.f32 %v5763, %v5891
        %v5956 = vmul.f32 %v5764, %v5892
        %v5957 = vmul.f32 %v5765, %v5893
        %v5958 = vmul.f32 %v5766, %v5894
        %v5959 = vmul.f32 %v5767, %v5895
        %v5960 = vmul.f32 %v5768, %v5896
        %v5961 = vmul.f32 %v5769, %v5897
        %v5962 = vmul.f32 %v5770, %v5898
        %v5963 = vmul.f32 %v5771, %v5899
        %v5964 = vmul.f32 %v5772, %v5900
        %v5965 = vmul.f32 %v5773, %v5901
        %v5966 = vmul.f32 %v5774, %v5902
        %v5967 = vmul.f32 %v5775, %v5903
        %v5968 = vmul.f32 %v5776, %v5904
        %v5969 = vmul.f32 %v5777, %v5905
        %v5970 = vmul.f32 %v5778, %v5906
        %v5971 = vmul.f32 %v5779, %v5907
        %v5972 = vmul.f32 %v5780, %v5908
        %v5973 = vmul.f32 %v5781, %v5909
        %v5974 = vmul.f32 %v5782, %v5910
        %v5975 = vmul.f32 %v5783, %v5911
        %v5976 = vmul.f32 %v5784, %v5912
        %v5977 = vmul.f32 %v5785, %v5913
        %v5978 = vmul.f32 %v5786, %v5914
        %v5979 = vmul.f32 %v5787, %v5915
        %v5980 = vmul.f32 %v5788, %v5916
        %v5981 = vmul.f32 %v5789, %v5917
        %v5982 = vmul.f32 %v5790, %v5918
        %v5983 = vmul.f32 %v5791, %v5919
        %v5984 = vmul.f32 %v5792, %v5920
        %v5985 = vmul.f32 %v5793, %v5921
        %v5986 = vmul.f32 %v5794, %v5922
        %v5987 = vmul.f32 %v5795, %v5923
        %v5988 = vmul.f32 %v5796, %v5924
        %v5989 = vmul.f32 %v5797, %v5925
        %v5990 = vmul.f32 %v5798, %v5926
        %v5991 = vmul.f32 %v5799, %v5927
        %v5992 = vmul.f32 %v5800, %v5928
        %v5993 = vmul.f32 %v5801, %v5929
        %v5994 = vmul.f32 %v5802, %v5930
        %v5995 = vmul.f32 %v5803, %v5931
        %v5996 = vmul.f32 %v5804, %v5932
        %v5997 = vmul.f32 %v5805, %v5933
        %v5998 = vmul.f32 %v5806, %v5934
        %v5999 = vmul.f32 %v5807, %v5935
        %v6000 = vmul.f32 %v5808, %v5936
        %v6001 = vmul.f32 %v5809, %v5937
        %v6002 = vmul.f32 %v5810, %v5938
        %v6003 = vmul.f32 %v5811, %v5939
        %v6004 = vmul.f32 %v5812, %v5940
        %v6005 = vmul.f32 %v5813, %v5941
        %v6006 = vmul.f32 %v5814, %v5942
        %v6007 = vmul.f32 %v5815, %v5943
        %v6008 = vmul.f32 %v5816, %v5944
        %v6009 = vmul.f32 %v5817, %v5945
        %v6010 = vmul.f32 %v5818, %v5946
        %v6011 = vmul.f32 %v3516, %v5947
        %v6012 = vmul.f32 %v3518, %v5948
        %v6013 = vmul.f32 %v3520, %v5949
        %v6014 = vmul.f32 %v3522, %v5950
        %v6015 = vmul.f32 %v3524, %v5951
        %v6016 = vmul.f32 %v3526, %v5952
        %v6017 = vmul.f32 %v3528, %v5953
        %v6018 = vmul.f32 %v3530, %v5954
        %v6019 = vmul.f32 %v3532, %v5955
        %v6020 = vmul.f32 %v3534, %v5956
        %v6021 = vmul.f32 %v3536, %v5957
        %v6022 = vmul.f32 %v3538, %v5958
        %v6023 = vmul.f32 %v3540, %v5959
        %v6024 = vmul.f32 %v3542, %v5960
        %v6025 = vmul.f32 %v3544, %v5961
        %v6026 = vmul.f32 %v3546, %v5962
        %v6027 = vmul.f32 %v3548, %v5963
        %v6028 = vmul.f32 %v3550, %v5964
        %v6029 = vmul.f32 %v3552, %v5965
        %v6030 = vmul.f32 %v3554, %v5966
        %v6031 = vmul.f32 %v3556, %v5967
        %v6032 = vmul.f32 %v3558, %v5968
        %v6033 = vmul.f32 %v3560, %v5969
        %v6034 = vmul.f32 %v3562, %v5970
        %v6035 = vmul.f32 %v3564, %v5971
        %v6036 = vmul.f32 %v3566, %v5972
        %v6037 = vmul.f32 %v3568, %v5973
        %v6038 = vmul.f32 %v3570, %v5974
        %v6039 = vmul.f32 %v3572, %v5975
        %v6040 = vmul.f32 %v3574, %v5976
        %v6041 = vmul.f32 %v3576, %v5977
        %v6042 = vmul.f32 %v3578, %v5978
        %v6043 = vmul.f32 %v3580, %v5979
        %v6044 = vmul.f32 %v3582, %v5980
        %v6045 = vmul.f32 %v3584, %v5981
        %v6046 = vmul.f32 %v3586, %v5982
        %v6047 = vmul.f32 %v3588, %v5983
        %v6048 = vmul.f32 %v3590, %v5984
        %v6049 = vmul.f32 %v3592, %v5985
        %v6050 = vmul.f32 %v3594, %v5986
        %v6051 = vmul.f32 %v3596, %v5987
        %v6052 = vmul.f32 %v3598, %v5988
        %v6053 = vmul.f32 %v3600, %v5989
        %v6054 = vmul.f32 %v3602, %v5990
        %v6055 = vmul.f32 %v3604, %v5991
        %v6056 = vmul.f32 %v3606, %v5992
        %v6057 = vmul.f32 %v3608, %v5993
        %v6058 = vmul.f32 %v3610, %v5994
        %v6059 = vmul.f32 %v3612, %v5995
        %v6060 = vmul.f32 %v3614, %v5996
        %v6061 = vmul.f32 %v3616, %v5997
        %v6062 = vmul.f32 %v3618, %v5998
        %v6063 = vmul.f32 %v3620, %v5999
        %v6064 = vmul.f32 %v3622, %v6000
        %v6065 = vmul.f32 %v3624, %v6001
        %v6066 = vmul.f32 %v3626, %v6002
        %v6067 = vmul.f32 %v3628, %v6003
        %v6068 = vmul.f32 %v3630, %v6004
        %v6069 = vmul.f32 %v3632, %v6005
        %v6070 = vmul.f32 %v3634, %v6006
        %v6071 = vmul.f32 %v3636, %v6007
        %v6072 = vmul.f32 %v3638, %v6008
        %v6073 = vmul.f32 %v3640, %v6009
        %v6074 = vmul.f32 %v3642, %v6010
        %v6075 = vmul.f32 %v6011, %v1259
        %v6076 = vmul.f32 %v6012, %v1260
        %v6077 = vmul.f32 %v6013, %v1261
        %v6078 = vmul.f32 %v6014, %v1262
        %v6079 = vmul.f32 %v6015, %v1263
        %v6080 = vmul.f32 %v6016, %v1264
        %v6081 = vmul.f32 %v6017, %v1265
        %v6082 = vmul.f32 %v6018, %v1266
        %v6083 = vmul.f32 %v6019, %v1267
        %v6084 = vmul.f32 %v6020, %v1268
        %v6085 = vmul.f32 %v6021, %v1269
        %v6086 = vmul.f32 %v6022, %v1270
        %v6087 = vmul.f32 %v6023, %v1271
        %v6088 = vmul.f32 %v6024, %v1272
        %v6089 = vmul.f32 %v6025, %v1273
        %v6090 = vmul.f32 %v6026, %v1274
        %v6091 = vmul.f32 %v6027, %v1275
        %v6092 = vmul.f32 %v6028, %v1276
        %v6093 = vmul.f32 %v6029, %v1277
        %v6094 = vmul.f32 %v6030, %v1278
        %v6095 = vmul.f32 %v6031, %v1279
        %v6096 = vmul.f32 %v6032, %v1280
        %v6097 = vmul.f32 %v6033, %v1281
        %v6098 = vmul.f32 %v6034, %v1282
        %v6099 = vmul.f32 %v6035, %v1283
        %v6100 = vmul.f32 %v6036, %v1284
        %v6101 = vmul.f32 %v6037, %v1285
        %v6102 = vmul.f32 %v6038, %v1286
        %v6103 = vmul.f32 %v6039, %v1287
        %v6104 = vmul.f32 %v6040, %v1288
        %v6105 = vmul.f32 %v6041, %v1289
        %v6106 = vmul.f32 %v6042, %v1290
        %v6107 = vmul.f32 %v6043, %v1291
        %v6108 = vmul.f32 %v6044, %v1292
        %v6109 = vmul.f32 %v6045, %v1293
        %v6110 = vmul.f32 %v6046, %v1294
        %v6111 = vmul.f32 %v6047, %v1295
        %v6112 = vmul.f32 %v6048, %v1296
        %v6113 = vmul.f32 %v6049, %v1297
        %v6114 = vmul.f32 %v6050, %v1298
        %v6115 = vmul.f32 %v6051, %v1299
        %v6116 = vmul.f32 %v6052, %v1300
        %v6117 = vmul.f32 %v6053, %v1301
        %v6118 = vmul.f32 %v6054, %v1302
        %v6119 = vmul.f32 %v6055, %v1303
        %v6120 = vmul.f32 %v6056, %v1304
        %v6121 = vmul.f32 %v6057, %v1305
        %v6122 = vmul.f32 %v6058, %v1306
        %v6123 = vmul.f32 %v6059, %v1307
        %v6124 = vmul.f32 %v6060, %v1308
        %v6125 = vmul.f32 %v6061, %v1309
        %v6126 = vmul.f32 %v6062, %v1310
        %v6127 = vmul.f32 %v6063, %v1311
        %v6128 = vmul.f32 %v6064, %v1312
        %v6129 = vmul.f32 %v6065, %v1313
        %v6130 = vmul.f32 %v6066, %v1314
        %v6131 = vmul.f32 %v6067, %v1315
        %v6132 = vmul.f32 %v6068, %v1316
        %v6133 = vmul.f32 %v6069, %v1317
        %v6134 = vmul.f32 %v6070, %v1318
        %v6135 = vmul.f32 %v6071, %v1319
        %v6136 = vmul.f32 %v6072, %v1320
        %v6137 = vmul.f32 %v6073, %v1321
        %v6138 = vmul.f32 %v6074, %v1322
        %v6139 = vmul.f32 %v4476, %v5947
        %v6140 = vmul.f32 %v4478, %v5948
        %v6141 = vmul.f32 %v4480, %v5949
        %v6142 = vmul.f32 %v4482, %v5950
        %v6143 = vmul.f32 %v4484, %v5951
        %v6144 = vmul.f32 %v4486, %v5952
        %v6145 = vmul.f32 %v4488, %v5953
        %v6146 = vmul.f32 %v4490, %v5954
        %v6147 = vmul.f32 %v4492, %v5955
        %v6148 = vmul.f32 %v4494, %v5956
        %v6149 = vmul.f32 %v4496, %v5957
        %v6150 = vmul.f32 %v4498, %v5958
        %v6151 = vmul.f32 %v4500, %v5959
        %v6152 = vmul.f32 %v4502, %v5960
        %v6153 = vmul.f32 %v4504, %v5961
        %v6154 = vmul.f32 %v4506, %v5962
        %v6155 = vmul.f32 %v4508, %v5963
        %v6156 = vmul.f32 %v4510, %v5964
        %v6157 = vmul.f32 %v4512, %v5965
        %v6158 = vmul.f32 %v4514, %v5966
        %v6159 = vmul.f32 %v4516, %v5967
        %v6160 = vmul.f32 %v4518, %v5968
        %v6161 = vmul.f32 %v4520, %v5969
        %v6162 = vmul.f32 %v4522, %v5970
        %v6163 = vmul.f32 %v4524, %v5971
        %v6164 = vmul.f32 %v4526, %v5972
        %v6165 = vmul.f32 %v4528, %v5973
        %v6166 = vmul.f32 %v4530, %v5974
        %v6167 = vmul.f32 %v4532, %v5975
        %v6168 = vmul.f32 %v4534, %v5976
        %v6169 = vmul.f32 %v4536, %v5977
        %v6170 = vmul.f32 %v4538, %v5978
        %v6171 = vmul.f32 %v4540, %v5979
        %v6172 = vmul.f32 %v4542, %v5980
        %v6173 = vmul.f32 %v4544, %v5981
        %v6174 = vmul.f32 %v4546, %v5982
        %v6175 = vmul.f32 %v4548, %v5983
        %v6176 = vmul.f32 %v4550, %v5984
        %v6177 = vmul.f32 %v4552, %v5985
        %v6178 = vmul.f32 %v4554, %v5986
        %v6179 = vmul.f32 %v4556, %v5987
        %v6180 = vmul.f32 %v4558, %v5988
        %v6181 = vmul.f32 %v4560, %v5989
        %v6182 = vmul.f32 %v4562, %v5990
        %v6183 = vmul.f32 %v4564, %v5991
        %v6184 = vmul.f32 %v4566, %v5992
        %v6185 = vmul.f32 %v4568, %v5993
        %v6186 = vmul.f32 %v4570, %v5994
        %v6187 = vmul.f32 %v4572, %v5995
        %v6188 = vmul.f32 %v4574, %v5996
        %v6189 = vmul.f32 %v4576, %v5997
        %v6190 = vmul.f32 %v4578, %v5998
        %v6191 = vmul.f32 %v4580, %v5999
        %v6192 = vmul.f32 %v4582, %v6000
        %v6193 = vmul.f32 %v4584, %v6001
        %v6194 = vmul.f32 %v4586, %v6002
        %v6195 = vmul.f32 %v4588, %v6003
        %v6196 = vmul.f32 %v4590, %v6004
        %v6197 = vmul.f32 %v4592, %v6005
        %v6198 = vmul.f32 %v4594, %v6006
        %v6199 = vmul.f32 %v4596, %v6007
        %v6200 = vmul.f32 %v4598, %v6008
        %v6201 = vmul.f32 %v4600, %v6009
        %v6202 = vmul.f32 %v4602, %v6010
        %v6203 = vmul.f32 %v6139, %v1978
        %v6204 = vmul.f32 %v6140, %v1979
        %v6205 = vmul.f32 %v6141, %v1980
        %v6206 = vmul.f32 %v6142, %v1981
        %v6207 = vmul.f32 %v6143, %v1982
        %v6208 = vmul.f32 %v6144, %v1983
        %v6209 = vmul.f32 %v6145, %v1984
        %v6210 = vmul.f32 %v6146, %v1985
        %v6211 = vmul.f32 %v6147, %v1986
        %v6212 = vmul.f32 %v6148, %v1987
        %v6213 = vmul.f32 %v6149, %v1988
        %v6214 = vmul.f32 %v6150, %v1989
        %v6215 = vmul.f32 %v6151, %v1990
        %v6216 = vmul.f32 %v6152, %v1991
        %v6217 = vmul.f32 %v6153, %v1992
        %v6218 = vmul.f32 %v6154, %v1993
        %v6219 = vmul.f32 %v6155, %v1994
        %v6220 = vmul.f32 %v6156, %v1995
        %v6221 = vmul.f32 %v6157, %v1996
        %v6222 = vmul.f32 %v6158, %v1997
        %v6223 = vmul.f32 %v6159, %v1998
        %v6224 = vmul.f32 %v6160, %v1999
        %v6225 = vmul.f32 %v6161, %v2000
        %v6226 = vmul.f32 %v6162, %v2001
        %v6227 = vmul.f32 %v6163, %v2002
        %v6228 = vmul.f32 %v6164, %v2003
        %v6229 = vmul.f32 %v6165, %v2004
        %v6230 = vmul.f32 %v6166, %v2005
        %v6231 = vmul.f32 %v6167, %v2006
        %v6232 = vmul.f32 %v6168, %v2007
        %v6233 = vmul.f32 %v6169, %v2008
        %v6234 = vmul.f32 %v6170, %v2009
        %v6235 = vmul.f32 %v6171, %v2010
        %v6236 = vmul.f32 %v6172, %v2011
        %v6237 = vmul.f32 %v6173, %v2012
        %v6238 = vmul.f32 %v6174, %v2013
        %v6239 = vmul.f32 %v6175, %v2014
        %v6240 = vmul.f32 %v6176, %v2015
        %v6241 = vmul.f32 %v6177, %v2016
        %v6242 = vmul.f32 %v6178, %v2017
        %v6243 = vmul.f32 %v6179, %v2018
        %v6244 = vmul.f32 %v6180, %v2019
        %v6245 = vmul.f32 %v6181, %v2020
        %v6246 = vmul.f32 %v6182, %v2021
        %v6247 = vmul.f32 %v6183, %v2022
        %v6248 = vmul.f32 %v6184, %v2023
        %v6249 = vmul.f32 %v6185, %v2024
        %v6250 = vmul.f32 %v6186, %v2025
        %v6251 = vmul.f32 %v6187, %v2026
        %v6252 = vmul.f32 %v6188, %v2027
        %v6253 = vmul.f32 %v6189, %v2028
        %v6254 = vmul.f32 %v6190, %v2029
        %v6255 = vmul.f32 %v6191, %v2030
        %v6256 = vmul.f32 %v6192, %v2031
        %v6257 = vmul.f32 %v6193, %v2032
        %v6258 = vmul.f32 %v6194, %v2033
        %v6259 = vmul.f32 %v6195, %v2034
        %v6260 = vmul.f32 %v6196, %v2035
        %v6261 = vmul.f32 %v6197, %v2036
        %v6262 = vmul.f32 %v6198, %v2037
        %v6263 = vmul.f32 %v6199, %v2038
        %v6264 = vmul.f32 %v6200, %v2039
        %v6265 = vmul.f32 %v6201, %v2040
        %v6266 = vmul.f32 %v6202, %v2041
        %v6267 = vadd.f32 %v6075, %v6203
        %v6268 = vadd.f32 %v6076, %v6204
        %v6269 = vadd.f32 %v6077, %v6205
        %v6270 = vadd.f32 %v6078, %v6206
        %v6271 = vadd.f32 %v6079, %v6207
        %v6272 = vadd.f32 %v6080, %v6208
        %v6273 = vadd.f32 %v6081, %v6209
        %v6274 = vadd.f32 %v6082, %v6210
        %v6275 = vadd.f32 %v6083, %v6211
        %v6276 = vadd.f32 %v6084, %v6212
        %v6277 = vadd.f32 %v6085, %v6213
        %v6278 = vadd.f32 %v6086, %v6214
        %v6279 = vadd.f32 %v6087, %v6215
        %v6280 = vadd.f32 %v6088, %v6216
        %v6281 = vadd.f32 %v6089, %v6217
        %v6282 = vadd.f32 %v6090, %v6218
        %v6283 = vadd.f32 %v6091, %v6219
        %v6284 = vadd.f32 %v6092, %v6220
        %v6285 = vadd.f32 %v6093, %v6221
        %v6286 = vadd.f32 %v6094, %v6222
        %v6287 = vadd.f32 %v6095, %v6223
        %v6288 = vadd.f32 %v6096, %v6224
        %v6289 = vadd.f32 %v6097, %v6225
        %v6290 = vadd.f32 %v6098, %v6226
        %v6291 = vadd.f32 %v6099, %v6227
        %v6292 = vadd.f32 %v6100, %v6228
        %v6293 = vadd.f32 %v6101, %v6229
        %v6294 = vadd.f32 %v6102, %v6230
        %v6295 = vadd.f32 %v6103, %v6231
        %v6296 = vadd.f32 %v6104, %v6232
        %v6297 = vadd.f32 %v6105, %v6233
        %v6298 = vadd.f32 %v6106, %v6234
        %v6299 = vadd.f32 %v6107, %v6235
        %v6300 = vadd.f32 %v6108, %v6236
        %v6301 = vadd.f32 %v6109, %v6237
        %v6302 = vadd.f32 %v6110, %v6238
        %v6303 = vadd.f32 %v6111, %v6239
        %v6304 = vadd.f32 %v6112, %v6240
        %v6305 = vadd.f32 %v6113, %v6241
        %v6306 = vadd.f32 %v6114, %v6242
        %v6307 = vadd.f32 %v6115, %v6243
        %v6308 = vadd.f32 %v6116, %v6244
        %v6309 = vadd.f32 %v6117, %v6245
        %v6310 = vadd.f32 %v6118, %v6246
        %v6311 = vadd.f32 %v6119, %v6247
        %v6312 = vadd.f32 %v6120, %v6248
        %v6313 = vadd.f32 %v6121, %v6249
        %v6314 = vadd.f32 %v6122, %v6250
        %v6315 = vadd.f32 %v6123, %v6251
        %v6316 = vadd.f32 %v6124, %v6252
        %v6317 = vadd.f32 %v6125, %v6253
        %v6318 = vadd.f32 %v6126, %v6254
        %v6319 = vadd.f32 %v6127, %v6255
        %v6320 = vadd.f32 %v6128, %v6256
        %v6321 = vadd.f32 %v6129, %v6257
        %v6322 = vadd.f32 %v6130, %v6258
        %v6323 = vadd.f32 %v6131, %v6259
        %v6324 = vadd.f32 %v6132, %v6260
        %v6325 = vadd.f32 %v6133, %v6261
        %v6326 = vadd.f32 %v6134, %v6262
        %v6327 = vadd.f32 %v6135, %v6263
        %v6328 = vadd.f32 %v6136, %v6264
        %v6329 = vadd.f32 %v6137, %v6265
        %v6330 = vadd.f32 %v6138, %v6266
        %v6331 = vmul.f32 %v5564, %v5947
        %v6332 = vmul.f32 %v5566, %v5948
        %v6333 = vmul.f32 %v5568, %v5949
        %v6334 = vmul.f32 %v5570, %v5950
        %v6335 = vmul.f32 %v5572, %v5951
        %v6336 = vmul.f32 %v5574, %v5952
        %v6337 = vmul.f32 %v5576, %v5953
        %v6338 = vmul.f32 %v5578, %v5954
        %v6339 = vmul.f32 %v5580, %v5955
        %v6340 = vmul.f32 %v5582, %v5956
        %v6341 = vmul.f32 %v5584, %v5957
        %v6342 = vmul.f32 %v5586, %v5958
        %v6343 = vmul.f32 %v5588, %v5959
        %v6344 = vmul.f32 %v5590, %v5960
        %v6345 = vmul.f32 %v5592, %v5961
        %v6346 = vmul.f32 %v5594, %v5962
        %v6347 = vmul.f32 %v5596, %v5963
        %v6348 = vmul.f32 %v5598, %v5964
        %v6349 = vmul.f32 %v5600, %v5965
        %v6350 = vmul.f32 %v5602, %v5966
        %v6351 = vmul.f32 %v5604, %v5967
        %v6352 = vmul.f32 %v5606, %v5968
        %v6353 = vmul.f32 %v5608, %v5969
        %v6354 = vmul.f32 %v5610, %v5970
        %v6355 = vmul.f32 %v5612, %v5971
        %v6356 = vmul.f32 %v5614, %v5972
        %v6357 = vmul.f32 %v5616, %v5973
        %v6358 = vmul.f32 %v5618, %v5974
        %v6359 = vmul.f32 %v5620, %v5975
        %v6360 = vmul.f32 %v5622, %v5976
        %v6361 = vmul.f32 %v5624, %v5977
        %v6362 = vmul.f32 %v5626, %v5978
        %v6363 = vmul.f32 %v5628, %v5979
        %v6364 = vmul.f32 %v5630, %v5980
        %v6365 = vmul.f32 %v5632, %v5981
        %v6366 = vmul.f32 %v5634, %v5982
        %v6367 = vmul.f32 %v5636, %v5983
        %v6368 = vmul.f32 %v5638, %v5984
        %v6369 = vmul.f32 %v5640, %v5985
        %v6370 = vmul.f32 %v5642, %v5986
        %v6371 = vmul.f32 %v5644, %v5987
        %v6372 = vmul.f32 %v5646, %v5988
        %v6373 = vmul.f32 %v5648, %v5989
        %v6374 = vmul.f32 %v5650, %v5990
        %v6375 = vmul.f32 %v5652, %v5991
        %v6376 = vmul.f32 %v5654, %v5992
        %v6377 = vmul.f32 %v5656, %v5993
        %v6378 = vmul.f32 %v5658, %v5994
        %v6379 = vmul.f32 %v5660, %v5995
        %v6380 = vmul.f32 %v5662, %v5996
        %v6381 = vmul.f32 %v5664, %v5997
        %v6382 = vmul.f32 %v5666, %v5998
        %v6383 = vmul.f32 %v5668, %v5999
        %v6384 = vmul.f32 %v5670, %v6000
        %v6385 = vmul.f32 %v5672, %v6001
        %v6386 = vmul.f32 %v5674, %v6002
        %v6387 = vmul.f32 %v5676, %v6003
        %v6388 = vmul.f32 %v5678, %v6004
        %v6389 = vmul.f32 %v5680, %v6005
        %v6390 = vmul.f32 %v5682, %v6006
        %v6391 = vmul.f32 %v5684, %v6007
        %v6392 = vmul.f32 %v5686, %v6008
        %v6393 = vmul.f32 %v5688, %v6009
        %v6394 = vmul.f32 %v5690, %v6010
        %v6395 = vmul.f32 %v6331, %v2683
        %v6396 = vmul.f32 %v6332, %v2684
        %v6397 = vmul.f32 %v6333, %v2685
        %v6398 = vmul.f32 %v6334, %v2686
        %v6399 = vmul.f32 %v6335, %v2687
        %v6400 = vmul.f32 %v6336, %v2688
        %v6401 = vmul.f32 %v6337, %v2689
        %v6402 = vmul.f32 %v6338, %v2690
        %v6403 = vmul.f32 %v6339, %v2691
        %v6404 = vmul.f32 %v6340, %v2692
        %v6405 = vmul.f32 %v6341, %v2693
        %v6406 = vmul.f32 %v6342, %v2694
        %v6407 = vmul.f32 %v6343, %v2695
        %v6408 = vmul.f32 %v6344, %v2696
        %v6409 = vmul.f32 %v6345, %v2697
        %v6410 = vmul.f32 %v6346, %v2698
        %v6411 = vmul.f32 %v6347, %v2699
        %v6412 = vmul.f32 %v6348, %v2700
        %v6413 = vmul.f32 %v6349, %v2701
        %v6414 = vmul.f32 %v6350, %v2702
        %v6415 = vmul.f32 %v6351, %v2703
        %v6416 = vmul.f32 %v6352, %v2704
        %v6417 = vmul.f32 %v6353, %v2705
        %v6418 = vmul.f32 %v6354, %v2706
        %v6419 = vmul.f32 %v6355, %v2707
        %v6420 = vmul.f32 %v6356, %v2708
        %v6421 = vmul.f32 %v6357, %v2709
        %v6422 = vmul.f32 %v6358, %v2710
        %v6423 = vmul.f32 %v6359, %v2711
        %v6424 = vmul.f32 %v6360, %v2712
        %v6425 = vmul.f32 %v6361, %v2713
        %v6426 = vmul.f32 %v6362, %v2714
        %v6427 = vmul.f32 %v6363, %v2715
        %v6428 = vmul.f32 %v6364, %v2716
        %v6429 = vmul.f32 %v6365, %v2717
        %v6430 = vmul.f32 %v6366, %v2718
        %v6431 = vmul.f32 %v6367, %v2719
        %v6432 = vmul.f32 %v6368, %v2720
        %v6433 = vmul.f32 %v6369, %v2721
        %v6434 = vmul.f32 %v6370, %v2722
        %v6435 = vmul.f32 %v6371, %v2723
        %v6436 = vmul.f32 %v6372, %v2724
        %v6437 = vmul.f32 %v6373, %v2725
        %v6438 = vmul.f32 %v6374, %v2726
        %v6439 = vmul.f32 %v6375, %v2727
        %v6440 = vmul.f32 %v6376, %v2728
        %v6441 = vmul.f32 %v6377, %v2729
        %v6442 = vmul.f32 %v6378, %v2730
        %v6443 = vmul.f32 %v6379, %v2731
        %v6444 = vmul.f32 %v6380, %v2732
        %v6445 = vmul.f32 %v6381, %v2733
        %v6446 = vmul.f32 %v6382, %v2734
        %v6447 = vmul.f32 %v6383, %v2735
        %v6448 = vmul.f32 %v6384, %v2736
        %v6449 = vmul.f32 %v6385, %v2737
        %v6450 = vmul.f32 %v6386, %v2738
        %v6451 = vmul.f32 %v6387, %v2739
        %v6452 = vmul.f32 %v6388, %v2740
        %v6453 = vmul.f32 %v6389, %v2741
        %v6454 = vmul.f32 %v6390, %v2742
        %v6455 = vmul.f32 %v6391, %v2743
        %v6456 = vmul.f32 %v6392, %v2744
        %v6457 = vmul.f32 %v6393, %v2745
        %v6458 = vmul.f32 %v6394, %v2746
        %v6459 = vadd.f32 %v6267, %v6395
        %v6460 = vadd.f32 %v6268, %v6396
        %v6461 = vadd.f32 %v6269, %v6397
        %v6462 = vadd.f32 %v6270, %v6398
        %v6463 = vadd.f32 %v6271, %v6399
        %v6464 = vadd.f32 %v6272, %v6400
        %v6465 = vadd.f32 %v6273, %v6401
        %v6466 = vadd.f32 %v6274, %v6402
        %v6467 = vadd.f32 %v6275, %v6403
        %v6468 = vadd.f32 %v6276, %v6404
        %v6469 = vadd.f32 %v6277, %v6405
        %v6470 = vadd.f32 %v6278, %v6406
        %v6471 = vadd.f32 %v6279, %v6407
        %v6472 = vadd.f32 %v6280, %v6408
        %v6473 = vadd.f32 %v6281, %v6409
        %v6474 = vadd.f32 %v6282, %v6410
        %v6475 = vadd.f32 %v6283, %v6411
        %v6476 = vadd.f32 %v6284, %v6412
        %v6477 = vadd.f32 %v6285, %v6413
        %v6478 = vadd.f32 %v6286, %v6414
        %v6479 = vadd.f32 %v6287, %v6415
        %v6480 = vadd.f32 %v6288, %v6416
        %v6481 = vadd.f32 %v6289, %v6417
        %v6482 = vadd.f32 %v6290, %v6418
        %v6483 = vadd.f32 %v6291, %v6419
        %v6484 = vadd.f32 %v6292, %v6420
        %v6485 = vadd.f32 %v6293, %v6421
        %v6486 = vadd.f32 %v6294, %v6422
        %v6487 = vadd.f32 %v6295, %v6423
        %v6488 = vadd.f32 %v6296, %v6424
        %v6489 = vadd.f32 %v6297, %v6425
        %v6490 = vadd.f32 %v6298, %v6426
        %v6491 = vadd.f32 %v6299, %v6427
        %v6492 = vadd.f32 %v6300, %v6428
        %v6493 = vadd.f32 %v6301, %v6429
        %v6494 = vadd.f32 %v6302, %v6430
        %v6495 = vadd.f32 %v6303, %v6431
        %v6496 = vadd.f32 %v6304, %v6432
        %v6497 = vadd.f32 %v6305, %v6433
        %v6498 = vadd.f32 %v6306, %v6434
        %v6499 = vadd.f32 %v6307, %v6435
        %v6500 = vadd.f32 %v6308, %v6436
        %v6501 = vadd.f32 %v6309, %v6437
        %v6502 = vadd.f32 %v6310, %v6438
        %v6503 = vadd.f32 %v6311, %v6439
        %v6504 = vadd.f32 %v6312, %v6440
        %v6505 = vadd.f32 %v6313, %v6441
        %v6506 = vadd.f32 %v6314, %v6442
        %v6507 = vadd.f32 %v6315, %v6443
        %v6508 = vadd.f32 %v6316, %v6444
        %v6509 = vadd.f32 %v6317, %v6445
        %v6510 = vadd.f32 %v6318, %v6446
        %v6511 = vadd.f32 %v6319, %v6447
        %v6512 = vadd.f32 %v6320, %v6448
        %v6513 = vadd.f32 %v6321, %v6449
        %v6514 = vadd.f32 %v6322, %v6450
        %v6515 = vadd.f32 %v6323, %v6451
        %v6516 = vadd.f32 %v6324, %v6452
        %v6517 = vadd.f32 %v6325, %v6453
        %v6518 = vadd.f32 %v6326, %v6454
        %v6519 = vadd.f32 %v6327, %v6455
        %v6520 = vadd.f32 %v6328, %v6456
        %v6521 = vadd.f32 %v6329, %v6457
        %v6522 = vadd.f32 %v6330, %v6458
        %v6523 = vld [vmem:[%s1183] sm:$0xf]
        %v6524 = vld [vmem:[%s1183 + $0x4] sm:$0xf]
        %v6525 = vld [vmem:[%s1183 + $0x8] sm:$0xf]
        %v6526 = vld [vmem:[%s1183 + $0xc] sm:$0xf]
        %v6527 = vld [vmem:[%s1183 + $0x10] sm:$0xf]
        %v6528 = vld [vmem:[%s1183 + $0x14] sm:$0xf]
        %v6529 = vld [vmem:[%s1183 + $0x18] sm:$0xf]
        %v6530 = vld [vmem:[%s1183 + $0x1c] sm:$0xf]
        %v6531 = vld [vmem:[%s1183 + $0x20] sm:$0xf]
        %v6532 = vld [vmem:[%s1183 + $0x24] sm:$0xf]
        %v6533 = vld [vmem:[%s1183 + $0x28] sm:$0xf]
        %v6534 = vld [vmem:[%s1183 + $0x2c] sm:$0xf]
        %v6535 = vld [vmem:[%s1183 + $0x30] sm:$0xf]
        %v6536 = vld [vmem:[%s1183 + $0x34] sm:$0xf]
        %v6537 = vld [vmem:[%s1183 + $0x38] sm:$0xf]
        %v6538 = vld [vmem:[%s1183 + $0x3c] sm:$0xf]
        %v6539 = vld [vmem:[%s1183 + $0x40] sm:$0xf]
        %v6540 = vld [vmem:[%s1183 + $0x44] sm:$0xf]
        %v6541 = vld [vmem:[%s1183 + $0x48] sm:$0xf]
        %v6542 = vld [vmem:[%s1183 + $0x4c] sm:$0xf]
        %v6543 = vld [vmem:[%s1183 + $0x50] sm:$0xf]
        %v6544 = vld [vmem:[%s1183 + $0x54] sm:$0xf]
        %v6545 = vld [vmem:[%s1183 + $0x58] sm:$0xf]
        %v6546 = vld [vmem:[%s1183 + $0x5c] sm:$0xf]
        %v6547 = vld [vmem:[%s1183 + $0x60] sm:$0xf]
        %v6548 = vld [vmem:[%s1183 + $0x64] sm:$0xf]
        %v6549 = vld [vmem:[%s1183 + $0x68] sm:$0xf]
        %v6550 = vld [vmem:[%s1183 + $0x6c] sm:$0xf]
        %v6551 = vld [vmem:[%s1183 + $0x70] sm:$0xf]
        %v6552 = vld [vmem:[%s1183 + $0x74] sm:$0xf]
        %v6553 = vld [vmem:[%s1183 + $0x78] sm:$0xf]
        %v6554 = vld [vmem:[%s1183 + $0x7c] sm:$0xf]
        %v6555 = vld [vmem:[%s1183 + $0x80] sm:$0xf]
        %v6556 = vld [vmem:[%s1183 + $0x84] sm:$0xf]
        %v6557 = vld [vmem:[%s1183 + $0x88] sm:$0xf]
        %v6558 = vld [vmem:[%s1183 + $0x8c] sm:$0xf]
        %v6559 = vld [vmem:[%s1183 + $0x90] sm:$0xf]
        %v6560 = vld [vmem:[%s1183 + $0x94] sm:$0xf]
        %v6561 = vld [vmem:[%s1183 + $0x98] sm:$0xf]
        %v6562 = vld [vmem:[%s1183 + $0x9c] sm:$0xf]
        %v6563 = vld [vmem:[%s1183 + $0xa0] sm:$0xf]
        %v6564 = vld [vmem:[%s1183 + $0xa4] sm:$0xf]
        %v6565 = vld [vmem:[%s1183 + $0xa8] sm:$0xf]
        %v6566 = vld [vmem:[%s1183 + $0xac] sm:$0xf]
        %v6567 = vld [vmem:[%s1183 + $0xb0] sm:$0xf]
        %v6568 = vld [vmem:[%s1183 + $0xb4] sm:$0xf]
        %v6569 = vld [vmem:[%s1183 + $0xb8] sm:$0xf]
        %v6570 = vld [vmem:[%s1183 + $0xbc] sm:$0xf]
        %v6571 = vld [vmem:[%s1183 + $0xc0] sm:$0xf]
        %v6572 = vld [vmem:[%s1183 + $0xc4] sm:$0xf]
        %v6573 = vld [vmem:[%s1183 + $0xc8] sm:$0xf]
        %v6574 = vld [vmem:[%s1183 + $0xcc] sm:$0xf]
        %v6575 = vld [vmem:[%s1183 + $0xd0] sm:$0xf]
        %v6576 = vld [vmem:[%s1183 + $0xd4] sm:$0xf]
        %v6577 = vld [vmem:[%s1183 + $0xd8] sm:$0xf]
        %v6578 = vld [vmem:[%s1183 + $0xdc] sm:$0xf]
        %v6579 = vld [vmem:[%s1183 + $0xe0] sm:$0xf]
        %v6580 = vld [vmem:[%s1183 + $0xe4] sm:$0xf]
        %v6581 = vld [vmem:[%s1183 + $0xe8] sm:$0xf]
        %v6582 = vld [vmem:[%s1183 + $0xec] sm:$0xf]
        %v6583 = vld [vmem:[%s1183 + $0xf0] sm:$0xf]
        %v6584 = vld [vmem:[%s1183 + $0xf4] sm:$0xf]
        %v6585 = vld [vmem:[%s1183 + $0xf8] sm:$0xf]
        %v6586 = vld [vmem:[%s1183 + $0xfc] sm:$0xf]
        %v6587 = vunpack.c.l.bf16 %v6523
        %v6588 = vunpack.c.l.bf16 %v6524
        %v6589 = vunpack.c.l.bf16 %v6525
        %v6590 = vunpack.c.l.bf16 %v6526
        %v6591 = vunpack.c.l.bf16 %v6527
        %v6592 = vunpack.c.l.bf16 %v6528
        %v6593 = vunpack.c.l.bf16 %v6529
        %v6594 = vunpack.c.l.bf16 %v6530
        %v6595 = vunpack.c.l.bf16 %v6531
        %v6596 = vunpack.c.l.bf16 %v6532
        %v6597 = vunpack.c.l.bf16 %v6533
        %v6598 = vunpack.c.l.bf16 %v6534
        %v6599 = vunpack.c.l.bf16 %v6535
        %v6600 = vunpack.c.l.bf16 %v6536
        %v6601 = vunpack.c.l.bf16 %v6537
        %v6602 = vunpack.c.l.bf16 %v6538
        %v6603 = vunpack.c.l.bf16 %v6539
        %v6604 = vunpack.c.l.bf16 %v6540
        %v6605 = vunpack.c.l.bf16 %v6541
        %v6606 = vunpack.c.l.bf16 %v6542
        %v6607 = vunpack.c.l.bf16 %v6543
        %v6608 = vunpack.c.l.bf16 %v6544
        %v6609 = vunpack.c.l.bf16 %v6545
        %v6610 = vunpack.c.l.bf16 %v6546
        %v6611 = vunpack.c.l.bf16 %v6547
        %v6612 = vunpack.c.l.bf16 %v6548
        %v6613 = vunpack.c.l.bf16 %v6549
        %v6614 = vunpack.c.l.bf16 %v6550
        %v6615 = vunpack.c.l.bf16 %v6551
        %v6616 = vunpack.c.l.bf16 %v6552
        %v6617 = vunpack.c.l.bf16 %v6553
        %v6618 = vunpack.c.l.bf16 %v6554
        %v6619 = vunpack.c.l.bf16 %v6555
        %v6620 = vunpack.c.l.bf16 %v6556
        %v6621 = vunpack.c.l.bf16 %v6557
        %v6622 = vunpack.c.l.bf16 %v6558
        %v6623 = vunpack.c.l.bf16 %v6559
        %v6624 = vunpack.c.l.bf16 %v6560
        %v6625 = vunpack.c.l.bf16 %v6561
        %v6626 = vunpack.c.l.bf16 %v6562
        %v6627 = vunpack.c.l.bf16 %v6563
        %v6628 = vunpack.c.l.bf16 %v6564
        %v6629 = vunpack.c.l.bf16 %v6565
        %v6630 = vunpack.c.l.bf16 %v6566
        %v6631 = vunpack.c.l.bf16 %v6567
        %v6632 = vunpack.c.l.bf16 %v6568
        %v6633 = vunpack.c.l.bf16 %v6569
        %v6634 = vunpack.c.l.bf16 %v6570
        %v6635 = vunpack.c.l.bf16 %v6571
        %v6636 = vunpack.c.l.bf16 %v6572
        %v6637 = vunpack.c.l.bf16 %v6573
        %v6638 = vunpack.c.l.bf16 %v6574
        %v6639 = vunpack.c.l.bf16 %v6575
        %v6640 = vunpack.c.l.bf16 %v6576
        %v6641 = vunpack.c.l.bf16 %v6577
        %v6642 = vunpack.c.l.bf16 %v6578
        %v6643 = vunpack.c.l.bf16 %v6579
        %v6644 = vunpack.c.l.bf16 %v6580
        %v6645 = vunpack.c.l.bf16 %v6581
        %v6646 = vunpack.c.l.bf16 %v6582
        %v6647 = vunpack.c.l.bf16 %v6583
        %v6648 = vunpack.c.l.bf16 %v6584
        %v6649 = vunpack.c.l.bf16 %v6585
        %v6650 = vunpack.c.l.bf16 %v6586
        %6715 = vrot.lane.b32.xlu0 %v6587, 64
        %v6716 = vpop.permute.xlu0 %6715
        %6717 = vrot.lane.b32.xlu0 %v6588, 64
        %v6718 = vpop.permute.xlu0 %6717
        %6719 = vrot.lane.b32.xlu0 %v6589, 64
        %v6720 = vpop.permute.xlu0 %6719
        %6721 = vrot.lane.b32.xlu0 %v6590, 64
        %v6722 = vpop.permute.xlu0 %6721
        %6723 = vrot.lane.b32.xlu0 %v6591, 64
        %v6724 = vpop.permute.xlu0 %6723
        %6725 = vrot.lane.b32.xlu0 %v6592, 64
        %v6726 = vpop.permute.xlu0 %6725
        %6727 = vrot.lane.b32.xlu0 %v6593, 64
        %v6728 = vpop.permute.xlu0 %6727
        %6729 = vrot.lane.b32.xlu0 %v6594, 64
        %v6730 = vpop.permute.xlu0 %6729
        %6731 = vrot.lane.b32.xlu0 %v6595, 64
        %v6732 = vpop.permute.xlu0 %6731
        %6733 = vrot.lane.b32.xlu0 %v6596, 64
        %v6734 = vpop.permute.xlu0 %6733
        %6735 = vrot.lane.b32.xlu0 %v6597, 64
        %v6736 = vpop.permute.xlu0 %6735
        %6737 = vrot.lane.b32.xlu0 %v6598, 64
        %v6738 = vpop.permute.xlu0 %6737
        %6739 = vrot.lane.b32.xlu0 %v6599, 64
        %v6740 = vpop.permute.xlu0 %6739
        %6741 = vrot.lane.b32.xlu0 %v6600, 64
        %v6742 = vpop.permute.xlu0 %6741
        %6743 = vrot.lane.b32.xlu0 %v6601, 64
        %v6744 = vpop.permute.xlu0 %6743
        %6745 = vrot.lane.b32.xlu0 %v6602, 64
        %v6746 = vpop.permute.xlu0 %6745
        %6747 = vrot.lane.b32.xlu0 %v6603, 64
        %v6748 = vpop.permute.xlu0 %6747
        %6749 = vrot.lane.b32.xlu0 %v6604, 64
        %v6750 = vpop.permute.xlu0 %6749
        %6751 = vrot.lane.b32.xlu0 %v6605, 64
        %v6752 = vpop.permute.xlu0 %6751
        %6753 = vrot.lane.b32.xlu0 %v6606, 64
        %v6754 = vpop.permute.xlu0 %6753
        %6755 = vrot.lane.b32.xlu0 %v6607, 64
        %v6756 = vpop.permute.xlu0 %6755
        %6757 = vrot.lane.b32.xlu0 %v6608, 64
        %v6758 = vpop.permute.xlu0 %6757
        %6759 = vrot.lane.b32.xlu0 %v6609, 64
        %v6760 = vpop.permute.xlu0 %6759
        %6761 = vrot.lane.b32.xlu0 %v6610, 64
        %v6762 = vpop.permute.xlu0 %6761
        %6763 = vrot.lane.b32.xlu0 %v6611, 64
        %v6764 = vpop.permute.xlu0 %6763
        %6765 = vrot.lane.b32.xlu0 %v6612, 64
        %v6766 = vpop.permute.xlu0 %6765
        %6767 = vrot.lane.b32.xlu0 %v6613, 64
        %v6768 = vpop.permute.xlu0 %6767
        %6769 = vrot.lane.b32.xlu0 %v6614, 64
        %v6770 = vpop.permute.xlu0 %6769
        %6771 = vrot.lane.b32.xlu0 %v6615, 64
        %v6772 = vpop.permute.xlu0 %6771
        %6773 = vrot.lane.b32.xlu0 %v6616, 64
        %v6774 = vpop.permute.xlu0 %6773
        %6775 = vrot.lane.b32.xlu0 %v6617, 64
        %v6776 = vpop.permute.xlu0 %6775
        %6777 = vrot.lane.b32.xlu0 %v6618, 64
        %v6778 = vpop.permute.xlu0 %6777
        %6779 = vrot.lane.b32.xlu0 %v6619, 64
        %v6780 = vpop.permute.xlu0 %6779
        %6781 = vrot.lane.b32.xlu0 %v6620, 64
        %v6782 = vpop.permute.xlu0 %6781
        %6783 = vrot.lane.b32.xlu0 %v6621, 64
        %v6784 = vpop.permute.xlu0 %6783
        %6785 = vrot.lane.b32.xlu0 %v6622, 64
        %v6786 = vpop.permute.xlu0 %6785
        %6787 = vrot.lane.b32.xlu0 %v6623, 64
        %v6788 = vpop.permute.xlu0 %6787
        %6789 = vrot.lane.b32.xlu0 %v6624, 64
        %v6790 = vpop.permute.xlu0 %6789
        %6791 = vrot.lane.b32.xlu0 %v6625, 64
        %v6792 = vpop.permute.xlu0 %6791
        %6793 = vrot.lane.b32.xlu0 %v6626, 64
        %v6794 = vpop.permute.xlu0 %6793
        %6795 = vrot.lane.b32.xlu0 %v6627, 64
        %v6796 = vpop.permute.xlu0 %6795
        %6797 = vrot.lane.b32.xlu0 %v6628, 64
        %v6798 = vpop.permute.xlu0 %6797
        %6799 = vrot.lane.b32.xlu0 %v6629, 64
        %v6800 = vpop.permute.xlu0 %6799
        %6801 = vrot.lane.b32.xlu0 %v6630, 64
        %v6802 = vpop.permute.xlu0 %6801
        %6803 = vrot.lane.b32.xlu0 %v6631, 64
        %v6804 = vpop.permute.xlu0 %6803
        %6805 = vrot.lane.b32.xlu0 %v6632, 64
        %v6806 = vpop.permute.xlu0 %6805
        %6807 = vrot.lane.b32.xlu0 %v6633, 64
        %v6808 = vpop.permute.xlu0 %6807
        %6809 = vrot.lane.b32.xlu0 %v6634, 64
        %v6810 = vpop.permute.xlu0 %6809
        %6811 = vrot.lane.b32.xlu0 %v6635, 64
        %v6812 = vpop.permute.xlu0 %6811
        %6813 = vrot.lane.b32.xlu0 %v6636, 64
        %v6814 = vpop.permute.xlu0 %6813
        %6815 = vrot.lane.b32.xlu0 %v6637, 64
        %v6816 = vpop.permute.xlu0 %6815
        %6817 = vrot.lane.b32.xlu0 %v6638, 64
        %v6818 = vpop.permute.xlu0 %6817
        %6819 = vrot.lane.b32.xlu0 %v6639, 64
        %v6820 = vpop.permute.xlu0 %6819
        %6821 = vrot.lane.b32.xlu0 %v6640, 64
        %v6822 = vpop.permute.xlu0 %6821
        %6823 = vrot.lane.b32.xlu0 %v6641, 64
        %v6824 = vpop.permute.xlu0 %6823
        %6825 = vrot.lane.b32.xlu0 %v6642, 64
        %v6826 = vpop.permute.xlu0 %6825
        %6827 = vrot.lane.b32.xlu0 %v6643, 64
        %v6828 = vpop.permute.xlu0 %6827
        %6829 = vrot.lane.b32.xlu0 %v6644, 64
        %v6830 = vpop.permute.xlu0 %6829
        %6831 = vrot.lane.b32.xlu0 %v6645, 64
        %v6832 = vpop.permute.xlu0 %6831
        %6833 = vrot.lane.b32.xlu0 %v6646, 64
        %v6834 = vpop.permute.xlu0 %6833
        %6835 = vrot.lane.b32.xlu0 %v6647, 64
        %v6836 = vpop.permute.xlu0 %6835
        %6837 = vrot.lane.b32.xlu0 %v6648, 64
        %v6838 = vpop.permute.xlu0 %6837
        %6839 = vrot.lane.b32.xlu0 %v6649, 64
        %v6840 = vpop.permute.xlu0 %6839
        %6841 = vrot.lane.b32.xlu0 %v6650, 64
        %v6842 = vpop.permute.xlu0 %6841
        %v6907 = vsel %vm1393, %v6459, %v6716
        %v6908 = vsel %vm1393, %v6460, %v6718
        %v6909 = vsel %vm1393, %v6461, %v6720
        %v6910 = vsel %vm1393, %v6462, %v6722
        %v6911 = vsel %vm1393, %v6463, %v6724
        %v6912 = vsel %vm1393, %v6464, %v6726
        %v6913 = vsel %vm1393, %v6465, %v6728
        %v6914 = vsel %vm1393, %v6466, %v6730
        %v6915 = vsel %vm1393, %v6467, %v6732
        %v6916 = vsel %vm1393, %v6468, %v6734
        %v6917 = vsel %vm1393, %v6469, %v6736
        %v6918 = vsel %vm1393, %v6470, %v6738
        %v6919 = vsel %vm1393, %v6471, %v6740
        %v6920 = vsel %vm1393, %v6472, %v6742
        %v6921 = vsel %vm1393, %v6473, %v6744
        %v6922 = vsel %vm1393, %v6474, %v6746
        %v6923 = vsel %vm1393, %v6475, %v6748
        %v6924 = vsel %vm1393, %v6476, %v6750
        %v6925 = vsel %vm1393, %v6477, %v6752
        %v6926 = vsel %vm1393, %v6478, %v6754
        %v6927 = vsel %vm1393, %v6479, %v6756
        %v6928 = vsel %vm1393, %v6480, %v6758
        %v6929 = vsel %vm1393, %v6481, %v6760
        %v6930 = vsel %vm1393, %v6482, %v6762
        %v6931 = vsel %vm1393, %v6483, %v6764
        %v6932 = vsel %vm1393, %v6484, %v6766
        %v6933 = vsel %vm1393, %v6485, %v6768
        %v6934 = vsel %vm1393, %v6486, %v6770
        %v6935 = vsel %vm1393, %v6487, %v6772
        %v6936 = vsel %vm1393, %v6488, %v6774
        %v6937 = vsel %vm1393, %v6489, %v6776
        %v6938 = vsel %vm1393, %v6490, %v6778
        %v6939 = vsel %vm1393, %v6491, %v6780
        %v6940 = vsel %vm1393, %v6492, %v6782
        %v6941 = vsel %vm1393, %v6493, %v6784
        %v6942 = vsel %vm1393, %v6494, %v6786
        %v6943 = vsel %vm1393, %v6495, %v6788
        %v6944 = vsel %vm1393, %v6496, %v6790
        %v6945 = vsel %vm1393, %v6497, %v6792
        %v6946 = vsel %vm1393, %v6498, %v6794
        %v6947 = vsel %vm1393, %v6499, %v6796
        %v6948 = vsel %vm1393, %v6500, %v6798
        %v6949 = vsel %vm1393, %v6501, %v6800
        %v6950 = vsel %vm1393, %v6502, %v6802
        %v6951 = vsel %vm1393, %v6503, %v6804
        %v6952 = vsel %vm1393, %v6504, %v6806
        %v6953 = vsel %vm1393, %v6505, %v6808
        %v6954 = vsel %vm1393, %v6506, %v6810
        %v6955 = vsel %vm1393, %v6507, %v6812
        %v6956 = vsel %vm1393, %v6508, %v6814
        %v6957 = vsel %vm1393, %v6509, %v6816
        %v6958 = vsel %vm1393, %v6510, %v6818
        %v6959 = vsel %vm1393, %v6511, %v6820
        %v6960 = vsel %vm1393, %v6512, %v6822
        %v6961 = vsel %vm1393, %v6513, %v6824
        %v6962 = vsel %vm1393, %v6514, %v6826
        %v6963 = vsel %vm1393, %v6515, %v6828
        %v6964 = vsel %vm1393, %v6516, %v6830
        %v6965 = vsel %vm1393, %v6517, %v6832
        %v6966 = vsel %vm1393, %v6518, %v6834
        %v6967 = vsel %vm1393, %v6519, %v6836
        %v6968 = vsel %vm1393, %v6520, %v6838
        %v6969 = vsel %vm1393, %v6521, %v6840
        %v6970 = vsel %vm1393, %v6522, %v6842
        %v6971 = vpack.c.bf16 %v6908, %v6907
        %v6972 = vpack.c.bf16 %v6910, %v6909
        %v6973 = vpack.c.bf16 %v6912, %v6911
        %v6974 = vpack.c.bf16 %v6914, %v6913
        %v6975 = vpack.c.bf16 %v6916, %v6915
        %v6976 = vpack.c.bf16 %v6918, %v6917
        %v6977 = vpack.c.bf16 %v6920, %v6919
        %v6978 = vpack.c.bf16 %v6922, %v6921
        %v6979 = vpack.c.bf16 %v6924, %v6923
        %v6980 = vpack.c.bf16 %v6926, %v6925
        %v6981 = vpack.c.bf16 %v6928, %v6927
        %v6982 = vpack.c.bf16 %v6930, %v6929
        %v6983 = vpack.c.bf16 %v6932, %v6931
        %v6984 = vpack.c.bf16 %v6934, %v6933
        %v6985 = vpack.c.bf16 %v6936, %v6935
        %v6986 = vpack.c.bf16 %v6938, %v6937
        %v6987 = vpack.c.bf16 %v6940, %v6939
        %v6988 = vpack.c.bf16 %v6942, %v6941
        %v6989 = vpack.c.bf16 %v6944, %v6943
        %v6990 = vpack.c.bf16 %v6946, %v6945
        %v6991 = vpack.c.bf16 %v6948, %v6947
        %v6992 = vpack.c.bf16 %v6950, %v6949
        %v6993 = vpack.c.bf16 %v6952, %v6951
        %v6994 = vpack.c.bf16 %v6954, %v6953
        %v6995 = vpack.c.bf16 %v6956, %v6955
        %v6996 = vpack.c.bf16 %v6958, %v6957
        %v6997 = vpack.c.bf16 %v6960, %v6959
        %v6998 = vpack.c.bf16 %v6962, %v6961
        %v6999 = vpack.c.bf16 %v6964, %v6963
        %v7000 = vpack.c.bf16 %v6966, %v6965
        %v7001 = vpack.c.bf16 %v6968, %v6967
        %v7002 = vpack.c.bf16 %v6970, %v6969
        %v7003 = vld [vmem:[%s5] sm:$0xff]
        %v7004 = vld [vmem:[%s5 + $0x8] sm:$0xff]
        %v7005 = vld [vmem:[%s5 + $0x10] sm:$0xff]
        %v7006 = vld [vmem:[%s5 + $0x18] sm:$0xff]
        %v7007 = vld [vmem:[%s5 + $0x20] sm:$0xff]
        %v7008 = vld [vmem:[%s5 + $0x28] sm:$0xff]
        %v7009 = vld [vmem:[%s5 + $0x30] sm:$0xff]
        %v7010 = vld [vmem:[%s5 + $0x38] sm:$0xff]
        %v7011 = vld [vmem:[%s5 + $0x40] sm:$0xff]
        %v7012 = vld [vmem:[%s5 + $0x48] sm:$0xff]
        %v7013 = vld [vmem:[%s5 + $0x50] sm:$0xff]
        %v7014 = vld [vmem:[%s5 + $0x58] sm:$0xff]
        %v7015 = vld [vmem:[%s6] sm:$0x3]
        %v7017 = vlaneseq
        %v7018 = vshrl.u32 %v7017, 7
        %v7019 = vsub.s32 0, %v7018
        %v7020 = vrot.slane %v7015, %v7019
        %v7021 = vlaneseq
        %v7022 = vshrl.u32 %v7021, 7
        %v7023 = vsub.s32 1, %v7022
        %v7024 = vrot.slane %v7015, %v7023
        %v7039 = vunpack.c.l.b16 %v7003
        %v7040 = vunpack.c.h.b16 %v7003
        %v7041 = vunpack.c.l.b16 %v7004
        %v7042 = vunpack.c.h.b16 %v7004
        %v7043 = vunpack.c.l.b16 %v7005
        %v7044 = vunpack.c.h.b16 %v7005
        %v7045 = vunpack.c.l.b16 %v7006
        %v7046 = vunpack.c.h.b16 %v7006
        %v7047 = vunpack.c.l.b16 %v7007
        %v7048 = vunpack.c.h.b16 %v7007
        %v7049 = vunpack.c.l.b16 %v7008
        %v7050 = vunpack.c.h.b16 %v7008
        %v7051 = vunpack.c.l.b16 %v7009
        %v7052 = vunpack.c.h.b16 %v7009
        %v7053 = vunpack.c.l.b16 %v7010
        %v7054 = vunpack.c.h.b16 %v7010
        %v7055 = vunpack.c.l.b16 %v7011
        %v7056 = vunpack.c.h.b16 %v7011
        %v7057 = vunpack.c.l.b16 %v7012
        %v7058 = vunpack.c.h.b16 %v7012
        %v7059 = vunpack.c.l.b16 %v7013
        %v7060 = vunpack.c.h.b16 %v7013
        %v7061 = vunpack.c.l.b16 %v7014
        %v7062 = vunpack.c.h.b16 %v7014
        %v7063 = vpack.c.b16 %v7041, %v7039
        %v7064 = vpack.c.b16 %v7042, %v7040
        %v7065 = vpack.c.b16 %v7045, %v7043
        %v7066 = vpack.c.b16 %v7046, %v7044
        %v7067 = vpack.c.b16 %v7049, %v7047
        %v7068 = vpack.c.b16 %v7050, %v7048
        %v7069 = vpack.c.b16 %v7053, %v7051
        %v7070 = vpack.c.b16 %v7054, %v7052
        %v7071 = vpack.c.b16 %v7057, %v7055
        %v7072 = vpack.c.b16 %v7058, %v7056
        %v7073 = vpack.c.b16 %v7061, %v7059
        %v7074 = vpack.c.b16 %v7062, %v7060
        %vm7087 = vcmask 785408
        %v7089 = vsel %vm7087, %v6971, 0
        %v7092 = vsel %vm7087, %v6972, 0
        %v7095 = vsel %vm7087, %v6973, 0
        %v7098 = vsel %vm7087, %v6974, 0
        %v7101 = vsel %vm7087, %v6975, 0
        %v7104 = vsel %vm7087, %v6976, 0
        %v7107 = vsel %vm7087, %v6977, 0
        %v7110 = vsel %vm7087, %v6978, 0
        %v7113 = vsel %vm7087, %v6979, 0
        %v7116 = vsel %vm7087, %v6980, 0
        %v7119 = vsel %vm7087, %v6981, 0
        %v7122 = vsel %vm7087, %v6982, 0
        %v7125 = vsel %vm7087, %v6983, 0
        %v7128 = vsel %vm7087, %v6984, 0
        %v7131 = vsel %vm7087, %v6985, 0
        %v7134 = vsel %vm7087, %v6986, 0
        %v7137 = vsel %vm7087, %v6987, 0
        %v7140 = vsel %vm7087, %v6988, 0
        %v7143 = vsel %vm7087, %v6989, 0
        %v7146 = vsel %vm7087, %v6990, 0
        %v7149 = vsel %vm7087, %v6991, 0
        %v7152 = vsel %vm7087, %v6992, 0
        %v7155 = vsel %vm7087, %v6993, 0
        %v7158 = vsel %vm7087, %v6994, 0
        %v7161 = vsel %vm7087, %v6995, 0
        %v7164 = vsel %vm7087, %v6996, 0
        %v7167 = vsel %vm7087, %v6997, 0
        %v7170 = vsel %vm7087, %v6998, 0
        %v7173 = vsel %vm7087, %v6999, 0
        %v7176 = vsel %vm7087, %v7000, 0
        %v7179 = vsel %vm7087, %v7001, 0
        %v7182 = vsel %vm7087, %v7002, 0
        %7184 = vmatprep.subr.bf16.mxu0 %v7064
        %7185 = vmatpush1.bf16.msra.mxu0 %v7063
        %7186 = vmatprep.subr.bf16.mxu0 %v7066
        %7187 = vmatpush1.bf16.msra.mxu0 %v7065
        %7188 = vmatprep.subr.bf16.mxu0 %v7068
        %7189 = vmatpush1.bf16.msra.mxu0 %v7067
        %7190 = vmatprep.subr.bf16.mxu0 %v7070
        %7191 = vmatpush1.bf16.msra.mxu0 %v7069
        %7192 = vmatprep.subr.bf16.mxu0 %v7072
        %7193 = vmatpush1.bf16.msra.mxu0 %v7071
        %7194 = vmatprep.subr.bf16.mxu0 %v7074
        %7195 = vmatpush1.bf16.msra.mxu0 %v7073
        %7196 = vmatprep.subr.bf16.mxu0 0
        %7197 = vmatpush1.bf16.msra.mxu0 0
        %7198 = vmatprep.subr.bf16.mxu0 0
        %7199 = vmatpush1.bf16.msra.mxu0 0
        %7200 = vmatprep.subr.bf16.mxu0 0
        %7201 = vmatpush1.bf16.msra.mxu0 0
        %7202 = vmatprep.subr.bf16.mxu0 0
        %7203 = vmatpush1.bf16.msra.mxu0 0
        %7204 = vmatprep.subr.bf16.mxu0 0
        %7205 = vmatpush1.bf16.msra.mxu0 0
        %7206 = vmatprep.subr.bf16.mxu0 0
        %7207 = vmatpush1.bf16.msra.mxu0 0
        %7208 = vmatprep.subr.bf16.mxu0 0
        %7209 = vmatpush1.bf16.msra.mxu0 0
        %7210 = vmatprep.subr.bf16.mxu0 0
        %7211 = vmatpush1.bf16.msra.mxu0 0
        %7212 = vmatprep.subr.bf16.mxu0 0
        %7213 = vmatpush1.bf16.msra.mxu0 0
        %7214 = vmatprep.subr.bf16.mxu0 0
        %7215 = vmatpush1.bf16.msra.mxu0 0
        %7216 = vmatprep.mubr.bf16.mxu0 0
        %7217 = vmatmul.mubr.bf16.gmra.mrb[0].mxu0 %v7089
        %v7218 = vpop.f32.mrb[0].mxu0
        %v7219 = vadd.f32 %v7020, %v7218
        %v7220 = vpop.f32.mrb[0].mxu0
        %v7221 = vadd.f32 %v7024, %v7220
        %v7222 = vpop.f32.mrb[0].mxu0
        %v7223 = vadd.f32 %v7020, %v7222
        %v7224 = vpop.f32.mrb[0].mxu0
        %v7225 = vadd.f32 %v7024, %v7224
        %7226 = vmatprep.mubr.bf16.mxu0 0
        %7227 = vmatmul.mubr.bf16.gmra.mrb[0].mxu0 %v7092
        %v7228 = vpop.f32.mrb[0].mxu0
        %v7229 = vadd.f32 %v7020, %v7228
        %v7230 = vpop.f32.mrb[0].mxu0
        %v7231 = vadd.f32 %v7024, %v7230
        %v7232 = vpop.f32.mrb[0].mxu0
        %v7233 = vadd.f32 %v7020, %v7232
        %v7234 = vpop.f32.mrb[0].mxu0
        %v7235 = vadd.f32 %v7024, %v7234
        %7236 = vmatprep.mubr.bf16.mxu0 0
        %7237 = vmatmul.mubr.bf16.gmra.mrb[0].mxu0 %v7095
        %v7238 = vpop.f32.mrb[0].mxu0
        %v7239 = vadd.f32 %v7020, %v7238
        %v7240 = vpop.f32.mrb[0].mxu0
        %v7241 = vadd.f32 %v7024, %v7240
        %v7242 = vpop.f32.mrb[0].mxu0
        %v7243 = vadd.f32 %v7020, %v7242
        %v7244 = vpop.f32.mrb[0].mxu0
        %v7245 = vadd.f32 %v7024, %v7244
        %7246 = vmatprep.mubr.bf16.mxu0 0
        %7247 = vmatmul.mubr.bf16.gmra.mrb[0].mxu0 %v7098
        %v7248 = vpop.f32.mrb[0].mxu0
        %v7249 = vadd.f32 %v7020, %v7248
        %v7250 = vpop.f32.mrb[0].mxu0
        %v7251 = vadd.f32 %v7024, %v7250
        %v7252 = vpop.f32.mrb[0].mxu0
        %v7253 = vadd.f32 %v7020, %v7252
        %v7254 = vpop.f32.mrb[0].mxu0
        %v7255 = vadd.f32 %v7024, %v7254
        %7256 = vmatprep.mubr.bf16.mxu0 0
        %7257 = vmatmul.mubr.bf16.gmra.mrb[0].mxu0 %v7101
        %v7258 = vpop.f32.mrb[0].mxu0
        %v7259 = vadd.f32 %v7020, %v7258
        %v7260 = vpop.f32.mrb[0].mxu0
        %v7261 = vadd.f32 %v7024, %v7260
        %v7262 = vpop.f32.mrb[0].mxu0
        %v7263 = vadd.f32 %v7020, %v7262
        %v7264 = vpop.f32.mrb[0].mxu0
        %v7265 = vadd.f32 %v7024, %v7264
        %7266 = vmatprep.mubr.bf16.mxu0 0
        %7267 = vmatmul.mubr.bf16.gmra.mrb[0].mxu0 %v7104
        %v7268 = vpop.f32.mrb[0].mxu0
        %v7269 = vadd.f32 %v7020, %v7268
        %v7270 = vpop.f32.mrb[0].mxu0
        %v7271 = vadd.f32 %v7024, %v7270
        %v7272 = vpop.f32.mrb[0].mxu0
        %v7273 = vadd.f32 %v7020, %v7272
        %v7274 = vpop.f32.mrb[0].mxu0
        %v7275 = vadd.f32 %v7024, %v7274
        %7276 = vmatprep.mubr.bf16.mxu0 0
        %7277 = vmatmul.mubr.bf16.gmra.mrb[0].mxu0 %v7107
        %v7278 = vpop.f32.mrb[0].mxu0
        %v7279 = vadd.f32 %v7020, %v7278
        %v7280 = vpop.f32.mrb[0].mxu0
        %v7281 = vadd.f32 %v7024, %v7280
        %v7282 = vpop.f32.mrb[0].mxu0
        %v7283 = vadd.f32 %v7020, %v7282
        %v7284 = vpop.f32.mrb[0].mxu0
        %v7285 = vadd.f32 %v7024, %v7284
        %7286 = vmatprep.mubr.bf16.mxu0 0
        %7287 = vmatmul.mubr.bf16.gmra.mrb[0].mxu0 %v7110
        %v7288 = vpop.f32.mrb[0].mxu0
        %v7289 = vadd.f32 %v7020, %v7288
        %v7290 = vpop.f32.mrb[0].mxu0
        %v7291 = vadd.f32 %v7024, %v7290
        %v7292 = vpop.f32.mrb[0].mxu0
        %v7293 = vadd.f32 %v7020, %v7292
        %v7294 = vpop.f32.mrb[0].mxu0
        %v7295 = vadd.f32 %v7024, %v7294
        %7296 = vmatprep.mubr.bf16.mxu0 0
        %7297 = vmatmul.mubr.bf16.gmra.mrb[0].mxu0 %v7113
        %v7298 = vpop.f32.mrb[0].mxu0
        %v7299 = vadd.f32 %v7020, %v7298
        %v7300 = vpop.f32.mrb[0].mxu0
        %v7301 = vadd.f32 %v7024, %v7300
        %v7302 = vpop.f32.mrb[0].mxu0
        %v7303 = vadd.f32 %v7020, %v7302
        %v7304 = vpop.f32.mrb[0].mxu0
        %v7305 = vadd.f32 %v7024, %v7304
        %7306 = vmatprep.mubr.bf16.mxu0 0
        %7307 = vmatmul.mubr.bf16.gmra.mrb[0].mxu0 %v7116
        %v7308 = vpop.f32.mrb[0].mxu0
        %v7309 = vadd.f32 %v7020, %v7308
        %v7310 = vpop.f32.mrb[0].mxu0
        %v7311 = vadd.f32 %v7024, %v7310
        %v7312 = vpop.f32.mrb[0].mxu0
        %v7313 = vadd.f32 %v7020, %v7312
        %v7314 = vpop.f32.mrb[0].mxu0
        %v7315 = vadd.f32 %v7024, %v7314
        %7316 = vmatprep.mubr.bf16.mxu0 0
        %7317 = vmatmul.mubr.bf16.gmra.mrb[0].mxu0 %v7119
        %v7318 = vpop.f32.mrb[0].mxu0
        %v7319 = vadd.f32 %v7020, %v7318
        %v7320 = vpop.f32.mrb[0].mxu0
        %v7321 = vadd.f32 %v7024, %v7320
        %v7322 = vpop.f32.mrb[0].mxu0
        %v7323 = vadd.f32 %v7020, %v7322
        %v7324 = vpop.f32.mrb[0].mxu0
        %v7325 = vadd.f32 %v7024, %v7324
        %7326 = vmatprep.mubr.bf16.mxu0 0
        %7327 = vmatmul.mubr.bf16.gmra.mrb[0].mxu0 %v7122
        %v7328 = vpop.f32.mrb[0].mxu0
        %v7329 = vadd.f32 %v7020, %v7328
        %v7330 = vpop.f32.mrb[0].mxu0
        %v7331 = vadd.f32 %v7024, %v7330
        %v7332 = vpop.f32.mrb[0].mxu0
        %v7333 = vadd.f32 %v7020, %v7332
        %v7334 = vpop.f32.mrb[0].mxu0
        %v7335 = vadd.f32 %v7024, %v7334
        %7336 = vmatprep.mubr.bf16.mxu0 0
        %7337 = vmatmul.mubr.bf16.gmra.mrb[0].mxu0 %v7125
        %v7338 = vpop.f32.mrb[0].mxu0
        %v7339 = vadd.f32 %v7020, %v7338
        %v7340 = vpop.f32.mrb[0].mxu0
        %v7341 = vadd.f32 %v7024, %v7340
        %v7342 = vpop.f32.mrb[0].mxu0
        %v7343 = vadd.f32 %v7020, %v7342
        %v7344 = vpop.f32.mrb[0].mxu0
        %v7345 = vadd.f32 %v7024, %v7344
        %7346 = vmatprep.mubr.bf16.mxu0 0
        %7347 = vmatmul.mubr.bf16.gmra.mrb[0].mxu0 %v7128
        %v7348 = vpop.f32.mrb[0].mxu0
        %v7349 = vadd.f32 %v7020, %v7348
        %v7350 = vpop.f32.mrb[0].mxu0
        %v7351 = vadd.f32 %v7024, %v7350
        %v7352 = vpop.f32.mrb[0].mxu0
        %v7353 = vadd.f32 %v7020, %v7352
        %v7354 = vpop.f32.mrb[0].mxu0
        %v7355 = vadd.f32 %v7024, %v7354
        %7356 = vmatprep.mubr.bf16.mxu0 0
        %7357 = vmatmul.mubr.bf16.gmra.mrb[0].mxu0 %v7131
        %v7358 = vpop.f32.mrb[0].mxu0
        %v7359 = vadd.f32 %v7020, %v7358
        %v7360 = vpop.f32.mrb[0].mxu0
        %v7361 = vadd.f32 %v7024, %v7360
        %v7362 = vpop.f32.mrb[0].mxu0
        %v7363 = vadd.f32 %v7020, %v7362
        %v7364 = vpop.f32.mrb[0].mxu0
        %v7365 = vadd.f32 %v7024, %v7364
        %7366 = vmatprep.mubr.bf16.mxu0 0
        %7367 = vmatmul.mubr.bf16.gmra.mrb[0].mxu0 %v7134
        %v7368 = vpop.f32.mrb[0].mxu0
        %v7369 = vadd.f32 %v7020, %v7368
        %v7370 = vpop.f32.mrb[0].mxu0
        %v7371 = vadd.f32 %v7024, %v7370
        %v7372 = vpop.f32.mrb[0].mxu0
        %v7373 = vadd.f32 %v7020, %v7372
        %v7374 = vpop.f32.mrb[0].mxu0
        %v7375 = vadd.f32 %v7024, %v7374
        %7376 = vmatprep.mubr.bf16.mxu0 0
        %7377 = vmatmul.mubr.bf16.gmra.mrb[0].mxu0 %v7137
        %v7378 = vpop.f32.mrb[0].mxu0
        %v7379 = vadd.f32 %v7020, %v7378
        %v7380 = vpop.f32.mrb[0].mxu0
        %v7381 = vadd.f32 %v7024, %v7380
        %v7382 = vpop.f32.mrb[0].mxu0
        %v7383 = vadd.f32 %v7020, %v7382
        %v7384 = vpop.f32.mrb[0].mxu0
        %v7385 = vadd.f32 %v7024, %v7384
        %7386 = vmatprep.mubr.bf16.mxu0 0
        %7387 = vmatmul.mubr.bf16.gmra.mrb[0].mxu0 %v7140
        %v7388 = vpop.f32.mrb[0].mxu0
        %v7389 = vadd.f32 %v7020, %v7388
        %v7390 = vpop.f32.mrb[0].mxu0
        %v7391 = vadd.f32 %v7024, %v7390
        %v7392 = vpop.f32.mrb[0].mxu0
        %v7393 = vadd.f32 %v7020, %v7392
        %v7394 = vpop.f32.mrb[0].mxu0
        %v7395 = vadd.f32 %v7024, %v7394
        %7396 = vmatprep.mubr.bf16.mxu0 0
        %7397 = vmatmul.mubr.bf16.gmra.mrb[0].mxu0 %v7143
        %v7398 = vpop.f32.mrb[0].mxu0
        %v7399 = vadd.f32 %v7020, %v7398
        %v7400 = vpop.f32.mrb[0].mxu0
        %v7401 = vadd.f32 %v7024, %v7400
        %v7402 = vpop.f32.mrb[0].mxu0
        %v7403 = vadd.f32 %v7020, %v7402
        %v7404 = vpop.f32.mrb[0].mxu0
        %v7405 = vadd.f32 %v7024, %v7404
        %7406 = vmatprep.mubr.bf16.mxu0 0
        %7407 = vmatmul.mubr.bf16.gmra.mrb[0].mxu0 %v7146
        %v7408 = vpop.f32.mrb[0].mxu0
        %v7409 = vadd.f32 %v7020, %v7408
        %v7410 = vpop.f32.mrb[0].mxu0
        %v7411 = vadd.f32 %v7024, %v7410
        %v7412 = vpop.f32.mrb[0].mxu0
        %v7413 = vadd.f32 %v7020, %v7412
        %v7414 = vpop.f32.mrb[0].mxu0
        %v7415 = vadd.f32 %v7024, %v7414
        %7416 = vmatprep.mubr.bf16.mxu0 0
        %7417 = vmatmul.mubr.bf16.gmra.mrb[0].mxu0 %v7149
        %v7418 = vpop.f32.mrb[0].mxu0
        %v7419 = vadd.f32 %v7020, %v7418
        %v7420 = vpop.f32.mrb[0].mxu0
        %v7421 = vadd.f32 %v7024, %v7420
        %v7422 = vpop.f32.mrb[0].mxu0
        %v7423 = vadd.f32 %v7020, %v7422
        %v7424 = vpop.f32.mrb[0].mxu0
        %v7425 = vadd.f32 %v7024, %v7424
        %7426 = vmatprep.mubr.bf16.mxu0 0
        %7427 = vmatmul.mubr.bf16.gmra.mrb[0].mxu0 %v7152
        %v7428 = vpop.f32.mrb[0].mxu0
        %v7429 = vadd.f32 %v7020, %v7428
        %v7430 = vpop.f32.mrb[0].mxu0
        %v7431 = vadd.f32 %v7024, %v7430
        %v7432 = vpop.f32.mrb[0].mxu0
        %v7433 = vadd.f32 %v7020, %v7432
        %v7434 = vpop.f32.mrb[0].mxu0
        %v7435 = vadd.f32 %v7024, %v7434
        %7436 = vmatprep.mubr.bf16.mxu0 0
        %7437 = vmatmul.mubr.bf16.gmra.mrb[0].mxu0 %v7155
        %v7438 = vpop.f32.mrb[0].mxu0
        %v7439 = vadd.f32 %v7020, %v7438
        %v7440 = vpop.f32.mrb[0].mxu0
        %v7441 = vadd.f32 %v7024, %v7440
        %v7442 = vpop.f32.mrb[0].mxu0
        %v7443 = vadd.f32 %v7020, %v7442
        %v7444 = vpop.f32.mrb[0].mxu0
        %v7445 = vadd.f32 %v7024, %v7444
        %7446 = vmatprep.mubr.bf16.mxu0 0
        %7447 = vmatmul.mubr.bf16.gmra.mrb[0].mxu0 %v7158
        %v7448 = vpop.f32.mrb[0].mxu0
        %v7449 = vadd.f32 %v7020, %v7448
        %v7450 = vpop.f32.mrb[0].mxu0
        %v7451 = vadd.f32 %v7024, %v7450
        %v7452 = vpop.f32.mrb[0].mxu0
        %v7453 = vadd.f32 %v7020, %v7452
        %v7454 = vpop.f32.mrb[0].mxu0
        %v7455 = vadd.f32 %v7024, %v7454
        %7456 = vmatprep.mubr.bf16.mxu0 0
        %7457 = vmatmul.mubr.bf16.gmra.mrb[0].mxu0 %v7161
        %v7458 = vpop.f32.mrb[0].mxu0
        %v7459 = vadd.f32 %v7020, %v7458
        %v7460 = vpop.f32.mrb[0].mxu0
        %v7461 = vadd.f32 %v7024, %v7460
        %v7462 = vpop.f32.mrb[0].mxu0
        %v7463 = vadd.f32 %v7020, %v7462
        %v7464 = vpop.f32.mrb[0].mxu0
        %v7465 = vadd.f32 %v7024, %v7464
        %7466 = vmatprep.mubr.bf16.mxu0 0
        %7467 = vmatmul.mubr.bf16.gmra.mrb[0].mxu0 %v7164
        %v7468 = vpop.f32.mrb[0].mxu0
        %v7469 = vadd.f32 %v7020, %v7468
        %v7470 = vpop.f32.mrb[0].mxu0
        %v7471 = vadd.f32 %v7024, %v7470
        %v7472 = vpop.f32.mrb[0].mxu0
        %v7473 = vadd.f32 %v7020, %v7472
        %v7474 = vpop.f32.mrb[0].mxu0
        %v7475 = vadd.f32 %v7024, %v7474
        %7476 = vmatprep.mubr.bf16.mxu0 0
        %7477 = vmatmul.mubr.bf16.gmra.mrb[0].mxu0 %v7167
        %v7478 = vpop.f32.mrb[0].mxu0
        %v7479 = vadd.f32 %v7020, %v7478
        %v7480 = vpop.f32.mrb[0].mxu0
        %v7481 = vadd.f32 %v7024, %v7480
        %v7482 = vpop.f32.mrb[0].mxu0
        %v7483 = vadd.f32 %v7020, %v7482
        %v7484 = vpop.f32.mrb[0].mxu0
        %v7485 = vadd.f32 %v7024, %v7484
        %7486 = vmatprep.mubr.bf16.mxu0 0
        %7487 = vmatmul.mubr.bf16.gmra.mrb[0].mxu0 %v7170
        %v7488 = vpop.f32.mrb[0].mxu0
        %v7489 = vadd.f32 %v7020, %v7488
        %v7490 = vpop.f32.mrb[0].mxu0
        %v7491 = vadd.f32 %v7024, %v7490
        %v7492 = vpop.f32.mrb[0].mxu0
        %v7493 = vadd.f32 %v7020, %v7492
        %v7494 = vpop.f32.mrb[0].mxu0
        %v7495 = vadd.f32 %v7024, %v7494
        %7496 = vmatprep.mubr.bf16.mxu0 0
        %7497 = vmatmul.mubr.bf16.gmra.mrb[0].mxu0 %v7173
        %v7498 = vpop.f32.mrb[0].mxu0
        %v7499 = vadd.f32 %v7020, %v7498
        %v7500 = vpop.f32.mrb[0].mxu0
        %v7501 = vadd.f32 %v7024, %v7500
        %v7502 = vpop.f32.mrb[0].mxu0
        %v7503 = vadd.f32 %v7020, %v7502
        %v7504 = vpop.f32.mrb[0].mxu0
        %v7505 = vadd.f32 %v7024, %v7504
        %7506 = vmatprep.mubr.bf16.mxu0 0
        %7507 = vmatmul.mubr.bf16.gmra.mrb[0].mxu0 %v7176
        %v7508 = vpop.f32.mrb[0].mxu0
        %v7509 = vadd.f32 %v7020, %v7508
        %v7510 = vpop.f32.mrb[0].mxu0
        %v7511 = vadd.f32 %v7024, %v7510
        %v7512 = vpop.f32.mrb[0].mxu0
        %v7513 = vadd.f32 %v7020, %v7512
        %v7514 = vpop.f32.mrb[0].mxu0
        %v7515 = vadd.f32 %v7024, %v7514
        %7516 = vmatprep.mubr.bf16.mxu0 0
        %7517 = vmatmul.mubr.bf16.gmra.mrb[0].mxu0 %v7179
        %v7518 = vpop.f32.mrb[0].mxu0
        %v7519 = vadd.f32 %v7020, %v7518
        %v7520 = vpop.f32.mrb[0].mxu0
        %v7521 = vadd.f32 %v7024, %v7520
        %v7522 = vpop.f32.mrb[0].mxu0
        %v7523 = vadd.f32 %v7020, %v7522
        %v7524 = vpop.f32.mrb[0].mxu0
        %v7525 = vadd.f32 %v7024, %v7524
        %7526 = vmatprep.mubr.bf16.mxu0 0
        %7527 = vmatmul.mubr.bf16.gmra.mrb[0].mxu0 %v7182
        %v7528 = vpop.f32.mrb[0].mxu0
        %v7529 = vadd.f32 %v7020, %v7528
        %v7530 = vpop.f32.mrb[0].mxu0
        %v7531 = vadd.f32 %v7024, %v7530
        %v7532 = vpop.f32.mrb[0].mxu0
        %v7533 = vadd.f32 %v7020, %v7532
        %v7534 = vpop.f32.mrb[0].mxu0
        %v7535 = vadd.f32 %v7024, %v7534
        %7536 = vdwg.mxu0
        %vm7537 = vcmp.ge.f32.partialorder %v7219, 0.0
        %vm7538 = vcmp.ge.f32.partialorder %v7221, 0.0
        %vm7539 = vcmp.ge.f32.partialorder %v7223, 0.0
        %vm7540 = vcmp.ge.f32.partialorder %v7225, 0.0
        %vm7541 = vcmp.ge.f32.partialorder %v7229, 0.0
        %vm7542 = vcmp.ge.f32.partialorder %v7231, 0.0
        %vm7543 = vcmp.ge.f32.partialorder %v7233, 0.0
        %vm7544 = vcmp.ge.f32.partialorder %v7235, 0.0
        %vm7545 = vcmp.ge.f32.partialorder %v7239, 0.0
        %vm7546 = vcmp.ge.f32.partialorder %v7241, 0.0
        %vm7547 = vcmp.ge.f32.partialorder %v7243, 0.0
        %vm7548 = vcmp.ge.f32.partialorder %v7245, 0.0
        %vm7549 = vcmp.ge.f32.partialorder %v7249, 0.0
        %vm7550 = vcmp.ge.f32.partialorder %v7251, 0.0
        %vm7551 = vcmp.ge.f32.partialorder %v7253, 0.0
        %vm7552 = vcmp.ge.f32.partialorder %v7255, 0.0
        %vm7553 = vcmp.ge.f32.partialorder %v7259, 0.0
        %vm7554 = vcmp.ge.f32.partialorder %v7261, 0.0
        %vm7555 = vcmp.ge.f32.partialorder %v7263, 0.0
        %vm7556 = vcmp.ge.f32.partialorder %v7265, 0.0
        %vm7557 = vcmp.ge.f32.partialorder %v7269, 0.0
        %vm7558 = vcmp.ge.f32.partialorder %v7271, 0.0
        %vm7559 = vcmp.ge.f32.partialorder %v7273, 0.0
        %vm7560 = vcmp.ge.f32.partialorder %v7275, 0.0
        %vm7561 = vcmp.ge.f32.partialorder %v7279, 0.0
        %vm7562 = vcmp.ge.f32.partialorder %v7281, 0.0
        %vm7563 = vcmp.ge.f32.partialorder %v7283, 0.0
        %vm7564 = vcmp.ge.f32.partialorder %v7285, 0.0
        %vm7565 = vcmp.ge.f32.partialorder %v7289, 0.0
        %vm7566 = vcmp.ge.f32.partialorder %v7291, 0.0
        %vm7567 = vcmp.ge.f32.partialorder %v7293, 0.0
        %vm7568 = vcmp.ge.f32.partialorder %v7295, 0.0
        %vm7569 = vcmp.ge.f32.partialorder %v7299, 0.0
        %vm7570 = vcmp.ge.f32.partialorder %v7301, 0.0
        %vm7571 = vcmp.ge.f32.partialorder %v7303, 0.0
        %vm7572 = vcmp.ge.f32.partialorder %v7305, 0.0
        %vm7573 = vcmp.ge.f32.partialorder %v7309, 0.0
        %vm7574 = vcmp.ge.f32.partialorder %v7311, 0.0
        %vm7575 = vcmp.ge.f32.partialorder %v7313, 0.0
        %vm7576 = vcmp.ge.f32.partialorder %v7315, 0.0
        %vm7577 = vcmp.ge.f32.partialorder %v7319, 0.0
        %vm7578 = vcmp.ge.f32.partialorder %v7321, 0.0
        %vm7579 = vcmp.ge.f32.partialorder %v7323, 0.0
        %vm7580 = vcmp.ge.f32.partialorder %v7325, 0.0
        %vm7581 = vcmp.ge.f32.partialorder %v7329, 0.0
        %vm7582 = vcmp.ge.f32.partialorder %v7331, 0.0
        %vm7583 = vcmp.ge.f32.partialorder %v7333, 0.0
        %vm7584 = vcmp.ge.f32.partialorder %v7335, 0.0
        %vm7585 = vcmp.ge.f32.partialorder %v7339, 0.0
        %vm7586 = vcmp.ge.f32.partialorder %v7341, 0.0
        %vm7587 = vcmp.ge.f32.partialorder %v7343, 0.0
        %vm7588 = vcmp.ge.f32.partialorder %v7345, 0.0
        %vm7589 = vcmp.ge.f32.partialorder %v7349, 0.0
        %vm7590 = vcmp.ge.f32.partialorder %v7351, 0.0
        %vm7591 = vcmp.ge.f32.partialorder %v7353, 0.0
        %vm7592 = vcmp.ge.f32.partialorder %v7355, 0.0
        %vm7593 = vcmp.ge.f32.partialorder %v7359, 0.0
        %vm7594 = vcmp.ge.f32.partialorder %v7361, 0.0
        %vm7595 = vcmp.ge.f32.partialorder %v7363, 0.0
        %vm7596 = vcmp.ge.f32.partialorder %v7365, 0.0
        %vm7597 = vcmp.ge.f32.partialorder %v7369, 0.0
        %vm7598 = vcmp.ge.f32.partialorder %v7371, 0.0
        %vm7599 = vcmp.ge.f32.partialorder %v7373, 0.0
        %vm7600 = vcmp.ge.f32.partialorder %v7375, 0.0
        %vm7601 = vcmp.ge.f32.partialorder %v7379, 0.0
        %vm7602 = vcmp.ge.f32.partialorder %v7381, 0.0
        %vm7603 = vcmp.ge.f32.partialorder %v7383, 0.0
        %vm7604 = vcmp.ge.f32.partialorder %v7385, 0.0
        %vm7605 = vcmp.ge.f32.partialorder %v7389, 0.0
        %vm7606 = vcmp.ge.f32.partialorder %v7391, 0.0
        %vm7607 = vcmp.ge.f32.partialorder %v7393, 0.0
        %vm7608 = vcmp.ge.f32.partialorder %v7395, 0.0
        %vm7609 = vcmp.ge.f32.partialorder %v7399, 0.0
        %vm7610 = vcmp.ge.f32.partialorder %v7401, 0.0
        %vm7611 = vcmp.ge.f32.partialorder %v7403, 0.0
        %vm7612 = vcmp.ge.f32.partialorder %v7405, 0.0
        %vm7613 = vcmp.ge.f32.partialorder %v7409, 0.0
        %vm7614 = vcmp.ge.f32.partialorder %v7411, 0.0
        %vm7615 = vcmp.ge.f32.partialorder %v7413, 0.0
        %vm7616 = vcmp.ge.f32.partialorder %v7415, 0.0
        %vm7617 = vcmp.ge.f32.partialorder %v7419, 0.0
        %vm7618 = vcmp.ge.f32.partialorder %v7421, 0.0
        %vm7619 = vcmp.ge.f32.partialorder %v7423, 0.0
        %vm7620 = vcmp.ge.f32.partialorder %v7425, 0.0
        %vm7621 = vcmp.ge.f32.partialorder %v7429, 0.0
        %vm7622 = vcmp.ge.f32.partialorder %v7431, 0.0
        %vm7623 = vcmp.ge.f32.partialorder %v7433, 0.0
        %vm7624 = vcmp.ge.f32.partialorder %v7435, 0.0
        %vm7625 = vcmp.ge.f32.partialorder %v7439, 0.0
        %vm7626 = vcmp.ge.f32.partialorder %v7441, 0.0
        %vm7627 = vcmp.ge.f32.partialorder %v7443, 0.0
        %vm7628 = vcmp.ge.f32.partialorder %v7445, 0.0
        %vm7629 = vcmp.ge.f32.partialorder %v7449, 0.0
        %vm7630 = vcmp.ge.f32.partialorder %v7451, 0.0
        %vm7631 = vcmp.ge.f32.partialorder %v7453, 0.0
        %vm7632 = vcmp.ge.f32.partialorder %v7455, 0.0
        %vm7633 = vcmp.ge.f32.partialorder %v7459, 0.0
        %vm7634 = vcmp.ge.f32.partialorder %v7461, 0.0
        %vm7635 = vcmp.ge.f32.partialorder %v7463, 0.0
        %vm7636 = vcmp.ge.f32.partialorder %v7465, 0.0
        %vm7637 = vcmp.ge.f32.partialorder %v7469, 0.0
        %vm7638 = vcmp.ge.f32.partialorder %v7471, 0.0
        %vm7639 = vcmp.ge.f32.partialorder %v7473, 0.0
        %vm7640 = vcmp.ge.f32.partialorder %v7475, 0.0
        %vm7641 = vcmp.ge.f32.partialorder %v7479, 0.0
        %vm7642 = vcmp.ge.f32.partialorder %v7481, 0.0
        %vm7643 = vcmp.ge.f32.partialorder %v7483, 0.0
        %vm7644 = vcmp.ge.f32.partialorder %v7485, 0.0
        %vm7645 = vcmp.ge.f32.partialorder %v7489, 0.0
        %vm7646 = vcmp.ge.f32.partialorder %v7491, 0.0
        %vm7647 = vcmp.ge.f32.partialorder %v7493, 0.0
        %vm7648 = vcmp.ge.f32.partialorder %v7495, 0.0
        %vm7649 = vcmp.ge.f32.partialorder %v7499, 0.0
        %vm7650 = vcmp.ge.f32.partialorder %v7501, 0.0
        %vm7651 = vcmp.ge.f32.partialorder %v7503, 0.0
        %vm7652 = vcmp.ge.f32.partialorder %v7505, 0.0
        %vm7653 = vcmp.ge.f32.partialorder %v7509, 0.0
        %vm7654 = vcmp.ge.f32.partialorder %v7511, 0.0
        %vm7655 = vcmp.ge.f32.partialorder %v7513, 0.0
        %vm7656 = vcmp.ge.f32.partialorder %v7515, 0.0
        %vm7657 = vcmp.ge.f32.partialorder %v7519, 0.0
        %vm7658 = vcmp.ge.f32.partialorder %v7521, 0.0
        %vm7659 = vcmp.ge.f32.partialorder %v7523, 0.0
        %vm7660 = vcmp.ge.f32.partialorder %v7525, 0.0
        %vm7661 = vcmp.ge.f32.partialorder %v7529, 0.0
        %vm7662 = vcmp.ge.f32.partialorder %v7531, 0.0
        %vm7663 = vcmp.ge.f32.partialorder %v7533, 0.0
        %vm7664 = vcmp.ge.f32.partialorder %v7535, 0.0
        %v7665 = vld [vmem:[%s7] sm:$0x3]
        %v7667 = vlaneseq
        %v7668 = vshrl.u32 %v7667, 7
        %v7669 = vsub.s32 0, %v7668
        %v7670 = vrot.slane %v7665, %v7669
        %v7671 = vlaneseq
        %v7672 = vshrl.u32 %v7671, 7
        %v7673 = vsub.s32 1, %v7672
        %v7674 = vrot.slane %v7665, %v7673
        %v7677 = vmul.f32 %v7670, %v7219
        %v7678 = vmul.f32 %v7674, %v7221
        %v7679 = vmul.f32 %v7670, %v7223
        %v7680 = vmul.f32 %v7674, %v7225
        %v7681 = vmul.f32 %v7670, %v7229
        %v7682 = vmul.f32 %v7674, %v7231
        %v7683 = vmul.f32 %v7670, %v7233
        %v7684 = vmul.f32 %v7674, %v7235
        %v7685 = vmul.f32 %v7670, %v7239
        %v7686 = vmul.f32 %v7674, %v7241
        %v7687 = vmul.f32 %v7670, %v7243
        %v7688 = vmul.f32 %v7674, %v7245
        %v7689 = vmul.f32 %v7670, %v7249
        %v7690 = vmul.f32 %v7674, %v7251
        %v7691 = vmul.f32 %v7670, %v7253
        %v7692 = vmul.f32 %v7674, %v7255
        %v7693 = vmul.f32 %v7670, %v7259
        %v7694 = vmul.f32 %v7674, %v7261
        %v7695 = vmul.f32 %v7670, %v7263
        %v7696 = vmul.f32 %v7674, %v7265
        %v7697 = vmul.f32 %v7670, %v7269
        %v7698 = vmul.f32 %v7674, %v7271
        %v7699 = vmul.f32 %v7670, %v7273
        %v7700 = vmul.f32 %v7674, %v7275
        %v7701 = vmul.f32 %v7670, %v7279
        %v7702 = vmul.f32 %v7674, %v7281
        %v7703 = vmul.f32 %v7670, %v7283
        %v7704 = vmul.f32 %v7674, %v7285
        %v7705 = vmul.f32 %v7670, %v7289
        %v7706 = vmul.f32 %v7674, %v7291
        %v7707 = vmul.f32 %v7670, %v7293
        %v7708 = vmul.f32 %v7674, %v7295
        %v7709 = vmul.f32 %v7670, %v7299
        %v7710 = vmul.f32 %v7674, %v7301
        %v7711 = vmul.f32 %v7670, %v7303
        %v7712 = vmul.f32 %v7674, %v7305
        %v7713 = vmul.f32 %v7670, %v7309
        %v7714 = vmul.f32 %v7674, %v7311
        %v7715 = vmul.f32 %v7670, %v7313
        %v7716 = vmul.f32 %v7674, %v7315
        %v7717 = vmul.f32 %v7670, %v7319
        %v7718 = vmul.f32 %v7674, %v7321
        %v7719 = vmul.f32 %v7670, %v7323
        %v7720 = vmul.f32 %v7674, %v7325
        %v7721 = vmul.f32 %v7670, %v7329
        %v7722 = vmul.f32 %v7674, %v7331
        %v7723 = vmul.f32 %v7670, %v7333
        %v7724 = vmul.f32 %v7674, %v7335
        %v7725 = vmul.f32 %v7670, %v7339
        %v7726 = vmul.f32 %v7674, %v7341
        %v7727 = vmul.f32 %v7670, %v7343
        %v7728 = vmul.f32 %v7674, %v7345
        %v7729 = vmul.f32 %v7670, %v7349
        %v7730 = vmul.f32 %v7674, %v7351
        %v7731 = vmul.f32 %v7670, %v7353
        %v7732 = vmul.f32 %v7674, %v7355
        %v7733 = vmul.f32 %v7670, %v7359
        %v7734 = vmul.f32 %v7674, %v7361
        %v7735 = vmul.f32 %v7670, %v7363
        %v7736 = vmul.f32 %v7674, %v7365
        %v7737 = vmul.f32 %v7670, %v7369
        %v7738 = vmul.f32 %v7674, %v7371
        %v7739 = vmul.f32 %v7670, %v7373
        %v7740 = vmul.f32 %v7674, %v7375
        %v7741 = vmul.f32 %v7670, %v7379
        %v7742 = vmul.f32 %v7674, %v7381
        %v7743 = vmul.f32 %v7670, %v7383
        %v7744 = vmul.f32 %v7674, %v7385
        %v7745 = vmul.f32 %v7670, %v7389
        %v7746 = vmul.f32 %v7674, %v7391
        %v7747 = vmul.f32 %v7670, %v7393
        %v7748 = vmul.f32 %v7674, %v7395
        %v7749 = vmul.f32 %v7670, %v7399
        %v7750 = vmul.f32 %v7674, %v7401
        %v7751 = vmul.f32 %v7670, %v7403
        %v7752 = vmul.f32 %v7674, %v7405
        %v7753 = vmul.f32 %v7670, %v7409
        %v7754 = vmul.f32 %v7674, %v7411
        %v7755 = vmul.f32 %v7670, %v7413
        %v7756 = vmul.f32 %v7674, %v7415
        %v7757 = vmul.f32 %v7670, %v7419
        %v7758 = vmul.f32 %v7674, %v7421
        %v7759 = vmul.f32 %v7670, %v7423
        %v7760 = vmul.f32 %v7674, %v7425
        %v7761 = vmul.f32 %v7670, %v7429
        %v7762 = vmul.f32 %v7674, %v7431
        %v7763 = vmul.f32 %v7670, %v7433
        %v7764 = vmul.f32 %v7674, %v7435
        %v7765 = vmul.f32 %v7670, %v7439
        %v7766 = vmul.f32 %v7674, %v7441
        %v7767 = vmul.f32 %v7670, %v7443
        %v7768 = vmul.f32 %v7674, %v7445
        %v7769 = vmul.f32 %v7670, %v7449
        %v7770 = vmul.f32 %v7674, %v7451
        %v7771 = vmul.f32 %v7670, %v7453
        %v7772 = vmul.f32 %v7674, %v7455
        %v7773 = vmul.f32 %v7670, %v7459
        %v7774 = vmul.f32 %v7674, %v7461
        %v7775 = vmul.f32 %v7670, %v7463
        %v7776 = vmul.f32 %v7674, %v7465
        %v7777 = vmul.f32 %v7670, %v7469
        %v7778 = vmul.f32 %v7674, %v7471
        %v7779 = vmul.f32 %v7670, %v7473
        %v7780 = vmul.f32 %v7674, %v7475
        %v7781 = vmul.f32 %v7670, %v7479
        %v7782 = vmul.f32 %v7674, %v7481
        %v7783 = vmul.f32 %v7670, %v7483
        %v7784 = vmul.f32 %v7674, %v7485
        %v7785 = vmul.f32 %v7670, %v7489
        %v7786 = vmul.f32 %v7674, %v7491
        %v7787 = vmul.f32 %v7670, %v7493
        %v7788 = vmul.f32 %v7674, %v7495
        %v7789 = vmul.f32 %v7670, %v7499
        %v7790 = vmul.f32 %v7674, %v7501
        %v7791 = vmul.f32 %v7670, %v7503
        %v7792 = vmul.f32 %v7674, %v7505
        %v7793 = vmul.f32 %v7670, %v7509
        %v7794 = vmul.f32 %v7674, %v7511
        %v7795 = vmul.f32 %v7670, %v7513
        %v7796 = vmul.f32 %v7674, %v7515
        %v7797 = vmul.f32 %v7670, %v7519
        %v7798 = vmul.f32 %v7674, %v7521
        %v7799 = vmul.f32 %v7670, %v7523
        %v7800 = vmul.f32 %v7674, %v7525
        %v7801 = vmul.f32 %v7670, %v7529
        %v7802 = vmul.f32 %v7674, %v7531
        %v7803 = vmul.f32 %v7670, %v7533
        %v7804 = vmul.f32 %v7674, %v7535
        %v7805 = vsel %vm7537, %v7219, %v7677
        %v7806 = vsel %vm7538, %v7221, %v7678
        %v7807 = vsel %vm7539, %v7223, %v7679
        %v7808 = vsel %vm7540, %v7225, %v7680
        %v7809 = vsel %vm7541, %v7229, %v7681
        %v7810 = vsel %vm7542, %v7231, %v7682
        %v7811 = vsel %vm7543, %v7233, %v7683
        %v7812 = vsel %vm7544, %v7235, %v7684
        %v7813 = vsel %vm7545, %v7239, %v7685
        %v7814 = vsel %vm7546, %v7241, %v7686
        %v7815 = vsel %vm7547, %v7243, %v7687
        %v7816 = vsel %vm7548, %v7245, %v7688
        %v7817 = vsel %vm7549, %v7249, %v7689
        %v7818 = vsel %vm7550, %v7251, %v7690
        %v7819 = vsel %vm7551, %v7253, %v7691
        %v7820 = vsel %vm7552, %v7255, %v7692
        %v7821 = vsel %vm7553, %v7259, %v7693
        %v7822 = vsel %vm7554, %v7261, %v7694
        %v7823 = vsel %vm7555, %v7263, %v7695
        %v7824 = vsel %vm7556, %v7265, %v7696
        %v7825 = vsel %vm7557, %v7269, %v7697
        %v7826 = vsel %vm7558, %v7271, %v7698
        %v7827 = vsel %vm7559, %v7273, %v7699
        %v7828 = vsel %vm7560, %v7275, %v7700
        %v7829 = vsel %vm7561, %v7279, %v7701
        %v7830 = vsel %vm7562, %v7281, %v7702
        %v7831 = vsel %vm7563, %v7283, %v7703
        %v7832 = vsel %vm7564, %v7285, %v7704
        %v7833 = vsel %vm7565, %v7289, %v7705
        %v7834 = vsel %vm7566, %v7291, %v7706
        %v7835 = vsel %vm7567, %v7293, %v7707
        %v7836 = vsel %vm7568, %v7295, %v7708
        %v7837 = vsel %vm7569, %v7299, %v7709
        %v7838 = vsel %vm7570, %v7301, %v7710
        %v7839 = vsel %vm7571, %v7303, %v7711
        %v7840 = vsel %vm7572, %v7305, %v7712
        %v7841 = vsel %vm7573, %v7309, %v7713
        %v7842 = vsel %vm7574, %v7311, %v7714
        %v7843 = vsel %vm7575, %v7313, %v7715
        %v7844 = vsel %vm7576, %v7315, %v7716
        %v7845 = vsel %vm7577, %v7319, %v7717
        %v7846 = vsel %vm7578, %v7321, %v7718
        %v7847 = vsel %vm7579, %v7323, %v7719
        %v7848 = vsel %vm7580, %v7325, %v7720
        %v7849 = vsel %vm7581, %v7329, %v7721
        %v7850 = vsel %vm7582, %v7331, %v7722
        %v7851 = vsel %vm7583, %v7333, %v7723
        %v7852 = vsel %vm7584, %v7335, %v7724
        %v7853 = vsel %vm7585, %v7339, %v7725
        %v7854 = vsel %vm7586, %v7341, %v7726
        %v7855 = vsel %vm7587, %v7343, %v7727
        %v7856 = vsel %vm7588, %v7345, %v7728
        %v7857 = vsel %vm7589, %v7349, %v7729
        %v7858 = vsel %vm7590, %v7351, %v7730
        %v7859 = vsel %vm7591, %v7353, %v7731
        %v7860 = vsel %vm7592, %v7355, %v7732
        %v7861 = vsel %vm7593, %v7359, %v7733
        %v7862 = vsel %vm7594, %v7361, %v7734
        %v7863 = vsel %vm7595, %v7363, %v7735
        %v7864 = vsel %vm7596, %v7365, %v7736
        %v7865 = vsel %vm7597, %v7369, %v7737
        %v7866 = vsel %vm7598, %v7371, %v7738
        %v7867 = vsel %vm7599, %v7373, %v7739
        %v7868 = vsel %vm7600, %v7375, %v7740
        %v7869 = vsel %vm7601, %v7379, %v7741
        %v7870 = vsel %vm7602, %v7381, %v7742
        %v7871 = vsel %vm7603, %v7383, %v7743
        %v7872 = vsel %vm7604, %v7385, %v7744
        %v7873 = vsel %vm7605, %v7389, %v7745
        %v7874 = vsel %vm7606, %v7391, %v7746
        %v7875 = vsel %vm7607, %v7393, %v7747
        %v7876 = vsel %vm7608, %v7395, %v7748
        %v7877 = vsel %vm7609, %v7399, %v7749
        %v7878 = vsel %vm7610, %v7401, %v7750
        %v7879 = vsel %vm7611, %v7403, %v7751
        %v7880 = vsel %vm7612, %v7405, %v7752
        %v7881 = vsel %vm7613, %v7409, %v7753
        %v7882 = vsel %vm7614, %v7411, %v7754
        %v7883 = vsel %vm7615, %v7413, %v7755
        %v7884 = vsel %vm7616, %v7415, %v7756
        %v7885 = vsel %vm7617, %v7419, %v7757
        %v7886 = vsel %vm7618, %v7421, %v7758
        %v7887 = vsel %vm7619, %v7423, %v7759
        %v7888 = vsel %vm7620, %v7425, %v7760
        %v7889 = vsel %vm7621, %v7429, %v7761
        %v7890 = vsel %vm7622, %v7431, %v7762
        %v7891 = vsel %vm7623, %v7433, %v7763
        %v7892 = vsel %vm7624, %v7435, %v7764
        %v7893 = vsel %vm7625, %v7439, %v7765
        %v7894 = vsel %vm7626, %v7441, %v7766
        %v7895 = vsel %vm7627, %v7443, %v7767
        %v7896 = vsel %vm7628, %v7445, %v7768
        %v7897 = vsel %vm7629, %v7449, %v7769
        %v7898 = vsel %vm7630, %v7451, %v7770
        %v7899 = vsel %vm7631, %v7453, %v7771
        %v7900 = vsel %vm7632, %v7455, %v7772
        %v7901 = vsel %vm7633, %v7459, %v7773
        %v7902 = vsel %vm7634, %v7461, %v7774
        %v7903 = vsel %vm7635, %v7463, %v7775
        %v7904 = vsel %vm7636, %v7465, %v7776
        %v7905 = vsel %vm7637, %v7469, %v7777
        %v7906 = vsel %vm7638, %v7471, %v7778
        %v7907 = vsel %vm7639, %v7473, %v7779
        %v7908 = vsel %vm7640, %v7475, %v7780
        %v7909 = vsel %vm7641, %v7479, %v7781
        %v7910 = vsel %vm7642, %v7481, %v7782
        %v7911 = vsel %vm7643, %v7483, %v7783
        %v7912 = vsel %vm7644, %v7485, %v7784
        %v7913 = vsel %vm7645, %v7489, %v7785
        %v7914 = vsel %vm7646, %v7491, %v7786
        %v7915 = vsel %vm7647, %v7493, %v7787
        %v7916 = vsel %vm7648, %v7495, %v7788
        %v7917 = vsel %vm7649, %v7499, %v7789
        %v7918 = vsel %vm7650, %v7501, %v7790
        %v7919 = vsel %vm7651, %v7503, %v7791
        %v7920 = vsel %vm7652, %v7505, %v7792
        %v7921 = vsel %vm7653, %v7509, %v7793
        %v7922 = vsel %vm7654, %v7511, %v7794
        %v7923 = vsel %vm7655, %v7513, %v7795
        %v7924 = vsel %vm7656, %v7515, %v7796
        %v7925 = vsel %vm7657, %v7519, %v7797
        %v7926 = vsel %vm7658, %v7521, %v7798
        %v7927 = vsel %vm7659, %v7523, %v7799
        %v7928 = vsel %vm7660, %v7525, %v7800
        %v7929 = vsel %vm7661, %v7529, %v7801
        %v7930 = vsel %vm7662, %v7531, %v7802
        %v7931 = vsel %vm7663, %v7533, %v7803
        %v7932 = vsel %vm7664, %v7535, %v7804
        %v7933 = vpack.c.bf16 %v7807, %v7805
        %v7934 = vpack.c.bf16 %v7808, %v7806
        %v7935 = vpack.c.bf16 %v7811, %v7809
        %v7936 = vpack.c.bf16 %v7812, %v7810
        %v7937 = vpack.c.bf16 %v7815, %v7813
        %v7938 = vpack.c.bf16 %v7816, %v7814
        %v7939 = vpack.c.bf16 %v7819, %v7817
        %v7940 = vpack.c.bf16 %v7820, %v7818
        %v7941 = vpack.c.bf16 %v7823, %v7821
        %v7942 = vpack.c.bf16 %v7824, %v7822
        %v7943 = vpack.c.bf16 %v7827, %v7825
        %v7944 = vpack.c.bf16 %v7828, %v7826
        %v7945 = vpack.c.bf16 %v7831, %v7829
        %v7946 = vpack.c.bf16 %v7832, %v7830
        %v7947 = vpack.c.bf16 %v7835, %v7833
        %v7948 = vpack.c.bf16 %v7836, %v7834
        %v7949 = vpack.c.bf16 %v7839, %v7837
        %v7950 = vpack.c.bf16 %v7840, %v7838
        %v7951 = vpack.c.bf16 %v7843, %v7841
        %v7952 = vpack.c.bf16 %v7844, %v7842
        %v7953 = vpack.c.bf16 %v7847, %v7845
        %v7954 = vpack.c.bf16 %v7848, %v7846
        %v7955 = vpack.c.bf16 %v7851, %v7849
        %v7956 = vpack.c.bf16 %v7852, %v7850
        %v7957 = vpack.c.bf16 %v7855, %v7853
        %v7958 = vpack.c.bf16 %v7856, %v7854
        %v7959 = vpack.c.bf16 %v7859, %v7857
        %v7960 = vpack.c.bf16 %v7860, %v7858
        %v7961 = vpack.c.bf16 %v7863, %v7861
        %v7962 = vpack.c.bf16 %v7864, %v7862
        %v7963 = vpack.c.bf16 %v7867, %v7865
        %v7964 = vpack.c.bf16 %v7868, %v7866
        %v7965 = vpack.c.bf16 %v7871, %v7869
        %v7966 = vpack.c.bf16 %v7872, %v7870
        %v7967 = vpack.c.bf16 %v7875, %v7873
        %v7968 = vpack.c.bf16 %v7876, %v7874
        %v7969 = vpack.c.bf16 %v7879, %v7877
        %v7970 = vpack.c.bf16 %v7880, %v7878
        %v7971 = vpack.c.bf16 %v7883, %v7881
        %v7972 = vpack.c.bf16 %v7884, %v7882
        %v7973 = vpack.c.bf16 %v7887, %v7885
        %v7974 = vpack.c.bf16 %v7888, %v7886
        %v7975 = vpack.c.bf16 %v7891, %v7889
        %v7976 = vpack.c.bf16 %v7892, %v7890
        %v7977 = vpack.c.bf16 %v7895, %v7893
        %v7978 = vpack.c.bf16 %v7896, %v7894
        %v7979 = vpack.c.bf16 %v7899, %v7897
        %v7980 = vpack.c.bf16 %v7900, %v7898
        %v7981 = vpack.c.bf16 %v7903, %v7901
        %v7982 = vpack.c.bf16 %v7904, %v7902
        %v7983 = vpack.c.bf16 %v7907, %v7905
        %v7984 = vpack.c.bf16 %v7908, %v7906
        %v7985 = vpack.c.bf16 %v7911, %v7909
        %v7986 = vpack.c.bf16 %v7912, %v7910
        %v7987 = vpack.c.bf16 %v7915, %v7913
        %v7988 = vpack.c.bf16 %v7916, %v7914
        %v7989 = vpack.c.bf16 %v7919, %v7917
        %v7990 = vpack.c.bf16 %v7920, %v7918
        %v7991 = vpack.c.bf16 %v7923, %v7921
        %v7992 = vpack.c.bf16 %v7924, %v7922
        %v7993 = vpack.c.bf16 %v7927, %v7925
        %v7994 = vpack.c.bf16 %v7928, %v7926
        %v7995 = vpack.c.bf16 %v7931, %v7929
        %v7996 = vpack.c.bf16 %v7932, %v7930
        %v7997 = vld [vmem:[%s8] sm:$0xf]
        %v7998 = vld [vmem:[%s8 + $0x4] sm:$0xf]
        %v7999 = vld [vmem:[%s8 + $0x8] sm:$0xf]
        %v8000 = vld [vmem:[%s8 + $0xc] sm:$0xf]
        %v8001 = vld [vmem:[%s8 + $0x10] sm:$0xf]
        %v8002 = vld [vmem:[%s8 + $0x14] sm:$0xf]
        %v8003 = vld [vmem:[%s8 + $0x18] sm:$0xf]
        %v8004 = vld [vmem:[%s8 + $0x1c] sm:$0xf]
        %v8005 = vld [vmem:[%s8 + $0x20] sm:$0xf]
        %v8006 = vld [vmem:[%s8 + $0x24] sm:$0xf]
        %v8007 = vld [vmem:[%s8 + $0x28] sm:$0xf]
        %v8008 = vld [vmem:[%s8 + $0x2c] sm:$0xf]
        %v8009 = vld [vmem:[%s8 + $0x30] sm:$0xf]
        %v8010 = vld [vmem:[%s8 + $0x34] sm:$0xf]
        %v8011 = vld [vmem:[%s8 + $0x38] sm:$0xf]
        %v8012 = vld [vmem:[%s8 + $0x3c] sm:$0xf]
        %v8013 = vld [vmem:[%s8 + $0x40] sm:$0xf]
        %v8014 = vld [vmem:[%s8 + $0x44] sm:$0xf]
        %v8015 = vld [vmem:[%s8 + $0x48] sm:$0xf]
        %v8016 = vld [vmem:[%s8 + $0x4c] sm:$0xf]
        %v8017 = vld [vmem:[%s8 + $0x50] sm:$0xf]
        %v8018 = vld [vmem:[%s8 + $0x54] sm:$0xf]
        %v8019 = vld [vmem:[%s8 + $0x58] sm:$0xf]
        %v8020 = vld [vmem:[%s8 + $0x5c] sm:$0xf]
        %v8021 = vld [vmem:[%s8 + $0x60] sm:$0xf]
        %v8022 = vld [vmem:[%s8 + $0x64] sm:$0xf]
        %v8023 = vld [vmem:[%s8 + $0x68] sm:$0xf]
        %v8024 = vld [vmem:[%s8 + $0x6c] sm:$0xf]
        %v8025 = vld [vmem:[%s8 + $0x70] sm:$0xf]
        %v8026 = vld [vmem:[%s8 + $0x74] sm:$0xf]
        %v8027 = vld [vmem:[%s8 + $0x78] sm:$0xf]
        %v8028 = vld [vmem:[%s8 + $0x7c] sm:$0xf]
        %v8029 = vld [vmem:[%s9] sm:$0x1]
        %v8031 = vlaneseq
        %v8032 = vshrl.u32 %v8031, 7
        %v8033 = vsub.s32 0, %v8032
        %v8034 = vrot.slane %v8029, %v8033
        %v8068 = vunpack.c.l.b16 %v7997
        %v8069 = vunpack.c.l.b16 %v7998
        %v8070 = vunpack.c.l.b16 %v7999
        %v8071 = vunpack.c.l.b16 %v8000
        %v8072 = vunpack.c.l.b16 %v8001
        %v8073 = vunpack.c.l.b16 %v8002
        %v8074 = vunpack.c.l.b16 %v8003
        %v8075 = vunpack.c.l.b16 %v8004
        %v8076 = vunpack.c.l.b16 %v8005
        %v8077 = vunpack.c.l.b16 %v8006
        %v8078 = vunpack.c.l.b16 %v8007
        %v8079 = vunpack.c.l.b16 %v8008
        %v8080 = vunpack.c.l.b16 %v8009
        %v8081 = vunpack.c.l.b16 %v8010
        %v8082 = vunpack.c.l.b16 %v8011
        %v8083 = vunpack.c.l.b16 %v8012
        %v8084 = vunpack.c.l.b16 %v8013
        %v8085 = vunpack.c.l.b16 %v8014
        %v8086 = vunpack.c.l.b16 %v8015
        %v8087 = vunpack.c.l.b16 %v8016
        %v8088 = vunpack.c.l.b16 %v8017
        %v8089 = vunpack.c.l.b16 %v8018
        %v8090 = vunpack.c.l.b16 %v8019
        %v8091 = vunpack.c.l.b16 %v8020
        %v8092 = vunpack.c.l.b16 %v8021
        %v8093 = vunpack.c.l.b16 %v8022
        %v8094 = vunpack.c.l.b16 %v8023
        %v8095 = vunpack.c.l.b16 %v8024
        %v8096 = vunpack.c.l.b16 %v8025
        %v8097 = vunpack.c.l.b16 %v8026
        %v8098 = vunpack.c.l.b16 %v8027
        %v8099 = vunpack.c.l.b16 %v8028
        %v8100 = vpack.c.b16 %v8069, %v8068
        %v8101 = vpack.c.b16 %v8071, %v8070
        %v8102 = vpack.c.b16 %v8073, %v8072
        %v8103 = vpack.c.b16 %v8075, %v8074
        %v8104 = vpack.c.b16 %v8077, %v8076
        %v8105 = vpack.c.b16 %v8079, %v8078
        %v8106 = vpack.c.b16 %v8081, %v8080
        %v8107 = vpack.c.b16 %v8083, %v8082
        %v8108 = vpack.c.b16 %v8085, %v8084
        %v8109 = vpack.c.b16 %v8087, %v8086
        %v8110 = vpack.c.b16 %v8089, %v8088
        %v8111 = vpack.c.b16 %v8091, %v8090
        %v8112 = vpack.c.b16 %v8093, %v8092
        %v8113 = vpack.c.b16 %v8095, %v8094
        %v8114 = vpack.c.b16 %v8097, %v8096
        %v8115 = vpack.c.b16 %v8099, %v8098
        %8132 = vmatprep.subr.bf16.mxu0 0
        %8133 = vmatpush1.bf16.msra.mxu0 %v8100
        %8134 = vmatprep.subr.bf16.mxu0 0
        %8135 = vmatpush1.bf16.msra.mxu0 %v8101
        %8136 = vmatprep.subr.bf16.mxu0 0
        %8137 = vmatpush1.bf16.msra.mxu0 %v8102
        %8138 = vmatprep.subr.bf16.mxu0 0
        %8139 = vmatpush1.bf16.msra.mxu0 %v8103
        %8140 = vmatprep.subr.bf16.mxu0 0
        %8141 = vmatpush1.bf16.msra.mxu0 %v8104
        %8142 = vmatprep.subr.bf16.mxu0 0
        %8143 = vmatpush1.bf16.msra.mxu0 %v8105
        %8144 = vmatprep.subr.bf16.mxu0 0
        %8145 = vmatpush1.bf16.msra.mxu0 %v8106
        %8146 = vmatprep.subr.bf16.mxu0 0
        %8147 = vmatpush1.bf16.msra.mxu0 %v8107
        %8148 = vmatprep.subr.bf16.mxu0 0
        %8149 = vmatpush1.bf16.msra.mxu0 %v8108
        %8150 = vmatprep.subr.bf16.mxu0 0
        %8151 = vmatpush1.bf16.msra.mxu0 %v8109
        %8152 = vmatprep.subr.bf16.mxu0 0
        %8153 = vmatpush1.bf16.msra.mxu0 %v8110
        %8154 = vmatprep.subr.bf16.mxu0 0
        %8155 = vmatpush1.bf16.msra.mxu0 %v8111
        %8156 = vmatprep.subr.bf16.mxu0 0
        %8157 = vmatpush1.bf16.msra.mxu0 %v8112
        %8158 = vmatprep.subr.bf16.mxu0 0
        %8159 = vmatpush1.bf16.msra.mxu0 %v8113
        %8160 = vmatprep.subr.bf16.mxu0 0
        %8161 = vmatpush1.bf16.msra.mxu0 %v8114
        %8162 = vmatprep.subr.bf16.mxu0 0
        %8163 = vmatpush1.bf16.msra.mxu0 %v8115
        %8164 = vmatprep.mubr.bf16.mxu0 %v7934
        %8165 = vmatmul.mubr.bf16.gmra.mrb[0].mxu0 %v7933
        %v8166 = vpop.f32.mrb[0].mxu0
        %v8167 = vadd.f32 %v8034, %v8166
        %v8168 = vpop.f32.mrb[0].mxu0
        %v8169 = vpop.f32.mrb[0].mxu0
        %v8170 = vadd.f32 %v8034, %v8169
        %v8171 = vpop.f32.mrb[0].mxu0
        %8172 = vmatprep.mubr.bf16.mxu0 %v7936
        %8173 = vmatmul.mubr.bf16.gmra.mrb[0].mxu0 %v7935
        %v8174 = vpop.f32.mrb[0].mxu0
        %v8175 = vadd.f32 %v8034, %v8174
        %v8176 = vpop.f32.mrb[0].mxu0
        %v8177 = vpop.f32.mrb[0].mxu0
        %v8178 = vadd.f32 %v8034, %v8177
        %v8179 = vpop.f32.mrb[0].mxu0
        %8180 = vmatprep.mubr.bf16.mxu0 %v7938
        %8181 = vmatmul.mubr.bf16.gmra.mrb[0].mxu0 %v7937
        %v8182 = vpop.f32.mrb[0].mxu0
        %v8183 = vadd.f32 %v8034, %v8182
        %v8184 = vpop.f32.mrb[0].mxu0
        %v8185 = vpop.f32.mrb[0].mxu0
        %v8186 = vadd.f32 %v8034, %v8185
        %v8187 = vpop.f32.mrb[0].mxu0
        %8188 = vmatprep.mubr.bf16.mxu0 %v7940
        %8189 = vmatmul.mubr.bf16.gmra.mrb[0].mxu0 %v7939
        %v8190 = vpop.f32.mrb[0].mxu0
        %v8191 = vadd.f32 %v8034, %v8190
        %v8192 = vpop.f32.mrb[0].mxu0
        %v8193 = vpop.f32.mrb[0].mxu0
        %v8194 = vadd.f32 %v8034, %v8193
        %v8195 = vpop.f32.mrb[0].mxu0
        %8196 = vmatprep.mubr.bf16.mxu0 %v7942
        %8197 = vmatmul.mubr.bf16.gmra.mrb[0].mxu0 %v7941
        %v8198 = vpop.f32.mrb[0].mxu0
        %v8199 = vadd.f32 %v8034, %v8198
        %v8200 = vpop.f32.mrb[0].mxu0
        %v8201 = vpop.f32.mrb[0].mxu0
        %v8202 = vadd.f32 %v8034, %v8201
        %v8203 = vpop.f32.mrb[0].mxu0
        %8204 = vmatprep.mubr.bf16.mxu0 %v7944
        %8205 = vmatmul.mubr.bf16.gmra.mrb[0].mxu0 %v7943
        %v8206 = vpop.f32.mrb[0].mxu0
        %v8207 = vadd.f32 %v8034, %v8206
        %v8208 = vpop.f32.mrb[0].mxu0
        %v8209 = vpop.f32.mrb[0].mxu0
        %v8210 = vadd.f32 %v8034, %v8209
        %v8211 = vpop.f32.mrb[0].mxu0
        %8212 = vmatprep.mubr.bf16.mxu0 %v7946
        %8213 = vmatmul.mubr.bf16.gmra.mrb[0].mxu0 %v7945
        %v8214 = vpop.f32.mrb[0].mxu0
        %v8215 = vadd.f32 %v8034, %v8214
        %v8216 = vpop.f32.mrb[0].mxu0
        %v8217 = vpop.f32.mrb[0].mxu0
        %v8218 = vadd.f32 %v8034, %v8217
        %v8219 = vpop.f32.mrb[0].mxu0
        %8220 = vmatprep.mubr.bf16.mxu0 %v7948
        %8221 = vmatmul.mubr.bf16.gmra.mrb[0].mxu0 %v7947
        %v8222 = vpop.f32.mrb[0].mxu0
        %v8223 = vadd.f32 %v8034, %v8222
        %v8224 = vpop.f32.mrb[0].mxu0
        %v8225 = vpop.f32.mrb[0].mxu0
        %v8226 = vadd.f32 %v8034, %v8225
        %v8227 = vpop.f32.mrb[0].mxu0
        %8228 = vmatprep.mubr.bf16.mxu0 %v7950
        %8229 = vmatmul.mubr.bf16.gmra.mrb[0].mxu0 %v7949
        %v8230 = vpop.f32.mrb[0].mxu0
        %v8231 = vadd.f32 %v8034, %v8230
        %v8232 = vpop.f32.mrb[0].mxu0
        %v8233 = vpop.f32.mrb[0].mxu0
        %v8234 = vadd.f32 %v8034, %v8233
        %v8235 = vpop.f32.mrb[0].mxu0
        %8236 = vmatprep.mubr.bf16.mxu0 %v7952
        %8237 = vmatmul.mubr.bf16.gmra.mrb[0].mxu0 %v7951
        %v8238 = vpop.f32.mrb[0].mxu0
        %v8239 = vadd.f32 %v8034, %v8238
        %v8240 = vpop.f32.mrb[0].mxu0
        %v8241 = vpop.f32.mrb[0].mxu0
        %v8242 = vadd.f32 %v8034, %v8241
        %v8243 = vpop.f32.mrb[0].mxu0
        %8244 = vmatprep.mubr.bf16.mxu0 %v7954
        %8245 = vmatmul.mubr.bf16.gmra.mrb[0].mxu0 %v7953
        %v8246 = vpop.f32.mrb[0].mxu0
        %v8247 = vadd.f32 %v8034, %v8246
        %v8248 = vpop.f32.mrb[0].mxu0
        %v8249 = vpop.f32.mrb[0].mxu0
        %v8250 = vadd.f32 %v8034, %v8249
        %v8251 = vpop.f32.mrb[0].mxu0
        %8252 = vmatprep.mubr.bf16.mxu0 %v7956
        %8253 = vmatmul.mubr.bf16.gmra.mrb[0].mxu0 %v7955
        %v8254 = vpop.f32.mrb[0].mxu0
        %v8255 = vadd.f32 %v8034, %v8254
        %v8256 = vpop.f32.mrb[0].mxu0
        %v8257 = vpop.f32.mrb[0].mxu0
        %v8258 = vadd.f32 %v8034, %v8257
        %v8259 = vpop.f32.mrb[0].mxu0
        %8260 = vmatprep.mubr.bf16.mxu0 %v7958
        %8261 = vmatmul.mubr.bf16.gmra.mrb[0].mxu0 %v7957
        %v8262 = vpop.f32.mrb[0].mxu0
        %v8263 = vadd.f32 %v8034, %v8262
        %v8264 = vpop.f32.mrb[0].mxu0
        %v8265 = vpop.f32.mrb[0].mxu0
        %v8266 = vadd.f32 %v8034, %v8265
        %v8267 = vpop.f32.mrb[0].mxu0
        %8268 = vmatprep.mubr.bf16.mxu0 %v7960
        %8269 = vmatmul.mubr.bf16.gmra.mrb[0].mxu0 %v7959
        %v8270 = vpop.f32.mrb[0].mxu0
        %v8271 = vadd.f32 %v8034, %v8270
        %v8272 = vpop.f32.mrb[0].mxu0
        %v8273 = vpop.f32.mrb[0].mxu0
        %v8274 = vadd.f32 %v8034, %v8273
        %v8275 = vpop.f32.mrb[0].mxu0
        %8276 = vmatprep.mubr.bf16.mxu0 %v7962
        %8277 = vmatmul.mubr.bf16.gmra.mrb[0].mxu0 %v7961
        %v8278 = vpop.f32.mrb[0].mxu0
        %v8279 = vadd.f32 %v8034, %v8278
        %v8280 = vpop.f32.mrb[0].mxu0
        %v8281 = vpop.f32.mrb[0].mxu0
        %v8282 = vadd.f32 %v8034, %v8281
        %v8283 = vpop.f32.mrb[0].mxu0
        %8284 = vmatprep.mubr.bf16.mxu0 %v7964
        %8285 = vmatmul.mubr.bf16.gmra.mrb[0].mxu0 %v7963
        %v8286 = vpop.f32.mrb[0].mxu0
        %v8287 = vadd.f32 %v8034, %v8286
        %v8288 = vpop.f32.mrb[0].mxu0
        %v8289 = vpop.f32.mrb[0].mxu0
        %v8290 = vadd.f32 %v8034, %v8289
        %v8291 = vpop.f32.mrb[0].mxu0
        %8292 = vmatprep.mubr.bf16.mxu0 %v7966
        %8293 = vmatmul.mubr.bf16.gmra.mrb[0].mxu0 %v7965
        %v8294 = vpop.f32.mrb[0].mxu0
        %v8295 = vadd.f32 %v8034, %v8294
        %v8296 = vpop.f32.mrb[0].mxu0
        %v8297 = vpop.f32.mrb[0].mxu0
        %v8298 = vadd.f32 %v8034, %v8297
        %v8299 = vpop.f32.mrb[0].mxu0
        %8300 = vmatprep.mubr.bf16.mxu0 %v7968
        %8301 = vmatmul.mubr.bf16.gmra.mrb[0].mxu0 %v7967
        %v8302 = vpop.f32.mrb[0].mxu0
        %v8303 = vadd.f32 %v8034, %v8302
        %v8304 = vpop.f32.mrb[0].mxu0
        %v8305 = vpop.f32.mrb[0].mxu0
        %v8306 = vadd.f32 %v8034, %v8305
        %v8307 = vpop.f32.mrb[0].mxu0
        %8308 = vmatprep.mubr.bf16.mxu0 %v7970
        %8309 = vmatmul.mubr.bf16.gmra.mrb[0].mxu0 %v7969
        %v8310 = vpop.f32.mrb[0].mxu0
        %v8311 = vadd.f32 %v8034, %v8310
        %v8312 = vpop.f32.mrb[0].mxu0
        %v8313 = vpop.f32.mrb[0].mxu0
        %v8314 = vadd.f32 %v8034, %v8313
        %v8315 = vpop.f32.mrb[0].mxu0
        %8316 = vmatprep.mubr.bf16.mxu0 %v7972
        %8317 = vmatmul.mubr.bf16.gmra.mrb[0].mxu0 %v7971
        %v8318 = vpop.f32.mrb[0].mxu0
        %v8319 = vadd.f32 %v8034, %v8318
        %v8320 = vpop.f32.mrb[0].mxu0
        %v8321 = vpop.f32.mrb[0].mxu0
        %v8322 = vadd.f32 %v8034, %v8321
        %v8323 = vpop.f32.mrb[0].mxu0
        %8324 = vmatprep.mubr.bf16.mxu0 %v7974
        %8325 = vmatmul.mubr.bf16.gmra.mrb[0].mxu0 %v7973
        %v8326 = vpop.f32.mrb[0].mxu0
        %v8327 = vadd.f32 %v8034, %v8326
        %v8328 = vpop.f32.mrb[0].mxu0
        %v8329 = vpop.f32.mrb[0].mxu0
        %v8330 = vadd.f32 %v8034, %v8329
        %v8331 = vpop.f32.mrb[0].mxu0
        %8332 = vmatprep.mubr.bf16.mxu0 %v7976
        %8333 = vmatmul.mubr.bf16.gmra.mrb[0].mxu0 %v7975
        %v8334 = vpop.f32.mrb[0].mxu0
        %v8335 = vadd.f32 %v8034, %v8334
        %v8336 = vpop.f32.mrb[0].mxu0
        %v8337 = vpop.f32.mrb[0].mxu0
        %v8338 = vadd.f32 %v8034, %v8337
        %v8339 = vpop.f32.mrb[0].mxu0
        %8340 = vmatprep.mubr.bf16.mxu0 %v7978
        %8341 = vmatmul.mubr.bf16.gmra.mrb[0].mxu0 %v7977
        %v8342 = vpop.f32.mrb[0].mxu0
        %v8343 = vadd.f32 %v8034, %v8342
        %v8344 = vpop.f32.mrb[0].mxu0
        %v8345 = vpop.f32.mrb[0].mxu0
        %v8346 = vadd.f32 %v8034, %v8345
        %v8347 = vpop.f32.mrb[0].mxu0
        %8348 = vmatprep.mubr.bf16.mxu0 %v7980
        %8349 = vmatmul.mubr.bf16.gmra.mrb[0].mxu0 %v7979
        %v8350 = vpop.f32.mrb[0].mxu0
        %v8351 = vadd.f32 %v8034, %v8350
        %v8352 = vpop.f32.mrb[0].mxu0
        %v8353 = vpop.f32.mrb[0].mxu0
        %v8354 = vadd.f32 %v8034, %v8353
        %v8355 = vpop.f32.mrb[0].mxu0
        %8356 = vmatprep.mubr.bf16.mxu0 %v7982
        %8357 = vmatmul.mubr.bf16.gmra.mrb[0].mxu0 %v7981
        %v8358 = vpop.f32.mrb[0].mxu0
        %v8359 = vadd.f32 %v8034, %v8358
        %v8360 = vpop.f32.mrb[0].mxu0
        %v8361 = vpop.f32.mrb[0].mxu0
        %v8362 = vadd.f32 %v8034, %v8361
        %v8363 = vpop.f32.mrb[0].mxu0
        %8364 = vmatprep.mubr.bf16.mxu0 %v7984
        %8365 = vmatmul.mubr.bf16.gmra.mrb[0].mxu0 %v7983
        %v8366 = vpop.f32.mrb[0].mxu0
        %v8367 = vadd.f32 %v8034, %v8366
        %v8368 = vpop.f32.mrb[0].mxu0
        %v8369 = vpop.f32.mrb[0].mxu0
        %v8370 = vadd.f32 %v8034, %v8369
        %v8371 = vpop.f32.mrb[0].mxu0
        %8372 = vmatprep.mubr.bf16.mxu0 %v7986
        %8373 = vmatmul.mubr.bf16.gmra.mrb[0].mxu0 %v7985
        %v8374 = vpop.f32.mrb[0].mxu0
        %v8375 = vadd.f32 %v8034, %v8374
        %v8376 = vpop.f32.mrb[0].mxu0
        %v8377 = vpop.f32.mrb[0].mxu0
        %v8378 = vadd.f32 %v8034, %v8377
        %v8379 = vpop.f32.mrb[0].mxu0
        %8380 = vmatprep.mubr.bf16.mxu0 %v7988
        %8381 = vmatmul.mubr.bf16.gmra.mrb[0].mxu0 %v7987
        %v8382 = vpop.f32.mrb[0].mxu0
        %v8383 = vadd.f32 %v8034, %v8382
        %v8384 = vpop.f32.mrb[0].mxu0
        %v8385 = vpop.f32.mrb[0].mxu0
        %v8386 = vadd.f32 %v8034, %v8385
        %v8387 = vpop.f32.mrb[0].mxu0
        %8388 = vmatprep.mubr.bf16.mxu0 %v7990
        %8389 = vmatmul.mubr.bf16.gmra.mrb[0].mxu0 %v7989
        %v8390 = vpop.f32.mrb[0].mxu0
        %v8391 = vadd.f32 %v8034, %v8390
        %v8392 = vpop.f32.mrb[0].mxu0
        %v8393 = vpop.f32.mrb[0].mxu0
        %v8394 = vadd.f32 %v8034, %v8393
        %v8395 = vpop.f32.mrb[0].mxu0
        %8396 = vmatprep.mubr.bf16.mxu0 %v7992
        %8397 = vmatmul.mubr.bf16.gmra.mrb[0].mxu0 %v7991
        %v8398 = vpop.f32.mrb[0].mxu0
        %v8399 = vadd.f32 %v8034, %v8398
        %v8400 = vpop.f32.mrb[0].mxu0
        %v8401 = vpop.f32.mrb[0].mxu0
        %v8402 = vadd.f32 %v8034, %v8401
        %v8403 = vpop.f32.mrb[0].mxu0
        %8404 = vmatprep.mubr.bf16.mxu0 %v7994
        %8405 = vmatmul.mubr.bf16.gmra.mrb[0].mxu0 %v7993
        %v8406 = vpop.f32.mrb[0].mxu0
        %v8407 = vadd.f32 %v8034, %v8406
        %v8408 = vpop.f32.mrb[0].mxu0
        %v8409 = vpop.f32.mrb[0].mxu0
        %v8410 = vadd.f32 %v8034, %v8409
        %v8411 = vpop.f32.mrb[0].mxu0
        %8412 = vmatprep.mubr.bf16.mxu0 %v7996
        %8413 = vmatmul.mubr.bf16.gmra.mrb[0].mxu0 %v7995
        %v8414 = vpop.f32.mrb[0].mxu0
        %v8415 = vadd.f32 %v8034, %v8414
        %v8416 = vpop.f32.mrb[0].mxu0
        %v8417 = vpop.f32.mrb[0].mxu0
        %v8418 = vadd.f32 %v8034, %v8417
        %v8419 = vpop.f32.mrb[0].mxu0
        %8420 = vdwg.mxu0
        %8421 = vst [vmem:[%s1189] sm:$0xff] %v8167
        %8422 = vst [vmem:[%s1189 + $0x8] sm:$0xff] %v8170
        %8423 = vst [vmem:[%s1189 + $0x10] sm:$0xff] %v8175
        %8424 = vst [vmem:[%s1189 + $0x18] sm:$0xff] %v8178
        %8425 = vst [vmem:[%s1189 + $0x20] sm:$0xff] %v8183
        %8426 = vst [vmem:[%s1189 + $0x28] sm:$0xff] %v8186
        %8427 = vst [vmem:[%s1189 + $0x30] sm:$0xff] %v8191
        %8428 = vst [vmem:[%s1189 + $0x38] sm:$0xff] %v8194
        %8429 = vst [vmem:[%s1189 + $0x40] sm:$0xff] %v8199
        %8430 = vst [vmem:[%s1189 + $0x48] sm:$0xff] %v8202
        %8431 = vst [vmem:[%s1189 + $0x50] sm:$0xff] %v8207
        %8432 = vst [vmem:[%s1189 + $0x58] sm:$0xff] %v8210
        %8433 = vst [vmem:[%s1189 + $0x60] sm:$0xff] %v8215
        %8434 = vst [vmem:[%s1189 + $0x68] sm:$0xff] %v8218
        %8435 = vst [vmem:[%s1189 + $0x70] sm:$0xff] %v8223
        %8436 = vst [vmem:[%s1189 + $0x78] sm:$0xff] %v8226
        %8437 = vst [vmem:[%s1189 + $0x80] sm:$0xff] %v8231
        %8438 = vst [vmem:[%s1189 + $0x88] sm:$0xff] %v8234
        %8439 = vst [vmem:[%s1189 + $0x90] sm:$0xff] %v8239
        %8440 = vst [vmem:[%s1189 + $0x98] sm:$0xff] %v8242
        %8441 = vst [vmem:[%s1189 + $0xa0] sm:$0xff] %v8247
        %8442 = vst [vmem:[%s1189 + $0xa8] sm:$0xff] %v8250
        %8443 = vst [vmem:[%s1189 + $0xb0] sm:$0xff] %v8255
        %8444 = vst [vmem:[%s1189 + $0xb8] sm:$0xff] %v8258
        %8445 = vst [vmem:[%s1189 + $0xc0] sm:$0xff] %v8263
        %8446 = vst [vmem:[%s1189 + $0xc8] sm:$0xff] %v8266
        %8447 = vst [vmem:[%s1189 + $0xd0] sm:$0xff] %v8271
        %8448 = vst [vmem:[%s1189 + $0xd8] sm:$0xff] %v8274
        %8449 = vst [vmem:[%s1189 + $0xe0] sm:$0xff] %v8279
        %8450 = vst [vmem:[%s1189 + $0xe8] sm:$0xff] %v8282
        %8451 = vst [vmem:[%s1189 + $0xf0] sm:$0xff] %v8287
        %8452 = vst [vmem:[%s1189 + $0xf8] sm:$0xff] %v8290
        %8453 = vst [vmem:[%s1189 + $0x100] sm:$0xff] %v8295
        %8454 = vst [vmem:[%s1189 + $0x108] sm:$0xff] %v8298
        %8455 = vst [vmem:[%s1189 + $0x110] sm:$0xff] %v8303
        %8456 = vst [vmem:[%s1189 + $0x118] sm:$0xff] %v8306
        %8457 = vst [vmem:[%s1189 + $0x120] sm:$0xff] %v8311
        %8458 = vst [vmem:[%s1189 + $0x128] sm:$0xff] %v8314
        %8459 = vst [vmem:[%s1189 + $0x130] sm:$0xff] %v8319
        %8460 = vst [vmem:[%s1189 + $0x138] sm:$0xff] %v8322
        %8461 = vst [vmem:[%s1189 + $0x140] sm:$0xff] %v8327
        %8462 = vst [vmem:[%s1189 + $0x148] sm:$0xff] %v8330
        %8463 = vst [vmem:[%s1189 + $0x150] sm:$0xff] %v8335
        %8464 = vst [vmem:[%s1189 + $0x158] sm:$0xff] %v8338
        %8465 = vst [vmem:[%s1189 + $0x160] sm:$0xff] %v8343
        %8466 = vst [vmem:[%s1189 + $0x168] sm:$0xff] %v8346
        %8467 = vst [vmem:[%s1189 + $0x170] sm:$0xff] %v8351
        %8468 = vst [vmem:[%s1189 + $0x178] sm:$0xff] %v8354
        %8469 = vst [vmem:[%s1189 + $0x180] sm:$0xff] %v8359
        %8470 = vst [vmem:[%s1189 + $0x188] sm:$0xff] %v8362
        %8471 = vst [vmem:[%s1189 + $0x190] sm:$0xff] %v8367
        %8472 = vst [vmem:[%s1189 + $0x198] sm:$0xff] %v8370
        %8473 = vst [vmem:[%s1189 + $0x1a0] sm:$0xff] %v8375
        %8474 = vst [vmem:[%s1189 + $0x1a8] sm:$0xff] %v8378
        %8475 = vst [vmem:[%s1189 + $0x1b0] sm:$0xff] %v8383
        %8476 = vst [vmem:[%s1189 + $0x1b8] sm:$0xff] %v8386
        %8477 = vst [vmem:[%s1189 + $0x1c0] sm:$0xff] %v8391
        %8478 = vst [vmem:[%s1189 + $0x1c8] sm:$0xff] %v8394
        %8479 = vst [vmem:[%s1189 + $0x1d0] sm:$0xff] %v8399
        %8480 = vst [vmem:[%s1189 + $0x1d8] sm:$0xff] %v8402
        %8481 = vst [vmem:[%s1189 + $0x1e0] sm:$0xff] %v8407
        %8482 = vst [vmem:[%s1189 + $0x1e8] sm:$0xff] %v8410
        %8483 = vst [vmem:[%s1189 + $0x1f0] sm:$0xff] %v8415
        %8484 = vst [vmem:[%s1189 + $0x1f8] sm:$0xff] %v8418
        %s8485 = smul.u32 64, %s22
        %p8486 = scmp.lt.s32.totalorder %s8485, 127
        %s8487 = scalar_select %p8486, %s8485, 127
        %s8488 = smul.addr %s8487, 8
        %s8489 = scalar_lea.vmem %s10, %s8488
        // Predicated region
        $region102: #{_forward_impl.1} parent=96 // pred_check
          %p8490 = pneg %p260
        $region103: #{_forward_impl.1} parent=96 // pred_check_branch
          %8492 = sbr.rel (%p8490) target = $region105
        $region104: #{_forward_impl.1} parent=96 // pred_region
          %s8493 = smul.u32 64, %s22
        $region105: #{_forward_impl.1} parent=96 // pred_fallthru
          _
      $region97: #{_forward_impl.1} parent=5 // pred_fallthru
        _
      %p8494 = scmp.le.s32.totalorder 2, %s17
      // Predicated region
      $region106: #{_forward_impl.1} parent=5 // pred_check
        %p8495 = pneg %p8494
      $region107: #{_forward_impl.1} parent=5 // pred_check_branch
        %8497 = sbr.rel (%p8495) target = $region109
      $region108: #{_forward_impl.1} parent=5 // pred_region
        %s8498 = ssub.s32 %s17, 2
        // Predicated region
        $region110: #{_forward_impl.1} parent=108 // pred_check
          %p8499 = pneg %p266
        $region111: #{_forward_impl.1} parent=108 // pred_check_branch
          %8501 = sbr.rel (%p8499) target = $region113
        $region112: #{_forward_impl.1} parent=108 // pred_region
          %s8502 = smul.u32 64, %s23
          %p8503 = scmp.lt.s32.totalorder %s8502, 127
          %s8504 = scalar_select %p8503, %s8502, 127
          %s8505 = smul.addr %s8504, 8
          %s8506 = scalar_lea.vmem %s10, %s8505
        $region113: #{_forward_impl.1} parent=108 // pred_fallthru
          _
      $region109: #{_forward_impl.1} parent=5 // pred_fallthru
        _
    $region6: #{_forward_impl.1} parent=1 // loop_footer
      %s21 = sadd.s32 1, %s17
    $region7: #{_forward_impl.1} parent=1 // loop_footer_branch
      %16 = sbr.rel target = $region3
    $region8: #{_forward_impl.1} parent=1 // loop_exit
      _

</llo_original>
